<compile_context>
chip_gen: v6e
topology: v6e:2x2x1
jax: 0.10.0
libtpu: 0.0.40
codegen_flags: <defaults>
</compile_context>

<pallas_src>
import functools
import math

import jax
import jax.numpy as jnp
from jax.experimental import pallas as pl
from jax.experimental.pallas import tpu as pltpu


_TM = 128                         # row tile for matmul-bearing kernels
_TM_ELEMWISE = 512                # row tile for pure elementwise kernels (HBM-bound)
_HEAVY_VMEM = 48 * 1024 * 1024    # scoped VMEM limit for heavy kernels (safe on v5e/v6e/v7x)


# ---------------------------------------------------------------------------
# Small tiling helpers
# ---------------------------------------------------------------------------

def _row_tile(M, target):
    """Full-array block for small M, otherwise a fixed multiple-of-8 tile (edge blocks masked)."""
    return M if M <= target else target


def _e_tile(E):
    """Expansion-dim tile: largest multiple-of-128 tile <= 512 dividing E, else full E."""
    if E <= 512:
        return E
    for t in (512, 384, 256, 128):
        if E % t == 0:
            return t
    return E


def _seq_tile(T, target):
    """Sequence tile that exactly divides T (needed for softmax correctness)."""
    if T <= target:
        return T
    for t in range(target, 7, -8):
        if T % t == 0:
            return t
    return T


# ---------------------------------------------------------------------------
# Generic row-tiled pallas_call helper (no XLA-side padding; edge blocks are masked)
# ---------------------------------------------------------------------------

def _row_call(kernel, row_arrays, full_arrays, out_dims, *, tm_target=_TM,
              vmem_limit=None, cost=None):
    """Run `kernel` over row tiles.  row_arrays: (M, Di) arrays tiled along rows; full_arrays are
    broadcast whole (weights / biases / LN params).  Kernel signature:
        kernel(*row_refs, *full_refs, *out_refs)."""
    M = row_arrays[0].shape[0]
    dtype = row_arrays[0].dtype
    tm = _row_tile(M, tm_target)
    grid = (pl.cdiv(M, tm),)

    in_specs = [pl.BlockSpec((tm, a.shape[1]), lambda i: (i, 0)) for a in row_arrays]
    in_specs += [pl.BlockSpec(a.shape, lambda i, nd=a.ndim: (0,) * nd) for a in full_arrays]

    single = isinstance(out_dims, int)
    dims = (out_dims,) if single else tuple(out_dims)
    if single:
        out_shape = jax.ShapeDtypeStruct((M, dims[0]), dtype)
        out_specs = pl.BlockSpec((tm, dims[0]), lambda i: (i, 0))
    else:
        out_shape = tuple(jax.ShapeDtypeStruct((M, d), dtype) for d in dims)
        out_specs = tuple(pl.BlockSpec((tm, d), lambda i: (i, 0)) for d in dims)

    return pl.pallas_call(
        kernel,
        out_shape=out_shape,
        grid=grid,
        in_specs=in_specs,
        out_specs=out_specs,
        compiler_params=pltpu.CompilerParams(
            dimension_semantics=("parallel",), vmem_limit_bytes=vmem_limit),
        cost_estimate=cost,
    )(*row_arrays, *full_arrays)


# ---------------------------------------------------------------------------
# Row-tiled fused kernels
# ---------------------------------------------------------------------------

def _make_linear_kernel(act):
    def kernel(x_ref, w_ref, b_ref, o_ref):
        y = jnp.dot(x_ref[...].astype(jnp.bfloat16), w_ref[...],
                    preferred_element_type=jnp.float32) + b_ref[...]
        if act == "swish":
            y = y * jax.nn.sigmoid(y)
        elif act == "tanh":
            y = jnp.tanh(y)
        o_ref[...] = y.astype(o_ref.dtype)
    return kernel


def pallas_linear(x, w, b, act="none"):
    """y = act(x @ w + b).  w is pre-stored bf16; f32 accumulate on the MXU."""
    *lead, K = x.shape
    Nout = w.shape[1]
    out = _row_call(_make_linear_kernel(act), [x.reshape(-1, K)],
                    [w, b.reshape(1, Nout)], Nout)
    return out.reshape(*lead, Nout)


def _make_ff_kernel(has_post_ln):
    """Conformer FF: LN -> linear -> swish -> linear -> x + 0.5*y (-> optional LN).
    E-tiled: grid axis 1 runs over expansion-dim tiles; LN(x) cached in a bf16 scratch and the
    second matmul accumulated into an f32 scratch."""
    def kernel(x_ref, g_ref, b_ref, w1_ref, b1_ref, w2_ref, b2_ref, *rest):
        if has_post_ln:
            pg_ref, pb_ref, o_ref, y_sc, acc_sc = rest
        else:
            o_ref, y_sc, acc_sc = rest
        e = pl.program_id(1)

        @pl.when(e == 0)
        def _():
            x = x_ref[...]
            mean = jnp.mean(x, axis=-1, keepdims=True)
            var = jnp.mean((x - mean) ** 2, axis=-1, keepdims=True)
            y = (x - mean) * jax.lax.rsqrt(var + 1e-5) * g_ref[...] + b_ref[...]
            y_sc[...] = y.astype(jnp.bfloat16)
            acc_sc[...] = jnp.zeros_like(acc_sc)

        h = jnp.dot(y_sc[...], w1_ref[...], preferred_element_type=jnp.float32) + b1_ref[...]
        h = h * jax.nn.sigmoid(h)                                   # swish
        acc_sc[...] += jnp.dot(h.astype(jnp.bfloat16), w2_ref[...],
                               preferred_element_type=jnp.float32)

        @pl.when(e == pl.num_programs(1) - 1)
        def _():
            out = x_ref[...] + 0.5 * (acc_sc[...] + b2_ref[...])
            if has_post_ln:
                m2 = jnp.mean(out, axis=-1, keepdims=True)
                v2 = jnp.mean((out - m2) ** 2, axis=-1, keepdims=True)
                out = (out - m2) * jax.lax.rsqrt(v2 + 1e-5) * pg_ref[...] + pb_ref[...]
            o_ref[...] = out.astype(o_ref.dtype)
    return kernel


def fused_ff(x, ln_g, ln_b, w1, b1, w2, b2, post_ln=None):
    *lead, D = x.shape
    E = w1.shape[1]
    x2 = x.reshape(-1, D)
    M = x2.shape[0]
    tm = _row_tile(M, _TM)
    tE = _e_tile(E)
    grid = (pl.cdiv(M, tm), E // tE)

    inputs = [x2, ln_g.reshape(1, D), ln_b.reshape(1, D),
              w1, b1.reshape(1, E), w2, b2.reshape(1, D)]
    in_specs = [
        pl.BlockSpec((tm, D), lambda i, e: (i, 0)),
        pl.BlockSpec((1, D), lambda i, e: (0, 0)),
        pl.BlockSpec((1, D), lambda i, e: (0, 0)),
        pl.BlockSpec((D, tE), lambda i, e: (0, e)),
        pl.BlockSpec((1, tE), lambda i, e: (0, e)),
        pl.BlockSpec((tE, D), lambda i, e: (e, 0)),
        pl.BlockSpec((1, D), lambda i, e: (0, 0)),
    ]
    if post_ln is not None:
        inputs += [post_ln[0].reshape(1, D), post_ln[1].reshape(1, D)]
        in_specs += [pl.BlockSpec((1, D), lambda i, e: (0, 0)),
                     pl.BlockSpec((1, D), lambda i, e: (0, 0))]

    cost = pl.CostEstimate(flops=4 * M * D * E, transcendentals=M * E,
                           bytes_accessed=2 * M * D * 4 + 4 * D * E)
    out = pl.pallas_call(
        _make_ff_kernel(post_ln is not None),
        out_shape=jax.ShapeDtypeStruct((M, D), x.dtype),
        grid=grid,
        in_specs=in_specs,
        out_specs=pl.BlockSpec((tm, D), lambda i, e: (i, 0)),
        scratch_shapes=[pltpu.VMEM((tm, D), jnp.bfloat16),
                        pltpu.VMEM((tm, D), jnp.float32)],
        compiler_params=pltpu.CompilerParams(
            dimension_semantics=("parallel", "arbitrary"),
            vmem_limit_bytes=_HEAVY_VMEM),
        cost_estimate=cost,
    )(*inputs)
    return out.reshape(*lead, D)


def _ln_qkv_kernel(x_ref, g_ref, b_ref, wq_ref, bq_ref, wk_ref, bk_ref, wv_ref, bv_ref,
                   q_ref, k_ref, v_ref):
    x = x_ref[...]
    mean = jnp.mean(x, axis=-1, keepdims=True)
    var = jnp.mean((x - mean) ** 2, axis=-1, keepdims=True)
    y = ((x - mean) * jax.lax.rsqrt(var + 1e-5) * g_ref[...] + b_ref[...]).astype(jnp.bfloat16)
    q_ref[...] = (jnp.dot(y, wq_ref[...], preferred_element_type=jnp.float32)
                  + bq_ref[...]).astype(q_ref.dtype)
    k_ref[...] = (jnp.dot(y, wk_ref[...], preferred_element_type=jnp.float32)
                  + bk_ref[...]).astype(k_ref.dtype)
    v_ref[...] = (jnp.dot(y, wv_ref[...], preferred_element_type=jnp.float32)
                  + bv_ref[...]).astype(v_ref.dtype)


def fused_ln_qkv(x, g, b, wq, bq, wk, bk, wv, bv):
    """LayerNorm + three projections (q, k, v) in one kernel; three separate outputs (no split)."""
    *lead, D = x.shape
    F = wq.shape[1]
    q, k, v = _row_call(_ln_qkv_kernel, [x.reshape(-1, D)],
                        [g.reshape(1, D), b.reshape(1, D),
                         wq, bq.reshape(1, F), wk, bk.reshape(1, F), wv, bv.reshape(1, F)],
                        (F, F, F))
    shp = (*lead, F)
    return q.reshape(shp), k.reshape(shp), v.reshape(shp)


def _linear_residual_kernel(x_ref, r_ref, w_ref, b_ref, o_ref):
    o = jnp.dot(x_ref[...].astype(jnp.bfloat16), w_ref[...],
                preferred_element_type=jnp.float32) + b_ref[...]
    o_ref[...] = (r_ref[...] + o).astype(o_ref.dtype)


def fused_linear_residual(x, w, b, residual):
    """residual + (x @ w + b), one kernel (attention output projection)."""
    *lead, D = x.shape
    Nout = w.shape[1]
    out = _row_call(_linear_residual_kernel,
                    [x.reshape(-1, D), residual.reshape(-1, Nout)],
                    [w, b.reshape(1, Nout)], Nout)
    return out.reshape(*lead, Nout)


def _ln_glu_kernel(x_ref, g_ref, b_ref, wa_ref, ba_ref, wg_ref, bg_ref, o_ref):
    x = x_ref[...]
    mean = jnp.mean(x, axis=-1, keepdims=True)
    var = jnp.mean((x - mean) ** 2, axis=-1, keepdims=True)
    y = ((x - mean) * jax.lax.rsqrt(var + 1e-5) * g_ref[...] + b_ref[...]).astype(jnp.bfloat16)
    a = jnp.dot(y, wa_ref[...], preferred_element_type=jnp.float32) + ba_ref[...]
    gate = jnp.dot(y, wg_ref[...], preferred_element_type=jnp.float32) + bg_ref[...]
    o_ref[...] = (a * jax.nn.sigmoid(gate)).astype(o_ref.dtype)


def fused_ln_glu(x, g, b, wa, ba, wg, bg):
    """LN -> pointwise conv1 -> GLU, one kernel (GLU halves pre-split at init)."""
    *lead, D = x.shape
    F = wa.shape[1]
    out = _row_call(_ln_glu_kernel, [x.reshape(-1, D)],
                    [g.reshape(1, D), b.reshape(1, D),
                     wa, ba.reshape(1, F), wg, bg.reshape(1, F)], F)
    return out.reshape(*lead, F)


def _affine_residual_kernel(h_ref, r_ref, s_ref, t_ref, o_ref):
    o_ref[...] = (r_ref[...] + h_ref[...] * s_ref[...] + t_ref[...]).astype(o_ref.dtype)


def fused_affine_residual(h, scale, shift, residual):
    """residual + (h * scale + shift) — final Postnet BN affine fused with the residual add."""
    *lead, C = h.shape
    out = _row_call(_affine_residual_kernel,
                    [h.reshape(-1, C), residual.reshape(-1, C)],
                    [scale.reshape(1, C), shift.reshape(1, C)], C, tm_target=_TM_ELEMWISE)
    return out.reshape(*lead, C)


# ---------------------------------------------------------------------------
# Flash-style multi-head self-attention (all heads per grid step, kv-tiled online softmax)
# ---------------------------------------------------------------------------

def _make_flash_attn_kernel(num_heads, dh, scale):
    def kernel(q_ref, k_ref, v_ref, o_ref, m_sc, l_sc, acc_sc):
        kv = pl.program_id(2)

        @pl.when(kv == 0)
        def _():
            m_sc[...] = jnp.full_like(m_sc, -jnp.inf)
            l_sc[...] = jnp.zeros_like(l_sc)
            acc_sc[...] = jnp.zeros_like(acc_sc)

        last = kv == pl.num_programs(2) - 1
        qb = q_ref[0].astype(jnp.bfloat16)        # (tq, F)
        kb = k_ref[0].astype(jnp.bfloat16)        # (tkv, F)
        vb = v_ref[0].astype(jnp.bfloat16)        # (tkv, F)

        for h in range(num_heads):                # static head loop (no XLA head transposes)
            sl = slice(h * dh, (h + 1) * dh)
            s = jax.lax.dot_general(qb[:, sl], kb[:, sl], (((1,), (1,)), ((), ())),
                                    preferred_element_type=jnp.float32) * scale
            m_prev = m_sc[h]
            m_new = jnp.maximum(m_prev, jnp.max(s, axis=-1, keepdims=True))
            alpha = jnp.exp(m_prev - m_new)
            p = jnp.exp(s - m_new)
            l_sc[h] = alpha * l_sc[h] + jnp.sum(p, axis=-1, keepdims=True)
            acc_sc[h] = alpha * acc_sc[h] + jnp.dot(p.astype(jnp.bfloat16), vb[:, sl],
                                                    preferred_element_type=jnp.float32)
            m_sc[h] = m_new

            @pl.when(last)
            def _():
                o_ref[0, :, sl] = (acc_sc[h] * pl.reciprocal(l_sc[h], approx=True)
                                   ).astype(o_ref.dtype)
    return kernel


def pallas_attention(q, k, v, num_heads):
    """q, k, v, out: (N, T, F); heads split in-kernel along lanes."""
    N, T, F = q.shape
    dh = F // num_heads
    tq = _seq_tile(T, 128)
    tkv = _seq_tile(T, 256)
    grid = (N, T // tq, T // tkv)
    q_spec = pl.BlockSpec((1, tq, F), lambda n, qi, ki: (n, qi, 0))
    kv_spec = pl.BlockSpec((1, tkv, F), lambda n, qi, ki: (n, ki, 0))
    cost = pl.CostEstimate(flops=4 * N * T * T * F,
                           transcendentals=N * num_heads * T * T,
                           bytes_accessed=4 * N * T * F * 4)
    return pl.pallas_call(
        _make_flash_attn_kernel(num_heads, dh, 1.0 / math.sqrt(dh)),
        out_shape=jax.ShapeDtypeStruct((N, T, F), q.dtype),
        grid=grid,
        in_specs=[q_spec, kv_spec, kv_spec],
        out_specs=q_spec,
        scratch_shapes=[pltpu.VMEM((num_heads, tq, 1), jnp.float32),
                        pltpu.VMEM((num_heads, tq, 1), jnp.float32),
                        pltpu.VMEM((num_heads, tq, dh), jnp.float32)],
        compiler_params=pltpu.CompilerParams(
            dimension_semantics=("parallel", "parallel", "arbitrary"),
            vmem_limit_bytes=_HEAVY_VMEM),
        cost_estimate=cost,
    )(q, k, v)


# ---------------------------------------------------------------------------
# FiLM (projection kernel + T-tiled affine kernel)
# ---------------------------------------------------------------------------

def _film_affine_kernel(x_ref, g_ref, b_ref, o_ref):
    o_ref[...] = (x_ref[...] * g_ref[...] + b_ref[...]).astype(o_ref.dtype)


def film_layer(x, cond, p):
    """FiLM: x * (cond @ Wg + bg) + (cond @ Wb + bb).  Projections are a tiny row-tiled matmul
    over (N, H); the per-token affine is a T-tiled elementwise kernel."""
    N, T, H = x.shape
    gain = pallas_linear(cond, p["Wg"], p["bg"]).reshape(N, 1, H)
    bias = pallas_linear(cond, p["Wb"], p["bb"]).reshape(N, 1, H)
    tT = T if T <= 512 else 512
    return pl.pallas_call(
        _film_affine_kernel,
        out_shape=jax.ShapeDtypeStruct((N, T, H), x.dtype),
        grid=(N, pl.cdiv(T, tT)),
        in_specs=[pl.BlockSpec((1, tT, H), lambda n, t: (n, t, 0)),
                  pl.BlockSpec((1, 1, H), lambda n, t: (n, 0, 0)),
                  pl.BlockSpec((1, 1, H), lambda n, t: (n, 0, 0))],
        out_specs=pl.BlockSpec((1, tT, H), lambda n, t: (n, t, 0)),
        compiler_params=pltpu.CompilerParams(
            dimension_semantics=("parallel", "parallel")),
    )(x, gain, bias)


# ---------------------------------------------------------------------------
# Convolution kernels (roll-based 'same' padding, no XLA jnp.pad)
# ---------------------------------------------------------------------------

def _shift_same(x, d, T, row):
    """x shifted so that out[t] = x[t + d] with zeros outside [0, T); shift via XLU roll + mask."""
    shifted = x if d == 0 else pltpu.roll(x, shift=(-d) % T, axis=0)
    valid = (row + d >= 0) & (row + d < T)
    return jnp.where(valid, shifted, 0.0)


def _make_dwconv_pw_kernel(K, T, C):
    """Depthwise 'same' conv -> swish -> pointwise conv2 -> + residual, per batch element."""
    pad = (K - 1) // 2

    def kernel(y_ref, dw_ref, w2_ref, b2_ref, r_ref, o_ref):
        y = y_ref[0]                                        # (T, C)
        row = jax.lax.broadcasted_iota(jnp.int32, (T, 1), 0)
        acc = jnp.zeros((T, C), jnp.float32)
        for k in range(K):
            acc = acc + _shift_same(y, k - pad, T, row) * dw_ref[k]
        acc = acc * jax.nn.sigmoid(acc)                     # swish
        out = jnp.dot(acc.astype(jnp.bfloat16), w2_ref[...],
                      preferred_element_type=jnp.float32) + b2_ref[...]
        o_ref[...] = (r_ref[0] + out)[None].astype(o_ref.dtype)
    return kernel


def fused_dwconv_pw_residual(glu, dw_w, pw2_w, pw2_b, residual):
    N, T, F = glu.shape
    K = dw_w.shape[0]
    return pl.pallas_call(
        _make_dwconv_pw_kernel(K, T, F),
        out_shape=jax.ShapeDtypeStruct((N, T, F), glu.dtype),
        grid=(N,),
        in_specs=[
            pl.BlockSpec((1, T, F), lambda n: (n, 0, 0)),
            pl.BlockSpec((K, 1, F), lambda n: (0, 0, 0)),
            pl.BlockSpec((F, F), lambda n: (0, 0)),
            pl.BlockSpec((1, F), lambda n: (0, 0)),
            pl.BlockSpec((1, T, F), lambda n: (n, 0, 0)),
        ],
        out_specs=pl.BlockSpec((1, T, F), lambda n: (n, 0, 0)),
        compiler_params=pltpu.CompilerParams(
            dimension_semantics=("parallel",), vmem_limit_bytes=_HEAVY_VMEM),
    )(glu, dw_w, pw2_w, pw2_b.reshape(1, F), residual)


def _make_postnet_conv_kernel(K, T, Cout, prologue):
    """'same' conv1d; optional fused prologue = BN-affine + tanh of the *previous* layer.
    Also emits the per-batch-element BatchNorm partial statistics (sum, sum of squares)."""
    pad = (K - 1) // 2

    def kernel(x_ref, *rest):
        if prologue:
            s_ref, t_ref, w_ref, b_ref, o_ref, sum_ref, sq_ref = rest
        else:
            w_ref, b_ref, o_ref, sum_ref, sq_ref = rest
        x = x_ref[0]                                        # (T, Cin)
        if prologue:
            x = jnp.tanh(x * s_ref[...] + t_ref[...])
        row = jax.lax.broadcasted_iota(jnp.int32, (T, 1), 0)
        acc = jnp.zeros((T, Cout), jnp.float32)
        for k in range(K):
            xs = _shift_same(x, k - pad, T, row).astype(jnp.bfloat16)
            acc = acc + jnp.dot(xs, w_ref[k], preferred_element_type=jnp.float32)
        out = acc + b_ref[...]
        o_ref[...] = out[None].astype(o_ref.dtype)
        sum_ref[...] = jnp.sum(out, axis=0, keepdims=True)[None]
        sq_ref[...] = jnp.sum(out * out, axis=0, keepdims=True)[None]
    return kernel


def pallas_postnet_conv(x, w, b, scale=None, shift=None):
    """x: (N, T, Cin), w: (K, Cin, Cout) bf16.  If scale/shift given, apply tanh(x*scale+shift)
    first.  Returns (conv_out, per-batch sum, per-batch sum-of-squares)."""
    N, T, Cin = x.shape
    K, _, Cout = w.shape
    prologue = scale is not None
    inputs = [x]
    in_specs = [pl.BlockSpec((1, T, Cin), lambda n: (n, 0, 0))]
    if prologue:
        inputs += [scale.reshape(1, Cin), shift.reshape(1, Cin)]
        in_specs += [pl.BlockSpec((1, Cin), lambda n: (0, 0)),
                     pl.BlockSpec((1, Cin), lambda n: (0, 0))]
    inputs += [w, b.reshape(1, Cout)]
    in_specs += [pl.BlockSpec((K, Cin, Cout), lambda n: (0, 0, 0)),
                 pl.BlockSpec((1, Cout), lambda n: (0, 0))]
    out_shape = (jax.ShapeDtypeStruct((N, T, Cout), x.dtype),
                 jax.ShapeDtypeStruct((N, 1, Cout), jnp.float32),
                 jax.ShapeDtypeStruct((N, 1, Cout), jnp.float32))
    out_specs = (pl.BlockSpec((1, T, Cout), lambda n: (n, 0, 0)),
                 pl.BlockSpec((1, 1, Cout), lambda n: (n, 0, 0)),
                 pl.BlockSpec((1, 1, Cout), lambda n: (n, 0, 0)))
    return pl.pallas_call(
        _make_postnet_conv_kernel(K, T, Cout, prologue),
        out_shape=out_shape,
        grid=(N,),
        in_specs=in_specs,
        out_specs=out_specs,
        compiler_params=pltpu.CompilerParams(
            dimension_semantics=("parallel",), vmem_limit_bytes=_HEAVY_VMEM),
    )(*inputs)


# ---------------------------------------------------------------------------
# Module building blocks (JAX glue around the fused Pallas kernels)
# ---------------------------------------------------------------------------

def conformer_block(x, p, num_heads):
    # feed-forward module 1 (LN + FF + half residual; E-tiled)
    x = fused_ff(x, p["ln1_g"], p["ln1_b"], p["ff1_w1"], p["ff1_b1"],
                 p["ff1_w2"], p["ff1_b2"])

    # multi-head self attention (LN + q/k/v projections fused; flash attention; out-proj+residual)
    q, k, v = fused_ln_qkv(x, p["ln2_g"], p["ln2_b"],
                           p["q_w"], p["q_b"], p["k_w"], p["k_b"], p["v_w"], p["v_b"])
    o = pallas_attention(q, k, v, num_heads)
    x = fused_linear_residual(o, p["attn_out_w"], p["attn_out_b"], x)

    # convolution module: (LN + pw1 + GLU) then (dwconv + swish + pw2 + residual)
    glu = fused_ln_glu(x, p["ln3_g"], p["ln3_b"],
                       p["pw1a_w"], p["pw1a_b"], p["pw1g_w"], p["pw1g_b"])
    x = fused_dwconv_pw_residual(glu, p["dw_w"], p["pw2_w"], p["pw2_b"], x)

    # feed-forward module 2 with the block's final LayerNorm fused in
    x = fused_ff(x, p["ln4_g"], p["ln4_b"], p["ff2_w1"], p["ff2_b1"],
                 p["ff2_w2"], p["ff2_b2"], post_ln=(p["ln5_g"], p["ln5_b"]))
    return x


def dfconformer(x, p, num_heads):
    h = pallas_linear(x, p["in_w"], p["in_b"])
    for blk in p["blocks"]:
        h = conformer_block(h, blk, num_heads)
    return pallas_linear(h, p["out_w"], p["out_b"])


def postnet(x, p):
    """Returns the last conv output plus the final BN affine (scale, shift); the caller fuses the
    final affine with the residual add.  BN affine+tanh of layer i is fused as the prologue of
    conv i+1.  Batch statistics come from in-kernel partial sums (tiny cross-batch reduce only)."""
    h = x
    scale = shift = None
    for c in p["convs"]:
        h, ssum, ssq = pallas_postnet_conv(h, c["w"], c["b"], scale, shift)
        cnt = h.shape[0] * h.shape[1]
        mean = jnp.sum(ssum, axis=(0, 1)) / cnt
        var = jnp.maximum(jnp.sum(ssq, axis=(0, 1)) / cnt - mean * mean, 0.0)
        scale = c["bn_g"] * jax.lax.rsqrt(var + 1e-5)
        shift = c["bn_b"] - mean * scale
    return h, scale, shift


def sinusoidal_pe(max_len, d):
    pos = jnp.arange(max_len, dtype=jnp.float32)[:, None]
    div = jnp.exp(jnp.arange(0, d, 2, dtype=jnp.float32) * (-math.log(10000.0) / d))
    pe = jnp.zeros((max_len, d), jnp.float32)
    pe = pe.at[:, 0::2].set(jnp.sin(pos * div))
    pe = pe.at[:, 1::2].set(jnp.cos(pos * div))
    return pe


def miipher_forward(params, phone_feature, speaker_feature, ssl_feature, cfg):
    """
    phone_feature:   (N, T, n_phone_feature)
    speaker_feature: (N, n_speaker_embedding)
    ssl_feature:     (N, T, n_ssl_feature)
    returns (ssl_feature, intermediates) with intermediates: (2*n_iters, N, T, n_hidden_dim)
    """
    N = phone_feature.shape[0]
    H = cfg["n_hidden_dim"]

    phone_h = pallas_linear(phone_feature, params["phone_w"], params["phone_b"])
    spk_h = pallas_linear(speaker_feature, params["spk_w"], params["spk_b"])
    ssl_h = pallas_linear(ssl_feature, params["ssl_w"], params["ssl_b"])

    phone_speaker = film_layer(phone_h, spk_h, params["phone_speaker_film"])

    intermediates = []
    pe = params["pe_table"]
    for it in range(cfg["n_iters"]):
        pos_enc = jnp.broadcast_to(pe[it], (N, H))      # same position index per batch element
        phone_speaker = film_layer(phone_speaker, pos_enc, params["pos_film"])
        ssl_h = dfconformer(ssl_h, params["dfconformer"], cfg["num_heads"])
        intermediates.append(ssl_h)
        h, s, t = postnet(ssl_h, params["postnet"])
        ssl_h = fused_affine_residual(h, s, t, ssl_h)   # final BN affine + residual, one kernel
        intermediates.append(ssl_h)
    return ssl_h, jnp.stack(intermediates)


# ---------------------------------------------------------------------------
# Deterministic parameter initialization (MXU weights stored bf16 once, outside jit)
# ---------------------------------------------------------------------------

class KeyGen:
    def __init__(self, key):
        self.key = key

    def __call__(self):
        self.key, sub = jax.random.split(self.key)
        return sub


def _dense(key, din, dout, scale=0.02):
    kw, kb = jax.random.split(key)
    w = (scale * jax.random.normal(kw, (din, dout), jnp.float32)).astype(jnp.bfloat16)
    b = scale * jax.random.normal(kb, (dout,), jnp.float32)
    return w, b


def init_film(kg, in_dim, cond_dim):
    Wg, bg = _dense(kg(), cond_dim, in_dim)
    Wb, bb = _dense(kg(), cond_dim, in_dim)
    return {"Wg": Wg, "bg": bg, "Wb": Wb, "bb": bb}


def init_conformer_block(kg, d, ef, dw_k):
    p = {}
    p["ln1_g"], p["ln1_b"] = jnp.ones((d,)), jnp.zeros((d,))
    p["ff1_w1"], p["ff1_b1"] = _dense(kg(), d, d * ef)
    p["ff1_w2"], p["ff1_b2"] = _dense(kg(), d * ef, d)
    p["ln2_g"], p["ln2_b"] = jnp.ones((d,)), jnp.zeros((d,))
    p["q_w"], p["q_b"] = _dense(kg(), d, d)
    p["k_w"], p["k_b"] = _dense(kg(), d, d)
    p["v_w"], p["v_b"] = _dense(kg(), d, d)
    p["attn_out_w"], p["attn_out_b"] = _dense(kg(), d, d)
    p["ln3_g"], p["ln3_b"] = jnp.ones((d,)), jnp.zeros((d,))
    p["pw1a_w"], p["pw1a_b"] = _dense(kg(), d, d)       # GLU value half
    p["pw1g_w"], p["pw1g_b"] = _dense(kg(), d, d)       # GLU gate half
    p["dw_w"] = 0.02 * jax.random.normal(kg(), (dw_k, 1, d), jnp.float32)
    p["pw2_w"], p["pw2_b"] = _dense(kg(), d, d)
    p["ln4_g"], p["ln4_b"] = jnp.ones((d,)), jnp.zeros((d,))
    p["ff2_w1"], p["ff2_b1"] = _dense(kg(), d, d * ef)
    p["ff2_w2"], p["ff2_b2"] = _dense(kg(), d * ef, d)
    p["ln5_g"], p["ln5_b"] = jnp.ones((d,)), jnp.zeros((d,))
    return p


def init_dfconformer(kg, in_size, out_size, filters, efs, dw_k):
    p = {}
    p["in_w"], p["in_b"] = _dense(kg(), in_size, filters)
    p["blocks"] = [init_conformer_block(kg, filters, ef, dw_k) for ef in efs]
    p["out_w"], p["out_b"] = _dense(kg(), filters, out_size)
    return p


def init_postnet(kg, h, e, k, n):
    dims = [h] + [e] * (n - 1) + [h]
    convs = []
    for i in range(n):
        cin, cout = dims[i], dims[i + 1]
        convs.append({
            "w": (0.02 * jax.random.normal(kg(), (k, cin, cout), jnp.float32)
                  ).astype(jnp.bfloat16),
            "b": jnp.zeros((cout,), jnp.float32),
            "bn_g": jnp.ones((cout,), jnp.float32),
            "bn_b": jnp.zeros((cout,), jnp.float32),
        })
    return {"convs": convs}


def init_miipher_params(seed, cfg):
    kg = KeyGen(jax.random.PRNGKey(seed))
    H = cfg["n_hidden_dim"]
    params = {}
    params["phone_w"], params["phone_b"] = _dense(kg(), cfg["n_phone_feature"], H)
    params["spk_w"], params["spk_b"] = _dense(kg(), cfg["n_speaker_embedding"], H)
    params["ssl_w"], params["ssl_b"] = _dense(kg(), cfg["n_ssl_feature"], H)
    params["phone_speaker_film"] = init_film(kg, H, H)
    params["pos_film"] = init_film(kg, H, H)
    params["pe_table"] = sinusoidal_pe(100, H)
    # NOTE: reference code hardcodes DFconformer(input_size=1024,...) with n_hidden_dim==1024;
    # at these small test shapes we keep the invariant input_size == output_size == n_hidden_dim.
    params["dfconformer"] = init_dfconformer(
        kg, H, H, cfg["filters"], cfg["expansion_factors"], cfg["dw_kernel"])
    params["postnet"] = init_postnet(
        kg, H, cfg["postnet_embedding_dim"], cfg["postnet_kernel_size"],
        cfg["postnet_n_convolutions"])
    return params


# ---------------------------------------------------------------------------
# main
# ---------------------------------------------------------------------------

if __name__ == "__main__":
    cfg = dict(
        n_phone_feature=12,
        n_speaker_embedding=10,
        n_ssl_feature=24,
        n_hidden_dim=32,
        n_conformer_blocks=2,   # stored by reference module but unused in its forward
        n_iters=2,
        filters=16,
        num_heads=4,
        expansion_factors=(4, 4),
        dw_kernel=3,
        postnet_embedding_dim=16,
        postnet_kernel_size=5,
        postnet_n_convolutions=5,
    )

    params = init_miipher_params(0, cfg)

    N, T = 2, 8
    k1, k2, k3 = jax.random.split(jax.random.PRNGKey(0), 3)
    phone = jax.random.normal(k1, (N, T, cfg["n_phone_feature"]), jnp.float32)
    speaker = jax.random.normal(k2, (N, cfg["n_speaker_embedding"]), jnp.float32)
    ssl = jax.random.normal(k3, (N, T, cfg["n_ssl_feature"]), jnp.float32)

    fwd = jax.jit(functools.partial(miipher_forward, cfg=cfg))
    out, intermediates = fwd(params, phone, speaker, ssl)
    jax.block_until_ready((out, intermediates))

    assert out.shape == (N, T, cfg["n_hidden_dim"])
    assert intermediates.shape == (2 * cfg["n_iters"], N, T, cfg["n_hidden_dim"])
    assert jnp.all(jnp.isfinite(out)) and jnp.all(jnp.isfinite(intermediates))
    print("KERNEL_OK")
</pallas_src>

<mosaic_0001>
module attributes {stable_mosaic.version = 11 : i64} {
  func.func @kernel(%arg0: i32, %arg1: memref<16x24xf32, #tpu.memory_space<vmem>>, %arg2: memref<24x32xbf16, #tpu.memory_space<vmem>>, %arg3: memref<1x32xf32, #tpu.memory_space<vmem>>, %arg4: memref<16x32xf32, #tpu.memory_space<vmem>>) attributes {dimension_semantics = [#tpu.dimension_semantics<parallel>], iteration_bounds = array<i64: 1>, scalar_prefetch = 0 : i64, scratch_operands = 0 : i64, tpu.core_type = #tpu.core_type<tc>, window_params = [{transform_indices = @transform_0, window_bounds = array<i64: 16, 24>}, {pipeline_mode = #tpu.pipeline_mode<synchronous>, transform_indices = @transform_1, window_bounds = array<i64: 24, 32>}, {pipeline_mode = #tpu.pipeline_mode<synchronous>, transform_indices = @transform_2, window_bounds = array<i64: 1, 32>}, {transform_indices = @transform_3, window_bounds = array<i64: 16, 32>}]} {
    %c0 = arith.constant 0 : index
    %c0_0 = arith.constant 0 : index
    %0 = vector.load %arg1[%c0, %c0_0] : memref<16x24xf32, #tpu.memory_space<vmem>>, vector<16x24xf32>
    %1 = arith.truncf %0 : vector<16x24xf32> to vector<16x24xbf16>
    %c0_1 = arith.constant 0 : index
    %c0_2 = arith.constant 0 : index
    %2 = vector.load %arg2[%c0_1, %c0_2] : memref<24x32xbf16, #tpu.memory_space<vmem>>, vector<24x32xbf16>
    %cst = arith.constant dense<0.000000e+00> : vector<16x32xf32>
    %3 = tpu.matmul %1, %2, %cst {dimension_numbers = #tpu.dot_dimension_numbers<[1], [0], [0], [1], [0, 0, 1, 1], [], []>} : vector<16x24xbf16>, vector<24x32xbf16>, vector<16x32xf32> -> vector<16x32xf32>
    %c0_3 = arith.constant 0 : index
    %c0_4 = arith.constant 0 : index
    %4 = vector.load %arg3[%c0_3, %c0_4] : memref<1x32xf32, #tpu.memory_space<vmem>>, vector<1x32xf32>
    %5 = vector.broadcast %4 : vector<1x32xf32> to vector<16x32xf32>
    %6 = arith.addf %3, %5 : vector<16x32xf32>
    %c0_5 = arith.constant 0 : index
    %c0_6 = arith.constant 0 : index
    %7 = vector.load %arg4[%c0_5, %c0_6] : memref<16x32xf32, #tpu.memory_space<vmem>>, vector<16x32xf32>
    tpu.vector_store %arg4[%c0_5, %c0_6], %6 {strides = array<i32>} : memref<16x32xf32, #tpu.memory_space<vmem>>, vector<16x32xf32>,
    return
  }
  func.func @transform_0(%arg0: i32) -> (i32, i32) {
    %c0_i32 = arith.constant 0 : i32
    %c0_i32_0 = arith.constant 0 : i32
    return %arg0, %c0_i32 : i32, i32
  }
  func.func @transform_1(%arg0: i32) -> (i32, i32) {
    %c0_i32 = arith.constant 0 : i32
    %c0_i32_0 = arith.constant 0 : i32
    %c0_i32_1 = arith.constant 0 : i32
    return %c0_i32, %c0_i32_0 : i32, i32
  }
  func.func @transform_2(%arg0: i32) -> (i32, i32) {
    %c0_i32 = arith.constant 0 : i32
    %c0_i32_0 = arith.constant 0 : i32
    %c0_i32_1 = arith.constant 0 : i32
    return %c0_i32, %c0_i32_0 : i32, i32
  }
  func.func @transform_3(%arg0: i32) -> (i32, i32) {
    %c0_i32 = arith.constant 0 : i32
    %c0_i32_0 = arith.constant 0 : i32
    return %arg0, %c0_i32 : i32, i32
  }
}

module attributes {stable_mosaic.version = 11 : i64} {
  func.func @kernel(%arg0: i32, %arg1: memref<16x32xf32, #tpu.memory_space<vmem>>, %arg2: memref<32x16xbf16, #tpu.memory_space<vmem>>, %arg3: memref<1x16xf32, #tpu.memory_space<vmem>>, %arg4: memref<16x16xf32, #tpu.memory_space<vmem>>) attributes {dimension_semantics = [#tpu.dimension_semantics<parallel>], iteration_bounds = array<i64: 1>, scalar_prefetch = 0 : i64, scratch_operands = 0 : i64, tpu.core_type = #tpu.core_type<tc>, window_params = [{transform_indices = @transform_0, window_bounds = array<i64: 16, 32>}, {pipeline_mode = #tpu.pipeline_mode<synchronous>, transform_indices = @transform_1, window_bounds = array<i64: 32, 16>}, {pipeline_mode = #tpu.pipeline_mode<synchronous>, transform_indices = @transform_2, window_bounds = array<i64: 1, 16>}, {transform_indices = @transform_3, window_bounds = array<i64: 16, 16>}]} {
    %c0 = arith.constant 0 : index
    %c0_0 = arith.constant 0 : index
    %0 = vector.load %arg1[%c0, %c0_0] : memref<16x32xf32, #tpu.memory_space<vmem>>, vector<16x32xf32>
    %1 = arith.truncf %0 : vector<16x32xf32> to vector<16x32xbf16>
    %c0_1 = arith.constant 0 : index
    %c0_2 = arith.constant 0 : index
    %2 = vector.load %arg2[%c0_1, %c0_2] : memref<32x16xbf16, #tpu.memory_space<vmem>>, vector<32x16xbf16>
    %cst = arith.constant dense<0.000000e+00> : vector<16x16xf32>
    %3 = tpu.matmul %1, %2, %cst {dimension_numbers = #tpu.dot_dimension_numbers<[1], [0], [0], [1], [0, 0, 1, 1], [], []>} : vector<16x32xbf16>, vector<32x16xbf16>, vector<16x16xf32> -> vector<16x16xf32>
    %c0_3 = arith.constant 0 : index
    %c0_4 = arith.constant 0 : index
    %4 = vector.load %arg3[%c0_3, %c0_4] : memref<1x16xf32, #tpu.memory_space<vmem>>, vector<1x16xf32>
    %5 = vector.broadcast %4 : vector<1x16xf32> to vector<16x16xf32>
    %6 = arith.addf %3, %5 : vector<16x16xf32>
    %c0_5 = arith.constant 0 : index
    %c0_6 = arith.constant 0 : index
    %7 = vector.load %arg4[%c0_5, %c0_6] : memref<16x16xf32, #tpu.memory_space<vmem>>, vector<16x16xf32>
    tpu.vector_store %arg4[%c0_5, %c0_6], %6 {strides = array<i32>} : memref<16x16xf32, #tpu.memory_space<vmem>>, vector<16x16xf32>,
    return
  }
  func.func @transform_0(%arg0: i32) -> (i32, i32) {
    %c0_i32 = arith.constant 0 : i32
    %c0_i32_0 = arith.constant 0 : i32
    return %arg0, %c0_i32 : i32, i32
  }
  func.func @transform_1(%arg0: i32) -> (i32, i32) {
    %c0_i32 = arith.constant 0 : i32
    %c0_i32_0 = arith.constant 0 : i32
    %c0_i32_1 = arith.constant 0 : i32
    return %c0_i32, %c0_i32_0 : i32, i32
  }
  func.func @transform_2(%arg0: i32) -> (i32, i32) {
    %c0_i32 = arith.constant 0 : i32
    %c0_i32_0 = arith.constant 0 : i32
    %c0_i32_1 = arith.constant 0 : i32
    return %c0_i32, %c0_i32_0 : i32, i32
  }
  func.func @transform_3(%arg0: i32) -> (i32, i32) {
    %c0_i32 = arith.constant 0 : i32
    %c0_i32_0 = arith.constant 0 : i32
    return %arg0, %c0_i32 : i32, i32
  }
}

module attributes {stable_mosaic.version = 11 : i64} {
  func.func @kernel(%arg0: i32, %arg1: i32, %arg2: memref<16x16xf32, #tpu.memory_space<vmem>>, %arg3: memref<1x16xf32, #tpu.memory_space<vmem>>, %arg4: memref<1x16xf32, #tpu.memory_space<vmem>>, %arg5: memref<16x64xbf16, #tpu.memory_space<vmem>>, %arg6: memref<1x64xf32, #tpu.memory_space<vmem>>, %arg7: memref<64x16xbf16, #tpu.memory_space<vmem>>, %arg8: memref<1x16xf32, #tpu.memory_space<vmem>>, %arg9: memref<16x16xf32, #tpu.memory_space<vmem>>, %arg10: memref<16x16xbf16, #tpu.memory_space<vmem>>, %arg11: memref<16x16xf32, #tpu.memory_space<vmem>>) attributes {dimension_semantics = [#tpu.dimension_semantics<parallel>, #tpu.dimension_semantics<arbitrary>], iteration_bounds = array<i64: 1, 1>, scalar_prefetch = 0 : i64, scratch_operands = 2 : i64, tpu.core_type = #tpu.core_type<tc>, window_params = [{transform_indices = @transform_0, window_bounds = array<i64: 16, 16>}, {pipeline_mode = #tpu.pipeline_mode<synchronous>, transform_indices = @transform_1, window_bounds = array<i64: 1, 16>}, {pipeline_mode = #tpu.pipeline_mode<synchronous>, transform_indices = @transform_2, window_bounds = array<i64: 1, 16>}, {transform_indices = @transform_3, window_bounds = array<i64: 16, 64>}, {transform_indices = @transform_4, window_bounds = array<i64: 1, 64>}, {transform_indices = @transform_5, window_bounds = array<i64: 64, 16>}, {pipeline_mode = #tpu.pipeline_mode<synchronous>, transform_indices = @transform_6, window_bounds = array<i64: 1, 16>}, {transform_indices = @transform_7, window_bounds = array<i64: 16, 16>}]} {
    %c0_i32 = arith.constant 0 : i32
    %0 = arith.cmpi eq, %arg1, %c0_i32 : i32
    %1 = arith.extui %0 : i1 to i32
    %c0_i32_0 = arith.constant 0 : i32
    %2 = arith.cmpi ne, %1, %c0_i32_0 : i32
    scf.if %2 {
      %c0_16 = arith.constant 0 : index
      %c0_17 = arith.constant 0 : index
      %24 = vector.load %arg2[%c0_16, %c0_17] : memref<16x16xf32, #tpu.memory_space<vmem>>, vector<16x16xf32>
      %cst_18 = arith.constant dense<0.000000e+00> : vector<16xf32>
      %25 = vector.multi_reduction <add>, %24, %cst_18 [1] : vector<16x16xf32> to vector<16xf32>
      %26 = vector.shape_cast %25 : vector<16xf32> to vector<16x1xf32>
      %cst_19 = arith.constant 1.600000e+01 : f32
      %27 = vector.broadcast %cst_19 : f32 to vector<16x1xf32>
      %28 = arith.divf %26, %27 : vector<16x1xf32>
      %29 = vector.broadcast %28 : vector<16x1xf32> to vector<16x16xf32>
      %30 = arith.subf %24, %29 : vector<16x16xf32>
      %31 = arith.mulf %30, %30 : vector<16x16xf32>
      %cst_20 = arith.constant dense<0.000000e+00> : vector<16xf32>
      %32 = vector.multi_reduction <add>, %31, %cst_20 [1] : vector<16x16xf32> to vector<16xf32>
      %33 = vector.shape_cast %32 : vector<16xf32> to vector<16x1xf32>
      %cst_21 = arith.constant 1.600000e+01 : f32
      %34 = vector.broadcast %cst_21 : f32 to vector<16x1xf32>
      %35 = arith.divf %33, %34 : vector<16x1xf32>
      %36 = vector.broadcast %28 : vector<16x1xf32> to vector<16x16xf32>
      %37 = arith.subf %24, %36 : vector<16x16xf32>
      %cst_22 = arith.constant 9.99999974E-6 : f32
      %38 = vector.broadcast %cst_22 : f32 to vector<16x1xf32>
      %39 = arith.addf %35, %38 : vector<16x1xf32>
      %40 = math.rsqrt %39 : vector<16x1xf32>
      %41 = vector.broadcast %40 : vector<16x1xf32> to vector<16x16xf32>
      %42 = arith.mulf %37, %41 : vector<16x16xf32>
      %c0_23 = arith.constant 0 : index
      %c0_24 = arith.constant 0 : index
      %43 = vector.load %arg3[%c0_23, %c0_24] : memref<1x16xf32, #tpu.memory_space<vmem>>, vector<1x16xf32>
      %44 = vector.broadcast %43 : vector<1x16xf32> to vector<16x16xf32>
      %45 = arith.mulf %42, %44 : vector<16x16xf32>
      %c0_25 = arith.constant 0 : index
      %c0_26 = arith.constant 0 : index
      %46 = vector.load %arg4[%c0_25, %c0_26] : memref<1x16xf32, #tpu.memory_space<vmem>>, vector<1x16xf32>
      %47 = vector.broadcast %46 : vector<1x16xf32> to vector<16x16xf32>
      %48 = arith.addf %45, %47 : vector<16x16xf32>
      %49 = arith.truncf %48 : vector<16x16xf32> to vector<16x16xbf16>
      %c0_27 = arith.constant 0 : index
      %c0_28 = arith.constant 0 : index
      %50 = vector.load %arg10[%c0_27, %c0_28] : memref<16x16xbf16, #tpu.memory_space<vmem>>, vector<16x16xbf16>
      tpu.vector_store %arg10[%c0_27, %c0_28], %49 {strides = array<i32>} : memref<16x16xbf16, #tpu.memory_space<vmem>>, vector<16x16xbf16>,
      %cst_29 = arith.constant 0.000000e+00 : f32
      %51 = vector.broadcast %cst_29 : f32 to vector<16x16xf32>
      %c0_30 = arith.constant 0 : index
      %c0_31 = arith.constant 0 : index
      %52 = vector.load %arg11[%c0_30, %c0_31] : memref<16x16xf32, #tpu.memory_space<vmem>>, vector<16x16xf32>
      tpu.vector_store %arg11[%c0_30, %c0_31], %51 {strides = array<i32>} : memref<16x16xf32, #tpu.memory_space<vmem>>, vector<16x16xf32>,
    } else {
    }
    %c0 = arith.constant 0 : index
    %c0_1 = arith.constant 0 : index
    %3 = vector.load %arg10[%c0, %c0_1] : memref<16x16xbf16, #tpu.memory_space<vmem>>, vector<16x16xbf16>
    %c0_2 = arith.constant 0 : index
    %c0_3 = arith.constant 0 : index
    %4 = vector.load %arg5[%c0_2, %c0_3] : memref<16x64xbf16, #tpu.memory_space<vmem>>, vector<16x64xbf16>
    %cst = arith.constant dense<0.000000e+00> : vector<16x64xf32>
    %5 = tpu.matmul %3, %4, %cst {dimension_numbers = #tpu.dot_dimension_numbers<[1], [0], [0], [1], [0, 0, 1, 1], [], []>} : vector<16x16xbf16>, vector<16x64xbf16>, vector<16x64xf32> -> vector<16x64xf32>
    %c0_4 = arith.constant 0 : index
    %c0_5 = arith.constant 0 : index
    %6 = vector.load %arg6[%c0_4, %c0_5] : memref<1x64xf32, #tpu.memory_space<vmem>>, vector<1x64xf32>
    %7 = vector.broadcast %6 : vector<1x64xf32> to vector<16x64xf32>
    %8 = arith.addf %5, %7 : vector<16x64xf32>
    %9 = arith.negf %8 : vector<16x64xf32>
    %10 = math.exp %9 : vector<16x64xf32>
    %cst_6 = arith.constant 1.000000e+00 : f32
    %11 = vector.broadcast %cst_6 : f32 to vector<16x64xf32>
    %12 = arith.addf %11, %10 : vector<16x64xf32>
    %13 = arith.divf %11, %12 : vector<16x64xf32>
    %14 = arith.mulf %8, %13 : vector<16x64xf32>
    %c0_7 = arith.constant 0 : index
    %c0_8 = arith.constant 0 : index
    %15 = vector.load %arg11[%c0_7, %c0_8] : memref<16x16xf32, #tpu.memory_space<vmem>>, vector<16x16xf32>
    %16 = arith.truncf %14 : vector<16x64xf32> to vector<16x64xbf16>
    %c0_9 = arith.constant 0 : index
    %c0_10 = arith.constant 0 : index
    %17 = vector.load %arg7[%c0_9, %c0_10] : memref<64x16xbf16, #tpu.memory_space<vmem>>, vector<64x16xbf16>
    %cst_11 = arith.constant dense<0.000000e+00> : vector<16x16xf32>
    %18 = tpu.matmul %16, %17, %cst_11 {dimension_numbers = #tpu.dot_dimension_numbers<[1], [0], [0], [1], [0, 0, 1, 1], [], []>} : vector<16x64xbf16>, vector<64x16xbf16>, vector<16x16xf32> -> vector<16x16xf32>
    %19 = arith.addf %15, %18 : vector<16x16xf32>
    %c0_12 = arith.constant 0 : index
    %c0_13 = arith.constant 0 : index
    %20 = vector.load %arg11[%c0_12, %c0_13] : memref<16x16xf32, #tpu.memory_space<vmem>>, vector<16x16xf32>
    tpu.vector_store %arg11[%c0_12, %c0_13], %19 {strides = array<i32>} : memref<16x16xf32, #tpu.memory_space<vmem>>, vector<16x16xf32>,
    %c0_i32_14 = arith.constant 0 : i32
    %21 = arith.cmpi eq, %arg1, %c0_i32_14 : i32
    %22 = arith.extui %21 : i1 to i32
    %c0_i32_15 = arith.constant 0 : i32
    %23 = arith.cmpi ne, %22, %c0_i32_15 : i32
    scf.if %23 {
      %c0_16 = arith.constant 0 : index
      %c0_17 = arith.constant 0 : index
      %24 = vector.load %arg2[%c0_16, %c0_17] : memref<16x16xf32, #tpu.memory_space<vmem>>, vector<16x16xf32>
      %c0_18 = arith.constant 0 : index
      %c0_19 = arith.constant 0 : index
      %25 = vector.load %arg11[%c0_18, %c0_19] : memref<16x16xf32, #tpu.memory_space<vmem>>, vector<16x16xf32>
      %c0_20 = arith.constant 0 : index
      %c0_21 = arith.constant 0 : index
      %26 = vector.load %arg8[%c0_20, %c0_21] : memref<1x16xf32, #tpu.memory_space<vmem>>, vector<1x16xf32>
      %27 = vector.broadcast %26 : vector<1x16xf32> to vector<16x16xf32>
      %28 = arith.addf %25, %27 : vector<16x16xf32>
      %cst_22 = arith.constant 5.000000e-01 : f32
      %29 = vector.broadcast %cst_22 : f32 to vector<16x16xf32>
      %30 = arith.mulf %29, %28 : vector<16x16xf32>
      %31 = arith.addf %24, %30 : vector<16x16xf32>
      %c0_23 = arith.constant 0 : index
      %c0_24 = arith.constant 0 : index
      %32 = vector.load %arg9[%c0_23, %c0_24] : memref<16x16xf32, #tpu.memory_space<vmem>>, vector<16x16xf32>
      tpu.vector_store %arg9[%c0_23, %c0_24], %31 {strides = array<i32>} : memref<16x16xf32, #tpu.memory_space<vmem>>, vector<16x16xf32>,
    } else {
    }
    return
  }
  func.func @transform_0(%arg0: i32, %arg1: i32) -> (i32, i32) {
    %c0_i32 = arith.constant 0 : i32
    %c0_i32_0 = arith.constant 0 : i32
    return %arg0, %c0_i32 : i32, i32
  }
  func.func @transform_1(%arg0: i32, %arg1: i32) -> (i32, i32) {
    %c0_i32 = arith.constant 0 : i32
    %c0_i32_0 = arith.constant 0 : i32
    %c0_i32_1 = arith.constant 0 : i32
    return %c0_i32, %c0_i32_0 : i32, i32
  }
  func.func @transform_2(%arg0: i32, %arg1: i32) -> (i32, i32) {
    %c0_i32 = arith.constant 0 : i32
    %c0_i32_0 = arith.constant 0 : i32
    %c0_i32_1 = arith.constant 0 : i32
    return %c0_i32, %c0_i32_0 : i32, i32
  }
  func.func @transform_3(%arg0: i32, %arg1: i32) -> (i32, i32) {
    %c0_i32 = arith.constant 0 : i32
    %c0_i32_0 = arith.constant 0 : i32
    return %c0_i32, %arg1 : i32, i32
  }
  func.func @transform_4(%arg0: i32, %arg1: i32) -> (i32, i32) {
    %c0_i32 = arith.constant 0 : i32
    %c0_i32_0 = arith.constant 0 : i32
    return %c0_i32, %arg1 : i32, i32
  }
  func.func @transform_5(%arg0: i32, %arg1: i32) -> (i32, i32) {
    %c0_i32 = arith.constant 0 : i32
    %c0_i32_0 = arith.constant 0 : i32
    return %arg1, %c0_i32 : i32, i32
  }
  func.func @transform_6(%arg0: i32, %arg1: i32) -> (i32, i32) {
    %c0_i32 = arith.constant 0 : i32
    %c0_i32_0 = arith.constant 0 : i32
    %c0_i32_1 = arith.constant 0 : i32
    return %c0_i32, %c0_i32_0 : i32, i32
  }
  func.func @transform_7(%arg0: i32, %arg1: i32) -> (i32, i32) {
    %c0_i32 = arith.constant 0 : i32
    %c0_i32_0 = arith.constant 0 : i32
    return %arg0, %c0_i32 : i32, i32
  }
}

module attributes {stable_mosaic.version = 11 : i64} {
  func.func @_ln_qkv_kernel(%arg0: i32, %arg1: memref<16x16xf32, #tpu.memory_space<vmem>>, %arg2: memref<1x16xf32, #tpu.memory_space<vmem>>, %arg3: memref<1x16xf32, #tpu.memory_space<vmem>>, %arg4: memref<16x16xbf16, #tpu.memory_space<vmem>>, %arg5: memref<1x16xf32, #tpu.memory_space<vmem>>, %arg6: memref<16x16xbf16, #tpu.memory_space<vmem>>, %arg7: memref<1x16xf32, #tpu.memory_space<vmem>>, %arg8: memref<16x16xbf16, #tpu.memory_space<vmem>>, %arg9: memref<1x16xf32, #tpu.memory_space<vmem>>, %arg10: memref<16x16xf32, #tpu.memory_space<vmem>>, %arg11: memref<16x16xf32, #tpu.memory_space<vmem>>, %arg12: memref<16x16xf32, #tpu.memory_space<vmem>>) attributes {dimension_semantics = [#tpu.dimension_semantics<parallel>], iteration_bounds = array<i64: 1>, scalar_prefetch = 0 : i64, scratch_operands = 0 : i64, tpu.core_type = #tpu.core_type<tc>, window_params = [{transform_indices = @transform_0, window_bounds = array<i64: 16, 16>}, {pipeline_mode = #tpu.pipeline_mode<synchronous>, transform_indices = @transform_1, window_bounds = array<i64: 1, 16>}, {pipeline_mode = #tpu.pipeline_mode<synchronous>, transform_indices = @transform_2, window_bounds = array<i64: 1, 16>}, {pipeline_mode = #tpu.pipeline_mode<synchronous>, transform_indices = @transform_3, window_bounds = array<i64: 16, 16>}, {pipeline_mode = #tpu.pipeline_mode<synchronous>, transform_indices = @transform_4, window_bounds = array<i64: 1, 16>}, {pipeline_mode = #tpu.pipeline_mode<synchronous>, transform_indices = @transform_5, window_bounds = array<i64: 16, 16>}, {pipeline_mode = #tpu.pipeline_mode<synchronous>, transform_indices = @transform_6, window_bounds = array<i64: 1, 16>}, {pipeline_mode = #tpu.pipeline_mode<synchronous>, transform_indices = @transform_7, window_bounds = array<i64: 16, 16>}, {pipeline_mode = #tpu.pipeline_mode<synchronous>, transform_indices = @transform_8, window_bounds = array<i64: 1, 16>}, {transform_indices = @transform_9, window_bounds = array<i64: 16, 16>}, {transform_indices = @transform_10, window_bounds = array<i64: 16, 16>}, {transform_indices = @transform_11, window_bounds = array<i64: 16, 16>}]} {
    %c0 = arith.constant 0 : index
    %c0_0 = arith.constant 0 : index
    %0 = vector.load %arg1[%c0, %c0_0] : memref<16x16xf32, #tpu.memory_space<vmem>>, vector<16x16xf32>
    %cst = arith.constant dense<0.000000e+00> : vector<16xf32>
    %1 = vector.multi_reduction <add>, %0, %cst [1] : vector<16x16xf32> to vector<16xf32>
    %2 = vector.shape_cast %1 : vector<16xf32> to vector<16x1xf32>
    %cst_1 = arith.constant 1.600000e+01 : f32
    %3 = vector.broadcast %cst_1 : f32 to vector<16x1xf32>
    %4 = arith.divf %2, %3 : vector<16x1xf32>
    %5 = vector.broadcast %4 : vector<16x1xf32> to vector<16x16xf32>
    %6 = arith.subf %0, %5 : vector<16x16xf32>
    %7 = arith.mulf %6, %6 : vector<16x16xf32>
    %cst_2 = arith.constant dense<0.000000e+00> : vector<16xf32>
    %8 = vector.multi_reduction <add>, %7, %cst_2 [1] : vector<16x16xf32> to vector<16xf32>
    %9 = vector.shape_cast %8 : vector<16xf32> to vector<16x1xf32>
    %cst_3 = arith.constant 1.600000e+01 : f32
    %10 = vector.broadcast %cst_3 : f32 to vector<16x1xf32>
    %11 = arith.divf %9, %10 : vector<16x1xf32>
    %12 = vector.broadcast %4 : vector<16x1xf32> to vector<16x16xf32>
    %13 = arith.subf %0, %12 : vector<16x16xf32>
    %cst_4 = arith.constant 9.99999974E-6 : f32
    %14 = vector.broadcast %cst_4 : f32 to vector<16x1xf32>
    %15 = arith.addf %11, %14 : vector<16x1xf32>
    %16 = math.rsqrt %15 : vector<16x1xf32>
    %17 = vector.broadcast %16 : vector<16x1xf32> to vector<16x16xf32>
    %18 = arith.mulf %13, %17 : vector<16x16xf32>
    %c0_5 = arith.constant 0 : index
    %c0_6 = arith.constant 0 : index
    %19 = vector.load %arg2[%c0_5, %c0_6] : memref<1x16xf32, #tpu.memory_space<vmem>>, vector<1x16xf32>
    %20 = vector.broadcast %19 : vector<1x16xf32> to vector<16x16xf32>
    %21 = arith.mulf %18, %20 : vector<16x16xf32>
    %c0_7 = arith.constant 0 : index
    %c0_8 = arith.constant 0 : index
    %22 = vector.load %arg3[%c0_7, %c0_8] : memref<1x16xf32, #tpu.memory_space<vmem>>, vector<1x16xf32>
    %23 = vector.broadcast %22 : vector<1x16xf32> to vector<16x16xf32>
    %24 = arith.addf %21, %23 : vector<16x16xf32>
    %25 = arith.truncf %24 : vector<16x16xf32> to vector<16x16xbf16>
    %c0_9 = arith.constant 0 : index
    %c0_10 = arith.constant 0 : index
    %26 = vector.load %arg4[%c0_9, %c0_10] : memref<16x16xbf16, #tpu.memory_space<vmem>>, vector<16x16xbf16>
    %cst_11 = arith.constant dense<0.000000e+00> : vector<16x16xf32>
    %27 = tpu.matmul %25, %26, %cst_11 {dimension_numbers = #tpu.dot_dimension_numbers<[1], [0], [0], [1], [0, 0, 1, 1], [], []>} : vector<16x16xbf16>, vector<16x16xbf16>, vector<16x16xf32> -> vector<16x16xf32>
    %c0_12 = arith.constant 0 : index
    %c0_13 = arith.constant 0 : index
    %28 = vector.load %arg5[%c0_12, %c0_13] : memref<1x16xf32, #tpu.memory_space<vmem>>, vector<1x16xf32>
    %29 = vector.broadcast %28 : vector<1x16xf32> to vector<16x16xf32>
    %30 = arith.addf %27, %29 : vector<16x16xf32>
    %c0_14 = arith.constant 0 : index
    %c0_15 = arith.constant 0 : index
    %31 = vector.load %arg10[%c0_14, %c0_15] : memref<16x16xf32, #tpu.memory_space<vmem>>, vector<16x16xf32>
    tpu.vector_store %arg10[%c0_14, %c0_15], %30 {strides = array<i32>} : memref<16x16xf32, #tpu.memory_space<vmem>>, vector<16x16xf32>,
    %c0_16 = arith.constant 0 : index
    %c0_17 = arith.constant 0 : index
    %32 = vector.load %arg6[%c0_16, %c0_17] : memref<16x16xbf16, #tpu.memory_space<vmem>>, vector<16x16xbf16>
    %cst_18 = arith.constant dense<0.000000e+00> : vector<16x16xf32>
    %33 = tpu.matmul %25, %32, %cst_18 {dimension_numbers = #tpu.dot_dimension_numbers<[1], [0], [0], [1], [0, 0, 1, 1], [], []>} : vector<16x16xbf16>, vector<16x16xbf16>, vector<16x16xf32> -> vector<16x16xf32>
    %c0_19 = arith.constant 0 : index
    %c0_20 = arith.constant 0 : index
    %34 = vector.load %arg7[%c0_19, %c0_20] : memref<1x16xf32, #tpu.memory_space<vmem>>, vector<1x16xf32>
    %35 = vector.broadcast %34 : vector<1x16xf32> to vector<16x16xf32>
    %36 = arith.addf %33, %35 : vector<16x16xf32>
    %c0_21 = arith.constant 0 : index
    %c0_22 = arith.constant 0 : index
    %37 = vector.load %arg11[%c0_21, %c0_22] : memref<16x16xf32, #tpu.memory_space<vmem>>, vector<16x16xf32>
    tpu.vector_store %arg11[%c0_21, %c0_22], %36 {strides = array<i32>} : memref<16x16xf32, #tpu.memory_space<vmem>>, vector<16x16xf32>,
    %c0_23 = arith.constant 0 : index
    %c0_24 = arith.constant 0 : index
    %38 = vector.load %arg8[%c0_23, %c0_24] : memref<16x16xbf16, #tpu.memory_space<vmem>>, vector<16x16xbf16>
    %cst_25 = arith.constant dense<0.000000e+00> : vector<16x16xf32>
    %39 = tpu.matmul %25, %38, %cst_25 {dimension_numbers = #tpu.dot_dimension_numbers<[1], [0], [0], [1], [0, 0, 1, 1], [], []>} : vector<16x16xbf16>, vector<16x16xbf16>, vector<16x16xf32> -> vector<16x16xf32>
    %c0_26 = arith.constant 0 : index
    %c0_27 = arith.constant 0 : index
    %40 = vector.load %arg9[%c0_26, %c0_27] : memref<1x16xf32, #tpu.memory_space<vmem>>, vector<1x16xf32>
    %41 = vector.broadcast %40 : vector<1x16xf32> to vector<16x16xf32>
    %42 = arith.addf %39, %41 : vector<16x16xf32>
    %c0_28 = arith.constant 0 : index
    %c0_29 = arith.constant 0 : index
    %43 = vector.load %arg12[%c0_28, %c0_29] : memref<16x16xf32, #tpu.memory_space<vmem>>, vector<16x16xf32>
    tpu.vector_store %arg12[%c0_28, %c0_29], %42 {strides = array<i32>} : memref<16x16xf32, #tpu.memory_space<vmem>>, vector<16x16xf32>,
    return
  }
  func.func @transform_0(%arg0: i32) -> (i32, i32) {
    %c0_i32 = arith.constant 0 : i32
    %c0_i32_0 = arith.constant 0 : i32
    return %arg0, %c0_i32 : i32, i32
  }
  func.func @transform_1(%arg0: i32) -> (i32, i32) {
    %c0_i32 = arith.constant 0 : i32
    %c0_i32_0 = arith.constant 0 : i32
    %c0_i32_1 = arith.constant 0 : i32
    return %c0_i32, %c0_i32_0 : i32, i32
  }
  func.func @transform_2(%arg0: i32) -> (i32, i32) {
    %c0_i32 = arith.constant 0 : i32
    %c0_i32_0 = arith.constant 0 : i32
    %c0_i32_1 = arith.constant 0 : i32
    return %c0_i32, %c0_i32_0 : i32, i32
  }
  func.func @transform_3(%arg0: i32) -> (i32, i32) {
    %c0_i32 = arith.constant 0 : i32
    %c0_i32_0 = arith.constant 0 : i32
    %c0_i32_1 = arith.constant 0 : i32
    return %c0_i32, %c0_i32_0 : i32, i32
  }
  func.func @transform_4(%arg0: i32) -> (i32, i32) {
    %c0_i32 = arith.constant 0 : i32
    %c0_i32_0 = arith.constant 0 : i32
    %c0_i32_1 = arith.constant 0 : i32
    return %c0_i32, %c0_i32_0 : i32, i32
  }
  func.func @transform_5(%arg0: i32) -> (i32, i32) {
    %c0_i32 = arith.constant 0 : i32
    %c0_i32_0 = arith.constant 0 : i32
    %c0_i32_1 = arith.constant 0 : i32
    return %c0_i32, %c0_i32_0 : i32, i32
  }
  func.func @transform_6(%arg0: i32) -> (i32, i32) {
    %c0_i32 = arith.constant 0 : i32
    %c0_i32_0 = arith.constant 0 : i32
    %c0_i32_1 = arith.constant 0 : i32
    return %c0_i32, %c0_i32_0 : i32, i32
  }
  func.func @transform_7(%arg0: i32) -> (i32, i32) {
    %c0_i32 = arith.constant 0 : i32
    %c0_i32_0 = arith.constant 0 : i32
    %c0_i32_1 = arith.constant 0 : i32
    return %c0_i32, %c0_i32_0 : i32, i32
  }
  func.func @transform_8(%arg0: i32) -> (i32, i32) {
    %c0_i32 = arith.constant 0 : i32
    %c0_i32_0 = arith.constant 0 : i32
    %c0_i32_1 = arith.constant 0 : i32
    return %c0_i32, %c0_i32_0 : i32, i32
  }
  func.func @transform_9(%arg0: i32) -> (i32, i32) {
    %c0_i32 = arith.constant 0 : i32
    %c0_i32_0 = arith.constant 0 : i32
    return %arg0, %c0_i32 : i32, i32
  }
  func.func @transform_10(%arg0: i32) -> (i32, i32) {
    %c0_i32 = arith.constant 0 : i32
    %c0_i32_0 = arith.constant 0 : i32
    return %arg0, %c0_i32 : i32, i32
  }
  func.func @transform_11(%arg0: i32) -> (i32, i32) {
    %c0_i32 = arith.constant 0 : i32
    %c0_i32_0 = arith.constant 0 : i32
    return %arg0, %c0_i32 : i32, i32
  }
}

module attributes {stable_mosaic.version = 11 : i64} {
  func.func @_linear_residual_kernel(%arg0: i32, %arg1: memref<16x16xf32, #tpu.memory_space<vmem>>, %arg2: memref<16x16xf32, #tpu.memory_space<vmem>>, %arg3: memref<16x16xbf16, #tpu.memory_space<vmem>>, %arg4: memref<1x16xf32, #tpu.memory_space<vmem>>, %arg5: memref<16x16xf32, #tpu.memory_space<vmem>>) attributes {dimension_semantics = [#tpu.dimension_semantics<parallel>], iteration_bounds = array<i64: 1>, scalar_prefetch = 0 : i64, scratch_operands = 0 : i64, tpu.core_type = #tpu.core_type<tc>, window_params = [{transform_indices = @transform_0, window_bounds = array<i64: 16, 16>}, {transform_indices = @transform_1, window_bounds = array<i64: 16, 16>}, {pipeline_mode = #tpu.pipeline_mode<synchronous>, transform_indices = @transform_2, window_bounds = array<i64: 16, 16>}, {pipeline_mode = #tpu.pipeline_mode<synchronous>, transform_indices = @transform_3, window_bounds = array<i64: 1, 16>}, {transform_indices = @transform_4, window_bounds = array<i64: 16, 16>}]} {
    %c0 = arith.constant 0 : index
    %c0_0 = arith.constant 0 : index
    %0 = vector.load %arg1[%c0, %c0_0] : memref<16x16xf32, #tpu.memory_space<vmem>>, vector<16x16xf32>
    %1 = arith.truncf %0 : vector<16x16xf32> to vector<16x16xbf16>
    %c0_1 = arith.constant 0 : index
    %c0_2 = arith.constant 0 : index
    %2 = vector.load %arg3[%c0_1, %c0_2] : memref<16x16xbf16, #tpu.memory_space<vmem>>, vector<16x16xbf16>
    %cst = arith.constant dense<0.000000e+00> : vector<16x16xf32>
    %3 = tpu.matmul %1, %2, %cst {dimension_numbers = #tpu.dot_dimension_numbers<[1], [0], [0], [1], [0, 0, 1, 1], [], []>} : vector<16x16xbf16>, vector<16x16xbf16>, vector<16x16xf32> -> vector<16x16xf32>
    %c0_3 = arith.constant 0 : index
    %c0_4 = arith.constant 0 : index
    %4 = vector.load %arg4[%c0_3, %c0_4] : memref<1x16xf32, #tpu.memory_space<vmem>>, vector<1x16xf32>
    %5 = vector.broadcast %4 : vector<1x16xf32> to vector<16x16xf32>
    %6 = arith.addf %3, %5 : vector<16x16xf32>
    %c0_5 = arith.constant 0 : index
    %c0_6 = arith.constant 0 : index
    %7 = vector.load %arg2[%c0_5, %c0_6] : memref<16x16xf32, #tpu.memory_space<vmem>>, vector<16x16xf32>
    %8 = arith.addf %7, %6 : vector<16x16xf32>
    %c0_7 = arith.constant 0 : index
    %c0_8 = arith.constant 0 : index
    %9 = vector.load %arg5[%c0_7, %c0_8] : memref<16x16xf32, #tpu.memory_space<vmem>>, vector<16x16xf32>
    tpu.vector_store %arg5[%c0_7, %c0_8], %8 {strides = array<i32>} : memref<16x16xf32, #tpu.memory_space<vmem>>, vector<16x16xf32>,
    return
  }
  func.func @transform_0(%arg0: i32) -> (i32, i32) {
    %c0_i32 = arith.constant 0 : i32
    %c0_i32_0 = arith.constant 0 : i32
    return %arg0, %c0_i32 : i32, i32
  }
  func.func @transform_1(%arg0: i32) -> (i32, i32) {
    %c0_i32 = arith.constant 0 : i32
    %c0_i32_0 = arith.constant 0 : i32
    return %arg0, %c0_i32 : i32, i32
  }
  func.func @transform_2(%arg0: i32) -> (i32, i32) {
    %c0_i32 = arith.constant 0 : i32
    %c0_i32_0 = arith.constant 0 : i32
    %c0_i32_1 = arith.constant 0 : i32
    return %c0_i32, %c0_i32_0 : i32, i32
  }
  func.func @transform_3(%arg0: i32) -> (i32, i32) {
    %c0_i32 = arith.constant 0 : i32
    %c0_i32_0 = arith.constant 0 : i32
    %c0_i32_1 = arith.constant 0 : i32
    return %c0_i32, %c0_i32_0 : i32, i32
  }
  func.func @transform_4(%arg0: i32) -> (i32, i32) {
    %c0_i32 = arith.constant 0 : i32
    %c0_i32_0 = arith.constant 0 : i32
    return %arg0, %c0_i32 : i32, i32
  }
}

module attributes {stable_mosaic.version = 11 : i64} {
  func.func @kernel(%arg0: i32, %arg1: i32, %arg2: i32, %arg3: memref<1x8x16xf32, #tpu.memory_space<vmem>>, %arg4: memref<1x8x16xf32, #tpu.memory_space<vmem>>, %arg5: memref<1x8x16xf32, #tpu.memory_space<vmem>>, %arg6: memref<1x8x16xf32, #tpu.memory_space<vmem>>, %arg7: memref<4x8x1xf32, #tpu.memory_space<vmem>>, %arg8: memref<4x8x1xf32, #tpu.memory_space<vmem>>, %arg9: memref<4x8x4xf32, #tpu.memory_space<vmem>>) attributes {dimension_semantics = [#tpu.dimension_semantics<parallel>, #tpu.dimension_semantics<parallel>, #tpu.dimension_semantics<arbitrary>], iteration_bounds = array<i64: 2, 1, 1>, scalar_prefetch = 0 : i64, scratch_operands = 3 : i64, tpu.core_type = #tpu.core_type<tc>, window_params = [{transform_indices = @transform_0, window_bounds = array<i64: 1, 8, 16>}, {transform_indices = @transform_1, window_bounds = array<i64: 1, 8, 16>}, {transform_indices = @transform_2, window_bounds = array<i64: 1, 8, 16>}, {transform_indices = @transform_3, window_bounds = array<i64: 1, 8, 16>}]} {
    %c0_i32 = arith.constant 0 : i32
    %0 = arith.cmpi eq, %arg2, %c0_i32 : i32
    %1 = arith.extui %0 : i1 to i32
    %c0_i32_0 = arith.constant 0 : i32
    %2 = arith.cmpi ne, %1, %c0_i32_0 : i32
    scf.if %2 {
      %cst_102 = arith.constant 0xFF800000 : f32
      %173 = vector.broadcast %cst_102 : f32 to vector<4x8x1xf32>
      %c0_103 = arith.constant 0 : index
      %c0_104 = arith.constant 0 : index
      %c0_105 = arith.constant 0 : index
      %174 = vector.load %arg7[%c0_103, %c0_104, %c0_105] : memref<4x8x1xf32, #tpu.memory_space<vmem>>, vector<4x8x1xf32>
      tpu.vector_store %arg7[%c0_103, %c0_104, %c0_105], %173 {strides = array<i32>} : memref<4x8x1xf32, #tpu.memory_space<vmem>>, vector<4x8x1xf32>,
      %cst_106 = arith.constant 0.000000e+00 : f32
      %175 = vector.broadcast %cst_106 : f32 to vector<4x8x1xf32>
      %c0_107 = arith.constant 0 : index
      %c0_108 = arith.constant 0 : index
      %c0_109 = arith.constant 0 : index
      %176 = vector.load %arg8[%c0_107, %c0_108, %c0_109] : memref<4x8x1xf32, #tpu.memory_space<vmem>>, vector<4x8x1xf32>
      tpu.vector_store %arg8[%c0_107, %c0_108, %c0_109], %175 {strides = array<i32>} : memref<4x8x1xf32, #tpu.memory_space<vmem>>, vector<4x8x1xf32>,
      %cst_110 = arith.constant 0.000000e+00 : f32
      %177 = vector.broadcast %cst_110 : f32 to vector<4x8x4xf32>
      %c0_111 = arith.constant 0 : index
      %c0_112 = arith.constant 0 : index
      %c0_113 = arith.constant 0 : index
      %178 = vector.load %arg9[%c0_111, %c0_112, %c0_113] : memref<4x8x4xf32, #tpu.memory_space<vmem>>, vector<4x8x4xf32>
      tpu.vector_store %arg9[%c0_111, %c0_112, %c0_113], %177 {strides = array<i32>} : memref<4x8x4xf32, #tpu.memory_space<vmem>>, vector<4x8x4xf32>,
    } else {
    }
    %c0_i32_1 = arith.constant 0 : i32
    %3 = arith.cmpi eq, %arg2, %c0_i32_1 : i32
    %c0 = arith.constant 0 : index
    %c0_2 = arith.constant 0 : index
    %c0_3 = arith.constant 0 : index
    %4 = vector.load %arg3[%c0, %c0_2, %c0_3] : memref<1x8x16xf32, #tpu.memory_space<vmem>>, vector<1x8x16xf32>
    %5 = vector.shape_cast %4 : vector<1x8x16xf32> to vector<8x16xf32>
    %6 = arith.truncf %5 : vector<8x16xf32> to vector<8x16xbf16>
    %c0_4 = arith.constant 0 : index
    %c0_5 = arith.constant 0 : index
    %c0_6 = arith.constant 0 : index
    %7 = vector.load %arg4[%c0_4, %c0_5, %c0_6] : memref<1x8x16xf32, #tpu.memory_space<vmem>>, vector<1x8x16xf32>
    %8 = vector.shape_cast %7 : vector<1x8x16xf32> to vector<8x16xf32>
    %9 = arith.truncf %8 : vector<8x16xf32> to vector<8x16xbf16>
    %c0_7 = arith.constant 0 : index
    %c0_8 = arith.constant 0 : index
    %c0_9 = arith.constant 0 : index
    %10 = vector.load %arg5[%c0_7, %c0_8, %c0_9] : memref<1x8x16xf32, #tpu.memory_space<vmem>>, vector<1x8x16xf32>
    %11 = vector.shape_cast %10 : vector<1x8x16xf32> to vector<8x16xf32>
    %12 = arith.truncf %11 : vector<8x16xf32> to vector<8x16xbf16>
    %13 = vector.extract_strided_slice %6 {offsets = [0, 0], sizes = [8, 4], strides = [1, 1]} : vector<8x16xbf16> to vector<8x4xbf16>
    %14 = vector.extract_strided_slice %9 {offsets = [0, 0], sizes = [8, 4], strides = [1, 1]} : vector<8x16xbf16> to vector<8x4xbf16>
    %cst = arith.constant dense<0.000000e+00> : vector<8x8xf32>
    %15 = tpu.matmul %13, %14, %cst {dimension_numbers = #tpu.dot_dimension_numbers<[1], [1], [0], [0], [0, 0, 1, 0], [], []>} : vector<8x4xbf16>, vector<8x4xbf16>, vector<8x8xf32> -> vector<8x8xf32>
    %cst_10 = arith.constant 5.000000e-01 : f32
    %16 = vector.broadcast %cst_10 : f32 to vector<8x8xf32>
    %17 = arith.mulf %15, %16 : vector<8x8xf32>
    %c0_11 = arith.constant 0 : index
    %c0_12 = arith.constant 0 : index
    %c0_13 = arith.constant 0 : index
    %18 = vector.load %arg7[%c0_11, %c0_12, %c0_13] : memref<4x8x1xf32, #tpu.memory_space<vmem>>, vector<1x8x1xf32>
    %19 = vector.shape_cast %18 : vector<1x8x1xf32> to vector<8x1xf32>
    %cst_14 = arith.constant dense<0xFF800000> : vector<8xf32>
    %20 = vector.multi_reduction <maximumf>, %17, %cst_14 [1] : vector<8x8xf32> to vector<8xf32>
    %21 = vector.shape_cast %20 : vector<8xf32> to vector<8x1xf32>
    %22 = arith.maximumf %19, %21 : vector<8x1xf32>
    %23 = arith.subf %19, %22 : vector<8x1xf32>
    %24 = math.exp %23 : vector<8x1xf32>
    %25 = vector.broadcast %22 : vector<8x1xf32> to vector<8x8xf32>
    %26 = arith.subf %17, %25 : vector<8x8xf32>
    %27 = math.exp %26 : vector<8x8xf32>
    %c0_15 = arith.constant 0 : index
    %c0_16 = arith.constant 0 : index
    %c0_17 = arith.constant 0 : index
    %28 = vector.load %arg8[%c0_15, %c0_16, %c0_17] : memref<4x8x1xf32, #tpu.memory_space<vmem>>, vector<1x8x1xf32>
    %29 = vector.shape_cast %28 : vector<1x8x1xf32> to vector<8x1xf32>
    %30 = arith.mulf %24, %29 : vector<8x1xf32>
    %cst_18 = arith.constant dense<0.000000e+00> : vector<8xf32>
    %31 = vector.multi_reduction <add>, %27, %cst_18 [1] : vector<8x8xf32> to vector<8xf32>
    %32 = vector.shape_cast %31 : vector<8xf32> to vector<8x1xf32>
    %33 = arith.addf %30, %32 : vector<8x1xf32>
    %c0_19 = arith.constant 0 : index
    %c0_20 = arith.constant 0 : index
    %c0_21 = arith.constant 0 : index
    %34 = vector.load %arg8[%c0_19, %c0_20, %c0_21] : memref<4x8x1xf32, #tpu.memory_space<vmem>>, vector<1x8x1xf32>
    %35 = vector.shape_cast %34 : vector<1x8x1xf32> to vector<8x1xf32>
    %36 = vector.shape_cast %33 : vector<8x1xf32> to vector<1x8x1xf32>
    tpu.vector_store %arg8[%c0_19, %c0_20, %c0_21], %36 {strides = array<i32>} : memref<4x8x1xf32, #tpu.memory_space<vmem>>, vector<1x8x1xf32>,
    %c0_22 = arith.constant 0 : index
    %c0_23 = arith.constant 0 : index
    %c0_24 = arith.constant 0 : index
    %37 = vector.load %arg9[%c0_22, %c0_23, %c0_24] : memref<4x8x4xf32, #tpu.memory_space<vmem>>, vector<1x8x4xf32>
    %38 = vector.shape_cast %37 : vector<1x8x4xf32> to vector<8x4xf32>
    %39 = vector.broadcast %24 : vector<8x1xf32> to vector<8x4xf32>
    %40 = arith.mulf %39, %38 : vector<8x4xf32>
    %41 = arith.truncf %27 : vector<8x8xf32> to vector<8x8xbf16>
    %42 = vector.extract_strided_slice %12 {offsets = [0, 0], sizes = [8, 4], strides = [1, 1]} : vector<8x16xbf16> to vector<8x4xbf16>
    %cst_25 = arith.constant dense<0.000000e+00> : vector<8x4xf32>
    %43 = tpu.matmul %41, %42, %cst_25 {dimension_numbers = #tpu.dot_dimension_numbers<[1], [0], [0], [1], [0, 0, 1, 1], [], []>} : vector<8x8xbf16>, vector<8x4xbf16>, vector<8x4xf32> -> vector<8x4xf32>
    %44 = arith.addf %40, %43 : vector<8x4xf32>
    %c0_26 = arith.constant 0 : index
    %c0_27 = arith.constant 0 : index
    %c0_28 = arith.constant 0 : index
    %45 = vector.load %arg9[%c0_26, %c0_27, %c0_28] : memref<4x8x4xf32, #tpu.memory_space<vmem>>, vector<1x8x4xf32>
    %46 = vector.shape_cast %45 : vector<1x8x4xf32> to vector<8x4xf32>
    %47 = vector.shape_cast %44 : vector<8x4xf32> to vector<1x8x4xf32>
    tpu.vector_store %arg9[%c0_26, %c0_27, %c0_28], %47 {strides = array<i32>} : memref<4x8x4xf32, #tpu.memory_space<vmem>>, vector<1x8x4xf32>,
    %c0_29 = arith.constant 0 : index
    %c0_30 = arith.constant 0 : index
    %c0_31 = arith.constant 0 : index
    %48 = vector.load %arg7[%c0_29, %c0_30, %c0_31] : memref<4x8x1xf32, #tpu.memory_space<vmem>>, vector<1x8x1xf32>
    %49 = vector.shape_cast %48 : vector<1x8x1xf32> to vector<8x1xf32>
    %50 = vector.shape_cast %22 : vector<8x1xf32> to vector<1x8x1xf32>
    tpu.vector_store %arg7[%c0_29, %c0_30, %c0_31], %50 {strides = array<i32>} : memref<4x8x1xf32, #tpu.memory_space<vmem>>, vector<1x8x1xf32>,
    %51 = arith.extui %3 : i1 to i32
    %c0_i32_32 = arith.constant 0 : i32
    %52 = arith.cmpi ne, %51, %c0_i32_32 : i32
    scf.if %52 {
      %c0_102 = arith.constant 0 : index
      %c0_103 = arith.constant 0 : index
      %c0_104 = arith.constant 0 : index
      %173 = vector.load %arg9[%c0_102, %c0_103, %c0_104] : memref<4x8x4xf32, #tpu.memory_space<vmem>>, vector<1x8x4xf32>
      %174 = vector.shape_cast %173 : vector<1x8x4xf32> to vector<8x4xf32>
      %c0_105 = arith.constant 0 : index
      %c0_106 = arith.constant 0 : index
      %c0_107 = arith.constant 0 : index
      %175 = vector.load %arg8[%c0_105, %c0_106, %c0_107] : memref<4x8x1xf32, #tpu.memory_space<vmem>>, vector<1x8x1xf32>
      %176 = vector.shape_cast %175 : vector<1x8x1xf32> to vector<8x1xf32>
      %177 = tpu.reciprocal %176 {approx = true} : vector<8x1xf32> -> vector<8x1xf32>
      %178 = vector.broadcast %177 : vector<8x1xf32> to vector<8x4xf32>
      %179 = arith.mulf %174, %178 : vector<8x4xf32>
      %c0_108 = arith.constant 0 : index
      %c0_109 = arith.constant 0 : index
      %c0_110 = arith.constant 0 : index
      %180 = vector.load %arg6[%c0_108, %c0_109, %c0_110] : memref<1x8x16xf32, #tpu.memory_space<vmem>>, vector<1x8x4xf32>
      %181 = vector.shape_cast %180 : vector<1x8x4xf32> to vector<8x4xf32>
      %182 = vector.shape_cast %179 : vector<8x4xf32> to vector<1x8x4xf32>
      tpu.vector_store %arg6[%c0_108, %c0_109, %c0_110], %182 {strides = array<i32>} : memref<1x8x16xf32, #tpu.memory_space<vmem>>, vector<1x8x4xf32>,
    } else {
    }
    %53 = vector.extract_strided_slice %6 {offsets = [0, 4], sizes = [8, 4], strides = [1, 1]} : vector<8x16xbf16> to vector<8x4xbf16>
    %54 = vector.extract_strided_slice %9 {offsets = [0, 4], sizes = [8, 4], strides = [1, 1]} : vector<8x16xbf16> to vector<8x4xbf16>
    %cst_33 = arith.constant dense<0.000000e+00> : vector<8x8xf32>
    %55 = tpu.matmul %53, %54, %cst_33 {dimension_numbers = #tpu.dot_dimension_numbers<[1], [1], [0], [0], [0, 0, 1, 0], [], []>} : vector<8x4xbf16>, vector<8x4xbf16>, vector<8x8xf32> -> vector<8x8xf32>
    %cst_34 = arith.constant 5.000000e-01 : f32
    %56 = vector.broadcast %cst_34 : f32 to vector<8x8xf32>
    %57 = arith.mulf %55, %56 : vector<8x8xf32>
    %c1 = arith.constant 1 : index
    %c0_35 = arith.constant 0 : index
    %c0_36 = arith.constant 0 : index
    %58 = vector.load %arg7[%c1, %c0_35, %c0_36] : memref<4x8x1xf32, #tpu.memory_space<vmem>>, vector<1x8x1xf32>
    %59 = vector.shape_cast %58 : vector<1x8x1xf32> to vector<8x1xf32>
    %cst_37 = arith.constant dense<0xFF800000> : vector<8xf32>
    %60 = vector.multi_reduction <maximumf>, %57, %cst_37 [1] : vector<8x8xf32> to vector<8xf32>
    %61 = vector.shape_cast %60 : vector<8xf32> to vector<8x1xf32>
    %62 = arith.maximumf %59, %61 : vector<8x1xf32>
    %63 = arith.subf %59, %62 : vector<8x1xf32>
    %64 = math.exp %63 : vector<8x1xf32>
    %65 = vector.broadcast %62 : vector<8x1xf32> to vector<8x8xf32>
    %66 = arith.subf %57, %65 : vector<8x8xf32>
    %67 = math.exp %66 : vector<8x8xf32>
    %c1_38 = arith.constant 1 : index
    %c0_39 = arith.constant 0 : index
    %c0_40 = arith.constant 0 : index
    %68 = vector.load %arg8[%c1_38, %c0_39, %c0_40] : memref<4x8x1xf32, #tpu.memory_space<vmem>>, vector<1x8x1xf32>
    %69 = vector.shape_cast %68 : vector<1x8x1xf32> to vector<8x1xf32>
    %70 = arith.mulf %64, %69 : vector<8x1xf32>
    %cst_41 = arith.constant dense<0.000000e+00> : vector<8xf32>
    %71 = vector.multi_reduction <add>, %67, %cst_41 [1] : vector<8x8xf32> to vector<8xf32>
    %72 = vector.shape_cast %71 : vector<8xf32> to vector<8x1xf32>
    %73 = arith.addf %70, %72 : vector<8x1xf32>
    %c1_42 = arith.constant 1 : index
    %c0_43 = arith.constant 0 : index
    %c0_44 = arith.constant 0 : index
    %74 = vector.load %arg8[%c1_42, %c0_43, %c0_44] : memref<4x8x1xf32, #tpu.memory_space<vmem>>, vector<1x8x1xf32>
    %75 = vector.shape_cast %74 : vector<1x8x1xf32> to vector<8x1xf32>
    %76 = vector.shape_cast %73 : vector<8x1xf32> to vector<1x8x1xf32>
    tpu.vector_store %arg8[%c1_42, %c0_43, %c0_44], %76 {strides = array<i32>} : memref<4x8x1xf32, #tpu.memory_space<vmem>>, vector<1x8x1xf32>,
    %c1_45 = arith.constant 1 : index
    %c0_46 = arith.constant 0 : index
    %c0_47 = arith.constant 0 : index
    %77 = vector.load %arg9[%c1_45, %c0_46, %c0_47] : memref<4x8x4xf32, #tpu.memory_space<vmem>>, vector<1x8x4xf32>
    %78 = vector.shape_cast %77 : vector<1x8x4xf32> to vector<8x4xf32>
    %79 = vector.broadcast %64 : vector<8x1xf32> to vector<8x4xf32>
    %80 = arith.mulf %79, %78 : vector<8x4xf32>
    %81 = arith.truncf %67 : vector<8x8xf32> to vector<8x8xbf16>
    %82 = vector.extract_strided_slice %12 {offsets = [0, 4], sizes = [8, 4], strides = [1, 1]} : vector<8x16xbf16> to vector<8x4xbf16>
    %cst_48 = arith.constant dense<0.000000e+00> : vector<8x4xf32>
    %83 = tpu.matmul %81, %82, %cst_48 {dimension_numbers = #tpu.dot_dimension_numbers<[1], [0], [0], [1], [0, 0, 1, 1], [], []>} : vector<8x8xbf16>, vector<8x4xbf16>, vector<8x4xf32> -> vector<8x4xf32>
    %84 = arith.addf %80, %83 : vector<8x4xf32>
    %c1_49 = arith.constant 1 : index
    %c0_50 = arith.constant 0 : index
    %c0_51 = arith.constant 0 : index
    %85 = vector.load %arg9[%c1_49, %c0_50, %c0_51] : memref<4x8x4xf32, #tpu.memory_space<vmem>>, vector<1x8x4xf32>
    %86 = vector.shape_cast %85 : vector<1x8x4xf32> to vector<8x4xf32>
    %87 = vector.shape_cast %84 : vector<8x4xf32> to vector<1x8x4xf32>
    tpu.vector_store %arg9[%c1_49, %c0_50, %c0_51], %87 {strides = array<i32>} : memref<4x8x4xf32, #tpu.memory_space<vmem>>, vector<1x8x4xf32>,
    %c1_52 = arith.constant 1 : index
    %c0_53 = arith.constant 0 : index
    %c0_54 = arith.constant 0 : index
    %88 = vector.load %arg7[%c1_52, %c0_53, %c0_54] : memref<4x8x1xf32, #tpu.memory_space<vmem>>, vector<1x8x1xf32>
    %89 = vector.shape_cast %88 : vector<1x8x1xf32> to vector<8x1xf32>
    %90 = vector.shape_cast %62 : vector<8x1xf32> to vector<1x8x1xf32>
    tpu.vector_store %arg7[%c1_52, %c0_53, %c0_54], %90 {strides = array<i32>} : memref<4x8x1xf32, #tpu.memory_space<vmem>>, vector<1x8x1xf32>,
    %91 = arith.extui %3 : i1 to i32
    %c0_i32_55 = arith.constant 0 : i32
    %92 = arith.cmpi ne, %91, %c0_i32_55 : i32
    scf.if %92 {
      %c1_102 = arith.constant 1 : index
      %c0_103 = arith.constant 0 : index
      %c0_104 = arith.constant 0 : index
      %173 = vector.load %arg9[%c1_102, %c0_103, %c0_104] : memref<4x8x4xf32, #tpu.memory_space<vmem>>, vector<1x8x4xf32>
      %174 = vector.shape_cast %173 : vector<1x8x4xf32> to vector<8x4xf32>
      %c1_105 = arith.constant 1 : index
      %c0_106 = arith.constant 0 : index
      %c0_107 = arith.constant 0 : index
      %175 = vector.load %arg8[%c1_105, %c0_106, %c0_107] : memref<4x8x1xf32, #tpu.memory_space<vmem>>, vector<1x8x1xf32>
      %176 = vector.shape_cast %175 : vector<1x8x1xf32> to vector<8x1xf32>
      %177 = tpu.reciprocal %176 {approx = true} : vector<8x1xf32> -> vector<8x1xf32>
      %178 = vector.broadcast %177 : vector<8x1xf32> to vector<8x4xf32>
      %179 = arith.mulf %174, %178 : vector<8x4xf32>
      %c0_108 = arith.constant 0 : index
      %c0_109 = arith.constant 0 : index
      %c4 = arith.constant 4 : index
      %180 = vector.load %arg6[%c0_108, %c0_109, %c4] : memref<1x8x16xf32, #tpu.memory_space<vmem>>, vector<1x8x4xf32>
      %181 = vector.shape_cast %180 : vector<1x8x4xf32> to vector<8x4xf32>
      %182 = vector.shape_cast %179 : vector<8x4xf32> to vector<1x8x4xf32>
      tpu.vector_store %arg6[%c0_108, %c0_109, %c4], %182 {strides = array<i32>} : memref<1x8x16xf32, #tpu.memory_space<vmem>>, vector<1x8x4xf32>,
    } else {
    }
    %93 = vector.extract_strided_slice %6 {offsets = [0, 8], sizes = [8, 4], strides = [1, 1]} : vector<8x16xbf16> to vector<8x4xbf16>
    %94 = vector.extract_strided_slice %9 {offsets = [0, 8], sizes = [8, 4], strides = [1, 1]} : vector<8x16xbf16> to vector<8x4xbf16>
    %cst_56 = arith.constant dense<0.000000e+00> : vector<8x8xf32>
    %95 = tpu.matmul %93, %94, %cst_56 {dimension_numbers = #tpu.dot_dimension_numbers<[1], [1], [0], [0], [0, 0, 1, 0], [], []>} : vector<8x4xbf16>, vector<8x4xbf16>, vector<8x8xf32> -> vector<8x8xf32>
    %cst_57 = arith.constant 5.000000e-01 : f32
    %96 = vector.broadcast %cst_57 : f32 to vector<8x8xf32>
    %97 = arith.mulf %95, %96 : vector<8x8xf32>
    %c2 = arith.constant 2 : index
    %c0_58 = arith.constant 0 : index
    %c0_59 = arith.constant 0 : index
    %98 = vector.load %arg7[%c2, %c0_58, %c0_59] : memref<4x8x1xf32, #tpu.memory_space<vmem>>, vector<1x8x1xf32>
    %99 = vector.shape_cast %98 : vector<1x8x1xf32> to vector<8x1xf32>
    %cst_60 = arith.constant dense<0xFF800000> : vector<8xf32>
    %100 = vector.multi_reduction <maximumf>, %97, %cst_60 [1] : vector<8x8xf32> to vector<8xf32>
    %101 = vector.shape_cast %100 : vector<8xf32> to vector<8x1xf32>
    %102 = arith.maximumf %99, %101 : vector<8x1xf32>
    %103 = arith.subf %99, %102 : vector<8x1xf32>
    %104 = math.exp %103 : vector<8x1xf32>
    %105 = vector.broadcast %102 : vector<8x1xf32> to vector<8x8xf32>
    %106 = arith.subf %97, %105 : vector<8x8xf32>
    %107 = math.exp %106 : vector<8x8xf32>
    %c2_61 = arith.constant 2 : index
    %c0_62 = arith.constant 0 : index
    %c0_63 = arith.constant 0 : index
    %108 = vector.load %arg8[%c2_61, %c0_62, %c0_63] : memref<4x8x1xf32, #tpu.memory_space<vmem>>, vector<1x8x1xf32>
    %109 = vector.shape_cast %108 : vector<1x8x1xf32> to vector<8x1xf32>
    %110 = arith.mulf %104, %109 : vector<8x1xf32>
    %cst_64 = arith.constant dense<0.000000e+00> : vector<8xf32>
    %111 = vector.multi_reduction <add>, %107, %cst_64 [1] : vector<8x8xf32> to vector<8xf32>
    %112 = vector.shape_cast %111 : vector<8xf32> to vector<8x1xf32>
    %113 = arith.addf %110, %112 : vector<8x1xf32>
    %c2_65 = arith.constant 2 : index
    %c0_66 = arith.constant 0 : index
    %c0_67 = arith.constant 0 : index
    %114 = vector.load %arg8[%c2_65, %c0_66, %c0_67] : memref<4x8x1xf32, #tpu.memory_space<vmem>>, vector<1x8x1xf32>
    %115 = vector.shape_cast %114 : vector<1x8x1xf32> to vector<8x1xf32>
    %116 = vector.shape_cast %113 : vector<8x1xf32> to vector<1x8x1xf32>
    tpu.vector_store %arg8[%c2_65, %c0_66, %c0_67], %116 {strides = array<i32>} : memref<4x8x1xf32, #tpu.memory_space<vmem>>, vector<1x8x1xf32>,
    %c2_68 = arith.constant 2 : index
    %c0_69 = arith.constant 0 : index
    %c0_70 = arith.constant 0 : index
    %117 = vector.load %arg9[%c2_68, %c0_69, %c0_70] : memref<4x8x4xf32, #tpu.memory_space<vmem>>, vector<1x8x4xf32>
    %118 = vector.shape_cast %117 : vector<1x8x4xf32> to vector<8x4xf32>
    %119 = vector.broadcast %104 : vector<8x1xf32> to vector<8x4xf32>
    %120 = arith.mulf %119, %118 : vector<8x4xf32>
    %121 = arith.truncf %107 : vector<8x8xf32> to vector<8x8xbf16>
    %122 = vector.extract_strided_slice %12 {offsets = [0, 8], sizes = [8, 4], strides = [1, 1]} : vector<8x16xbf16> to vector<8x4xbf16>
    %cst_71 = arith.constant dense<0.000000e+00> : vector<8x4xf32>
    %123 = tpu.matmul %121, %122, %cst_71 {dimension_numbers = #tpu.dot_dimension_numbers<[1], [0], [0], [1], [0, 0, 1, 1], [], []>} : vector<8x8xbf16>, vector<8x4xbf16>, vector<8x4xf32> -> vector<8x4xf32>
    %124 = arith.addf %120, %123 : vector<8x4xf32>
    %c2_72 = arith.constant 2 : index
    %c0_73 = arith.constant 0 : index
    %c0_74 = arith.constant 0 : index
    %125 = vector.load %arg9[%c2_72, %c0_73, %c0_74] : memref<4x8x4xf32, #tpu.memory_space<vmem>>, vector<1x8x4xf32>
    %126 = vector.shape_cast %125 : vector<1x8x4xf32> to vector<8x4xf32>
    %127 = vector.shape_cast %124 : vector<8x4xf32> to vector<1x8x4xf32>
    tpu.vector_store %arg9[%c2_72, %c0_73, %c0_74], %127 {strides = array<i32>} : memref<4x8x4xf32, #tpu.memory_space<vmem>>, vector<1x8x4xf32>,
    %c2_75 = arith.constant 2 : index
    %c0_76 = arith.constant 0 : index
    %c0_77 = arith.constant 0 : index
    %128 = vector.load %arg7[%c2_75, %c0_76, %c0_77] : memref<4x8x1xf32, #tpu.memory_space<vmem>>, vector<1x8x1xf32>
    %129 = vector.shape_cast %128 : vector<1x8x1xf32> to vector<8x1xf32>
    %130 = vector.shape_cast %102 : vector<8x1xf32> to vector<1x8x1xf32>
    tpu.vector_store %arg7[%c2_75, %c0_76, %c0_77], %130 {strides = array<i32>} : memref<4x8x1xf32, #tpu.memory_space<vmem>>, vector<1x8x1xf32>,
    %131 = arith.extui %3 : i1 to i32
    %c0_i32_78 = arith.constant 0 : i32
    %132 = arith.cmpi ne, %131, %c0_i32_78 : i32
    scf.if %132 {
      %c2_102 = arith.constant 2 : index
      %c0_103 = arith.constant 0 : index
      %c0_104 = arith.constant 0 : index
      %173 = vector.load %arg9[%c2_102, %c0_103, %c0_104] : memref<4x8x4xf32, #tpu.memory_space<vmem>>, vector<1x8x4xf32>
      %174 = vector.shape_cast %173 : vector<1x8x4xf32> to vector<8x4xf32>
      %c2_105 = arith.constant 2 : index
      %c0_106 = arith.constant 0 : index
      %c0_107 = arith.constant 0 : index
      %175 = vector.load %arg8[%c2_105, %c0_106, %c0_107] : memref<4x8x1xf32, #tpu.memory_space<vmem>>, vector<1x8x1xf32>
      %176 = vector.shape_cast %175 : vector<1x8x1xf32> to vector<8x1xf32>
      %177 = tpu.reciprocal %176 {approx = true} : vector<8x1xf32> -> vector<8x1xf32>
      %178 = vector.broadcast %177 : vector<8x1xf32> to vector<8x4xf32>
      %179 = arith.mulf %174, %178 : vector<8x4xf32>
      %c0_108 = arith.constant 0 : index
      %c0_109 = arith.constant 0 : index
      %c8 = arith.constant 8 : index
      %180 = vector.load %arg6[%c0_108, %c0_109, %c8] : memref<1x8x16xf32, #tpu.memory_space<vmem>>, vector<1x8x4xf32>
      %181 = vector.shape_cast %180 : vector<1x8x4xf32> to vector<8x4xf32>
      %182 = vector.shape_cast %179 : vector<8x4xf32> to vector<1x8x4xf32>
      tpu.vector_store %arg6[%c0_108, %c0_109, %c8], %182 {strides = array<i32>} : memref<1x8x16xf32, #tpu.memory_space<vmem>>, vector<1x8x4xf32>,
    } else {
    }
    %133 = vector.extract_strided_slice %6 {offsets = [0, 12], sizes = [8, 4], strides = [1, 1]} : vector<8x16xbf16> to vector<8x4xbf16>
    %134 = vector.extract_strided_slice %9 {offsets = [0, 12], sizes = [8, 4], strides = [1, 1]} : vector<8x16xbf16> to vector<8x4xbf16>
    %cst_79 = arith.constant dense<0.000000e+00> : vector<8x8xf32>
    %135 = tpu.matmul %133, %134, %cst_79 {dimension_numbers = #tpu.dot_dimension_numbers<[1], [1], [0], [0], [0, 0, 1, 0], [], []>} : vector<8x4xbf16>, vector<8x4xbf16>, vector<8x8xf32> -> vector<8x8xf32>
    %cst_80 = arith.constant 5.000000e-01 : f32
    %136 = vector.broadcast %cst_80 : f32 to vector<8x8xf32>
    %137 = arith.mulf %135, %136 : vector<8x8xf32>
    %c3 = arith.constant 3 : index
    %c0_81 = arith.constant 0 : index
    %c0_82 = arith.constant 0 : index
    %138 = vector.load %arg7[%c3, %c0_81, %c0_82] : memref<4x8x1xf32, #tpu.memory_space<vmem>>, vector<1x8x1xf32>
    %139 = vector.shape_cast %138 : vector<1x8x1xf32> to vector<8x1xf32>
    %cst_83 = arith.constant dense<0xFF800000> : vector<8xf32>
    %140 = vector.multi_reduction <maximumf>, %137, %cst_83 [1] : vector<8x8xf32> to vector<8xf32>
    %141 = vector.shape_cast %140 : vector<8xf32> to vector<8x1xf32>
    %142 = arith.maximumf %139, %141 : vector<8x1xf32>
    %143 = arith.subf %139, %142 : vector<8x1xf32>
    %144 = math.exp %143 : vector<8x1xf32>
    %145 = vector.broadcast %142 : vector<8x1xf32> to vector<8x8xf32>
    %146 = arith.subf %137, %145 : vector<8x8xf32>
    %147 = math.exp %146 : vector<8x8xf32>
    %c3_84 = arith.constant 3 : index
    %c0_85 = arith.constant 0 : index
    %c0_86 = arith.constant 0 : index
    %148 = vector.load %arg8[%c3_84, %c0_85, %c0_86] : memref<4x8x1xf32, #tpu.memory_space<vmem>>, vector<1x8x1xf32>
    %149 = vector.shape_cast %148 : vector<1x8x1xf32> to vector<8x1xf32>
    %150 = arith.mulf %144, %149 : vector<8x1xf32>
    %cst_87 = arith.constant dense<0.000000e+00> : vector<8xf32>
    %151 = vector.multi_reduction <add>, %147, %cst_87 [1] : vector<8x8xf32> to vector<8xf32>
    %152 = vector.shape_cast %151 : vector<8xf32> to vector<8x1xf32>
    %153 = arith.addf %150, %152 : vector<8x1xf32>
    %c3_88 = arith.constant 3 : index
    %c0_89 = arith.constant 0 : index
    %c0_90 = arith.constant 0 : index
    %154 = vector.load %arg8[%c3_88, %c0_89, %c0_90] : memref<4x8x1xf32, #tpu.memory_space<vmem>>, vector<1x8x1xf32>
    %155 = vector.shape_cast %154 : vector<1x8x1xf32> to vector<8x1xf32>
    %156 = vector.shape_cast %153 : vector<8x1xf32> to vector<1x8x1xf32>
    tpu.vector_store %arg8[%c3_88, %c0_89, %c0_90], %156 {strides = array<i32>} : memref<4x8x1xf32, #tpu.memory_space<vmem>>, vector<1x8x1xf32>,
    %c3_91 = arith.constant 3 : index
    %c0_92 = arith.constant 0 : index
    %c0_93 = arith.constant 0 : index
    %157 = vector.load %arg9[%c3_91, %c0_92, %c0_93] : memref<4x8x4xf32, #tpu.memory_space<vmem>>, vector<1x8x4xf32>
    %158 = vector.shape_cast %157 : vector<1x8x4xf32> to vector<8x4xf32>
    %159 = vector.broadcast %144 : vector<8x1xf32> to vector<8x4xf32>
    %160 = arith.mulf %159, %158 : vector<8x4xf32>
    %161 = arith.truncf %147 : vector<8x8xf32> to vector<8x8xbf16>
    %162 = vector.extract_strided_slice %12 {offsets = [0, 12], sizes = [8, 4], strides = [1, 1]} : vector<8x16xbf16> to vector<8x4xbf16>
    %cst_94 = arith.constant dense<0.000000e+00> : vector<8x4xf32>
    %163 = tpu.matmul %161, %162, %cst_94 {dimension_numbers = #tpu.dot_dimension_numbers<[1], [0], [0], [1], [0, 0, 1, 1], [], []>} : vector<8x8xbf16>, vector<8x4xbf16>, vector<8x4xf32> -> vector<8x4xf32>
    %164 = arith.addf %160, %163 : vector<8x4xf32>
    %c3_95 = arith.constant 3 : index
    %c0_96 = arith.constant 0 : index
    %c0_97 = arith.constant 0 : index
    %165 = vector.load %arg9[%c3_95, %c0_96, %c0_97] : memref<4x8x4xf32, #tpu.memory_space<vmem>>, vector<1x8x4xf32>
    %166 = vector.shape_cast %165 : vector<1x8x4xf32> to vector<8x4xf32>
    %167 = vector.shape_cast %164 : vector<8x4xf32> to vector<1x8x4xf32>
    tpu.vector_store %arg9[%c3_95, %c0_96, %c0_97], %167 {strides = array<i32>} : memref<4x8x4xf32, #tpu.memory_space<vmem>>, vector<1x8x4xf32>,
    %c3_98 = arith.constant 3 : index
    %c0_99 = arith.constant 0 : index
    %c0_100 = arith.constant 0 : index
    %168 = vector.load %arg7[%c3_98, %c0_99, %c0_100] : memref<4x8x1xf32, #tpu.memory_space<vmem>>, vector<1x8x1xf32>
    %169 = vector.shape_cast %168 : vector<1x8x1xf32> to vector<8x1xf32>
    %170 = vector.shape_cast %142 : vector<8x1xf32> to vector<1x8x1xf32>
    tpu.vector_store %arg7[%c3_98, %c0_99, %c0_100], %170 {strides = array<i32>} : memref<4x8x1xf32, #tpu.memory_space<vmem>>, vector<1x8x1xf32>,
    %171 = arith.extui %3 : i1 to i32
    %c0_i32_101 = arith.constant 0 : i32
    %172 = arith.cmpi ne, %171, %c0_i32_101 : i32
    scf.if %172 {
      %c3_102 = arith.constant 3 : index
      %c0_103 = arith.constant 0 : index
      %c0_104 = arith.constant 0 : index
      %173 = vector.load %arg9[%c3_102, %c0_103, %c0_104] : memref<4x8x4xf32, #tpu.memory_space<vmem>>, vector<1x8x4xf32>
      %174 = vector.shape_cast %173 : vector<1x8x4xf32> to vector<8x4xf32>
      %c3_105 = arith.constant 3 : index
      %c0_106 = arith.constant 0 : index
      %c0_107 = arith.constant 0 : index
      %175 = vector.load %arg8[%c3_105, %c0_106, %c0_107] : memref<4x8x1xf32, #tpu.memory_space<vmem>>, vector<1x8x1xf32>
      %176 = vector.shape_cast %175 : vector<1x8x1xf32> to vector<8x1xf32>
      %177 = tpu.reciprocal %176 {approx = true} : vector<8x1xf32> -> vector<8x1xf32>
      %178 = vector.broadcast %177 : vector<8x1xf32> to vector<8x4xf32>
      %179 = arith.mulf %174, %178 : vector<8x4xf32>
      %c0_108 = arith.constant 0 : index
      %c0_109 = arith.constant 0 : index
      %c12 = arith.constant 12 : index
      %180 = vector.load %arg6[%c0_108, %c0_109, %c12] : memref<1x8x16xf32, #tpu.memory_space<vmem>>, vector<1x8x4xf32>
      %181 = vector.shape_cast %180 : vector<1x8x4xf32> to vector<8x4xf32>
      %182 = vector.shape_cast %179 : vector<8x4xf32> to vector<1x8x4xf32>
      tpu.vector_store %arg6[%c0_108, %c0_109, %c12], %182 {strides = array<i32>} : memref<1x8x16xf32, #tpu.memory_space<vmem>>, vector<1x8x4xf32>,
    } else {
    }
    return
  }
  func.func @transform_0(%arg0: i32, %arg1: i32, %arg2: i32) -> (i32, i32, i32) {
    %c0_i32 = arith.constant 0 : i32
    %c0_i32_0 = arith.constant 0 : i32
    return %arg0, %arg1, %c0_i32 : i32, i32, i32
  }
  func.func @transform_1(%arg0: i32, %arg1: i32, %arg2: i32) -> (i32, i32, i32) {
    %c0_i32 = arith.constant 0 : i32
    %c0_i32_0 = arith.constant 0 : i32
    return %arg0, %arg2, %c0_i32 : i32, i32, i32
  }
  func.func @transform_2(%arg0: i32, %arg1: i32, %arg2: i32) -> (i32, i32, i32) {
    %c0_i32 = arith.constant 0 : i32
    %c0_i32_0 = arith.constant 0 : i32
    return %arg0, %arg2, %c0_i32 : i32, i32, i32
  }
  func.func @transform_3(%arg0: i32, %arg1: i32, %arg2: i32) -> (i32, i32, i32) {
    %c0_i32 = arith.constant 0 : i32
    %c0_i32_0 = arith.constant 0 : i32
    return %arg0, %arg1, %c0_i32 : i32, i32, i32
  }
}

module attributes {stable_mosaic.version = 11 : i64} {
  func.func @_ln_glu_kernel(%arg0: i32, %arg1: memref<16x16xf32, #tpu.memory_space<vmem>>, %arg2: memref<1x16xf32, #tpu.memory_space<vmem>>, %arg3: memref<1x16xf32, #tpu.memory_space<vmem>>, %arg4: memref<16x16xbf16, #tpu.memory_space<vmem>>, %arg5: memref<1x16xf32, #tpu.memory_space<vmem>>, %arg6: memref<16x16xbf16, #tpu.memory_space<vmem>>, %arg7: memref<1x16xf32, #tpu.memory_space<vmem>>, %arg8: memref<16x16xf32, #tpu.memory_space<vmem>>) attributes {dimension_semantics = [#tpu.dimension_semantics<parallel>], iteration_bounds = array<i64: 1>, scalar_prefetch = 0 : i64, scratch_operands = 0 : i64, tpu.core_type = #tpu.core_type<tc>, window_params = [{transform_indices = @transform_0, window_bounds = array<i64: 16, 16>}, {pipeline_mode = #tpu.pipeline_mode<synchronous>, transform_indices = @transform_1, window_bounds = array<i64: 1, 16>}, {pipeline_mode = #tpu.pipeline_mode<synchronous>, transform_indices = @transform_2, window_bounds = array<i64: 1, 16>}, {pipeline_mode = #tpu.pipeline_mode<synchronous>, transform_indices = @transform_3, window_bounds = array<i64: 16, 16>}, {pipeline_mode = #tpu.pipeline_mode<synchronous>, transform_indices = @transform_4, window_bounds = array<i64: 1, 16>}, {pipeline_mode = #tpu.pipeline_mode<synchronous>, transform_indices = @transform_5, window_bounds = array<i64: 16, 16>}, {pipeline_mode = #tpu.pipeline_mode<synchronous>, transform_indices = @transform_6, window_bounds = array<i64: 1, 16>}, {transform_indices = @transform_7, window_bounds = array<i64: 16, 16>}]} {
    %c0 = arith.constant 0 : index
    %c0_0 = arith.constant 0 : index
    %0 = vector.load %arg1[%c0, %c0_0] : memref<16x16xf32, #tpu.memory_space<vmem>>, vector<16x16xf32>
    %cst = arith.constant dense<0.000000e+00> : vector<16xf32>
    %1 = vector.multi_reduction <add>, %0, %cst [1] : vector<16x16xf32> to vector<16xf32>
    %2 = vector.shape_cast %1 : vector<16xf32> to vector<16x1xf32>
    %cst_1 = arith.constant 1.600000e+01 : f32
    %3 = vector.broadcast %cst_1 : f32 to vector<16x1xf32>
    %4 = arith.divf %2, %3 : vector<16x1xf32>
    %5 = vector.broadcast %4 : vector<16x1xf32> to vector<16x16xf32>
    %6 = arith.subf %0, %5 : vector<16x16xf32>
    %7 = arith.mulf %6, %6 : vector<16x16xf32>
    %cst_2 = arith.constant dense<0.000000e+00> : vector<16xf32>
    %8 = vector.multi_reduction <add>, %7, %cst_2 [1] : vector<16x16xf32> to vector<16xf32>
    %9 = vector.shape_cast %8 : vector<16xf32> to vector<16x1xf32>
    %cst_3 = arith.constant 1.600000e+01 : f32
    %10 = vector.broadcast %cst_3 : f32 to vector<16x1xf32>
    %11 = arith.divf %9, %10 : vector<16x1xf32>
    %12 = vector.broadcast %4 : vector<16x1xf32> to vector<16x16xf32>
    %13 = arith.subf %0, %12 : vector<16x16xf32>
    %cst_4 = arith.constant 9.99999974E-6 : f32
    %14 = vector.broadcast %cst_4 : f32 to vector<16x1xf32>
    %15 = arith.addf %11, %14 : vector<16x1xf32>
    %16 = math.rsqrt %15 : vector<16x1xf32>
    %17 = vector.broadcast %16 : vector<16x1xf32> to vector<16x16xf32>
    %18 = arith.mulf %13, %17 : vector<16x16xf32>
    %c0_5 = arith.constant 0 : index
    %c0_6 = arith.constant 0 : index
    %19 = vector.load %arg2[%c0_5, %c0_6] : memref<1x16xf32, #tpu.memory_space<vmem>>, vector<1x16xf32>
    %20 = vector.broadcast %19 : vector<1x16xf32> to vector<16x16xf32>
    %21 = arith.mulf %18, %20 : vector<16x16xf32>
    %c0_7 = arith.constant 0 : index
    %c0_8 = arith.constant 0 : index
    %22 = vector.load %arg3[%c0_7, %c0_8] : memref<1x16xf32, #tpu.memory_space<vmem>>, vector<1x16xf32>
    %23 = vector.broadcast %22 : vector<1x16xf32> to vector<16x16xf32>
    %24 = arith.addf %21, %23 : vector<16x16xf32>
    %25 = arith.truncf %24 : vector<16x16xf32> to vector<16x16xbf16>
    %c0_9 = arith.constant 0 : index
    %c0_10 = arith.constant 0 : index
    %26 = vector.load %arg4[%c0_9, %c0_10] : memref<16x16xbf16, #tpu.memory_space<vmem>>, vector<16x16xbf16>
    %cst_11 = arith.constant dense<0.000000e+00> : vector<16x16xf32>
    %27 = tpu.matmul %25, %26, %cst_11 {dimension_numbers = #tpu.dot_dimension_numbers<[1], [0], [0], [1], [0, 0, 1, 1], [], []>} : vector<16x16xbf16>, vector<16x16xbf16>, vector<16x16xf32> -> vector<16x16xf32>
    %c0_12 = arith.constant 0 : index
    %c0_13 = arith.constant 0 : index
    %28 = vector.load %arg5[%c0_12, %c0_13] : memref<1x16xf32, #tpu.memory_space<vmem>>, vector<1x16xf32>
    %29 = vector.broadcast %28 : vector<1x16xf32> to vector<16x16xf32>
    %30 = arith.addf %27, %29 : vector<16x16xf32>
    %c0_14 = arith.constant 0 : index
    %c0_15 = arith.constant 0 : index
    %31 = vector.load %arg6[%c0_14, %c0_15] : memref<16x16xbf16, #tpu.memory_space<vmem>>, vector<16x16xbf16>
    %cst_16 = arith.constant dense<0.000000e+00> : vector<16x16xf32>
    %32 = tpu.matmul %25, %31, %cst_16 {dimension_numbers = #tpu.dot_dimension_numbers<[1], [0], [0], [1], [0, 0, 1, 1], [], []>} : vector<16x16xbf16>, vector<16x16xbf16>, vector<16x16xf32> -> vector<16x16xf32>
    %c0_17 = arith.constant 0 : index
    %c0_18 = arith.constant 0 : index
    %33 = vector.load %arg7[%c0_17, %c0_18] : memref<1x16xf32, #tpu.memory_space<vmem>>, vector<1x16xf32>
    %34 = vector.broadcast %33 : vector<1x16xf32> to vector<16x16xf32>
    %35 = arith.addf %32, %34 : vector<16x16xf32>
    %36 = arith.negf %35 : vector<16x16xf32>
    %37 = math.exp %36 : vector<16x16xf32>
    %cst_19 = arith.constant 1.000000e+00 : f32
    %38 = vector.broadcast %cst_19 : f32 to vector<16x16xf32>
    %39 = arith.addf %38, %37 : vector<16x16xf32>
    %40 = arith.divf %38, %39 : vector<16x16xf32>
    %41 = arith.mulf %30, %40 : vector<16x16xf32>
    %c0_20 = arith.constant 0 : index
    %c0_21 = arith.constant 0 : index
    %42 = vector.load %arg8[%c0_20, %c0_21] : memref<16x16xf32, #tpu.memory_space<vmem>>, vector<16x16xf32>
    tpu.vector_store %arg8[%c0_20, %c0_21], %41 {strides = array<i32>} : memref<16x16xf32, #tpu.memory_space<vmem>>, vector<16x16xf32>,
    return
  }
  func.func @transform_0(%arg0: i32) -> (i32, i32) {
    %c0_i32 = arith.constant 0 : i32
    %c0_i32_0 = arith.constant 0 : i32
    return %arg0, %c0_i32 : i32, i32
  }
  func.func @transform_1(%arg0: i32) -> (i32, i32) {
    %c0_i32 = arith.constant 0 : i32
    %c0_i32_0 = arith.constant 0 : i32
    %c0_i32_1 = arith.constant 0 : i32
    return %c0_i32, %c0_i32_0 : i32, i32
  }
  func.func @transform_2(%arg0: i32) -> (i32, i32) {
    %c0_i32 = arith.constant 0 : i32
    %c0_i32_0 = arith.constant 0 : i32
    %c0_i32_1 = arith.constant 0 : i32
    return %c0_i32, %c0_i32_0 : i32, i32
  }
  func.func @transform_3(%arg0: i32) -> (i32, i32) {
    %c0_i32 = arith.constant 0 : i32
    %c0_i32_0 = arith.constant 0 : i32
    %c0_i32_1 = arith.constant 0 : i32
    return %c0_i32, %c0_i32_0 : i32, i32
  }
  func.func @transform_4(%arg0: i32) -> (i32, i32) {
    %c0_i32 = arith.constant 0 : i32
    %c0_i32_0 = arith.constant 0 : i32
    %c0_i32_1 = arith.constant 0 : i32
    return %c0_i32, %c0_i32_0 : i32, i32
  }
  func.func @transform_5(%arg0: i32) -> (i32, i32) {
    %c0_i32 = arith.constant 0 : i32
    %c0_i32_0 = arith.constant 0 : i32
    %c0_i32_1 = arith.constant 0 : i32
    return %c0_i32, %c0_i32_0 : i32, i32
  }
  func.func @transform_6(%arg0: i32) -> (i32, i32) {
    %c0_i32 = arith.constant 0 : i32
    %c0_i32_0 = arith.constant 0 : i32
    %c0_i32_1 = arith.constant 0 : i32
    return %c0_i32, %c0_i32_0 : i32, i32
  }
  func.func @transform_7(%arg0: i32) -> (i32, i32) {
    %c0_i32 = arith.constant 0 : i32
    %c0_i32_0 = arith.constant 0 : i32
    return %arg0, %c0_i32 : i32, i32
  }
}

module attributes {stable_mosaic.version = 11 : i64} {
  func.func @kernel(%arg0: i32, %arg1: memref<1x8x16xf32, #tpu.memory_space<vmem>>, %arg2: memref<3x1x16xf32, #tpu.memory_space<vmem>>, %arg3: memref<16x16xbf16, #tpu.memory_space<vmem>>, %arg4: memref<1x16xf32, #tpu.memory_space<vmem>>, %arg5: memref<1x8x16xf32, #tpu.memory_space<vmem>>, %arg6: memref<1x8x16xf32, #tpu.memory_space<vmem>>) attributes {dimension_semantics = [#tpu.dimension_semantics<parallel>], iteration_bounds = array<i64: 2>, scalar_prefetch = 0 : i64, scratch_operands = 0 : i64, tpu.core_type = #tpu.core_type<tc>, window_params = [{transform_indices = @transform_0, window_bounds = array<i64: 1, 8, 16>}, {pipeline_mode = #tpu.pipeline_mode<synchronous>, transform_indices = @transform_1, window_bounds = array<i64: 3, 1, 16>}, {pipeline_mode = #tpu.pipeline_mode<synchronous>, transform_indices = @transform_2, window_bounds = array<i64: 16, 16>}, {pipeline_mode = #tpu.pipeline_mode<synchronous>, transform_indices = @transform_3, window_bounds = array<i64: 1, 16>}, {transform_indices = @transform_4, window_bounds = array<i64: 1, 8, 16>}, {transform_indices = @transform_5, window_bounds = array<i64: 1, 8, 16>}]} {
    %c0 = arith.constant 0 : index
    %c0_0 = arith.constant 0 : index
    %c0_1 = arith.constant 0 : index
    %0 = vector.load %arg1[%c0, %c0_0, %c0_1] : memref<1x8x16xf32, #tpu.memory_space<vmem>>, vector<1x8x16xf32>
    %1 = vector.shape_cast %0 : vector<1x8x16xf32> to vector<8x16xf32>
    %2 = tpu.iota {dimensions = array<i32: 0>} : vector<8x1xi32>
    %cst = arith.constant 0.000000e+00 : f32
    %3 = vector.broadcast %cst : f32 to vector<8x16xf32>
    %c1_i32 = arith.constant 1 : i32
    %4 = tpu.dynamic_rotate %1 by %c1_i32 dim 0 : vector<8x16xf32>, i32 -> vector<8x16xf32>
    %c-1_i32 = arith.constant -1 : i32
    %5 = vector.broadcast %c-1_i32 : i32 to vector<8x1xi32>
    %6 = arith.addi %2, %5 : vector<8x1xi32>
    %c0_i32 = arith.constant 0 : i32
    %7 = vector.broadcast %c0_i32 : i32 to vector<8x1xi32>
    %8 = arith.cmpi sge, %6, %7 : vector<8x1xi32>
    %c-1_i32_2 = arith.constant -1 : i32
    %9 = vector.broadcast %c-1_i32_2 : i32 to vector<8x1xi32>
    %10 = arith.addi %2, %9 : vector<8x1xi32>
    %c8_i32 = arith.constant 8 : i32
    %11 = vector.broadcast %c8_i32 : i32 to vector<8x1xi32>
    %12 = arith.cmpi slt, %10, %11 : vector<8x1xi32>
    %13 = arith.andi %8, %12 : vector<8x1xi1>
    %cst_3 = arith.constant 0.000000e+00 : f32
    %14 = vector.shape_cast %13 : vector<8x1xi1> to vector<8x1xi1>
    %15 = vector.broadcast %14 : vector<8x1xi1> to vector<8x16xi1>
    %16 = vector.broadcast %cst_3 : f32 to vector<8x16xf32>
    %17 = arith.select %15, %4, %16 : vector<8x16xi1>, vector<8x16xf32>
    %c0_4 = arith.constant 0 : index
    %c0_5 = arith.constant 0 : index
    %c0_6 = arith.constant 0 : index
    %18 = vector.load %arg2[%c0_4, %c0_5, %c0_6] : memref<3x1x16xf32, #tpu.memory_space<vmem>>, vector<1x1x16xf32>
    %19 = vector.shape_cast %18 : vector<1x1x16xf32> to vector<1x16xf32>
    %20 = vector.broadcast %19 : vector<1x16xf32> to vector<8x16xf32>
    %21 = arith.mulf %17, %20 : vector<8x16xf32>
    %22 = arith.addf %3, %21 : vector<8x16xf32>
    %c0_i32_7 = arith.constant 0 : i32
    %23 = vector.broadcast %c0_i32_7 : i32 to vector<8x1xi32>
    %24 = arith.addi %2, %23 : vector<8x1xi32>
    %c0_i32_8 = arith.constant 0 : i32
    %25 = vector.broadcast %c0_i32_8 : i32 to vector<8x1xi32>
    %26 = arith.cmpi sge, %24, %25 : vector<8x1xi32>
    %c0_i32_9 = arith.constant 0 : i32
    %27 = vector.broadcast %c0_i32_9 : i32 to vector<8x1xi32>
    %28 = arith.addi %2, %27 : vector<8x1xi32>
    %c8_i32_10 = arith.constant 8 : i32
    %29 = vector.broadcast %c8_i32_10 : i32 to vector<8x1xi32>
    %30 = arith.cmpi slt, %28, %29 : vector<8x1xi32>
    %31 = arith.andi %26, %30 : vector<8x1xi1>
    %cst_11 = arith.constant 0.000000e+00 : f32
    %32 = vector.shape_cast %31 : vector<8x1xi1> to vector<8x1xi1>
    %33 = vector.broadcast %32 : vector<8x1xi1> to vector<8x16xi1>
    %34 = vector.broadcast %cst_11 : f32 to vector<8x16xf32>
    %35 = arith.select %33, %1, %34 : vector<8x16xi1>, vector<8x16xf32>
    %c1 = arith.constant 1 : index
    %c0_12 = arith.constant 0 : index
    %c0_13 = arith.constant 0 : index
    %36 = vector.load %arg2[%c1, %c0_12, %c0_13] : memref<3x1x16xf32, #tpu.memory_space<vmem>>, vector<1x1x16xf32>
    %37 = vector.shape_cast %36 : vector<1x1x16xf32> to vector<1x16xf32>
    %38 = vector.broadcast %37 : vector<1x16xf32> to vector<8x16xf32>
    %39 = arith.mulf %35, %38 : vector<8x16xf32>
    %40 = arith.addf %22, %39 : vector<8x16xf32>
    %c7_i32 = arith.constant 7 : i32
    %41 = tpu.dynamic_rotate %1 by %c7_i32 dim 0 : vector<8x16xf32>, i32 -> vector<8x16xf32>
    %c1_i32_14 = arith.constant 1 : i32
    %42 = vector.broadcast %c1_i32_14 : i32 to vector<8x1xi32>
    %43 = arith.addi %2, %42 : vector<8x1xi32>
    %c0_i32_15 = arith.constant 0 : i32
    %44 = vector.broadcast %c0_i32_15 : i32 to vector<8x1xi32>
    %45 = arith.cmpi sge, %43, %44 : vector<8x1xi32>
    %c1_i32_16 = arith.constant 1 : i32
    %46 = vector.broadcast %c1_i32_16 : i32 to vector<8x1xi32>
    %47 = arith.addi %2, %46 : vector<8x1xi32>
    %c8_i32_17 = arith.constant 8 : i32
    %48 = vector.broadcast %c8_i32_17 : i32 to vector<8x1xi32>
    %49 = arith.cmpi slt, %47, %48 : vector<8x1xi32>
    %50 = arith.andi %45, %49 : vector<8x1xi1>
    %cst_18 = arith.constant 0.000000e+00 : f32
    %51 = vector.shape_cast %50 : vector<8x1xi1> to vector<8x1xi1>
    %52 = vector.broadcast %51 : vector<8x1xi1> to vector<8x16xi1>
    %53 = vector.broadcast %cst_18 : f32 to vector<8x16xf32>
    %54 = arith.select %52, %41, %53 : vector<8x16xi1>, vector<8x16xf32>
    %c2 = arith.constant 2 : index
    %c0_19 = arith.constant 0 : index
    %c0_20 = arith.constant 0 : index
    %55 = vector.load %arg2[%c2, %c0_19, %c0_20] : memref<3x1x16xf32, #tpu.memory_space<vmem>>, vector<1x1x16xf32>
    %56 = vector.shape_cast %55 : vector<1x1x16xf32> to vector<1x16xf32>
    %57 = vector.broadcast %56 : vector<1x16xf32> to vector<8x16xf32>
    %58 = arith.mulf %54, %57 : vector<8x16xf32>
    %59 = arith.addf %40, %58 : vector<8x16xf32>
    %60 = arith.negf %59 : vector<8x16xf32>
    %61 = math.exp %60 : vector<8x16xf32>
    %cst_21 = arith.constant 1.000000e+00 : f32
    %62 = vector.broadcast %cst_21 : f32 to vector<8x16xf32>
    %63 = arith.addf %62, %61 : vector<8x16xf32>
    %64 = arith.divf %62, %63 : vector<8x16xf32>
    %65 = arith.mulf %59, %64 : vector<8x16xf32>
    %66 = arith.truncf %65 : vector<8x16xf32> to vector<8x16xbf16>
    %c0_22 = arith.constant 0 : index
    %c0_23 = arith.constant 0 : index
    %67 = vector.load %arg3[%c0_22, %c0_23] : memref<16x16xbf16, #tpu.memory_space<vmem>>, vector<16x16xbf16>
    %cst_24 = arith.constant dense<0.000000e+00> : vector<8x16xf32>
    %68 = tpu.matmul %66, %67, %cst_24 {dimension_numbers = #tpu.dot_dimension_numbers<[1], [0], [0], [1], [0, 0, 1, 1], [], []>} : vector<8x16xbf16>, vector<16x16xbf16>, vector<8x16xf32> -> vector<8x16xf32>
    %c0_25 = arith.constant 0 : index
    %c0_26 = arith.constant 0 : index
    %69 = vector.load %arg4[%c0_25, %c0_26] : memref<1x16xf32, #tpu.memory_space<vmem>>, vector<1x16xf32>
    %70 = vector.broadcast %69 : vector<1x16xf32> to vector<8x16xf32>
    %71 = arith.addf %68, %70 : vector<8x16xf32>
    %c0_27 = arith.constant 0 : index
    %c0_28 = arith.constant 0 : index
    %c0_29 = arith.constant 0 : index
    %72 = vector.load %arg5[%c0_27, %c0_28, %c0_29] : memref<1x8x16xf32, #tpu.memory_space<vmem>>, vector<1x8x16xf32>
    %73 = vector.shape_cast %72 : vector<1x8x16xf32> to vector<8x16xf32>
    %74 = arith.addf %73, %71 : vector<8x16xf32>
    %75 = vector.shape_cast %74 : vector<8x16xf32> to vector<1x8x16xf32>
    %c0_30 = arith.constant 0 : index
    %c0_31 = arith.constant 0 : index
    %c0_32 = arith.constant 0 : index
    %76 = vector.load %arg6[%c0_30, %c0_31, %c0_32] : memref<1x8x16xf32, #tpu.memory_space<vmem>>, vector<1x8x16xf32>
    tpu.vector_store %arg6[%c0_30, %c0_31, %c0_32], %75 {strides = array<i32>} : memref<1x8x16xf32, #tpu.memory_space<vmem>>, vector<1x8x16xf32>,
    return
  }
  func.func @transform_0(%arg0: i32) -> (i32, i32, i32) {
    %c0_i32 = arith.constant 0 : i32
    %c0_i32_0 = arith.constant 0 : i32
    %c0_i32_1 = arith.constant 0 : i32
    return %arg0, %c0_i32, %c0_i32_0 : i32, i32, i32
  }
  func.func @transform_1(%arg0: i32) -> (i32, i32, i32) {
    %c0_i32 = arith.constant 0 : i32
    %c0_i32_0 = arith.constant 0 : i32
    %c0_i32_1 = arith.constant 0 : i32
    %c0_i32_2 = arith.constant 0 : i32
    return %c0_i32, %c0_i32_0, %c0_i32_1 : i32, i32, i32
  }
  func.func @transform_2(%arg0: i32) -> (i32, i32) {
    %c0_i32 = arith.constant 0 : i32
    %c0_i32_0 = arith.constant 0 : i32
    %c0_i32_1 = arith.constant 0 : i32
    return %c0_i32, %c0_i32_0 : i32, i32
  }
  func.func @transform_3(%arg0: i32) -> (i32, i32) {
    %c0_i32 = arith.constant 0 : i32
    %c0_i32_0 = arith.constant 0 : i32
    %c0_i32_1 = arith.constant 0 : i32
    return %c0_i32, %c0_i32_0 : i32, i32
  }
  func.func @transform_4(%arg0: i32) -> (i32, i32, i32) {
    %c0_i32 = arith.constant 0 : i32
    %c0_i32_0 = arith.constant 0 : i32
    %c0_i32_1 = arith.constant 0 : i32
    return %arg0, %c0_i32, %c0_i32_0 : i32, i32, i32
  }
  func.func @transform_5(%arg0: i32) -> (i32, i32, i32) {
    %c0_i32 = arith.constant 0 : i32
    %c0_i32_0 = arith.constant 0 : i32
    %c0_i32_1 = arith.constant 0 : i32
    return %arg0, %c0_i32, %c0_i32_0 : i32, i32, i32
  }
}

module attributes {stable_mosaic.version = 11 : i64} {
  func.func @kernel(%arg0: i32, %arg1: i32, %arg2: memref<16x16xf32, #tpu.memory_space<vmem>>, %arg3: memref<1x16xf32, #tpu.memory_space<vmem>>, %arg4: memref<1x16xf32, #tpu.memory_space<vmem>>, %arg5: memref<16x64xbf16, #tpu.memory_space<vmem>>, %arg6: memref<1x64xf32, #tpu.memory_space<vmem>>, %arg7: memref<64x16xbf16, #tpu.memory_space<vmem>>, %arg8: memref<1x16xf32, #tpu.memory_space<vmem>>, %arg9: memref<1x16xf32, #tpu.memory_space<vmem>>, %arg10: memref<1x16xf32, #tpu.memory_space<vmem>>, %arg11: memref<16x16xf32, #tpu.memory_space<vmem>>, %arg12: memref<16x16xbf16, #tpu.memory_space<vmem>>, %arg13: memref<16x16xf32, #tpu.memory_space<vmem>>) attributes {dimension_semantics = [#tpu.dimension_semantics<parallel>, #tpu.dimension_semantics<arbitrary>], iteration_bounds = array<i64: 1, 1>, scalar_prefetch = 0 : i64, scratch_operands = 2 : i64, tpu.core_type = #tpu.core_type<tc>, window_params = [{transform_indices = @transform_0, window_bounds = array<i64: 16, 16>}, {pipeline_mode = #tpu.pipeline_mode<synchronous>, transform_indices = @transform_1, window_bounds = array<i64: 1, 16>}, {pipeline_mode = #tpu.pipeline_mode<synchronous>, transform_indices = @transform_2, window_bounds = array<i64: 1, 16>}, {transform_indices = @transform_3, window_bounds = array<i64: 16, 64>}, {transform_indices = @transform_4, window_bounds = array<i64: 1, 64>}, {transform_indices = @transform_5, window_bounds = array<i64: 64, 16>}, {pipeline_mode = #tpu.pipeline_mode<synchronous>, transform_indices = @transform_6, window_bounds = array<i64: 1, 16>}, {pipeline_mode = #tpu.pipeline_mode<synchronous>, transform_indices = @transform_7, window_bounds = array<i64: 1, 16>}, {pipeline_mode = #tpu.pipeline_mode<synchronous>, transform_indices = @transform_8, window_bounds = array<i64: 1, 16>}, {transform_indices = @transform_9, window_bounds = array<i64: 16, 16>}]} {
    %c0_i32 = arith.constant 0 : i32
    %0 = arith.cmpi eq, %arg1, %c0_i32 : i32
    %1 = arith.extui %0 : i1 to i32
    %c0_i32_0 = arith.constant 0 : i32
    %2 = arith.cmpi ne, %1, %c0_i32_0 : i32
    scf.if %2 {
      %c0_16 = arith.constant 0 : index
      %c0_17 = arith.constant 0 : index
      %24 = vector.load %arg2[%c0_16, %c0_17] : memref<16x16xf32, #tpu.memory_space<vmem>>, vector<16x16xf32>
      %cst_18 = arith.constant dense<0.000000e+00> : vector<16xf32>
      %25 = vector.multi_reduction <add>, %24, %cst_18 [1] : vector<16x16xf32> to vector<16xf32>
      %26 = vector.shape_cast %25 : vector<16xf32> to vector<16x1xf32>
      %cst_19 = arith.constant 1.600000e+01 : f32
      %27 = vector.broadcast %cst_19 : f32 to vector<16x1xf32>
      %28 = arith.divf %26, %27 : vector<16x1xf32>
      %29 = vector.broadcast %28 : vector<16x1xf32> to vector<16x16xf32>
      %30 = arith.subf %24, %29 : vector<16x16xf32>
      %31 = arith.mulf %30, %30 : vector<16x16xf32>
      %cst_20 = arith.constant dense<0.000000e+00> : vector<16xf32>
      %32 = vector.multi_reduction <add>, %31, %cst_20 [1] : vector<16x16xf32> to vector<16xf32>
      %33 = vector.shape_cast %32 : vector<16xf32> to vector<16x1xf32>
      %cst_21 = arith.constant 1.600000e+01 : f32
      %34 = vector.broadcast %cst_21 : f32 to vector<16x1xf32>
      %35 = arith.divf %33, %34 : vector<16x1xf32>
      %36 = vector.broadcast %28 : vector<16x1xf32> to vector<16x16xf32>
      %37 = arith.subf %24, %36 : vector<16x16xf32>
      %cst_22 = arith.constant 9.99999974E-6 : f32
      %38 = vector.broadcast %cst_22 : f32 to vector<16x1xf32>
      %39 = arith.addf %35, %38 : vector<16x1xf32>
      %40 = math.rsqrt %39 : vector<16x1xf32>
      %41 = vector.broadcast %40 : vector<16x1xf32> to vector<16x16xf32>
      %42 = arith.mulf %37, %41 : vector<16x16xf32>
      %c0_23 = arith.constant 0 : index
      %c0_24 = arith.constant 0 : index
      %43 = vector.load %arg3[%c0_23, %c0_24] : memref<1x16xf32, #tpu.memory_space<vmem>>, vector<1x16xf32>
      %44 = vector.broadcast %43 : vector<1x16xf32> to vector<16x16xf32>
      %45 = arith.mulf %42, %44 : vector<16x16xf32>
      %c0_25 = arith.constant 0 : index
      %c0_26 = arith.constant 0 : index
      %46 = vector.load %arg4[%c0_25, %c0_26] : memref<1x16xf32, #tpu.memory_space<vmem>>, vector<1x16xf32>
      %47 = vector.broadcast %46 : vector<1x16xf32> to vector<16x16xf32>
      %48 = arith.addf %45, %47 : vector<16x16xf32>
      %49 = arith.truncf %48 : vector<16x16xf32> to vector<16x16xbf16>
      %c0_27 = arith.constant 0 : index
      %c0_28 = arith.constant 0 : index
      %50 = vector.load %arg12[%c0_27, %c0_28] : memref<16x16xbf16, #tpu.memory_space<vmem>>, vector<16x16xbf16>
      tpu.vector_store %arg12[%c0_27, %c0_28], %49 {strides = array<i32>} : memref<16x16xbf16, #tpu.memory_space<vmem>>, vector<16x16xbf16>,
      %cst_29 = arith.constant 0.000000e+00 : f32
      %51 = vector.broadcast %cst_29 : f32 to vector<16x16xf32>
      %c0_30 = arith.constant 0 : index
      %c0_31 = arith.constant 0 : index
      %52 = vector.load %arg13[%c0_30, %c0_31] : memref<16x16xf32, #tpu.memory_space<vmem>>, vector<16x16xf32>
      tpu.vector_store %arg13[%c0_30, %c0_31], %51 {strides = array<i32>} : memref<16x16xf32, #tpu.memory_space<vmem>>, vector<16x16xf32>,
    } else {
    }
    %c0 = arith.constant 0 : index
    %c0_1 = arith.constant 0 : index
    %3 = vector.load %arg12[%c0, %c0_1] : memref<16x16xbf16, #tpu.memory_space<vmem>>, vector<16x16xbf16>
    %c0_2 = arith.constant 0 : index
    %c0_3 = arith.constant 0 : index
    %4 = vector.load %arg5[%c0_2, %c0_3] : memref<16x64xbf16, #tpu.memory_space<vmem>>, vector<16x64xbf16>
    %cst = arith.constant dense<0.000000e+00> : vector<16x64xf32>
    %5 = tpu.matmul %3, %4, %cst {dimension_numbers = #tpu.dot_dimension_numbers<[1], [0], [0], [1], [0, 0, 1, 1], [], []>} : vector<16x16xbf16>, vector<16x64xbf16>, vector<16x64xf32> -> vector<16x64xf32>
    %c0_4 = arith.constant 0 : index
    %c0_5 = arith.constant 0 : index
    %6 = vector.load %arg6[%c0_4, %c0_5] : memref<1x64xf32, #tpu.memory_space<vmem>>, vector<1x64xf32>
    %7 = vector.broadcast %6 : vector<1x64xf32> to vector<16x64xf32>
    %8 = arith.addf %5, %7 : vector<16x64xf32>
    %9 = arith.negf %8 : vector<16x64xf32>
    %10 = math.exp %9 : vector<16x64xf32>
    %cst_6 = arith.constant 1.000000e+00 : f32
    %11 = vector.broadcast %cst_6 : f32 to vector<16x64xf32>
    %12 = arith.addf %11, %10 : vector<16x64xf32>
    %13 = arith.divf %11, %12 : vector<16x64xf32>
    %14 = arith.mulf %8, %13 : vector<16x64xf32>
    %c0_7 = arith.constant 0 : index
    %c0_8 = arith.constant 0 : index
    %15 = vector.load %arg13[%c0_7, %c0_8] : memref<16x16xf32, #tpu.memory_space<vmem>>, vector<16x16xf32>
    %16 = arith.truncf %14 : vector<16x64xf32> to vector<16x64xbf16>
    %c0_9 = arith.constant 0 : index
    %c0_10 = arith.constant 0 : index
    %17 = vector.load %arg7[%c0_9, %c0_10] : memref<64x16xbf16, #tpu.memory_space<vmem>>, vector<64x16xbf16>
    %cst_11 = arith.constant dense<0.000000e+00> : vector<16x16xf32>
    %18 = tpu.matmul %16, %17, %cst_11 {dimension_numbers = #tpu.dot_dimension_numbers<[1], [0], [0], [1], [0, 0, 1, 1], [], []>} : vector<16x64xbf16>, vector<64x16xbf16>, vector<16x16xf32> -> vector<16x16xf32>
    %19 = arith.addf %15, %18 : vector<16x16xf32>
    %c0_12 = arith.constant 0 : index
    %c0_13 = arith.constant 0 : index
    %20 = vector.load %arg13[%c0_12, %c0_13] : memref<16x16xf32, #tpu.memory_space<vmem>>, vector<16x16xf32>
    tpu.vector_store %arg13[%c0_12, %c0_13], %19 {strides = array<i32>} : memref<16x16xf32, #tpu.memory_space<vmem>>, vector<16x16xf32>,
    %c0_i32_14 = arith.constant 0 : i32
    %21 = arith.cmpi eq, %arg1, %c0_i32_14 : i32
    %22 = arith.extui %21 : i1 to i32
    %c0_i32_15 = arith.constant 0 : i32
    %23 = arith.cmpi ne, %22, %c0_i32_15 : i32
    scf.if %23 {
      %c0_16 = arith.constant 0 : index
      %c0_17 = arith.constant 0 : index
      %24 = vector.load %arg2[%c0_16, %c0_17] : memref<16x16xf32, #tpu.memory_space<vmem>>, vector<16x16xf32>
      %c0_18 = arith.constant 0 : index
      %c0_19 = arith.constant 0 : index
      %25 = vector.load %arg13[%c0_18, %c0_19] : memref<16x16xf32, #tpu.memory_space<vmem>>, vector<16x16xf32>
      %c0_20 = arith.constant 0 : index
      %c0_21 = arith.constant 0 : index
      %26 = vector.load %arg8[%c0_20, %c0_21] : memref<1x16xf32, #tpu.memory_space<vmem>>, vector<1x16xf32>
      %27 = vector.broadcast %26 : vector<1x16xf32> to vector<16x16xf32>
      %28 = arith.addf %25, %27 : vector<16x16xf32>
      %cst_22 = arith.constant 5.000000e-01 : f32
      %29 = vector.broadcast %cst_22 : f32 to vector<16x16xf32>
      %30 = arith.mulf %29, %28 : vector<16x16xf32>
      %31 = arith.addf %24, %30 : vector<16x16xf32>
      %cst_23 = arith.constant dense<0.000000e+00> : vector<16xf32>
      %32 = vector.multi_reduction <add>, %31, %cst_23 [1] : vector<16x16xf32> to vector<16xf32>
      %33 = vector.shape_cast %32 : vector<16xf32> to vector<16x1xf32>
      %cst_24 = arith.constant 1.600000e+01 : f32
      %34 = vector.broadcast %cst_24 : f32 to vector<16x1xf32>
      %35 = arith.divf %33, %34 : vector<16x1xf32>
      %36 = vector.broadcast %35 : vector<16x1xf32> to vector<16x16xf32>
      %37 = arith.subf %31, %36 : vector<16x16xf32>
      %38 = arith.mulf %37, %37 : vector<16x16xf32>
      %cst_25 = arith.constant dense<0.000000e+00> : vector<16xf32>
      %39 = vector.multi_reduction <add>, %38, %cst_25 [1] : vector<16x16xf32> to vector<16xf32>
      %40 = vector.shape_cast %39 : vector<16xf32> to vector<16x1xf32>
      %cst_26 = arith.constant 1.600000e+01 : f32
      %41 = vector.broadcast %cst_26 : f32 to vector<16x1xf32>
      %42 = arith.divf %40, %41 : vector<16x1xf32>
      %43 = vector.broadcast %35 : vector<16x1xf32> to vector<16x16xf32>
      %44 = arith.subf %31, %43 : vector<16x16xf32>
      %cst_27 = arith.constant 9.99999974E-6 : f32
      %45 = vector.broadcast %cst_27 : f32 to vector<16x1xf32>
      %46 = arith.addf %42, %45 : vector<16x1xf32>
      %47 = math.rsqrt %46 : vector<16x1xf32>
      %48 = vector.broadcast %47 : vector<16x1xf32> to vector<16x16xf32>
      %49 = arith.mulf %44, %48 : vector<16x16xf32>
      %c0_28 = arith.constant 0 : index
      %c0_29 = arith.constant 0 : index
      %50 = vector.load %arg9[%c0_28, %c0_29] : memref<1x16xf32, #tpu.memory_space<vmem>>, vector<1x16xf32>
      %51 = vector.broadcast %50 : vector<1x16xf32> to vector<16x16xf32>
      %52 = arith.mulf %49, %51 : vector<16x16xf32>
      %c0_30 = arith.constant 0 : index
      %c0_31 = arith.constant 0 : index
      %53 = vector.load %arg10[%c0_30, %c0_31] : memref<1x16xf32, #tpu.memory_space<vmem>>, vector<1x16xf32>
      %54 = vector.broadcast %53 : vector<1x16xf32> to vector<16x16xf32>
      %55 = arith.addf %52, %54 : vector<16x16xf32>
      %c0_32 = arith.constant 0 : index
      %c0_33 = arith.constant 0 : index
      %56 = vector.load %arg11[%c0_32, %c0_33] : memref<16x16xf32, #tpu.memory_space<vmem>>, vector<16x16xf32>
      tpu.vector_store %arg11[%c0_32, %c0_33], %55 {strides = array<i32>} : memref<16x16xf32, #tpu.memory_space<vmem>>, vector<16x16xf32>,
    } else {
    }
    return
  }
  func.func @transform_0(%arg0: i32, %arg1: i32) -> (i32, i32) {
    %c0_i32 = arith.constant 0 : i32
    %c0_i32_0 = arith.constant 0 : i32
    return %arg0, %c0_i32 : i32, i32
  }
  func.func @transform_1(%arg0: i32, %arg1: i32) -> (i32, i32) {
    %c0_i32 = arith.constant 0 : i32
    %c0_i32_0 = arith.constant 0 : i32
    %c0_i32_1 = arith.constant 0 : i32
    return %c0_i32, %c0_i32_0 : i32, i32
  }
  func.func @transform_2(%arg0: i32, %arg1: i32) -> (i32, i32) {
    %c0_i32 = arith.constant 0 : i32
    %c0_i32_0 = arith.constant 0 : i32
    %c0_i32_1 = arith.constant 0 : i32
    return %c0_i32, %c0_i32_0 : i32, i32
  }
  func.func @transform_3(%arg0: i32, %arg1: i32) -> (i32, i32) {
    %c0_i32 = arith.constant 0 : i32
    %c0_i32_0 = arith.constant 0 : i32
    return %c0_i32, %arg1 : i32, i32
  }
  func.func @transform_4(%arg0: i32, %arg1: i32) -> (i32, i32) {
    %c0_i32 = arith.constant 0 : i32
    %c0_i32_0 = arith.constant 0 : i32
    return %c0_i32, %arg1 : i32, i32
  }
  func.func @transform_5(%arg0: i32, %arg1: i32) -> (i32, i32) {
    %c0_i32 = arith.constant 0 : i32
    %c0_i32_0 = arith.constant 0 : i32
    return %arg1, %c0_i32 : i32, i32
  }
  func.func @transform_6(%arg0: i32, %arg1: i32) -> (i32, i32) {
    %c0_i32 = arith.constant 0 : i32
    %c0_i32_0 = arith.constant 0 : i32
    %c0_i32_1 = arith.constant 0 : i32
    return %c0_i32, %c0_i32_0 : i32, i32
  }
  func.func @transform_7(%arg0: i32, %arg1: i32) -> (i32, i32) {
    %c0_i32 = arith.constant 0 : i32
    %c0_i32_0 = arith.constant 0 : i32
    %c0_i32_1 = arith.constant 0 : i32
    return %c0_i32, %c0_i32_0 : i32, i32
  }
  func.func @transform_8(%arg0: i32, %arg1: i32) -> (i32, i32) {
    %c0_i32 = arith.constant 0 : i32
    %c0_i32_0 = arith.constant 0 : i32
    %c0_i32_1 = arith.constant 0 : i32
    return %c0_i32, %c0_i32_0 : i32, i32
  }
  func.func @transform_9(%arg0: i32, %arg1: i32) -> (i32, i32) {
    %c0_i32 = arith.constant 0 : i32
    %c0_i32_0 = arith.constant 0 : i32
    return %arg0, %c0_i32 : i32, i32
  }
}

module attributes {stable_mosaic.version = 11 : i64} {
  func.func @kernel(%arg0: i32, %arg1: memref<16x16xf32, #tpu.memory_space<vmem>>, %arg2: memref<16x32xbf16, #tpu.memory_space<vmem>>, %arg3: memref<1x32xf32, #tpu.memory_space<vmem>>, %arg4: memref<16x32xf32, #tpu.memory_space<vmem>>) attributes {dimension_semantics = [#tpu.dimension_semantics<parallel>], iteration_bounds = array<i64: 1>, scalar_prefetch = 0 : i64, scratch_operands = 0 : i64, tpu.core_type = #tpu.core_type<tc>, window_params = [{transform_indices = @transform_0, window_bounds = array<i64: 16, 16>}, {pipeline_mode = #tpu.pipeline_mode<synchronous>, transform_indices = @transform_1, window_bounds = array<i64: 16, 32>}, {pipeline_mode = #tpu.pipeline_mode<synchronous>, transform_indices = @transform_2, window_bounds = array<i64: 1, 32>}, {transform_indices = @transform_3, window_bounds = array<i64: 16, 32>}]} {
    %c0 = arith.constant 0 : index
    %c0_0 = arith.constant 0 : index
    %0 = vector.load %arg1[%c0, %c0_0] : memref<16x16xf32, #tpu.memory_space<vmem>>, vector<16x16xf32>
    %1 = arith.truncf %0 : vector<16x16xf32> to vector<16x16xbf16>
    %c0_1 = arith.constant 0 : index
    %c0_2 = arith.constant 0 : index
    %2 = vector.load %arg2[%c0_1, %c0_2] : memref<16x32xbf16, #tpu.memory_space<vmem>>, vector<16x32xbf16>
    %cst = arith.constant dense<0.000000e+00> : vector<16x32xf32>
    %3 = tpu.matmul %1, %2, %cst {dimension_numbers = #tpu.dot_dimension_numbers<[1], [0], [0], [1], [0, 0, 1, 1], [], []>} : vector<16x16xbf16>, vector<16x32xbf16>, vector<16x32xf32> -> vector<16x32xf32>
    %c0_3 = arith.constant 0 : index
    %c0_4 = arith.constant 0 : index
    %4 = vector.load %arg3[%c0_3, %c0_4] : memref<1x32xf32, #tpu.memory_space<vmem>>, vector<1x32xf32>
    %5 = vector.broadcast %4 : vector<1x32xf32> to vector<16x32xf32>
    %6 = arith.addf %3, %5 : vector<16x32xf32>
    %c0_5 = arith.constant 0 : index
    %c0_6 = arith.constant 0 : index
    %7 = vector.load %arg4[%c0_5, %c0_6] : memref<16x32xf32, #tpu.memory_space<vmem>>, vector<16x32xf32>
    tpu.vector_store %arg4[%c0_5, %c0_6], %6 {strides = array<i32>} : memref<16x32xf32, #tpu.memory_space<vmem>>, vector<16x32xf32>,
    return
  }
  func.func @transform_0(%arg0: i32) -> (i32, i32) {
    %c0_i32 = arith.constant 0 : i32
    %c0_i32_0 = arith.constant 0 : i32
    return %arg0, %c0_i32 : i32, i32
  }
  func.func @transform_1(%arg0: i32) -> (i32, i32) {
    %c0_i32 = arith.constant 0 : i32
    %c0_i32_0 = arith.constant 0 : i32
    %c0_i32_1 = arith.constant 0 : i32
    return %c0_i32, %c0_i32_0 : i32, i32
  }
  func.func @transform_2(%arg0: i32) -> (i32, i32) {
    %c0_i32 = arith.constant 0 : i32
    %c0_i32_0 = arith.constant 0 : i32
    %c0_i32_1 = arith.constant 0 : i32
    return %c0_i32, %c0_i32_0 : i32, i32
  }
  func.func @transform_3(%arg0: i32) -> (i32, i32) {
    %c0_i32 = arith.constant 0 : i32
    %c0_i32_0 = arith.constant 0 : i32
    return %arg0, %c0_i32 : i32, i32
  }
}

module attributes {stable_mosaic.version = 11 : i64} {
  func.func @kernel(%arg0: i32, %arg1: memref<1x8x32xf32, #tpu.memory_space<vmem>>, %arg2: memref<5x32x16xbf16, #tpu.memory_space<vmem>>, %arg3: memref<1x16xf32, #tpu.memory_space<vmem>>, %arg4: memref<1x8x16xf32, #tpu.memory_space<vmem>>, %arg5: memref<1x1x16xf32, #tpu.memory_space<vmem>>, %arg6: memref<1x1x16xf32, #tpu.memory_space<vmem>>) attributes {dimension_semantics = [#tpu.dimension_semantics<parallel>], iteration_bounds = array<i64: 2>, scalar_prefetch = 0 : i64, scratch_operands = 0 : i64, tpu.core_type = #tpu.core_type<tc>, window_params = [{transform_indices = @transform_0, window_bounds = array<i64: 1, 8, 32>}, {pipeline_mode = #tpu.pipeline_mode<synchronous>, transform_indices = @transform_1, window_bounds = array<i64: 5, 32, 16>}, {pipeline_mode = #tpu.pipeline_mode<synchronous>, transform_indices = @transform_2, window_bounds = array<i64: 1, 16>}, {transform_indices = @transform_3, window_bounds = array<i64: 1, 8, 16>}, {transform_indices = @transform_4, window_bounds = array<i64: 1, 1, 16>}, {transform_indices = @transform_5, window_bounds = array<i64: 1, 1, 16>}]} {
    %c0 = arith.constant 0 : index
    %c0_0 = arith.constant 0 : index
    %c0_1 = arith.constant 0 : index
    %0 = vector.load %arg1[%c0, %c0_0, %c0_1] : memref<1x8x32xf32, #tpu.memory_space<vmem>>, vector<1x8x32xf32>
    %1 = vector.shape_cast %0 : vector<1x8x32xf32> to vector<8x32xf32>
    %2 = tpu.iota {dimensions = array<i32: 0>} : vector<8x1xi32>
    %cst = arith.constant 0.000000e+00 : f32
    %3 = vector.broadcast %cst : f32 to vector<8x16xf32>
    %c2_i32 = arith.constant 2 : i32
    %4 = tpu.dynamic_rotate %1 by %c2_i32 dim 0 : vector<8x32xf32>, i32 -> vector<8x32xf32>
    %c-2_i32 = arith.constant -2 : i32
    %5 = vector.broadcast %c-2_i32 : i32 to vector<8x1xi32>
    %6 = arith.addi %2, %5 : vector<8x1xi32>
    %c0_i32 = arith.constant 0 : i32
    %7 = vector.broadcast %c0_i32 : i32 to vector<8x1xi32>
    %8 = arith.cmpi sge, %6, %7 : vector<8x1xi32>
    %c-2_i32_2 = arith.constant -2 : i32
    %9 = vector.broadcast %c-2_i32_2 : i32 to vector<8x1xi32>
    %10 = arith.addi %2, %9 : vector<8x1xi32>
    %c8_i32 = arith.constant 8 : i32
    %11 = vector.broadcast %c8_i32 : i32 to vector<8x1xi32>
    %12 = arith.cmpi slt, %10, %11 : vector<8x1xi32>
    %13 = arith.andi %8, %12 : vector<8x1xi1>
    %cst_3 = arith.constant 0.000000e+00 : f32
    %14 = vector.shape_cast %13 : vector<8x1xi1> to vector<8x1xi1>
    %15 = vector.broadcast %14 : vector<8x1xi1> to vector<8x32xi1>
    %16 = vector.broadcast %cst_3 : f32 to vector<8x32xf32>
    %17 = arith.select %15, %4, %16 : vector<8x32xi1>, vector<8x32xf32>
    %18 = arith.truncf %17 : vector<8x32xf32> to vector<8x32xbf16>
    %c0_4 = arith.constant 0 : index
    %c0_5 = arith.constant 0 : index
    %c0_6 = arith.constant 0 : index
    %19 = vector.load %arg2[%c0_4, %c0_5, %c0_6] : memref<5x32x16xbf16, #tpu.memory_space<vmem>>, vector<1x32x16xbf16>
    %20 = vector.shape_cast %19 : vector<1x32x16xbf16> to vector<32x16xbf16>
    %cst_7 = arith.constant dense<0.000000e+00> : vector<8x16xf32>
    %21 = tpu.matmul %18, %20, %cst_7 {dimension_numbers = #tpu.dot_dimension_numbers<[1], [0], [0], [1], [0, 0, 1, 1], [], []>} : vector<8x32xbf16>, vector<32x16xbf16>, vector<8x16xf32> -> vector<8x16xf32>
    %22 = arith.addf %3, %21 : vector<8x16xf32>
    %c1_i32 = arith.constant 1 : i32
    %23 = tpu.dynamic_rotate %1 by %c1_i32 dim 0 : vector<8x32xf32>, i32 -> vector<8x32xf32>
    %c-1_i32 = arith.constant -1 : i32
    %24 = vector.broadcast %c-1_i32 : i32 to vector<8x1xi32>
    %25 = arith.addi %2, %24 : vector<8x1xi32>
    %c0_i32_8 = arith.constant 0 : i32
    %26 = vector.broadcast %c0_i32_8 : i32 to vector<8x1xi32>
    %27 = arith.cmpi sge, %25, %26 : vector<8x1xi32>
    %c-1_i32_9 = arith.constant -1 : i32
    %28 = vector.broadcast %c-1_i32_9 : i32 to vector<8x1xi32>
    %29 = arith.addi %2, %28 : vector<8x1xi32>
    %c8_i32_10 = arith.constant 8 : i32
    %30 = vector.broadcast %c8_i32_10 : i32 to vector<8x1xi32>
    %31 = arith.cmpi slt, %29, %30 : vector<8x1xi32>
    %32 = arith.andi %27, %31 : vector<8x1xi1>
    %cst_11 = arith.constant 0.000000e+00 : f32
    %33 = vector.shape_cast %32 : vector<8x1xi1> to vector<8x1xi1>
    %34 = vector.broadcast %33 : vector<8x1xi1> to vector<8x32xi1>
    %35 = vector.broadcast %cst_11 : f32 to vector<8x32xf32>
    %36 = arith.select %34, %23, %35 : vector<8x32xi1>, vector<8x32xf32>
    %37 = arith.truncf %36 : vector<8x32xf32> to vector<8x32xbf16>
    %c1 = arith.constant 1 : index
    %c0_12 = arith.constant 0 : index
    %c0_13 = arith.constant 0 : index
    %38 = vector.load %arg2[%c1, %c0_12, %c0_13] : memref<5x32x16xbf16, #tpu.memory_space<vmem>>, vector<1x32x16xbf16>
    %39 = vector.shape_cast %38 : vector<1x32x16xbf16> to vector<32x16xbf16>
    %cst_14 = arith.constant dense<0.000000e+00> : vector<8x16xf32>
    %40 = tpu.matmul %37, %39, %cst_14 {dimension_numbers = #tpu.dot_dimension_numbers<[1], [0], [0], [1], [0, 0, 1, 1], [], []>} : vector<8x32xbf16>, vector<32x16xbf16>, vector<8x16xf32> -> vector<8x16xf32>
    %41 = arith.addf %22, %40 : vector<8x16xf32>
    %c0_i32_15 = arith.constant 0 : i32
    %42 = vector.broadcast %c0_i32_15 : i32 to vector<8x1xi32>
    %43 = arith.addi %2, %42 : vector<8x1xi32>
    %c0_i32_16 = arith.constant 0 : i32
    %44 = vector.broadcast %c0_i32_16 : i32 to vector<8x1xi32>
    %45 = arith.cmpi sge, %43, %44 : vector<8x1xi32>
    %c0_i32_17 = arith.constant 0 : i32
    %46 = vector.broadcast %c0_i32_17 : i32 to vector<8x1xi32>
    %47 = arith.addi %2, %46 : vector<8x1xi32>
    %c8_i32_18 = arith.constant 8 : i32
    %48 = vector.broadcast %c8_i32_18 : i32 to vector<8x1xi32>
    %49 = arith.cmpi slt, %47, %48 : vector<8x1xi32>
    %50 = arith.andi %45, %49 : vector<8x1xi1>
    %cst_19 = arith.constant 0.000000e+00 : f32
    %51 = vector.shape_cast %50 : vector<8x1xi1> to vector<8x1xi1>
    %52 = vector.broadcast %51 : vector<8x1xi1> to vector<8x32xi1>
    %53 = vector.broadcast %cst_19 : f32 to vector<8x32xf32>
    %54 = arith.select %52, %1, %53 : vector<8x32xi1>, vector<8x32xf32>
    %55 = arith.truncf %54 : vector<8x32xf32> to vector<8x32xbf16>
    %c2 = arith.constant 2 : index
    %c0_20 = arith.constant 0 : index
    %c0_21 = arith.constant 0 : index
    %56 = vector.load %arg2[%c2, %c0_20, %c0_21] : memref<5x32x16xbf16, #tpu.memory_space<vmem>>, vector<1x32x16xbf16>
    %57 = vector.shape_cast %56 : vector<1x32x16xbf16> to vector<32x16xbf16>
    %cst_22 = arith.constant dense<0.000000e+00> : vector<8x16xf32>
    %58 = tpu.matmul %55, %57, %cst_22 {dimension_numbers = #tpu.dot_dimension_numbers<[1], [0], [0], [1], [0, 0, 1, 1], [], []>} : vector<8x32xbf16>, vector<32x16xbf16>, vector<8x16xf32> -> vector<8x16xf32>
    %59 = arith.addf %41, %58 : vector<8x16xf32>
    %c7_i32 = arith.constant 7 : i32
    %60 = tpu.dynamic_rotate %1 by %c7_i32 dim 0 : vector<8x32xf32>, i32 -> vector<8x32xf32>
    %c1_i32_23 = arith.constant 1 : i32
    %61 = vector.broadcast %c1_i32_23 : i32 to vector<8x1xi32>
    %62 = arith.addi %2, %61 : vector<8x1xi32>
    %c0_i32_24 = arith.constant 0 : i32
    %63 = vector.broadcast %c0_i32_24 : i32 to vector<8x1xi32>
    %64 = arith.cmpi sge, %62, %63 : vector<8x1xi32>
    %c1_i32_25 = arith.constant 1 : i32
    %65 = vector.broadcast %c1_i32_25 : i32 to vector<8x1xi32>
    %66 = arith.addi %2, %65 : vector<8x1xi32>
    %c8_i32_26 = arith.constant 8 : i32
    %67 = vector.broadcast %c8_i32_26 : i32 to vector<8x1xi32>
    %68 = arith.cmpi slt, %66, %67 : vector<8x1xi32>
    %69 = arith.andi %64, %68 : vector<8x1xi1>
    %cst_27 = arith.constant 0.000000e+00 : f32
    %70 = vector.shape_cast %69 : vector<8x1xi1> to vector<8x1xi1>
    %71 = vector.broadcast %70 : vector<8x1xi1> to vector<8x32xi1>
    %72 = vector.broadcast %cst_27 : f32 to vector<8x32xf32>
    %73 = arith.select %71, %60, %72 : vector<8x32xi1>, vector<8x32xf32>
    %74 = arith.truncf %73 : vector<8x32xf32> to vector<8x32xbf16>
    %c3 = arith.constant 3 : index
    %c0_28 = arith.constant 0 : index
    %c0_29 = arith.constant 0 : index
    %75 = vector.load %arg2[%c3, %c0_28, %c0_29] : memref<5x32x16xbf16, #tpu.memory_space<vmem>>, vector<1x32x16xbf16>
    %76 = vector.shape_cast %75 : vector<1x32x16xbf16> to vector<32x16xbf16>
    %cst_30 = arith.constant dense<0.000000e+00> : vector<8x16xf32>
    %77 = tpu.matmul %74, %76, %cst_30 {dimension_numbers = #tpu.dot_dimension_numbers<[1], [0], [0], [1], [0, 0, 1, 1], [], []>} : vector<8x32xbf16>, vector<32x16xbf16>, vector<8x16xf32> -> vector<8x16xf32>
    %78 = arith.addf %59, %77 : vector<8x16xf32>
    %c6_i32 = arith.constant 6 : i32
    %79 = tpu.dynamic_rotate %1 by %c6_i32 dim 0 : vector<8x32xf32>, i32 -> vector<8x32xf32>
    %c2_i32_31 = arith.constant 2 : i32
    %80 = vector.broadcast %c2_i32_31 : i32 to vector<8x1xi32>
    %81 = arith.addi %2, %80 : vector<8x1xi32>
    %c0_i32_32 = arith.constant 0 : i32
    %82 = vector.broadcast %c0_i32_32 : i32 to vector<8x1xi32>
    %83 = arith.cmpi sge, %81, %82 : vector<8x1xi32>
    %c2_i32_33 = arith.constant 2 : i32
    %84 = vector.broadcast %c2_i32_33 : i32 to vector<8x1xi32>
    %85 = arith.addi %2, %84 : vector<8x1xi32>
    %c8_i32_34 = arith.constant 8 : i32
    %86 = vector.broadcast %c8_i32_34 : i32 to vector<8x1xi32>
    %87 = arith.cmpi slt, %85, %86 : vector<8x1xi32>
    %88 = arith.andi %83, %87 : vector<8x1xi1>
    %cst_35 = arith.constant 0.000000e+00 : f32
    %89 = vector.shape_cast %88 : vector<8x1xi1> to vector<8x1xi1>
    %90 = vector.broadcast %89 : vector<8x1xi1> to vector<8x32xi1>
    %91 = vector.broadcast %cst_35 : f32 to vector<8x32xf32>
    %92 = arith.select %90, %79, %91 : vector<8x32xi1>, vector<8x32xf32>
    %93 = arith.truncf %92 : vector<8x32xf32> to vector<8x32xbf16>
    %c4 = arith.constant 4 : index
    %c0_36 = arith.constant 0 : index
    %c0_37 = arith.constant 0 : index
    %94 = vector.load %arg2[%c4, %c0_36, %c0_37] : memref<5x32x16xbf16, #tpu.memory_space<vmem>>, vector<1x32x16xbf16>
    %95 = vector.shape_cast %94 : vector<1x32x16xbf16> to vector<32x16xbf16>
    %cst_38 = arith.constant dense<0.000000e+00> : vector<8x16xf32>
    %96 = tpu.matmul %93, %95, %cst_38 {dimension_numbers = #tpu.dot_dimension_numbers<[1], [0], [0], [1], [0, 0, 1, 1], [], []>} : vector<8x32xbf16>, vector<32x16xbf16>, vector<8x16xf32> -> vector<8x16xf32>
    %97 = arith.addf %78, %96 : vector<8x16xf32>
    %c0_39 = arith.constant 0 : index
    %c0_40 = arith.constant 0 : index
    %98 = vector.load %arg3[%c0_39, %c0_40] : memref<1x16xf32, #tpu.memory_space<vmem>>, vector<1x16xf32>
    %99 = vector.broadcast %98 : vector<1x16xf32> to vector<8x16xf32>
    %100 = arith.addf %97, %99 : vector<8x16xf32>
    %101 = vector.shape_cast %100 : vector<8x16xf32> to vector<1x8x16xf32>
    %c0_41 = arith.constant 0 : index
    %c0_42 = arith.constant 0 : index
    %c0_43 = arith.constant 0 : index
    %102 = vector.load %arg4[%c0_41, %c0_42, %c0_43] : memref<1x8x16xf32, #tpu.memory_space<vmem>>, vector<1x8x16xf32>
    tpu.vector_store %arg4[%c0_41, %c0_42, %c0_43], %101 {strides = array<i32>} : memref<1x8x16xf32, #tpu.memory_space<vmem>>, vector<1x8x16xf32>,
    %cst_44 = arith.constant dense<0.000000e+00> : vector<16xf32>
    %103 = vector.multi_reduction <add>, %100, %cst_44 [0] : vector<8x16xf32> to vector<16xf32>
    %104 = vector.shape_cast %103 : vector<16xf32> to vector<1x16xf32>
    %105 = vector.shape_cast %104 : vector<1x16xf32> to vector<1x1x16xf32>
    %c0_45 = arith.constant 0 : index
    %c0_46 = arith.constant 0 : index
    %c0_47 = arith.constant 0 : index
    %106 = vector.load %arg5[%c0_45, %c0_46, %c0_47] : memref<1x1x16xf32, #tpu.memory_space<vmem>>, vector<1x1x16xf32>
    tpu.vector_store %arg5[%c0_45, %c0_46, %c0_47], %105 {strides = array<i32>} : memref<1x1x16xf32, #tpu.memory_space<vmem>>, vector<1x1x16xf32>,
    %107 = arith.mulf %100, %100 : vector<8x16xf32>
    %cst_48 = arith.constant dense<0.000000e+00> : vector<16xf32>
    %108 = vector.multi_reduction <add>, %107, %cst_48 [0] : vector<8x16xf32> to vector<16xf32>
    %109 = vector.shape_cast %108 : vector<16xf32> to vector<1x16xf32>
    %110 = vector.shape_cast %109 : vector<1x16xf32> to vector<1x1x16xf32>
    %c0_49 = arith.constant 0 : index
    %c0_50 = arith.constant 0 : index
    %c0_51 = arith.constant 0 : index
    %111 = vector.load %arg6[%c0_49, %c0_50, %c0_51] : memref<1x1x16xf32, #tpu.memory_space<vmem>>, vector<1x1x16xf32>
    tpu.vector_store %arg6[%c0_49, %c0_50, %c0_51], %110 {strides = array<i32>} : memref<1x1x16xf32, #tpu.memory_space<vmem>>, vector<1x1x16xf32>,
    return
  }
  func.func @transform_0(%arg0: i32) -> (i32, i32, i32) {
    %c0_i32 = arith.constant 0 : i32
    %c0_i32_0 = arith.constant 0 : i32
    %c0_i32_1 = arith.constant 0 : i32
    return %arg0, %c0_i32, %c0_i32_0 : i32, i32, i32
  }
  func.func @transform_1(%arg0: i32) -> (i32, i32, i32) {
    %c0_i32 = arith.constant 0 : i32
    %c0_i32_0 = arith.constant 0 : i32
    %c0_i32_1 = arith.constant 0 : i32
    %c0_i32_2 = arith.constant 0 : i32
    return %c0_i32, %c0_i32_0, %c0_i32_1 : i32, i32, i32
  }
  func.func @transform_2(%arg0: i32) -> (i32, i32) {
    %c0_i32 = arith.constant 0 : i32
    %c0_i32_0 = arith.constant 0 : i32
    %c0_i32_1 = arith.constant 0 : i32
    return %c0_i32, %c0_i32_0 : i32, i32
  }
  func.func @transform_3(%arg0: i32) -> (i32, i32, i32) {
    %c0_i32 = arith.constant 0 : i32
    %c0_i32_0 = arith.constant 0 : i32
    %c0_i32_1 = arith.constant 0 : i32
    return %arg0, %c0_i32, %c0_i32_0 : i32, i32, i32
  }
  func.func @transform_4(%arg0: i32) -> (i32, i32, i32) {
    %c0_i32 = arith.constant 0 : i32
    %c0_i32_0 = arith.constant 0 : i32
    %c0_i32_1 = arith.constant 0 : i32
    return %arg0, %c0_i32, %c0_i32_0 : i32, i32, i32
  }
  func.func @transform_5(%arg0: i32) -> (i32, i32, i32) {
    %c0_i32 = arith.constant 0 : i32
    %c0_i32_0 = arith.constant 0 : i32
    %c0_i32_1 = arith.constant 0 : i32
    return %arg0, %c0_i32, %c0_i32_0 : i32, i32, i32
  }
}

module attributes {stable_mosaic.version = 11 : i64} {
  func.func @kernel(%arg0: i32, %arg1: memref<1x8x16xf32, #tpu.memory_space<vmem>>, %arg2: memref<1x16xf32, #tpu.memory_space<vmem>>, %arg3: memref<1x16xf32, #tpu.memory_space<vmem>>, %arg4: memref<5x16x16xbf16, #tpu.memory_space<vmem>>, %arg5: memref<1x16xf32, #tpu.memory_space<vmem>>, %arg6: memref<1x8x16xf32, #tpu.memory_space<vmem>>, %arg7: memref<1x1x16xf32, #tpu.memory_space<vmem>>, %arg8: memref<1x1x16xf32, #tpu.memory_space<vmem>>) attributes {dimension_semantics = [#tpu.dimension_semantics<parallel>], iteration_bounds = array<i64: 2>, scalar_prefetch = 0 : i64, scratch_operands = 0 : i64, tpu.core_type = #tpu.core_type<tc>, window_params = [{transform_indices = @transform_0, window_bounds = array<i64: 1, 8, 16>}, {pipeline_mode = #tpu.pipeline_mode<synchronous>, transform_indices = @transform_1, window_bounds = array<i64: 1, 16>}, {pipeline_mode = #tpu.pipeline_mode<synchronous>, transform_indices = @transform_2, window_bounds = array<i64: 1, 16>}, {pipeline_mode = #tpu.pipeline_mode<synchronous>, transform_indices = @transform_3, window_bounds = array<i64: 5, 16, 16>}, {pipeline_mode = #tpu.pipeline_mode<synchronous>, transform_indices = @transform_4, window_bounds = array<i64: 1, 16>}, {transform_indices = @transform_5, window_bounds = array<i64: 1, 8, 16>}, {transform_indices = @transform_6, window_bounds = array<i64: 1, 1, 16>}, {transform_indices = @transform_7, window_bounds = array<i64: 1, 1, 16>}]} {
    %c0 = arith.constant 0 : index
    %c0_0 = arith.constant 0 : index
    %c0_1 = arith.constant 0 : index
    %0 = vector.load %arg1[%c0, %c0_0, %c0_1] : memref<1x8x16xf32, #tpu.memory_space<vmem>>, vector<1x8x16xf32>
    %1 = vector.shape_cast %0 : vector<1x8x16xf32> to vector<8x16xf32>
    %c0_2 = arith.constant 0 : index
    %c0_3 = arith.constant 0 : index
    %2 = vector.load %arg2[%c0_2, %c0_3] : memref<1x16xf32, #tpu.memory_space<vmem>>, vector<1x16xf32>
    %3 = vector.broadcast %2 : vector<1x16xf32> to vector<8x16xf32>
    %4 = arith.mulf %1, %3 : vector<8x16xf32>
    %c0_4 = arith.constant 0 : index
    %c0_5 = arith.constant 0 : index
    %5 = vector.load %arg3[%c0_4, %c0_5] : memref<1x16xf32, #tpu.memory_space<vmem>>, vector<1x16xf32>
    %6 = vector.broadcast %5 : vector<1x16xf32> to vector<8x16xf32>
    %7 = arith.addf %4, %6 : vector<8x16xf32>
    %8 = math.tanh %7 : vector<8x16xf32>
    %9 = tpu.iota {dimensions = array<i32: 0>} : vector<8x1xi32>
    %cst = arith.constant 0.000000e+00 : f32
    %10 = vector.broadcast %cst : f32 to vector<8x16xf32>
    %c2_i32 = arith.constant 2 : i32
    %11 = tpu.dynamic_rotate %8 by %c2_i32 dim 0 : vector<8x16xf32>, i32 -> vector<8x16xf32>
    %c-2_i32 = arith.constant -2 : i32
    %12 = vector.broadcast %c-2_i32 : i32 to vector<8x1xi32>
    %13 = arith.addi %9, %12 : vector<8x1xi32>
    %c0_i32 = arith.constant 0 : i32
    %14 = vector.broadcast %c0_i32 : i32 to vector<8x1xi32>
    %15 = arith.cmpi sge, %13, %14 : vector<8x1xi32>
    %c-2_i32_6 = arith.constant -2 : i32
    %16 = vector.broadcast %c-2_i32_6 : i32 to vector<8x1xi32>
    %17 = arith.addi %9, %16 : vector<8x1xi32>
    %c8_i32 = arith.constant 8 : i32
    %18 = vector.broadcast %c8_i32 : i32 to vector<8x1xi32>
    %19 = arith.cmpi slt, %17, %18 : vector<8x1xi32>
    %20 = arith.andi %15, %19 : vector<8x1xi1>
    %cst_7 = arith.constant 0.000000e+00 : f32
    %21 = vector.shape_cast %20 : vector<8x1xi1> to vector<8x1xi1>
    %22 = vector.broadcast %21 : vector<8x1xi1> to vector<8x16xi1>
    %23 = vector.broadcast %cst_7 : f32 to vector<8x16xf32>
    %24 = arith.select %22, %11, %23 : vector<8x16xi1>, vector<8x16xf32>
    %25 = arith.truncf %24 : vector<8x16xf32> to vector<8x16xbf16>
    %c0_8 = arith.constant 0 : index
    %c0_9 = arith.constant 0 : index
    %c0_10 = arith.constant 0 : index
    %26 = vector.load %arg4[%c0_8, %c0_9, %c0_10] : memref<5x16x16xbf16, #tpu.memory_space<vmem>>, vector<1x16x16xbf16>
    %27 = vector.shape_cast %26 : vector<1x16x16xbf16> to vector<16x16xbf16>
    %cst_11 = arith.constant dense<0.000000e+00> : vector<8x16xf32>
    %28 = tpu.matmul %25, %27, %cst_11 {dimension_numbers = #tpu.dot_dimension_numbers<[1], [0], [0], [1], [0, 0, 1, 1], [], []>} : vector<8x16xbf16>, vector<16x16xbf16>, vector<8x16xf32> -> vector<8x16xf32>
    %29 = arith.addf %10, %28 : vector<8x16xf32>
    %c1_i32 = arith.constant 1 : i32
    %30 = tpu.dynamic_rotate %8 by %c1_i32 dim 0 : vector<8x16xf32>, i32 -> vector<8x16xf32>
    %c-1_i32 = arith.constant -1 : i32
    %31 = vector.broadcast %c-1_i32 : i32 to vector<8x1xi32>
    %32 = arith.addi %9, %31 : vector<8x1xi32>
    %c0_i32_12 = arith.constant 0 : i32
    %33 = vector.broadcast %c0_i32_12 : i32 to vector<8x1xi32>
    %34 = arith.cmpi sge, %32, %33 : vector<8x1xi32>
    %c-1_i32_13 = arith.constant -1 : i32
    %35 = vector.broadcast %c-1_i32_13 : i32 to vector<8x1xi32>
    %36 = arith.addi %9, %35 : vector<8x1xi32>
    %c8_i32_14 = arith.constant 8 : i32
    %37 = vector.broadcast %c8_i32_14 : i32 to vector<8x1xi32>
    %38 = arith.cmpi slt, %36, %37 : vector<8x1xi32>
    %39 = arith.andi %34, %38 : vector<8x1xi1>
    %cst_15 = arith.constant 0.000000e+00 : f32
    %40 = vector.shape_cast %39 : vector<8x1xi1> to vector<8x1xi1>
    %41 = vector.broadcast %40 : vector<8x1xi1> to vector<8x16xi1>
    %42 = vector.broadcast %cst_15 : f32 to vector<8x16xf32>
    %43 = arith.select %41, %30, %42 : vector<8x16xi1>, vector<8x16xf32>
    %44 = arith.truncf %43 : vector<8x16xf32> to vector<8x16xbf16>
    %c1 = arith.constant 1 : index
    %c0_16 = arith.constant 0 : index
    %c0_17 = arith.constant 0 : index
    %45 = vector.load %arg4[%c1, %c0_16, %c0_17] : memref<5x16x16xbf16, #tpu.memory_space<vmem>>, vector<1x16x16xbf16>
    %46 = vector.shape_cast %45 : vector<1x16x16xbf16> to vector<16x16xbf16>
    %cst_18 = arith.constant dense<0.000000e+00> : vector<8x16xf32>
    %47 = tpu.matmul %44, %46, %cst_18 {dimension_numbers = #tpu.dot_dimension_numbers<[1], [0], [0], [1], [0, 0, 1, 1], [], []>} : vector<8x16xbf16>, vector<16x16xbf16>, vector<8x16xf32> -> vector<8x16xf32>
    %48 = arith.addf %29, %47 : vector<8x16xf32>
    %c0_i32_19 = arith.constant 0 : i32
    %49 = vector.broadcast %c0_i32_19 : i32 to vector<8x1xi32>
    %50 = arith.addi %9, %49 : vector<8x1xi32>
    %c0_i32_20 = arith.constant 0 : i32
    %51 = vector.broadcast %c0_i32_20 : i32 to vector<8x1xi32>
    %52 = arith.cmpi sge, %50, %51 : vector<8x1xi32>
    %c0_i32_21 = arith.constant 0 : i32
    %53 = vector.broadcast %c0_i32_21 : i32 to vector<8x1xi32>
    %54 = arith.addi %9, %53 : vector<8x1xi32>
    %c8_i32_22 = arith.constant 8 : i32
    %55 = vector.broadcast %c8_i32_22 : i32 to vector<8x1xi32>
    %56 = arith.cmpi slt, %54, %55 : vector<8x1xi32>
    %57 = arith.andi %52, %56 : vector<8x1xi1>
    %cst_23 = arith.constant 0.000000e+00 : f32
    %58 = vector.shape_cast %57 : vector<8x1xi1> to vector<8x1xi1>
    %59 = vector.broadcast %58 : vector<8x1xi1> to vector<8x16xi1>
    %60 = vector.broadcast %cst_23 : f32 to vector<8x16xf32>
    %61 = arith.select %59, %8, %60 : vector<8x16xi1>, vector<8x16xf32>
    %62 = arith.truncf %61 : vector<8x16xf32> to vector<8x16xbf16>
    %c2 = arith.constant 2 : index
    %c0_24 = arith.constant 0 : index
    %c0_25 = arith.constant 0 : index
    %63 = vector.load %arg4[%c2, %c0_24, %c0_25] : memref<5x16x16xbf16, #tpu.memory_space<vmem>>, vector<1x16x16xbf16>
    %64 = vector.shape_cast %63 : vector<1x16x16xbf16> to vector<16x16xbf16>
    %cst_26 = arith.constant dense<0.000000e+00> : vector<8x16xf32>
    %65 = tpu.matmul %62, %64, %cst_26 {dimension_numbers = #tpu.dot_dimension_numbers<[1], [0], [0], [1], [0, 0, 1, 1], [], []>} : vector<8x16xbf16>, vector<16x16xbf16>, vector<8x16xf32> -> vector<8x16xf32>
    %66 = arith.addf %48, %65 : vector<8x16xf32>
    %c7_i32 = arith.constant 7 : i32
    %67 = tpu.dynamic_rotate %8 by %c7_i32 dim 0 : vector<8x16xf32>, i32 -> vector<8x16xf32>
    %c1_i32_27 = arith.constant 1 : i32
    %68 = vector.broadcast %c1_i32_27 : i32 to vector<8x1xi32>
    %69 = arith.addi %9, %68 : vector<8x1xi32>
    %c0_i32_28 = arith.constant 0 : i32
    %70 = vector.broadcast %c0_i32_28 : i32 to vector<8x1xi32>
    %71 = arith.cmpi sge, %69, %70 : vector<8x1xi32>
    %c1_i32_29 = arith.constant 1 : i32
    %72 = vector.broadcast %c1_i32_29 : i32 to vector<8x1xi32>
    %73 = arith.addi %9, %72 : vector<8x1xi32>
    %c8_i32_30 = arith.constant 8 : i32
    %74 = vector.broadcast %c8_i32_30 : i32 to vector<8x1xi32>
    %75 = arith.cmpi slt, %73, %74 : vector<8x1xi32>
    %76 = arith.andi %71, %75 : vector<8x1xi1>
    %cst_31 = arith.constant 0.000000e+00 : f32
    %77 = vector.shape_cast %76 : vector<8x1xi1> to vector<8x1xi1>
    %78 = vector.broadcast %77 : vector<8x1xi1> to vector<8x16xi1>
    %79 = vector.broadcast %cst_31 : f32 to vector<8x16xf32>
    %80 = arith.select %78, %67, %79 : vector<8x16xi1>, vector<8x16xf32>
    %81 = arith.truncf %80 : vector<8x16xf32> to vector<8x16xbf16>
    %c3 = arith.constant 3 : index
    %c0_32 = arith.constant 0 : index
    %c0_33 = arith.constant 0 : index
    %82 = vector.load %arg4[%c3, %c0_32, %c0_33] : memref<5x16x16xbf16, #tpu.memory_space<vmem>>, vector<1x16x16xbf16>
    %83 = vector.shape_cast %82 : vector<1x16x16xbf16> to vector<16x16xbf16>
    %cst_34 = arith.constant dense<0.000000e+00> : vector<8x16xf32>
    %84 = tpu.matmul %81, %83, %cst_34 {dimension_numbers = #tpu.dot_dimension_numbers<[1], [0], [0], [1], [0, 0, 1, 1], [], []>} : vector<8x16xbf16>, vector<16x16xbf16>, vector<8x16xf32> -> vector<8x16xf32>
    %85 = arith.addf %66, %84 : vector<8x16xf32>
    %c6_i32 = arith.constant 6 : i32
    %86 = tpu.dynamic_rotate %8 by %c6_i32 dim 0 : vector<8x16xf32>, i32 -> vector<8x16xf32>
    %c2_i32_35 = arith.constant 2 : i32
    %87 = vector.broadcast %c2_i32_35 : i32 to vector<8x1xi32>
    %88 = arith.addi %9, %87 : vector<8x1xi32>
    %c0_i32_36 = arith.constant 0 : i32
    %89 = vector.broadcast %c0_i32_36 : i32 to vector<8x1xi32>
    %90 = arith.cmpi sge, %88, %89 : vector<8x1xi32>
    %c2_i32_37 = arith.constant 2 : i32
    %91 = vector.broadcast %c2_i32_37 : i32 to vector<8x1xi32>
    %92 = arith.addi %9, %91 : vector<8x1xi32>
    %c8_i32_38 = arith.constant 8 : i32
    %93 = vector.broadcast %c8_i32_38 : i32 to vector<8x1xi32>
    %94 = arith.cmpi slt, %92, %93 : vector<8x1xi32>
    %95 = arith.andi %90, %94 : vector<8x1xi1>
    %cst_39 = arith.constant 0.000000e+00 : f32
    %96 = vector.shape_cast %95 : vector<8x1xi1> to vector<8x1xi1>
    %97 = vector.broadcast %96 : vector<8x1xi1> to vector<8x16xi1>
    %98 = vector.broadcast %cst_39 : f32 to vector<8x16xf32>
    %99 = arith.select %97, %86, %98 : vector<8x16xi1>, vector<8x16xf32>
    %100 = arith.truncf %99 : vector<8x16xf32> to vector<8x16xbf16>
    %c4 = arith.constant 4 : index
    %c0_40 = arith.constant 0 : index
    %c0_41 = arith.constant 0 : index
    %101 = vector.load %arg4[%c4, %c0_40, %c0_41] : memref<5x16x16xbf16, #tpu.memory_space<vmem>>, vector<1x16x16xbf16>
    %102 = vector.shape_cast %101 : vector<1x16x16xbf16> to vector<16x16xbf16>
    %cst_42 = arith.constant dense<0.000000e+00> : vector<8x16xf32>
    %103 = tpu.matmul %100, %102, %cst_42 {dimension_numbers = #tpu.dot_dimension_numbers<[1], [0], [0], [1], [0, 0, 1, 1], [], []>} : vector<8x16xbf16>, vector<16x16xbf16>, vector<8x16xf32> -> vector<8x16xf32>
    %104 = arith.addf %85, %103 : vector<8x16xf32>
    %c0_43 = arith.constant 0 : index
    %c0_44 = arith.constant 0 : index
    %105 = vector.load %arg5[%c0_43, %c0_44] : memref<1x16xf32, #tpu.memory_space<vmem>>, vector<1x16xf32>
    %106 = vector.broadcast %105 : vector<1x16xf32> to vector<8x16xf32>
    %107 = arith.addf %104, %106 : vector<8x16xf32>
    %108 = vector.shape_cast %107 : vector<8x16xf32> to vector<1x8x16xf32>
    %c0_45 = arith.constant 0 : index
    %c0_46 = arith.constant 0 : index
    %c0_47 = arith.constant 0 : index
    %109 = vector.load %arg6[%c0_45, %c0_46, %c0_47] : memref<1x8x16xf32, #tpu.memory_space<vmem>>, vector<1x8x16xf32>
    tpu.vector_store %arg6[%c0_45, %c0_46, %c0_47], %108 {strides = array<i32>} : memref<1x8x16xf32, #tpu.memory_space<vmem>>, vector<1x8x16xf32>,
    %cst_48 = arith.constant dense<0.000000e+00> : vector<16xf32>
    %110 = vector.multi_reduction <add>, %107, %cst_48 [0] : vector<8x16xf32> to vector<16xf32>
    %111 = vector.shape_cast %110 : vector<16xf32> to vector<1x16xf32>
    %112 = vector.shape_cast %111 : vector<1x16xf32> to vector<1x1x16xf32>
    %c0_49 = arith.constant 0 : index
    %c0_50 = arith.constant 0 : index
    %c0_51 = arith.constant 0 : index
    %113 = vector.load %arg7[%c0_49, %c0_50, %c0_51] : memref<1x1x16xf32, #tpu.memory_space<vmem>>, vector<1x1x16xf32>
    tpu.vector_store %arg7[%c0_49, %c0_50, %c0_51], %112 {strides = array<i32>} : memref<1x1x16xf32, #tpu.memory_space<vmem>>, vector<1x1x16xf32>,
    %114 = arith.mulf %107, %107 : vector<8x16xf32>
    %cst_52 = arith.constant dense<0.000000e+00> : vector<16xf32>
    %115 = vector.multi_reduction <add>, %114, %cst_52 [0] : vector<8x16xf32> to vector<16xf32>
    %116 = vector.shape_cast %115 : vector<16xf32> to vector<1x16xf32>
    %117 = vector.shape_cast %116 : vector<1x16xf32> to vector<1x1x16xf32>
    %c0_53 = arith.constant 0 : index
    %c0_54 = arith.constant 0 : index
    %c0_55 = arith.constant 0 : index
    %118 = vector.load %arg8[%c0_53, %c0_54, %c0_55] : memref<1x1x16xf32, #tpu.memory_space<vmem>>, vector<1x1x16xf32>
    tpu.vector_store %arg8[%c0_53, %c0_54, %c0_55], %117 {strides = array<i32>} : memref<1x1x16xf32, #tpu.memory_space<vmem>>, vector<1x1x16xf32>,
    return
  }
  func.func @transform_0(%arg0: i32) -> (i32, i32, i32) {
    %c0_i32 = arith.constant 0 : i32
    %c0_i32_0 = arith.constant 0 : i32
    %c0_i32_1 = arith.constant 0 : i32
    return %arg0, %c0_i32, %c0_i32_0 : i32, i32, i32
  }
  func.func @transform_1(%arg0: i32) -> (i32, i32) {
    %c0_i32 = arith.constant 0 : i32
    %c0_i32_0 = arith.constant 0 : i32
    %c0_i32_1 = arith.constant 0 : i32
    return %c0_i32, %c0_i32_0 : i32, i32
  }
  func.func @transform_2(%arg0: i32) -> (i32, i32) {
    %c0_i32 = arith.constant 0 : i32
    %c0_i32_0 = arith.constant 0 : i32
    %c0_i32_1 = arith.constant 0 : i32
    return %c0_i32, %c0_i32_0 : i32, i32
  }
  func.func @transform_3(%arg0: i32) -> (i32, i32, i32) {
    %c0_i32 = arith.constant 0 : i32
    %c0_i32_0 = arith.constant 0 : i32
    %c0_i32_1 = arith.constant 0 : i32
    %c0_i32_2 = arith.constant 0 : i32
    return %c0_i32, %c0_i32_0, %c0_i32_1 : i32, i32, i32
  }
  func.func @transform_4(%arg0: i32) -> (i32, i32) {
    %c0_i32 = arith.constant 0 : i32
    %c0_i32_0 = arith.constant 0 : i32
    %c0_i32_1 = arith.constant 0 : i32
    return %c0_i32, %c0_i32_0 : i32, i32
  }
  func.func @transform_5(%arg0: i32) -> (i32, i32, i32) {
    %c0_i32 = arith.constant 0 : i32
    %c0_i32_0 = arith.constant 0 : i32
    %c0_i32_1 = arith.constant 0 : i32
    return %arg0, %c0_i32, %c0_i32_0 : i32, i32, i32
  }
  func.func @transform_6(%arg0: i32) -> (i32, i32, i32) {
    %c0_i32 = arith.constant 0 : i32
    %c0_i32_0 = arith.constant 0 : i32
    %c0_i32_1 = arith.constant 0 : i32
    return %arg0, %c0_i32, %c0_i32_0 : i32, i32, i32
  }
  func.func @transform_7(%arg0: i32) -> (i32, i32, i32) {
    %c0_i32 = arith.constant 0 : i32
    %c0_i32_0 = arith.constant 0 : i32
    %c0_i32_1 = arith.constant 0 : i32
    return %arg0, %c0_i32, %c0_i32_0 : i32, i32, i32
  }
}

module attributes {stable_mosaic.version = 11 : i64} {
  func.func @kernel(%arg0: i32, %arg1: memref<1x8x16xf32, #tpu.memory_space<vmem>>, %arg2: memref<1x16xf32, #tpu.memory_space<vmem>>, %arg3: memref<1x16xf32, #tpu.memory_space<vmem>>, %arg4: memref<5x16x32xbf16, #tpu.memory_space<vmem>>, %arg5: memref<1x32xf32, #tpu.memory_space<vmem>>, %arg6: memref<1x8x32xf32, #tpu.memory_space<vmem>>, %arg7: memref<1x1x32xf32, #tpu.memory_space<vmem>>, %arg8: memref<1x1x32xf32, #tpu.memory_space<vmem>>) attributes {dimension_semantics = [#tpu.dimension_semantics<parallel>], iteration_bounds = array<i64: 2>, scalar_prefetch = 0 : i64, scratch_operands = 0 : i64, tpu.core_type = #tpu.core_type<tc>, window_params = [{transform_indices = @transform_0, window_bounds = array<i64: 1, 8, 16>}, {pipeline_mode = #tpu.pipeline_mode<synchronous>, transform_indices = @transform_1, window_bounds = array<i64: 1, 16>}, {pipeline_mode = #tpu.pipeline_mode<synchronous>, transform_indices = @transform_2, window_bounds = array<i64: 1, 16>}, {pipeline_mode = #tpu.pipeline_mode<synchronous>, transform_indices = @transform_3, window_bounds = array<i64: 5, 16, 32>}, {pipeline_mode = #tpu.pipeline_mode<synchronous>, transform_indices = @transform_4, window_bounds = array<i64: 1, 32>}, {transform_indices = @transform_5, window_bounds = array<i64: 1, 8, 32>}, {transform_indices = @transform_6, window_bounds = array<i64: 1, 1, 32>}, {transform_indices = @transform_7, window_bounds = array<i64: 1, 1, 32>}]} {
    %c0 = arith.constant 0 : index
    %c0_0 = arith.constant 0 : index
    %c0_1 = arith.constant 0 : index
    %0 = vector.load %arg1[%c0, %c0_0, %c0_1] : memref<1x8x16xf32, #tpu.memory_space<vmem>>, vector<1x8x16xf32>
    %1 = vector.shape_cast %0 : vector<1x8x16xf32> to vector<8x16xf32>
    %c0_2 = arith.constant 0 : index
    %c0_3 = arith.constant 0 : index
    %2 = vector.load %arg2[%c0_2, %c0_3] : memref<1x16xf32, #tpu.memory_space<vmem>>, vector<1x16xf32>
    %3 = vector.broadcast %2 : vector<1x16xf32> to vector<8x16xf32>
    %4 = arith.mulf %1, %3 : vector<8x16xf32>
    %c0_4 = arith.constant 0 : index
    %c0_5 = arith.constant 0 : index
    %5 = vector.load %arg3[%c0_4, %c0_5] : memref<1x16xf32, #tpu.memory_space<vmem>>, vector<1x16xf32>
    %6 = vector.broadcast %5 : vector<1x16xf32> to vector<8x16xf32>
    %7 = arith.addf %4, %6 : vector<8x16xf32>
    %8 = math.tanh %7 : vector<8x16xf32>
    %9 = tpu.iota {dimensions = array<i32: 0>} : vector<8x1xi32>
    %cst = arith.constant 0.000000e+00 : f32
    %10 = vector.broadcast %cst : f32 to vector<8x32xf32>
    %c2_i32 = arith.constant 2 : i32
    %11 = tpu.dynamic_rotate %8 by %c2_i32 dim 0 : vector<8x16xf32>, i32 -> vector<8x16xf32>
    %c-2_i32 = arith.constant -2 : i32
    %12 = vector.broadcast %c-2_i32 : i32 to vector<8x1xi32>
    %13 = arith.addi %9, %12 : vector<8x1xi32>
    %c0_i32 = arith.constant 0 : i32
    %14 = vector.broadcast %c0_i32 : i32 to vector<8x1xi32>
    %15 = arith.cmpi sge, %13, %14 : vector<8x1xi32>
    %c-2_i32_6 = arith.constant -2 : i32
    %16 = vector.broadcast %c-2_i32_6 : i32 to vector<8x1xi32>
    %17 = arith.addi %9, %16 : vector<8x1xi32>
    %c8_i32 = arith.constant 8 : i32
    %18 = vector.broadcast %c8_i32 : i32 to vector<8x1xi32>
    %19 = arith.cmpi slt, %17, %18 : vector<8x1xi32>
    %20 = arith.andi %15, %19 : vector<8x1xi1>
    %cst_7 = arith.constant 0.000000e+00 : f32
    %21 = vector.shape_cast %20 : vector<8x1xi1> to vector<8x1xi1>
    %22 = vector.broadcast %21 : vector<8x1xi1> to vector<8x16xi1>
    %23 = vector.broadcast %cst_7 : f32 to vector<8x16xf32>
    %24 = arith.select %22, %11, %23 : vector<8x16xi1>, vector<8x16xf32>
    %25 = arith.truncf %24 : vector<8x16xf32> to vector<8x16xbf16>
    %c0_8 = arith.constant 0 : index
    %c0_9 = arith.constant 0 : index
    %c0_10 = arith.constant 0 : index
    %26 = vector.load %arg4[%c0_8, %c0_9, %c0_10] : memref<5x16x32xbf16, #tpu.memory_space<vmem>>, vector<1x16x32xbf16>
    %27 = vector.shape_cast %26 : vector<1x16x32xbf16> to vector<16x32xbf16>
    %cst_11 = arith.constant dense<0.000000e+00> : vector<8x32xf32>
    %28 = tpu.matmul %25, %27, %cst_11 {dimension_numbers = #tpu.dot_dimension_numbers<[1], [0], [0], [1], [0, 0, 1, 1], [], []>} : vector<8x16xbf16>, vector<16x32xbf16>, vector<8x32xf32> -> vector<8x32xf32>
    %29 = arith.addf %10, %28 : vector<8x32xf32>
    %c1_i32 = arith.constant 1 : i32
    %30 = tpu.dynamic_rotate %8 by %c1_i32 dim 0 : vector<8x16xf32>, i32 -> vector<8x16xf32>
    %c-1_i32 = arith.constant -1 : i32
    %31 = vector.broadcast %c-1_i32 : i32 to vector<8x1xi32>
    %32 = arith.addi %9, %31 : vector<8x1xi32>
    %c0_i32_12 = arith.constant 0 : i32
    %33 = vector.broadcast %c0_i32_12 : i32 to vector<8x1xi32>
    %34 = arith.cmpi sge, %32, %33 : vector<8x1xi32>
    %c-1_i32_13 = arith.constant -1 : i32
    %35 = vector.broadcast %c-1_i32_13 : i32 to vector<8x1xi32>
    %36 = arith.addi %9, %35 : vector<8x1xi32>
    %c8_i32_14 = arith.constant 8 : i32
    %37 = vector.broadcast %c8_i32_14 : i32 to vector<8x1xi32>
    %38 = arith.cmpi slt, %36, %37 : vector<8x1xi32>
    %39 = arith.andi %34, %38 : vector<8x1xi1>
    %cst_15 = arith.constant 0.000000e+00 : f32
    %40 = vector.shape_cast %39 : vector<8x1xi1> to vector<8x1xi1>
    %41 = vector.broadcast %40 : vector<8x1xi1> to vector<8x16xi1>
    %42 = vector.broadcast %cst_15 : f32 to vector<8x16xf32>
    %43 = arith.select %41, %30, %42 : vector<8x16xi1>, vector<8x16xf32>
    %44 = arith.truncf %43 : vector<8x16xf32> to vector<8x16xbf16>
    %c1 = arith.constant 1 : index
    %c0_16 = arith.constant 0 : index
    %c0_17 = arith.constant 0 : index
    %45 = vector.load %arg4[%c1, %c0_16, %c0_17] : memref<5x16x32xbf16, #tpu.memory_space<vmem>>, vector<1x16x32xbf16>
    %46 = vector.shape_cast %45 : vector<1x16x32xbf16> to vector<16x32xbf16>
    %cst_18 = arith.constant dense<0.000000e+00> : vector<8x32xf32>
    %47 = tpu.matmul %44, %46, %cst_18 {dimension_numbers = #tpu.dot_dimension_numbers<[1], [0], [0], [1], [0, 0, 1, 1], [], []>} : vector<8x16xbf16>, vector<16x32xbf16>, vector<8x32xf32> -> vector<8x32xf32>
    %48 = arith.addf %29, %47 : vector<8x32xf32>
    %c0_i32_19 = arith.constant 0 : i32
    %49 = vector.broadcast %c0_i32_19 : i32 to vector<8x1xi32>
    %50 = arith.addi %9, %49 : vector<8x1xi32>
    %c0_i32_20 = arith.constant 0 : i32
    %51 = vector.broadcast %c0_i32_20 : i32 to vector<8x1xi32>
    %52 = arith.cmpi sge, %50, %51 : vector<8x1xi32>
    %c0_i32_21 = arith.constant 0 : i32
    %53 = vector.broadcast %c0_i32_21 : i32 to vector<8x1xi32>
    %54 = arith.addi %9, %53 : vector<8x1xi32>
    %c8_i32_22 = arith.constant 8 : i32
    %55 = vector.broadcast %c8_i32_22 : i32 to vector<8x1xi32>
    %56 = arith.cmpi slt, %54, %55 : vector<8x1xi32>
    %57 = arith.andi %52, %56 : vector<8x1xi1>
    %cst_23 = arith.constant 0.000000e+00 : f32
    %58 = vector.shape_cast %57 : vector<8x1xi1> to vector<8x1xi1>
    %59 = vector.broadcast %58 : vector<8x1xi1> to vector<8x16xi1>
    %60 = vector.broadcast %cst_23 : f32 to vector<8x16xf32>
    %61 = arith.select %59, %8, %60 : vector<8x16xi1>, vector<8x16xf32>
    %62 = arith.truncf %61 : vector<8x16xf32> to vector<8x16xbf16>
    %c2 = arith.constant 2 : index
    %c0_24 = arith.constant 0 : index
    %c0_25 = arith.constant 0 : index
    %63 = vector.load %arg4[%c2, %c0_24, %c0_25] : memref<5x16x32xbf16, #tpu.memory_space<vmem>>, vector<1x16x32xbf16>
    %64 = vector.shape_cast %63 : vector<1x16x32xbf16> to vector<16x32xbf16>
    %cst_26 = arith.constant dense<0.000000e+00> : vector<8x32xf32>
    %65 = tpu.matmul %62, %64, %cst_26 {dimension_numbers = #tpu.dot_dimension_numbers<[1], [0], [0], [1], [0, 0, 1, 1], [], []>} : vector<8x16xbf16>, vector<16x32xbf16>, vector<8x32xf32> -> vector<8x32xf32>
    %66 = arith.addf %48, %65 : vector<8x32xf32>
    %c7_i32 = arith.constant 7 : i32
    %67 = tpu.dynamic_rotate %8 by %c7_i32 dim 0 : vector<8x16xf32>, i32 -> vector<8x16xf32>
    %c1_i32_27 = arith.constant 1 : i32
    %68 = vector.broadcast %c1_i32_27 : i32 to vector<8x1xi32>
    %69 = arith.addi %9, %68 : vector<8x1xi32>
    %c0_i32_28 = arith.constant 0 : i32
    %70 = vector.broadcast %c0_i32_28 : i32 to vector<8x1xi32>
    %71 = arith.cmpi sge, %69, %70 : vector<8x1xi32>
    %c1_i32_29 = arith.constant 1 : i32
    %72 = vector.broadcast %c1_i32_29 : i32 to vector<8x1xi32>
    %73 = arith.addi %9, %72 : vector<8x1xi32>
    %c8_i32_30 = arith.constant 8 : i32
    %74 = vector.broadcast %c8_i32_30 : i32 to vector<8x1xi32>
    %75 = arith.cmpi slt, %73, %74 : vector<8x1xi32>
    %76 = arith.andi %71, %75 : vector<8x1xi1>
    %cst_31 = arith.constant 0.000000e+00 : f32
    %77 = vector.shape_cast %76 : vector<8x1xi1> to vector<8x1xi1>
    %78 = vector.broadcast %77 : vector<8x1xi1> to vector<8x16xi1>
    %79 = vector.broadcast %cst_31 : f32 to vector<8x16xf32>
    %80 = arith.select %78, %67, %79 : vector<8x16xi1>, vector<8x16xf32>
    %81 = arith.truncf %80 : vector<8x16xf32> to vector<8x16xbf16>
    %c3 = arith.constant 3 : index
    %c0_32 = arith.constant 0 : index
    %c0_33 = arith.constant 0 : index
    %82 = vector.load %arg4[%c3, %c0_32, %c0_33] : memref<5x16x32xbf16, #tpu.memory_space<vmem>>, vector<1x16x32xbf16>
    %83 = vector.shape_cast %82 : vector<1x16x32xbf16> to vector<16x32xbf16>
    %cst_34 = arith.constant dense<0.000000e+00> : vector<8x32xf32>
    %84 = tpu.matmul %81, %83, %cst_34 {dimension_numbers = #tpu.dot_dimension_numbers<[1], [0], [0], [1], [0, 0, 1, 1], [], []>} : vector<8x16xbf16>, vector<16x32xbf16>, vector<8x32xf32> -> vector<8x32xf32>
    %85 = arith.addf %66, %84 : vector<8x32xf32>
    %c6_i32 = arith.constant 6 : i32
    %86 = tpu.dynamic_rotate %8 by %c6_i32 dim 0 : vector<8x16xf32>, i32 -> vector<8x16xf32>
    %c2_i32_35 = arith.constant 2 : i32
    %87 = vector.broadcast %c2_i32_35 : i32 to vector<8x1xi32>
    %88 = arith.addi %9, %87 : vector<8x1xi32>
    %c0_i32_36 = arith.constant 0 : i32
    %89 = vector.broadcast %c0_i32_36 : i32 to vector<8x1xi32>
    %90 = arith.cmpi sge, %88, %89 : vector<8x1xi32>
    %c2_i32_37 = arith.constant 2 : i32
    %91 = vector.broadcast %c2_i32_37 : i32 to vector<8x1xi32>
    %92 = arith.addi %9, %91 : vector<8x1xi32>
    %c8_i32_38 = arith.constant 8 : i32
    %93 = vector.broadcast %c8_i32_38 : i32 to vector<8x1xi32>
    %94 = arith.cmpi slt, %92, %93 : vector<8x1xi32>
    %95 = arith.andi %90, %94 : vector<8x1xi1>
    %cst_39 = arith.constant 0.000000e+00 : f32
    %96 = vector.shape_cast %95 : vector<8x1xi1> to vector<8x1xi1>
    %97 = vector.broadcast %96 : vector<8x1xi1> to vector<8x16xi1>
    %98 = vector.broadcast %cst_39 : f32 to vector<8x16xf32>
    %99 = arith.select %97, %86, %98 : vector<8x16xi1>, vector<8x16xf32>
    %100 = arith.truncf %99 : vector<8x16xf32> to vector<8x16xbf16>
    %c4 = arith.constant 4 : index
    %c0_40 = arith.constant 0 : index
    %c0_41 = arith.constant 0 : index
    %101 = vector.load %arg4[%c4, %c0_40, %c0_41] : memref<5x16x32xbf16, #tpu.memory_space<vmem>>, vector<1x16x32xbf16>
    %102 = vector.shape_cast %101 : vector<1x16x32xbf16> to vector<16x32xbf16>
    %cst_42 = arith.constant dense<0.000000e+00> : vector<8x32xf32>
    %103 = tpu.matmul %100, %102, %cst_42 {dimension_numbers = #tpu.dot_dimension_numbers<[1], [0], [0], [1], [0, 0, 1, 1], [], []>} : vector<8x16xbf16>, vector<16x32xbf16>, vector<8x32xf32> -> vector<8x32xf32>
    %104 = arith.addf %85, %103 : vector<8x32xf32>
    %c0_43 = arith.constant 0 : index
    %c0_44 = arith.constant 0 : index
    %105 = vector.load %arg5[%c0_43, %c0_44] : memref<1x32xf32, #tpu.memory_space<vmem>>, vector<1x32xf32>
    %106 = vector.broadcast %105 : vector<1x32xf32> to vector<8x32xf32>
    %107 = arith.addf %104, %106 : vector<8x32xf32>
    %108 = vector.shape_cast %107 : vector<8x32xf32> to vector<1x8x32xf32>
    %c0_45 = arith.constant 0 : index
    %c0_46 = arith.constant 0 : index
    %c0_47 = arith.constant 0 : index
    %109 = vector.load %arg6[%c0_45, %c0_46, %c0_47] : memref<1x8x32xf32, #tpu.memory_space<vmem>>, vector<1x8x32xf32>
    tpu.vector_store %arg6[%c0_45, %c0_46, %c0_47], %108 {strides = array<i32>} : memref<1x8x32xf32, #tpu.memory_space<vmem>>, vector<1x8x32xf32>,
    %cst_48 = arith.constant dense<0.000000e+00> : vector<32xf32>
    %110 = vector.multi_reduction <add>, %107, %cst_48 [0] : vector<8x32xf32> to vector<32xf32>
    %111 = vector.shape_cast %110 : vector<32xf32> to vector<1x32xf32>
    %112 = vector.shape_cast %111 : vector<1x32xf32> to vector<1x1x32xf32>
    %c0_49 = arith.constant 0 : index
    %c0_50 = arith.constant 0 : index
    %c0_51 = arith.constant 0 : index
    %113 = vector.load %arg7[%c0_49, %c0_50, %c0_51] : memref<1x1x32xf32, #tpu.memory_space<vmem>>, vector<1x1x32xf32>
    tpu.vector_store %arg7[%c0_49, %c0_50, %c0_51], %112 {strides = array<i32>} : memref<1x1x32xf32, #tpu.memory_space<vmem>>, vector<1x1x32xf32>,
    %114 = arith.mulf %107, %107 : vector<8x32xf32>
    %cst_52 = arith.constant dense<0.000000e+00> : vector<32xf32>
    %115 = vector.multi_reduction <add>, %114, %cst_52 [0] : vector<8x32xf32> to vector<32xf32>
    %116 = vector.shape_cast %115 : vector<32xf32> to vector<1x32xf32>
    %117 = vector.shape_cast %116 : vector<1x32xf32> to vector<1x1x32xf32>
    %c0_53 = arith.constant 0 : index
    %c0_54 = arith.constant 0 : index
    %c0_55 = arith.constant 0 : index
    %118 = vector.load %arg8[%c0_53, %c0_54, %c0_55] : memref<1x1x32xf32, #tpu.memory_space<vmem>>, vector<1x1x32xf32>
    tpu.vector_store %arg8[%c0_53, %c0_54, %c0_55], %117 {strides = array<i32>} : memref<1x1x32xf32, #tpu.memory_space<vmem>>, vector<1x1x32xf32>,
    return
  }
  func.func @transform_0(%arg0: i32) -> (i32, i32, i32) {
    %c0_i32 = arith.constant 0 : i32
    %c0_i32_0 = arith.constant 0 : i32
    %c0_i32_1 = arith.constant 0 : i32
    return %arg0, %c0_i32, %c0_i32_0 : i32, i32, i32
  }
  func.func @transform_1(%arg0: i32) -> (i32, i32) {
    %c0_i32 = arith.constant 0 : i32
    %c0_i32_0 = arith.constant 0 : i32
    %c0_i32_1 = arith.constant 0 : i32
    return %c0_i32, %c0_i32_0 : i32, i32
  }
  func.func @transform_2(%arg0: i32) -> (i32, i32) {
    %c0_i32 = arith.constant 0 : i32
    %c0_i32_0 = arith.constant 0 : i32
    %c0_i32_1 = arith.constant 0 : i32
    return %c0_i32, %c0_i32_0 : i32, i32
  }
  func.func @transform_3(%arg0: i32) -> (i32, i32, i32) {
    %c0_i32 = arith.constant 0 : i32
    %c0_i32_0 = arith.constant 0 : i32
    %c0_i32_1 = arith.constant 0 : i32
    %c0_i32_2 = arith.constant 0 : i32
    return %c0_i32, %c0_i32_0, %c0_i32_1 : i32, i32, i32
  }
  func.func @transform_4(%arg0: i32) -> (i32, i32) {
    %c0_i32 = arith.constant 0 : i32
    %c0_i32_0 = arith.constant 0 : i32
    %c0_i32_1 = arith.constant 0 : i32
    return %c0_i32, %c0_i32_0 : i32, i32
  }
  func.func @transform_5(%arg0: i32) -> (i32, i32, i32) {
    %c0_i32 = arith.constant 0 : i32
    %c0_i32_0 = arith.constant 0 : i32
    %c0_i32_1 = arith.constant 0 : i32
    return %arg0, %c0_i32, %c0_i32_0 : i32, i32, i32
  }
  func.func @transform_6(%arg0: i32) -> (i32, i32, i32) {
    %c0_i32 = arith.constant 0 : i32
    %c0_i32_0 = arith.constant 0 : i32
    %c0_i32_1 = arith.constant 0 : i32
    return %arg0, %c0_i32, %c0_i32_0 : i32, i32, i32
  }
  func.func @transform_7(%arg0: i32) -> (i32, i32, i32) {
    %c0_i32 = arith.constant 0 : i32
    %c0_i32_0 = arith.constant 0 : i32
    %c0_i32_1 = arith.constant 0 : i32
    return %arg0, %c0_i32, %c0_i32_0 : i32, i32, i32
  }
}

module attributes {stable_mosaic.version = 11 : i64} {
  func.func @_affine_residual_kernel(%arg0: i32, %arg1: memref<16x32xf32, #tpu.memory_space<vmem>>, %arg2: memref<16x32xf32, #tpu.memory_space<vmem>>, %arg3: memref<1x32xf32, #tpu.memory_space<vmem>>, %arg4: memref<1x32xf32, #tpu.memory_space<vmem>>, %arg5: memref<16x32xf32, #tpu.memory_space<vmem>>) attributes {dimension_semantics = [#tpu.dimension_semantics<parallel>], iteration_bounds = array<i64: 1>, scalar_prefetch = 0 : i64, scratch_operands = 0 : i64, tpu.core_type = #tpu.core_type<tc>, window_params = [{transform_indices = @transform_0, window_bounds = array<i64: 16, 32>}, {transform_indices = @transform_1, window_bounds = array<i64: 16, 32>}, {pipeline_mode = #tpu.pipeline_mode<synchronous>, transform_indices = @transform_2, window_bounds = array<i64: 1, 32>}, {pipeline_mode = #tpu.pipeline_mode<synchronous>, transform_indices = @transform_3, window_bounds = array<i64: 1, 32>}, {transform_indices = @transform_4, window_bounds = array<i64: 16, 32>}]} {
    %c0 = arith.constant 0 : index
    %c0_0 = arith.constant 0 : index
    %0 = vector.load %arg2[%c0, %c0_0] : memref<16x32xf32, #tpu.memory_space<vmem>>, vector<16x32xf32>
    %c0_1 = arith.constant 0 : index
    %c0_2 = arith.constant 0 : index
    %1 = vector.load %arg1[%c0_1, %c0_2] : memref<16x32xf32, #tpu.memory_space<vmem>>, vector<16x32xf32>
    %c0_3 = arith.constant 0 : index
    %c0_4 = arith.constant 0 : index
    %2 = vector.load %arg3[%c0_3, %c0_4] : memref<1x32xf32, #tpu.memory_space<vmem>>, vector<1x32xf32>
    %3 = vector.broadcast %2 : vector<1x32xf32> to vector<16x32xf32>
    %4 = arith.mulf %1, %3 : vector<16x32xf32>
    %5 = arith.addf %0, %4 : vector<16x32xf32>
    %c0_5 = arith.constant 0 : index
    %c0_6 = arith.constant 0 : index
    %6 = vector.load %arg4[%c0_5, %c0_6] : memref<1x32xf32, #tpu.memory_space<vmem>>, vector<1x32xf32>
    %7 = vector.broadcast %6 : vector<1x32xf32> to vector<16x32xf32>
    %8 = arith.addf %5, %7 : vector<16x32xf32>
    %c0_7 = arith.constant 0 : index
    %c0_8 = arith.constant 0 : index
    %9 = vector.load %arg5[%c0_7, %c0_8] : memref<16x32xf32, #tpu.memory_space<vmem>>, vector<16x32xf32>
    tpu.vector_store %arg5[%c0_7, %c0_8], %8 {strides = array<i32>} : memref<16x32xf32, #tpu.memory_space<vmem>>, vector<16x32xf32>,
    return
  }
  func.func @transform_0(%arg0: i32) -> (i32, i32) {
    %c0_i32 = arith.constant 0 : i32
    %c0_i32_0 = arith.constant 0 : i32
    return %arg0, %c0_i32 : i32, i32
  }
  func.func @transform_1(%arg0: i32) -> (i32, i32) {
    %c0_i32 = arith.constant 0 : i32
    %c0_i32_0 = arith.constant 0 : i32
    return %arg0, %c0_i32 : i32, i32
  }
  func.func @transform_2(%arg0: i32) -> (i32, i32) {
    %c0_i32 = arith.constant 0 : i32
    %c0_i32_0 = arith.constant 0 : i32
    %c0_i32_1 = arith.constant 0 : i32
    return %c0_i32, %c0_i32_0 : i32, i32
  }
  func.func @transform_3(%arg0: i32) -> (i32, i32) {
    %c0_i32 = arith.constant 0 : i32
    %c0_i32_0 = arith.constant 0 : i32
    %c0_i32_1 = arith.constant 0 : i32
    return %c0_i32, %c0_i32_0 : i32, i32
  }
  func.func @transform_4(%arg0: i32) -> (i32, i32) {
    %c0_i32 = arith.constant 0 : i32
    %c0_i32_0 = arith.constant 0 : i32
    return %arg0, %c0_i32 : i32, i32
  }
}

</mosaic_0001>

<llo_original>
// kernel: miipher_forward.45
$region0: #{miipher_forward.45}
  #allocation0 [shape = 'u32[]', space=smem, size = 0x4, offset = 0x4, fixed_abs, tag = 'smem constant byte address 0x4 - core index']
  #allocation1 [shape = 'u32[144,128]{1,0:T(1,128)}', space=vmem, size = 0x12000, scoped, tag = 'internal scratch']
  %s0 = inlined_call_operand.vmem [shape: f32[16,24], index: 0, kind: input, shape index: {}]
  %s1 = inlined_call_operand.vmem [shape: bf16[24,32], index: 1, kind: input, shape index: {}]
  %s2 = inlined_call_operand.vmem [shape: f32[1,32], index: 2, kind: input, shape index: {}]
  %s3 = inlined_call_operand.vmem [shape: f32[16,32], index: 3, kind: output, shape index: {}]
  %s4 = sld [smem:[#allocation0]]
  $region22: #{miipher_forward.45} parent=0
    _
  %s6 = ssub.s32 1, %s4
  %s7 = scalar_select 0, %s6, %s4
  // Predicated region
  $region2: #{miipher_forward.45} parent=0 // pred_check
    _
  $region3: #{miipher_forward.45} parent=0 // pred_check_branch
    %9 = sbr.rel (0) target = $region5
  $region4: #{miipher_forward.45} parent=0 // pred_region
    _
  $region5: #{miipher_forward.45} parent=0 // pred_fallthru
    _
  // Predicated region
  $region6: #{miipher_forward.45} parent=0 // pred_check
    _
  $region7: #{miipher_forward.45} parent=0 // pred_check_branch
    %11 = sbr.rel (0) target = $region9
  $region8: #{miipher_forward.45} parent=0 // pred_region
    _
  $region9: #{miipher_forward.45} parent=0 // pred_fallthru
    _
  // Predicated region
  $region10: #{miipher_forward.45} parent=0 // pred_check
    _
  $region11: #{miipher_forward.45} parent=0 // pred_check_branch
    %13 = sbr.rel (0) target = $region13
  $region12: #{miipher_forward.45} parent=0 // pred_region
    _
  $region13: #{miipher_forward.45} parent=0 // pred_fallthru
    _
  %v15 = vld [vmem:[%s0] sm:$0xff]
  %v16 = vld [vmem:[%s0 + $0x8] sm:$0xff]
  %v17 = vpack.c.bf16 %v16, %v15
  %v18 = vld [vmem:[%s1] sm:$0xf]
  %v19 = vld [vmem:[%s1 + $0x4] sm:$0xf]
  %v20 = vld [vmem:[%s1 + $0x8] sm:$0xf]
  %v21 = vld [vmem:[%s2] sm:$0x1]
  %v23 = vlaneseq
  %v24 = vshrl.u32 %v23, 7
  %v25 = vsub.s32 0, %v24
  %v26 = vrot.slane %v21, %v25
  %v31 = vunpack.c.l.b16 %v18
  %v32 = vunpack.c.l.b16 %v19
  %v33 = vunpack.c.l.b16 %v20
  %v34 = vpack.c.b16 %v32, %v31
  %v35 = vpack.c.b16 %v33, %v33
  %vm37 = vcmask 195584
  %v39 = vsel %vm37, %v17, 0
  %vm41 = vcmask 1043456
  %v43 = vsel %vm41, %v35, 0
  %45 = vmatprep.subr.bf16.mxu0 0
  %46 = vmatpush1.bf16.msra.mxu0 0
  %47 = vmatprep.subr.bf16.mxu0 0
  %48 = vmatpush1.bf16.msra.mxu0 0
  %49 = vmatprep.subr.bf16.mxu0 0
  %50 = vmatpush1.bf16.msra.mxu0 0
  %51 = vmatprep.subr.bf16.mxu0 0
  %52 = vmatpush1.bf16.msra.mxu0 0
  %53 = vmatprep.subr.bf16.mxu0 0
  %54 = vmatpush1.bf16.msra.mxu0 0
  %55 = vmatprep.subr.bf16.mxu0 0
  %56 = vmatpush1.bf16.msra.mxu0 0
  %57 = vmatprep.subr.bf16.mxu0 0
  %58 = vmatpush1.bf16.msra.mxu0 %v43
  %59 = vmatprep.subr.bf16.mxu0 0
  %60 = vmatpush1.bf16.msra.mxu0 %v34
  %61 = vmatprep.subr.bf16.mxu0 0
  %62 = vmatpush2.bf16.msra.mxu0 0
  %63 = vmatprep.subr.bf16.mxu0 0
  %64 = vmatpush2.bf16.msra.mxu0 0
  %65 = vmatprep.subr.bf16.mxu0 0
  %66 = vmatpush2.bf16.msra.mxu0 0
  %67 = vmatprep.subr.bf16.mxu0 0
  %68 = vmatpush2.bf16.msra.mxu0 0
  %69 = vmatprep.subr.bf16.mxu0 0
  %70 = vmatpush2.bf16.msra.mxu0 0
  %71 = vmatprep.subr.bf16.mxu0 0
  %72 = vmatpush2.bf16.msra.mxu0 0
  %73 = vmatprep.subr.bf16.mxu0 0
  %74 = vmatpush2.bf16.msra.mxu0 0
  %75 = vmatprep.subr.bf16.mxu0 0
  %76 = vmatpush2.bf16.msra.mxu0 0
  %77 = vmatprep.mubr.bf16.mxu0 0
  %78 = vmatmul.mubr.bf16.gmra.mxu0 %v39
  %v79 = vpop.f32.mrf.mxu0
  %v80 = vadd.f32 %v26, %v79
  %v81 = vpop.f32.mrf.mxu0
  %v82 = vpop.f32.mrf.mxu0
  %v83 = vadd.f32 %v26, %v82
  %v84 = vpop.f32.mrf.mxu0
  %85 = vdwg.mxu0
  %vm86 = vcmask 261120
  %87 = vst.msk [vmem:[%s3] sm:$0xff] %vm86, %v80
  %88 = vst.msk [vmem:[%s3 + $0x8] sm:$0xff] %vm86, %v83
  // Predicated region
  $region14: #{miipher_forward.45} parent=0 // pred_check
    _
  $region15: #{miipher_forward.45} parent=0 // pred_check_branch
    %90 = sbr.rel (0) target = $region17
  $region16: #{miipher_forward.45} parent=0 // pred_region
    _
  $region17: #{miipher_forward.45} parent=0 // pred_fallthru
    _
  // Predicated region
  $region18: #{miipher_forward.45} parent=0 // pred_check
    _
  $region19: #{miipher_forward.45} parent=0 // pred_check_branch
    %92 = sbr.rel (0) target = $region21
  $region20: #{miipher_forward.45} parent=0 // pred_region
    _
  $region21: #{miipher_forward.45} parent=0 // pred_fallthru
    _

// kernel: miipher_forward.46
$region0: #{miipher_forward.46}
  #allocation0 [shape = 'u32[]', space=smem, size = 0x4, offset = 0x4, fixed_abs, tag = 'smem constant byte address 0x4 - core index']
  #allocation1 [shape = 'u32[144,128]{1,0:T(1,128)}', space=vmem, size = 0x12000, scoped, tag = 'internal scratch']
  %s0 = inlined_call_operand.vmem [shape: f32[16,32], index: 0, kind: input, shape index: {}]
  %s1 = inlined_call_operand.vmem [shape: bf16[32,16], index: 1, kind: input, shape index: {}]
  %s2 = inlined_call_operand.vmem [shape: f32[1,16], index: 2, kind: input, shape index: {}]
  %s3 = inlined_call_operand.vmem [shape: f32[16,16], index: 3, kind: output, shape index: {}]
  %s4 = sld [smem:[#allocation0]]
  $region22: #{miipher_forward.46} parent=0
    _
  %s6 = ssub.s32 1, %s4
  %s7 = scalar_select 0, %s6, %s4
  // Predicated region
  $region2: #{miipher_forward.46} parent=0 // pred_check
    _
  $region3: #{miipher_forward.46} parent=0 // pred_check_branch
    %9 = sbr.rel (0) target = $region5
  $region4: #{miipher_forward.46} parent=0 // pred_region
    _
  $region5: #{miipher_forward.46} parent=0 // pred_fallthru
    _
  // Predicated region
  $region6: #{miipher_forward.46} parent=0 // pred_check
    _
  $region7: #{miipher_forward.46} parent=0 // pred_check_branch
    %11 = sbr.rel (0) target = $region9
  $region8: #{miipher_forward.46} parent=0 // pred_region
    _
  $region9: #{miipher_forward.46} parent=0 // pred_fallthru
    _
  // Predicated region
  $region10: #{miipher_forward.46} parent=0 // pred_check
    _
  $region11: #{miipher_forward.46} parent=0 // pred_check_branch
    %13 = sbr.rel (0) target = $region13
  $region12: #{miipher_forward.46} parent=0 // pred_region
    _
  $region13: #{miipher_forward.46} parent=0 // pred_fallthru
    _
  %v15 = vld [vmem:[%s0] sm:$0xff]
  %v16 = vld [vmem:[%s0 + $0x8] sm:$0xff]
  %v17 = vpack.c.bf16 %v16, %v15
  %v18 = vld [vmem:[%s1] sm:$0xf]
  %v19 = vld [vmem:[%s1 + $0x4] sm:$0xf]
  %v20 = vld [vmem:[%s1 + $0x8] sm:$0xf]
  %v21 = vld [vmem:[%s1 + $0xc] sm:$0xf]
  %v22 = vld [vmem:[%s2] sm:$0x1]
  %v24 = vlaneseq
  %v25 = vshrl.u32 %v24, 7
  %v26 = vsub.s32 0, %v25
  %v27 = vrot.slane %v22, %v26
  %v33 = vunpack.c.l.b16 %v18
  %v34 = vunpack.c.l.b16 %v19
  %v35 = vunpack.c.l.b16 %v20
  %v36 = vunpack.c.l.b16 %v21
  %v37 = vpack.c.b16 %v34, %v33
  %v38 = vpack.c.b16 %v36, %v35
  %vm41 = vcmask 261120
  %v43 = vsel %vm41, %v17, 0
  %45 = vmatprep.subr.bf16.mxu0 0
  %46 = vmatpush1.bf16.msra.mxu0 0
  %47 = vmatprep.subr.bf16.mxu0 0
  %48 = vmatpush1.bf16.msra.mxu0 0
  %49 = vmatprep.subr.bf16.mxu0 0
  %50 = vmatpush1.bf16.msra.mxu0 0
  %51 = vmatprep.subr.bf16.mxu0 0
  %52 = vmatpush1.bf16.msra.mxu0 0
  %53 = vmatprep.subr.bf16.mxu0 0
  %54 = vmatpush1.bf16.msra.mxu0 0
  %55 = vmatprep.subr.bf16.mxu0 0
  %56 = vmatpush1.bf16.msra.mxu0 0
  %57 = vmatprep.subr.bf16.mxu0 0
  %58 = vmatpush1.bf16.msra.mxu0 %v38
  %59 = vmatprep.subr.bf16.mxu0 0
  %60 = vmatpush1.bf16.msra.mxu0 %v37
  %61 = vmatprep.subr.bf16.mxu0 0
  %62 = vmatpush2.bf16.msra.mxu0 0
  %63 = vmatprep.subr.bf16.mxu0 0
  %64 = vmatpush2.bf16.msra.mxu0 0
  %65 = vmatprep.subr.bf16.mxu0 0
  %66 = vmatpush2.bf16.msra.mxu0 0
  %67 = vmatprep.subr.bf16.mxu0 0
  %68 = vmatpush2.bf16.msra.mxu0 0
  %69 = vmatprep.subr.bf16.mxu0 0
  %70 = vmatpush2.bf16.msra.mxu0 0
  %71 = vmatprep.subr.bf16.mxu0 0
  %72 = vmatpush2.bf16.msra.mxu0 0
  %73 = vmatprep.subr.bf16.mxu0 0
  %74 = vmatpush2.bf16.msra.mxu0 0
  %75 = vmatprep.subr.bf16.mxu0 0
  %76 = vmatpush2.bf16.msra.mxu0 0
  %77 = vmatprep.mubr.bf16.mxu0 0
  %78 = vmatmul.mubr.bf16.gmra.mxu0 %v43
  %v79 = vpop.f32.mrf.mxu0
  %v80 = vadd.f32 %v27, %v79
  %v81 = vpop.f32.mrf.mxu0
  %v82 = vpop.f32.mrf.mxu0
  %v83 = vadd.f32 %v27, %v82
  %v84 = vpop.f32.mrf.mxu0
  %85 = vdwg.mxu0
  %vm86 = vcmask 130048
  %87 = vst.msk [vmem:[%s3] sm:$0xff] %vm86, %v80
  %88 = vst.msk [vmem:[%s3 + $0x8] sm:$0xff] %vm86, %v83
  // Predicated region
  $region14: #{miipher_forward.46} parent=0 // pred_check
    _
  $region15: #{miipher_forward.46} parent=0 // pred_check_branch
    %90 = sbr.rel (0) target = $region17
  $region16: #{miipher_forward.46} parent=0 // pred_region
    _
  $region17: #{miipher_forward.46} parent=0 // pred_fallthru
    _
  // Predicated region
  $region18: #{miipher_forward.46} parent=0 // pred_check
    _
  $region19: #{miipher_forward.46} parent=0 // pred_check_branch
    %92 = sbr.rel (0) target = $region21
  $region20: #{miipher_forward.46} parent=0 // pred_region
    _
  $region21: #{miipher_forward.46} parent=0 // pred_fallthru
    _

// kernel: miipher_forward.48
$region0: #{miipher_forward.48}
  #allocation0 [shape = 'u32[]', space=smem, size = 0x4, offset = 0x4, fixed_abs, tag = 'smem constant byte address 0x4 - core index']
  #allocation1 [shape = 'u32[144,128]{1,0:T(1,128)}', space=vmem, size = 0x12000, scoped, tag = 'internal scratch']
  %s0 = inlined_call_operand.vmem [shape: f32[16,16], index: 0, kind: input, shape index: {}]
  %s1 = inlined_call_operand.vmem [shape: f32[1,16], index: 1, kind: input, shape index: {}]
  %s2 = inlined_call_operand.vmem [shape: f32[1,16], index: 2, kind: input, shape index: {}]
  %s3 = inlined_call_operand.vmem [shape: bf16[16,16], index: 3, kind: input, shape index: {}]
  %s4 = inlined_call_operand.vmem [shape: f32[1,16], index: 4, kind: input, shape index: {}]
  %s5 = inlined_call_operand.vmem [shape: bf16[16,16], index: 5, kind: input, shape index: {}]
  %s6 = inlined_call_operand.vmem [shape: f32[1,16], index: 6, kind: input, shape index: {}]
  %s7 = inlined_call_operand.vmem [shape: bf16[16,16], index: 7, kind: input, shape index: {}]
  %s8 = inlined_call_operand.vmem [shape: f32[1,16], index: 8, kind: input, shape index: {}]
  %s9 = inlined_call_operand.vmem [shape: f32[16,16], index: 9, kind: output, shape index: {0}]
  %s10 = inlined_call_operand.vmem [shape: f32[16,16], index: 10, kind: output, shape index: {1}]
  %s11 = inlined_call_operand.vmem [shape: f32[16,16], index: 11, kind: output, shape index: {2}]
  %12 = xla_tuple %s9, %s10, %s11
  %s13 = sld [smem:[#allocation0]]
  $region62: #{miipher_forward.48} parent=0
    _
  %s15 = ssub.s32 1, %s13
  %s16 = scalar_select 0, %s15, %s13
  // Predicated region
  $region2: #{miipher_forward.48} parent=0 // pred_check
    _
  $region3: #{miipher_forward.48} parent=0 // pred_check_branch
    %18 = sbr.rel (0) target = $region5
  $region4: #{miipher_forward.48} parent=0 // pred_region
    _
  $region5: #{miipher_forward.48} parent=0 // pred_fallthru
    _
  // Predicated region
  $region6: #{miipher_forward.48} parent=0 // pred_check
    _
  $region7: #{miipher_forward.48} parent=0 // pred_check_branch
    %20 = sbr.rel (0) target = $region9
  $region8: #{miipher_forward.48} parent=0 // pred_region
    _
  $region9: #{miipher_forward.48} parent=0 // pred_fallthru
    _
  // Predicated region
  $region10: #{miipher_forward.48} parent=0 // pred_check
    _
  $region11: #{miipher_forward.48} parent=0 // pred_check_branch
    %22 = sbr.rel (0) target = $region13
  $region12: #{miipher_forward.48} parent=0 // pred_region
    _
  $region13: #{miipher_forward.48} parent=0 // pred_fallthru
    _
  // Predicated region
  $region14: #{miipher_forward.48} parent=0 // pred_check
    _
  $region15: #{miipher_forward.48} parent=0 // pred_check_branch
    %24 = sbr.rel (0) target = $region17
  $region16: #{miipher_forward.48} parent=0 // pred_region
    _
  $region17: #{miipher_forward.48} parent=0 // pred_fallthru
    _
  // Predicated region
  $region18: #{miipher_forward.48} parent=0 // pred_check
    _
  $region19: #{miipher_forward.48} parent=0 // pred_check_branch
    %26 = sbr.rel (0) target = $region21
  $region20: #{miipher_forward.48} parent=0 // pred_region
    _
  $region21: #{miipher_forward.48} parent=0 // pred_fallthru
    _
  // Predicated region
  $region22: #{miipher_forward.48} parent=0 // pred_check
    _
  $region23: #{miipher_forward.48} parent=0 // pred_check_branch
    %28 = sbr.rel (0) target = $region25
  $region24: #{miipher_forward.48} parent=0 // pred_region
    _
  $region25: #{miipher_forward.48} parent=0 // pred_fallthru
    _
  // Predicated region
  $region26: #{miipher_forward.48} parent=0 // pred_check
    _
  $region27: #{miipher_forward.48} parent=0 // pred_check_branch
    %30 = sbr.rel (0) target = $region29
  $region28: #{miipher_forward.48} parent=0 // pred_region
    _
  $region29: #{miipher_forward.48} parent=0 // pred_fallthru
    _
  // Predicated region
  $region30: #{miipher_forward.48} parent=0 // pred_check
    _
  $region31: #{miipher_forward.48} parent=0 // pred_check_branch
    %32 = sbr.rel (0) target = $region33
  $region32: #{miipher_forward.48} parent=0 // pred_region
    _
  $region33: #{miipher_forward.48} parent=0 // pred_fallthru
    _
  // Predicated region
  $region34: #{miipher_forward.48} parent=0 // pred_check
    _
  $region35: #{miipher_forward.48} parent=0 // pred_check_branch
    %34 = sbr.rel (0) target = $region37
  $region36: #{miipher_forward.48} parent=0 // pred_region
    _
  $region37: #{miipher_forward.48} parent=0 // pred_fallthru
    _
  %v36 = vld [vmem:[%s0] sm:$0xff]
  %v37 = vld [vmem:[%s0 + $0x8] sm:$0xff]
  %vm38 = vcmask 130048
  %v39 = vsel %vm38, %v36, 0.0
  %40 = vadd.xlane.f32.xlu0 %v39
  %v41 = vpop.xlane.xlu0 %40
  %v42 = vsel %vm38, %v37, 0.0
  %43 = vadd.xlane.f32.xlu0 %v42
  %v44 = vpop.xlane.xlu0 %43
  %v45 = vrcp.pop 16.0
  %v46 = vmul.f32 %v41, %v45
  %v47 = vmul.f32 %v44, %v45
  %v48 = vsub.f32 %v36, %v46
  %v49 = vsub.f32 %v37, %v47
  %v50 = vmul.f32 %v48, %v48
  %v51 = vmul.f32 %v49, %v49
  %v52 = vsel %vm38, %v50, 0.0
  %53 = vadd.xlane.f32.xlu0 %v52
  %v54 = vpop.xlane.xlu0 %53
  %v55 = vsel %vm38, %v51, 0.0
  %56 = vadd.xlane.f32.xlu0 %v55
  %v57 = vpop.xlane.xlu0 %56
  %v58 = vmul.f32 %v54, %v45
  %v59 = vmul.f32 %v57, %v45
  %v60 = vadd.f32 %v58, 1e-05
  %v61 = vadd.f32 %v59, 1e-05
  %v62 = vrsqrt.pop %v60
  %v63 = vrsqrt.pop %v61
  %v64 = vmul.f32 %v48, %v62
  %v65 = vmul.f32 %v49, %v63
  %v66 = vld [vmem:[%s1] sm:$0x1]
  %v68 = vlaneseq
  %v69 = vshrl.u32 %v68, 7
  %v70 = vsub.s32 0, %v69
  %v71 = vrot.slane %v66, %v70
  %v73 = vmul.f32 %v64, %v71
  %v74 = vmul.f32 %v65, %v71
  %v75 = vld [vmem:[%s2] sm:$0x1]
  %v77 = vlaneseq
  %v78 = vshrl.u32 %v77, 7
  %v79 = vsub.s32 0, %v78
  %v80 = vrot.slane %v75, %v79
  %v82 = vadd.f32 %v73, %v80
  %v83 = vadd.f32 %v74, %v80
  %v84 = vpack.c.bf16 %v83, %v82
  %v85 = vld [vmem:[%s3] sm:$0xf]
  %v86 = vld [vmem:[%s3 + $0x4] sm:$0xf]
  %v87 = vld [vmem:[%s4] sm:$0x1]
  %v89 = vlaneseq
  %v90 = vshrl.u32 %v89, 7
  %v91 = vsub.s32 0, %v90
  %v92 = vrot.slane %v87, %v91
  %v96 = vunpack.c.l.b16 %v85
  %v97 = vunpack.c.l.b16 %v86
  %v98 = vpack.c.b16 %v97, %v96
  %v101 = vsel %vm38, %v84, 0
  %103 = vmatprep.subr.bf16.mxu0 0
  %104 = vmatpush1.bf16.msra.mxu0 0
  %105 = vmatprep.subr.bf16.mxu0 0
  %106 = vmatpush1.bf16.msra.mxu0 0
  %107 = vmatprep.subr.bf16.mxu0 0
  %108 = vmatpush1.bf16.msra.mxu0 0
  %109 = vmatprep.subr.bf16.mxu0 0
  %110 = vmatpush1.bf16.msra.mxu0 0
  %111 = vmatprep.subr.bf16.mxu0 0
  %112 = vmatpush1.bf16.msra.mxu0 0
  %113 = vmatprep.subr.bf16.mxu0 0
  %114 = vmatpush1.bf16.msra.mxu0 0
  %115 = vmatprep.subr.bf16.mxu0 0
  %116 = vmatpush1.bf16.msra.mxu0 0
  %117 = vmatprep.subr.bf16.mxu0 0
  %118 = vmatpush1.bf16.msra.mxu0 %v98
  %119 = vmatprep.subr.bf16.mxu0 0
  %120 = vmatpush2.bf16.msra.mxu0 0
  %121 = vmatprep.subr.bf16.mxu0 0
  %122 = vmatpush2.bf16.msra.mxu0 0
  %123 = vmatprep.subr.bf16.mxu0 0
  %124 = vmatpush2.bf16.msra.mxu0 0
  %125 = vmatprep.subr.bf16.mxu0 0
  %126 = vmatpush2.bf16.msra.mxu0 0
  %127 = vmatprep.subr.bf16.mxu0 0
  %128 = vmatpush2.bf16.msra.mxu0 0
  %129 = vmatprep.subr.bf16.mxu0 0
  %130 = vmatpush2.bf16.msra.mxu0 0
  %131 = vmatprep.subr.bf16.mxu0 0
  %132 = vmatpush2.bf16.msra.mxu0 0
  %133 = vmatprep.subr.bf16.mxu0 0
  %134 = vmatpush2.bf16.msra.mxu0 0
  %135 = vmatprep.mubr.bf16.mxu0 0
  %136 = vmatmul.mubr.bf16.gmra.mxu0 %v101
  %v137 = vpop.f32.mrf.mxu0
  %v138 = vadd.f32 %v92, %v137
  %v139 = vpop.f32.mrf.mxu0
  %v140 = vpop.f32.mrf.mxu0
  %v141 = vadd.f32 %v92, %v140
  %v142 = vpop.f32.mrf.mxu0
  %143 = vdwg.mxu0
  %144 = vst.msk [vmem:[%s9] sm:$0xff] %vm38, %v138
  %145 = vst.msk [vmem:[%s9 + $0x8] sm:$0xff] %vm38, %v141
  %v146 = vld [vmem:[%s5] sm:$0xf]
  %v147 = vld [vmem:[%s5 + $0x4] sm:$0xf]
  %v148 = vld [vmem:[%s6] sm:$0x1]
  %v150 = vlaneseq
  %v151 = vshrl.u32 %v150, 7
  %v152 = vsub.s32 0, %v151
  %v153 = vrot.slane %v148, %v152
  %v157 = vunpack.c.l.b16 %v146
  %v158 = vunpack.c.l.b16 %v147
  %v159 = vpack.c.b16 %v158, %v157
  %161 = vmatprep.subr.bf16.mxu0 0
  %162 = vmatpush1.bf16.msra.mxu0 0
  %163 = vmatprep.subr.bf16.mxu0 0
  %164 = vmatpush1.bf16.msra.mxu0 0
  %165 = vmatprep.subr.bf16.mxu0 0
  %166 = vmatpush1.bf16.msra.mxu0 0
  %167 = vmatprep.subr.bf16.mxu0 0
  %168 = vmatpush1.bf16.msra.mxu0 0
  %169 = vmatprep.subr.bf16.mxu0 0
  %170 = vmatpush1.bf16.msra.mxu0 0
  %171 = vmatprep.subr.bf16.mxu0 0
  %172 = vmatpush1.bf16.msra.mxu0 0
  %173 = vmatprep.subr.bf16.mxu0 0
  %174 = vmatpush1.bf16.msra.mxu0 0
  %175 = vmatprep.subr.bf16.mxu0 0
  %176 = vmatpush1.bf16.msra.mxu0 %v159
  %177 = vmatprep.subr.bf16.mxu0 0
  %178 = vmatpush2.bf16.msra.mxu0 0
  %179 = vmatprep.subr.bf16.mxu0 0
  %180 = vmatpush2.bf16.msra.mxu0 0
  %181 = vmatprep.subr.bf16.mxu0 0
  %182 = vmatpush2.bf16.msra.mxu0 0
  %183 = vmatprep.subr.bf16.mxu0 0
  %184 = vmatpush2.bf16.msra.mxu0 0
  %185 = vmatprep.subr.bf16.mxu0 0
  %186 = vmatpush2.bf16.msra.mxu0 0
  %187 = vmatprep.subr.bf16.mxu0 0
  %188 = vmatpush2.bf16.msra.mxu0 0
  %189 = vmatprep.subr.bf16.mxu0 0
  %190 = vmatpush2.bf16.msra.mxu0 0
  %191 = vmatprep.subr.bf16.mxu0 0
  %192 = vmatpush2.bf16.msra.mxu0 0
  %193 = vmatprep.mubr.bf16.mxu0 0
  %194 = vmatmul.mubr.bf16.gmra.mxu0 %v101
  %v195 = vpop.f32.mrf.mxu0
  %v196 = vadd.f32 %v153, %v195
  %v197 = vpop.f32.mrf.mxu0
  %v198 = vpop.f32.mrf.mxu0
  %v199 = vadd.f32 %v153, %v198
  %v200 = vpop.f32.mrf.mxu0
  %201 = vdwg.mxu0
  %202 = vst.msk [vmem:[%s10] sm:$0xff] %vm38, %v196
  %203 = vst.msk [vmem:[%s10 + $0x8] sm:$0xff] %vm38, %v199
  %v204 = vld [vmem:[%s7] sm:$0xf]
  %v205 = vld [vmem:[%s7 + $0x4] sm:$0xf]
  %v206 = vld [vmem:[%s8] sm:$0x1]
  %v208 = vlaneseq
  %v209 = vshrl.u32 %v208, 7
  %v210 = vsub.s32 0, %v209
  %v211 = vrot.slane %v206, %v210
  %v215 = vunpack.c.l.b16 %v204
  %v216 = vunpack.c.l.b16 %v205
  %v217 = vpack.c.b16 %v216, %v215
  %219 = vmatprep.subr.bf16.mxu0 0
  %220 = vmatpush1.bf16.msra.mxu0 0
  %221 = vmatprep.subr.bf16.mxu0 0
  %222 = vmatpush1.bf16.msra.mxu0 0
  %223 = vmatprep.subr.bf16.mxu0 0
  %224 = vmatpush1.bf16.msra.mxu0 0
  %225 = vmatprep.subr.bf16.mxu0 0
  %226 = vmatpush1.bf16.msra.mxu0 0
  %227 = vmatprep.subr.bf16.mxu0 0
  %228 = vmatpush1.bf16.msra.mxu0 0
  %229 = vmatprep.subr.bf16.mxu0 0
  %230 = vmatpush1.bf16.msra.mxu0 0
  %231 = vmatprep.subr.bf16.mxu0 0
  %232 = vmatpush1.bf16.msra.mxu0 0
  %233 = vmatprep.subr.bf16.mxu0 0
  %234 = vmatpush1.bf16.msra.mxu0 %v217
  %235 = vmatprep.subr.bf16.mxu0 0
  %236 = vmatpush2.bf16.msra.mxu0 0
  %237 = vmatprep.subr.bf16.mxu0 0
  %238 = vmatpush2.bf16.msra.mxu0 0
  %239 = vmatprep.subr.bf16.mxu0 0
  %240 = vmatpush2.bf16.msra.mxu0 0
  %241 = vmatprep.subr.bf16.mxu0 0
  %242 = vmatpush2.bf16.msra.mxu0 0
  %243 = vmatprep.subr.bf16.mxu0 0
  %244 = vmatpush2.bf16.msra.mxu0 0
  %245 = vmatprep.subr.bf16.mxu0 0
  %246 = vmatpush2.bf16.msra.mxu0 0
  %247 = vmatprep.subr.bf16.mxu0 0
  %248 = vmatpush2.bf16.msra.mxu0 0
  %249 = vmatprep.subr.bf16.mxu0 0
  %250 = vmatpush2.bf16.msra.mxu0 0
  %251 = vmatprep.mubr.bf16.mxu0 0
  %252 = vmatmul.mubr.bf16.gmra.mxu0 %v101
  %v253 = vpop.f32.mrf.mxu0
  %v254 = vadd.f32 %v211, %v253
  %v255 = vpop.f32.mrf.mxu0
  %v256 = vpop.f32.mrf.mxu0
  %v257 = vadd.f32 %v211, %v256
  %v258 = vpop.f32.mrf.mxu0
  %259 = vdwg.mxu0
  %260 = vst.msk [vmem:[%s11] sm:$0xff] %vm38, %v254
  %261 = vst.msk [vmem:[%s11 + $0x8] sm:$0xff] %vm38, %v257
  // Predicated region
  $region38: #{miipher_forward.48} parent=0 // pred_check
    _
  $region39: #{miipher_forward.48} parent=0 // pred_check_branch
    %263 = sbr.rel (0) target = $region41
  $region40: #{miipher_forward.48} parent=0 // pred_region
    _
  $region41: #{miipher_forward.48} parent=0 // pred_fallthru
    _
  // Predicated region
  $region42: #{miipher_forward.48} parent=0 // pred_check
    _
  $region43: #{miipher_forward.48} parent=0 // pred_check_branch
    %265 = sbr.rel (0) target = $region45
  $region44: #{miipher_forward.48} parent=0 // pred_region
    _
  $region45: #{miipher_forward.48} parent=0 // pred_fallthru
    _
  // Predicated region
  $region46: #{miipher_forward.48} parent=0 // pred_check
    _
  $region47: #{miipher_forward.48} parent=0 // pred_check_branch
    %267 = sbr.rel (0) target = $region49
  $region48: #{miipher_forward.48} parent=0 // pred_region
    _
  $region49: #{miipher_forward.48} parent=0 // pred_fallthru
    _
  // Predicated region
  $region50: #{miipher_forward.48} parent=0 // pred_check
    _
  $region51: #{miipher_forward.48} parent=0 // pred_check_branch
    %269 = sbr.rel (0) target = $region53
  $region52: #{miipher_forward.48} parent=0 // pred_region
    _
  $region53: #{miipher_forward.48} parent=0 // pred_fallthru
    _
  // Predicated region
  $region54: #{miipher_forward.48} parent=0 // pred_check
    _
  $region55: #{miipher_forward.48} parent=0 // pred_check_branch
    %271 = sbr.rel (0) target = $region57
  $region56: #{miipher_forward.48} parent=0 // pred_region
    _
  $region57: #{miipher_forward.48} parent=0 // pred_fallthru
    _
  // Predicated region
  $region58: #{miipher_forward.48} parent=0 // pred_check
    _
  $region59: #{miipher_forward.48} parent=0 // pred_check_branch
    %273 = sbr.rel (0) target = $region61
  $region60: #{miipher_forward.48} parent=0 // pred_region
    _
  $region61: #{miipher_forward.48} parent=0 // pred_fallthru
    _

// kernel: miipher_forward.47
$region0: #{miipher_forward.47}
  #allocation0 [shape = 'u32[]', space=smem, size = 0x4, offset = 0x4, fixed_abs, tag = 'smem constant byte address 0x4 - core index']
  #allocation1 [shape = 'u32[144,128]{1,0:T(1,128)}', space=vmem, size = 0x12000, scoped, tag = 'internal scratch']
  #allocation2 [shape = 'bf16[16,16]{1,0:T(8,128)(2,1)}', space=vmem, size = 0x1000, scoped, tag = 'scratch operand']
  #allocation3 [shape = 'f32[16,16]{1,0:T(8,128)}', space=vmem, size = 0x2000, scoped, tag = 'scratch operand']
  %s0 = inlined_call_operand.vmem [shape: f32[16,16], index: 0, kind: input, shape index: {}]
  %s1 = inlined_call_operand.vmem [shape: f32[1,16], index: 1, kind: input, shape index: {}]
  %s2 = inlined_call_operand.vmem [shape: f32[1,16], index: 2, kind: input, shape index: {}]
  %s3 = inlined_call_operand.vmem [shape: bf16[16,64], index: 3, kind: input, shape index: {}]
  %s4 = inlined_call_operand.vmem [shape: f32[1,64], index: 4, kind: input, shape index: {}]
  %s5 = inlined_call_operand.vmem [shape: bf16[64,16], index: 5, kind: input, shape index: {}]
  %s6 = inlined_call_operand.vmem [shape: f32[1,16], index: 6, kind: input, shape index: {}]
  %s7 = inlined_call_operand.vmem [shape: f32[16,16], index: 7, kind: output, shape index: {}]
  %s8 = sld [smem:[#allocation0]]
  $region46: #{miipher_forward.47} parent=0
    _
  %s10 = ssub.s32 1, %s8
  %s11 = scalar_select 0, %s10, %s8
  // Predicated region
  $region2: #{miipher_forward.47} parent=0 // pred_check
    _
  $region3: #{miipher_forward.47} parent=0 // pred_check_branch
    %13 = sbr.rel (0) target = $region5
  $region4: #{miipher_forward.47} parent=0 // pred_region
    _
  $region5: #{miipher_forward.47} parent=0 // pred_fallthru
    _
  // Predicated region
  $region6: #{miipher_forward.47} parent=0 // pred_check
    _
  $region7: #{miipher_forward.47} parent=0 // pred_check_branch
    %15 = sbr.rel (0) target = $region9
  $region8: #{miipher_forward.47} parent=0 // pred_region
    _
  $region9: #{miipher_forward.47} parent=0 // pred_fallthru
    _
  // Predicated region
  $region10: #{miipher_forward.47} parent=0 // pred_check
    _
  $region11: #{miipher_forward.47} parent=0 // pred_check_branch
    %17 = sbr.rel (0) target = $region13
  $region12: #{miipher_forward.47} parent=0 // pred_region
    _
  $region13: #{miipher_forward.47} parent=0 // pred_fallthru
    _
  // Predicated region
  $region14: #{miipher_forward.47} parent=0 // pred_check
    _
  $region15: #{miipher_forward.47} parent=0 // pred_check_branch
    %19 = sbr.rel (0) target = $region17
  $region16: #{miipher_forward.47} parent=0 // pred_region
    _
  $region17: #{miipher_forward.47} parent=0 // pred_fallthru
    _
  // Predicated region
  $region18: #{miipher_forward.47} parent=0 // pred_check
    _
  $region19: #{miipher_forward.47} parent=0 // pred_check_branch
    %21 = sbr.rel (0) target = $region21
  $region20: #{miipher_forward.47} parent=0 // pred_region
    _
  $region21: #{miipher_forward.47} parent=0 // pred_fallthru
    _
  // Predicated region
  $region22: #{miipher_forward.47} parent=0 // pred_check
    _
  $region23: #{miipher_forward.47} parent=0 // pred_check_branch
    %23 = sbr.rel (0) target = $region25
  $region24: #{miipher_forward.47} parent=0 // pred_region
    _
  $region25: #{miipher_forward.47} parent=0 // pred_fallthru
    _
  // Predicated region
  $region26: #{miipher_forward.47} parent=0 // pred_check
    _
  $region27: #{miipher_forward.47} parent=0 // pred_check_branch
    %25 = sbr.rel (0) target = $region29
  $region28: #{miipher_forward.47} parent=0 // pred_region
    _
  $region29: #{miipher_forward.47} parent=0 // pred_fallthru
    _
  %p27 = scmp.eq.s32.totalorder 0, 0
  // Predicated region
  $region30: #{miipher_forward.47} parent=0 // pred_check
    %p28 = pneg %p27
  $region31: #{miipher_forward.47} parent=0 // pred_check_branch
    %30 = sbr.rel (%p28) target = $region33
  $region32: #{miipher_forward.47} parent=0 // pred_region
    %v31 = vld [vmem:[%s0] sm:$0xff]
    %v32 = vld [vmem:[%s0 + $0x8] sm:$0xff]
    %vm33 = vcmask 130048
    %v34 = vsel %vm33, %v31, 0.0
    %35 = vadd.xlane.f32.xlu0 %v34
    %v36 = vpop.xlane.xlu0 %35
    %v37 = vsel %vm33, %v32, 0.0
    %38 = vadd.xlane.f32.xlu0 %v37
    %v39 = vpop.xlane.xlu0 %38
    %v40 = vrcp.pop 16.0
    %v41 = vmul.f32 %v36, %v40
    %v42 = vmul.f32 %v39, %v40
    %v43 = vsub.f32 %v31, %v41
    %v44 = vsub.f32 %v32, %v42
    %v45 = vmul.f32 %v43, %v43
    %v46 = vmul.f32 %v44, %v44
    %v47 = vsel %vm33, %v45, 0.0
    %48 = vadd.xlane.f32.xlu0 %v47
    %v49 = vpop.xlane.xlu0 %48
    %v50 = vsel %vm33, %v46, 0.0
    %51 = vadd.xlane.f32.xlu0 %v50
    %v52 = vpop.xlane.xlu0 %51
    %v53 = vmul.f32 %v49, %v40
    %v54 = vmul.f32 %v52, %v40
    %v55 = vadd.f32 %v53, 1e-05
    %v56 = vadd.f32 %v54, 1e-05
    %v57 = vrsqrt.pop %v55
    %v58 = vrsqrt.pop %v56
    %v59 = vmul.f32 %v43, %v57
    %v60 = vmul.f32 %v44, %v58
    %v61 = vld [vmem:[%s1] sm:$0x1]
    %v63 = vlaneseq
    %v64 = vshrl.u32 %v63, 7
    %v65 = vsub.s32 0, %v64
    %v66 = vrot.slane %v61, %v65
    %v68 = vmul.f32 %v59, %v66
    %v69 = vmul.f32 %v60, %v66
    %v70 = vld [vmem:[%s2] sm:$0x1]
    %v72 = vlaneseq
    %v73 = vshrl.u32 %v72, 7
    %v74 = vsub.s32 0, %v73
    %v75 = vrot.slane %v70, %v74
    %v77 = vadd.f32 %v68, %v75
    %v78 = vadd.f32 %v69, %v75
    %v79 = vpack.c.bf16 %v78, %v77
    %v81 = vunpack.c.l.b16 %v79
    %v82 = vunpack.c.h.b16 %v79
    %v83 = vpack.c.b16 %v81, %v81
    %v84 = vpack.c.b16 %v82, %v82
    %vm87 = vcmask 125952
    %88 = vst.msk [vmem:[#allocation2] sm:$0xf] %vm87, %v83
    %89 = vst.msk [vmem:[#allocation2 + $0x4] sm:$0xf] %vm87, %v84
    %90 = vst.msk [vmem:[#allocation3] sm:$0xff] %vm33, 0.0
    %91 = vst.msk [vmem:[#allocation3 + $0x8] sm:$0xff] %vm33, 0.0
  $region33: #{miipher_forward.47} parent=0 // pred_fallthru
    _
  %v92 = vld [vmem:[#allocation2] sm:$0xf]
  %v93 = vld [vmem:[#allocation2 + $0x4] sm:$0xf]
  %v94 = vld [vmem:[%s3] sm:$0xf]
  %v95 = vld [vmem:[%s3 + $0x4] sm:$0xf]
  %v96 = vld [vmem:[%s4] sm:$0x1]
  %v98 = vlaneseq
  %v99 = vshrl.u32 %v98, 7
  %v100 = vsub.s32 0, %v99
  %v101 = vrot.slane %v96, %v100
  %v105 = vunpack.c.l.b16 %v92
  %v106 = vunpack.c.l.b16 %v93
  %v107 = vpack.c.b16 %v106, %v105
  %v110 = vunpack.c.l.b16 %v94
  %v111 = vunpack.c.l.b16 %v95
  %v112 = vpack.c.b16 %v111, %v110
  %vm114 = vcmask 130048
  %v116 = vsel %vm114, %v107, 0
  %118 = vmatprep.subr.bf16.mxu0 0
  %119 = vmatpush1.bf16.msra.mxu0 0
  %120 = vmatprep.subr.bf16.mxu0 0
  %121 = vmatpush1.bf16.msra.mxu0 0
  %122 = vmatprep.subr.bf16.mxu0 0
  %123 = vmatpush1.bf16.msra.mxu0 0
  %124 = vmatprep.subr.bf16.mxu0 0
  %125 = vmatpush1.bf16.msra.mxu0 0
  %126 = vmatprep.subr.bf16.mxu0 0
  %127 = vmatpush1.bf16.msra.mxu0 0
  %128 = vmatprep.subr.bf16.mxu0 0
  %129 = vmatpush1.bf16.msra.mxu0 0
  %130 = vmatprep.subr.bf16.mxu0 0
  %131 = vmatpush1.bf16.msra.mxu0 0
  %132 = vmatprep.subr.bf16.mxu0 0
  %133 = vmatpush1.bf16.msra.mxu0 %v112
  %134 = vmatprep.subr.bf16.mxu0 0
  %135 = vmatpush2.bf16.msra.mxu0 0
  %136 = vmatprep.subr.bf16.mxu0 0
  %137 = vmatpush2.bf16.msra.mxu0 0
  %138 = vmatprep.subr.bf16.mxu0 0
  %139 = vmatpush2.bf16.msra.mxu0 0
  %140 = vmatprep.subr.bf16.mxu0 0
  %141 = vmatpush2.bf16.msra.mxu0 0
  %142 = vmatprep.subr.bf16.mxu0 0
  %143 = vmatpush2.bf16.msra.mxu0 0
  %144 = vmatprep.subr.bf16.mxu0 0
  %145 = vmatpush2.bf16.msra.mxu0 0
  %146 = vmatprep.subr.bf16.mxu0 0
  %147 = vmatpush2.bf16.msra.mxu0 0
  %148 = vmatprep.subr.bf16.mxu0 0
  %149 = vmatpush2.bf16.msra.mxu0 0
  %150 = vmatprep.mubr.bf16.mxu0 0
  %151 = vmatmul.mubr.bf16.gmra.mxu0 %v116
  %v152 = vpop.f32.mrf.mxu0
  %v153 = vadd.f32 %v101, %v152
  %v154 = vpop.f32.mrf.mxu0
  %v155 = vpop.f32.mrf.mxu0
  %v156 = vadd.f32 %v101, %v155
  %v157 = vpop.f32.mrf.mxu0
  %158 = vdwg.mxu0
  %v159 = vxor.u32 %v153, 2147483648
  %v160 = vxor.u32 %v156, 2147483648
  %v161 = vmul.f32 %v159, 1.442695
  %v162 = vpow.pop %v161
  %v163 = vmul.f32 %v160, 1.442695
  %v164 = vpow.pop %v163
  %v165 = vadd.f32 %v162, 1.0
  %v166 = vadd.f32 %v164, 1.0
  %v167 = vrcp.pop %v165
  %v168 = vmul.f32 1.0, %v167
  %v169 = vrcp.pop %v166
  %v170 = vmul.f32 1.0, %v169
  %v171 = vmul.f32 %v153, %v168
  %v172 = vmul.f32 %v156, %v170
  %v173 = vld [vmem:[#allocation3] sm:$0xff]
  %v174 = vld [vmem:[#allocation3 + $0x8] sm:$0xff]
  %v175 = vpack.c.bf16 %v172, %v171
  %v176 = vld [vmem:[%s5] sm:$0xf]
  %v177 = vld [vmem:[%s5 + $0x4] sm:$0xf]
  %v178 = vld [vmem:[%s5 + $0x8] sm:$0xf]
  %v179 = vld [vmem:[%s5 + $0xc] sm:$0xf]
  %v180 = vld [vmem:[%s5 + $0x10] sm:$0xf]
  %v181 = vld [vmem:[%s5 + $0x14] sm:$0xf]
  %v182 = vld [vmem:[%s5 + $0x18] sm:$0xf]
  %v183 = vld [vmem:[%s5 + $0x1c] sm:$0xf]
  %v192 = vunpack.c.l.b16 %v176
  %v193 = vunpack.c.l.b16 %v177
  %v194 = vunpack.c.l.b16 %v178
  %v195 = vunpack.c.l.b16 %v179
  %v196 = vunpack.c.l.b16 %v180
  %v197 = vunpack.c.l.b16 %v181
  %v198 = vunpack.c.l.b16 %v182
  %v199 = vunpack.c.l.b16 %v183
  %v200 = vpack.c.b16 %v193, %v192
  %v201 = vpack.c.b16 %v195, %v194
  %v202 = vpack.c.b16 %v197, %v196
  %v203 = vpack.c.b16 %v199, %v198
  %vm208 = vcmask 523264
  %v210 = vsel %vm208, %v175, 0
  %212 = vmatprep.subr.bf16.mxu0 0
  %213 = vmatpush1.bf16.msra.mxu0 0
  %214 = vmatprep.subr.bf16.mxu0 0
  %215 = vmatpush1.bf16.msra.mxu0 0
  %216 = vmatprep.subr.bf16.mxu0 0
  %217 = vmatpush1.bf16.msra.mxu0 0
  %218 = vmatprep.subr.bf16.mxu0 0
  %219 = vmatpush1.bf16.msra.mxu0 0
  %220 = vmatprep.subr.bf16.mxu0 0
  %221 = vmatpush1.bf16.msra.mxu0 %v203
  %222 = vmatprep.subr.bf16.mxu0 0
  %223 = vmatpush1.bf16.msra.mxu0 %v202
  %224 = vmatprep.subr.bf16.mxu0 0
  %225 = vmatpush1.bf16.msra.mxu0 %v201
  %226 = vmatprep.subr.bf16.mxu0 0
  %227 = vmatpush1.bf16.msra.mxu0 %v200
  %228 = vmatprep.subr.bf16.mxu0 0
  %229 = vmatpush2.bf16.msra.mxu0 0
  %230 = vmatprep.subr.bf16.mxu0 0
  %231 = vmatpush2.bf16.msra.mxu0 0
  %232 = vmatprep.subr.bf16.mxu0 0
  %233 = vmatpush2.bf16.msra.mxu0 0
  %234 = vmatprep.subr.bf16.mxu0 0
  %235 = vmatpush2.bf16.msra.mxu0 0
  %236 = vmatprep.subr.bf16.mxu0 0
  %237 = vmatpush2.bf16.msra.mxu0 0
  %238 = vmatprep.subr.bf16.mxu0 0
  %239 = vmatpush2.bf16.msra.mxu0 0
  %240 = vmatprep.subr.bf16.mxu0 0
  %241 = vmatpush2.bf16.msra.mxu0 0
  %242 = vmatprep.subr.bf16.mxu0 0
  %243 = vmatpush2.bf16.msra.mxu0 0
  %244 = vmatprep.mubr.bf16.mxu0 0
  %245 = vmatmul.mubr.bf16.gmra.mxu0 %v210
  %v246 = vpop.f32.mrf.mxu0
  %v247 = vadd.f32 0.0, %v246
  %v248 = vpop.f32.mrf.mxu0
  %v249 = vpop.f32.mrf.mxu0
  %v250 = vadd.f32 0.0, %v249
  %v251 = vpop.f32.mrf.mxu0
  %252 = vdwg.mxu0
  %v253 = vadd.f32 %v173, %v247
  %v254 = vadd.f32 %v174, %v250
  %255 = vst.msk [vmem:[#allocation3] sm:$0xff] %vm114, %v253
  %256 = vst.msk [vmem:[#allocation3 + $0x8] sm:$0xff] %vm114, %v254
  // Predicated region
  $region34: #{miipher_forward.47} parent=0 // pred_check
    %p257 = pneg %p27
  $region35: #{miipher_forward.47} parent=0 // pred_check_branch
    %259 = sbr.rel (%p257) target = $region37
  $region36: #{miipher_forward.47} parent=0 // pred_region
    %v260 = vld [vmem:[%s0] sm:$0xff]
    %v261 = vld [vmem:[%s0 + $0x8] sm:$0xff]
    %v262 = vld [vmem:[#allocation3] sm:$0xff]
    %v263 = vld [vmem:[#allocation3 + $0x8] sm:$0xff]
    %v264 = vld [vmem:[%s6] sm:$0x1]
    %v266 = vlaneseq
    %v267 = vshrl.u32 %v266, 7
    %v268 = vsub.s32 0, %v267
    %v269 = vrot.slane %v264, %v268
    %v271 = vadd.f32 %v262, %v269
    %v272 = vadd.f32 %v263, %v269
    %v273 = vmul.f32 %v271, 0.5
    %v274 = vmul.f32 %v272, 0.5
    %v275 = vadd.f32 %v260, %v273
    %v276 = vadd.f32 %v261, %v274
    %277 = vst.msk [vmem:[%s7] sm:$0xff] %vm114, %v275
    %278 = vst.msk [vmem:[%s7 + $0x8] sm:$0xff] %vm114, %v276
  $region37: #{miipher_forward.47} parent=0 // pred_fallthru
    _
  // Predicated region
  $region38: #{miipher_forward.47} parent=0 // pred_check
    _
  $region39: #{miipher_forward.47} parent=0 // pred_check_branch
    %280 = sbr.rel (0) target = $region41
  $region40: #{miipher_forward.47} parent=0 // pred_region
    _
  $region41: #{miipher_forward.47} parent=0 // pred_fallthru
    _
  // Predicated region
  $region42: #{miipher_forward.47} parent=0 // pred_check
    _
  $region43: #{miipher_forward.47} parent=0 // pred_check_branch
    %282 = sbr.rel (0) target = $region45
  $region44: #{miipher_forward.47} parent=0 // pred_region
    _
  $region45: #{miipher_forward.47} parent=0 // pred_fallthru
    _

// kernel: miipher_forward.50
$region0: #{miipher_forward.50}
  #allocation0 [shape = 'u32[]', space=smem, size = 0x4, offset = 0x4, fixed_abs, tag = 'smem constant byte address 0x4 - core index']
  #allocation1 [shape = 'u32[144,128]{1,0:T(1,128)}', space=vmem, size = 0x12000, scoped, tag = 'internal scratch']
  %s0 = inlined_call_operand.vmem [shape: f32[16,16], index: 0, kind: input, shape index: {}]
  %s1 = inlined_call_operand.vmem [shape: f32[16,16], index: 1, kind: input, shape index: {}]
  %s2 = inlined_call_operand.vmem [shape: bf16[16,16], index: 2, kind: input, shape index: {}]
  %s3 = inlined_call_operand.vmem [shape: f32[1,16], index: 3, kind: input, shape index: {}]
  %s4 = inlined_call_operand.vmem [shape: f32[16,16], index: 4, kind: output, shape index: {}]
  %s5 = sld [smem:[#allocation0]]
  $region26: #{miipher_forward.50} parent=0
    _
  %s7 = ssub.s32 1, %s5
  %s8 = scalar_select 0, %s7, %s5
  // Predicated region
  $region2: #{miipher_forward.50} parent=0 // pred_check
    _
  $region3: #{miipher_forward.50} parent=0 // pred_check_branch
    %10 = sbr.rel (0) target = $region5
  $region4: #{miipher_forward.50} parent=0 // pred_region
    _
  $region5: #{miipher_forward.50} parent=0 // pred_fallthru
    _
  // Predicated region
  $region6: #{miipher_forward.50} parent=0 // pred_check
    _
  $region7: #{miipher_forward.50} parent=0 // pred_check_branch
    %12 = sbr.rel (0) target = $region9
  $region8: #{miipher_forward.50} parent=0 // pred_region
    _
  $region9: #{miipher_forward.50} parent=0 // pred_fallthru
    _
  // Predicated region
  $region10: #{miipher_forward.50} parent=0 // pred_check
    _
  $region11: #{miipher_forward.50} parent=0 // pred_check_branch
    %14 = sbr.rel (0) target = $region13
  $region12: #{miipher_forward.50} parent=0 // pred_region
    _
  $region13: #{miipher_forward.50} parent=0 // pred_fallthru
    _
  // Predicated region
  $region14: #{miipher_forward.50} parent=0 // pred_check
    _
  $region15: #{miipher_forward.50} parent=0 // pred_check_branch
    %16 = sbr.rel (0) target = $region17
  $region16: #{miipher_forward.50} parent=0 // pred_region
    _
  $region17: #{miipher_forward.50} parent=0 // pred_fallthru
    _
  %v18 = vld [vmem:[%s0] sm:$0xff]
  %v19 = vld [vmem:[%s0 + $0x8] sm:$0xff]
  %v20 = vpack.c.bf16 %v19, %v18
  %v21 = vld [vmem:[%s2] sm:$0xf]
  %v22 = vld [vmem:[%s2 + $0x4] sm:$0xf]
  %v23 = vld [vmem:[%s3] sm:$0x1]
  %v25 = vlaneseq
  %v26 = vshrl.u32 %v25, 7
  %v27 = vsub.s32 0, %v26
  %v28 = vrot.slane %v23, %v27
  %v32 = vunpack.c.l.b16 %v21
  %v33 = vunpack.c.l.b16 %v22
  %v34 = vpack.c.b16 %v33, %v32
  %vm36 = vcmask 130048
  %v38 = vsel %vm36, %v20, 0
  %40 = vmatprep.subr.bf16.mxu0 0
  %41 = vmatpush1.bf16.msra.mxu0 0
  %42 = vmatprep.subr.bf16.mxu0 0
  %43 = vmatpush1.bf16.msra.mxu0 0
  %44 = vmatprep.subr.bf16.mxu0 0
  %45 = vmatpush1.bf16.msra.mxu0 0
  %46 = vmatprep.subr.bf16.mxu0 0
  %47 = vmatpush1.bf16.msra.mxu0 0
  %48 = vmatprep.subr.bf16.mxu0 0
  %49 = vmatpush1.bf16.msra.mxu0 0
  %50 = vmatprep.subr.bf16.mxu0 0
  %51 = vmatpush1.bf16.msra.mxu0 0
  %52 = vmatprep.subr.bf16.mxu0 0
  %53 = vmatpush1.bf16.msra.mxu0 0
  %54 = vmatprep.subr.bf16.mxu0 0
  %55 = vmatpush1.bf16.msra.mxu0 %v34
  %56 = vmatprep.subr.bf16.mxu0 0
  %57 = vmatpush2.bf16.msra.mxu0 0
  %58 = vmatprep.subr.bf16.mxu0 0
  %59 = vmatpush2.bf16.msra.mxu0 0
  %60 = vmatprep.subr.bf16.mxu0 0
  %61 = vmatpush2.bf16.msra.mxu0 0
  %62 = vmatprep.subr.bf16.mxu0 0
  %63 = vmatpush2.bf16.msra.mxu0 0
  %64 = vmatprep.subr.bf16.mxu0 0
  %65 = vmatpush2.bf16.msra.mxu0 0
  %66 = vmatprep.subr.bf16.mxu0 0
  %67 = vmatpush2.bf16.msra.mxu0 0
  %68 = vmatprep.subr.bf16.mxu0 0
  %69 = vmatpush2.bf16.msra.mxu0 0
  %70 = vmatprep.subr.bf16.mxu0 0
  %71 = vmatpush2.bf16.msra.mxu0 0
  %72 = vmatprep.mubr.bf16.mxu0 0
  %73 = vmatmul.mubr.bf16.gmra.mxu0 %v38
  %v74 = vpop.f32.mrf.mxu0
  %v75 = vadd.f32 %v28, %v74
  %v76 = vpop.f32.mrf.mxu0
  %v77 = vpop.f32.mrf.mxu0
  %v78 = vadd.f32 %v28, %v77
  %v79 = vpop.f32.mrf.mxu0
  %80 = vdwg.mxu0
  %v81 = vld [vmem:[%s1] sm:$0xff]
  %v82 = vld [vmem:[%s1 + $0x8] sm:$0xff]
  %v83 = vadd.f32 %v81, %v75
  %v84 = vadd.f32 %v82, %v78
  %85 = vst.msk [vmem:[%s4] sm:$0xff] %vm36, %v83
  %86 = vst.msk [vmem:[%s4 + $0x8] sm:$0xff] %vm36, %v84
  // Predicated region
  $region18: #{miipher_forward.50} parent=0 // pred_check
    _
  $region19: #{miipher_forward.50} parent=0 // pred_check_branch
    %88 = sbr.rel (0) target = $region21
  $region20: #{miipher_forward.50} parent=0 // pred_region
    _
  $region21: #{miipher_forward.50} parent=0 // pred_fallthru
    _
  // Predicated region
  $region22: #{miipher_forward.50} parent=0 // pred_check
    _
  $region23: #{miipher_forward.50} parent=0 // pred_check_branch
    %90 = sbr.rel (0) target = $region25
  $region24: #{miipher_forward.50} parent=0 // pred_region
    _
  $region25: #{miipher_forward.50} parent=0 // pred_fallthru
    _

// kernel: miipher_forward.51
$region0: #{miipher_forward.51}
  #allocation0 [shape = 'u32[]', space=smem, size = 0x4, offset = 0x4, fixed_abs, tag = 'smem constant byte address 0x4 - core index']
  #allocation1 [shape = 'u32[144,128]{1,0:T(1,128)}', space=vmem, size = 0x12000, scoped, tag = 'internal scratch']
  %s0 = inlined_call_operand.vmem [shape: f32[16,16], index: 0, kind: input, shape index: {}]
  %s1 = inlined_call_operand.vmem [shape: f32[1,16], index: 1, kind: input, shape index: {}]
  %s2 = inlined_call_operand.vmem [shape: f32[1,16], index: 2, kind: input, shape index: {}]
  %s3 = inlined_call_operand.vmem [shape: bf16[16,16], index: 3, kind: input, shape index: {}]
  %s4 = inlined_call_operand.vmem [shape: f32[1,16], index: 4, kind: input, shape index: {}]
  %s5 = inlined_call_operand.vmem [shape: bf16[16,16], index: 5, kind: input, shape index: {}]
  %s6 = inlined_call_operand.vmem [shape: f32[1,16], index: 6, kind: input, shape index: {}]
  %s7 = inlined_call_operand.vmem [shape: f32[16,16], index: 7, kind: output, shape index: {}]
  %s8 = sld [smem:[#allocation0]]
  $region38: #{miipher_forward.51} parent=0
    _
  %s10 = ssub.s32 1, %s8
  %s11 = scalar_select 0, %s10, %s8
  // Predicated region
  $region2: #{miipher_forward.51} parent=0 // pred_check
    _
  $region3: #{miipher_forward.51} parent=0 // pred_check_branch
    %13 = sbr.rel (0) target = $region5
  $region4: #{miipher_forward.51} parent=0 // pred_region
    _
  $region5: #{miipher_forward.51} parent=0 // pred_fallthru
    _
  // Predicated region
  $region6: #{miipher_forward.51} parent=0 // pred_check
    _
  $region7: #{miipher_forward.51} parent=0 // pred_check_branch
    %15 = sbr.rel (0) target = $region9
  $region8: #{miipher_forward.51} parent=0 // pred_region
    _
  $region9: #{miipher_forward.51} parent=0 // pred_fallthru
    _
  // Predicated region
  $region10: #{miipher_forward.51} parent=0 // pred_check
    _
  $region11: #{miipher_forward.51} parent=0 // pred_check_branch
    %17 = sbr.rel (0) target = $region13
  $region12: #{miipher_forward.51} parent=0 // pred_region
    _
  $region13: #{miipher_forward.51} parent=0 // pred_fallthru
    _
  // Predicated region
  $region14: #{miipher_forward.51} parent=0 // pred_check
    _
  $region15: #{miipher_forward.51} parent=0 // pred_check_branch
    %19 = sbr.rel (0) target = $region17
  $region16: #{miipher_forward.51} parent=0 // pred_region
    _
  $region17: #{miipher_forward.51} parent=0 // pred_fallthru
    _
  // Predicated region
  $region18: #{miipher_forward.51} parent=0 // pred_check
    _
  $region19: #{miipher_forward.51} parent=0 // pred_check_branch
    %21 = sbr.rel (0) target = $region21
  $region20: #{miipher_forward.51} parent=0 // pred_region
    _
  $region21: #{miipher_forward.51} parent=0 // pred_fallthru
    _
  // Predicated region
  $region22: #{miipher_forward.51} parent=0 // pred_check
    _
  $region23: #{miipher_forward.51} parent=0 // pred_check_branch
    %23 = sbr.rel (0) target = $region25
  $region24: #{miipher_forward.51} parent=0 // pred_region
    _
  $region25: #{miipher_forward.51} parent=0 // pred_fallthru
    _
  // Predicated region
  $region26: #{miipher_forward.51} parent=0 // pred_check
    _
  $region27: #{miipher_forward.51} parent=0 // pred_check_branch
    %25 = sbr.rel (0) target = $region29
  $region28: #{miipher_forward.51} parent=0 // pred_region
    _
  $region29: #{miipher_forward.51} parent=0 // pred_fallthru
    _
  %v27 = vld [vmem:[%s0] sm:$0xff]
  %v28 = vld [vmem:[%s0 + $0x8] sm:$0xff]
  %vm29 = vcmask 130048
  %v30 = vsel %vm29, %v27, 0.0
  %31 = vadd.xlane.f32.xlu0 %v30
  %v32 = vpop.xlane.xlu0 %31
  %v33 = vsel %vm29, %v28, 0.0
  %34 = vadd.xlane.f32.xlu0 %v33
  %v35 = vpop.xlane.xlu0 %34
  %v36 = vrcp.pop 16.0
  %v37 = vmul.f32 %v32, %v36
  %v38 = vmul.f32 %v35, %v36
  %v39 = vsub.f32 %v27, %v37
  %v40 = vsub.f32 %v28, %v38
  %v41 = vmul.f32 %v39, %v39
  %v42 = vmul.f32 %v40, %v40
  %v43 = vsel %vm29, %v41, 0.0
  %44 = vadd.xlane.f32.xlu0 %v43
  %v45 = vpop.xlane.xlu0 %44
  %v46 = vsel %vm29, %v42, 0.0
  %47 = vadd.xlane.f32.xlu0 %v46
  %v48 = vpop.xlane.xlu0 %47
  %v49 = vmul.f32 %v45, %v36
  %v50 = vmul.f32 %v48, %v36
  %v51 = vadd.f32 %v49, 1e-05
  %v52 = vadd.f32 %v50, 1e-05
  %v53 = vrsqrt.pop %v51
  %v54 = vrsqrt.pop %v52
  %v55 = vmul.f32 %v39, %v53
  %v56 = vmul.f32 %v40, %v54
  %v57 = vld [vmem:[%s1] sm:$0x1]
  %v59 = vlaneseq
  %v60 = vshrl.u32 %v59, 7
  %v61 = vsub.s32 0, %v60
  %v62 = vrot.slane %v57, %v61
  %v64 = vmul.f32 %v55, %v62
  %v65 = vmul.f32 %v56, %v62
  %v66 = vld [vmem:[%s2] sm:$0x1]
  %v68 = vlaneseq
  %v69 = vshrl.u32 %v68, 7
  %v70 = vsub.s32 0, %v69
  %v71 = vrot.slane %v66, %v70
  %v73 = vadd.f32 %v64, %v71
  %v74 = vadd.f32 %v65, %v71
  %v75 = vpack.c.bf16 %v74, %v73
  %v76 = vld [vmem:[%s3] sm:$0xf]
  %v77 = vld [vmem:[%s3 + $0x4] sm:$0xf]
  %v78 = vld [vmem:[%s4] sm:$0x1]
  %v80 = vlaneseq
  %v81 = vshrl.u32 %v80, 7
  %v82 = vsub.s32 0, %v81
  %v83 = vrot.slane %v78, %v82
  %v87 = vunpack.c.l.b16 %v76
  %v88 = vunpack.c.l.b16 %v77
  %v89 = vpack.c.b16 %v88, %v87
  %v92 = vsel %vm29, %v75, 0
  %94 = vmatprep.subr.bf16.mxu0 0
  %95 = vmatpush1.bf16.msra.mxu0 0
  %96 = vmatprep.subr.bf16.mxu0 0
  %97 = vmatpush1.bf16.msra.mxu0 0
  %98 = vmatprep.subr.bf16.mxu0 0
  %99 = vmatpush1.bf16.msra.mxu0 0
  %100 = vmatprep.subr.bf16.mxu0 0
  %101 = vmatpush1.bf16.msra.mxu0 0
  %102 = vmatprep.subr.bf16.mxu0 0
  %103 = vmatpush1.bf16.msra.mxu0 0
  %104 = vmatprep.subr.bf16.mxu0 0
  %105 = vmatpush1.bf16.msra.mxu0 0
  %106 = vmatprep.subr.bf16.mxu0 0
  %107 = vmatpush1.bf16.msra.mxu0 0
  %108 = vmatprep.subr.bf16.mxu0 0
  %109 = vmatpush1.bf16.msra.mxu0 %v89
  %110 = vmatprep.subr.bf16.mxu0 0
  %111 = vmatpush2.bf16.msra.mxu0 0
  %112 = vmatprep.subr.bf16.mxu0 0
  %113 = vmatpush2.bf16.msra.mxu0 0
  %114 = vmatprep.subr.bf16.mxu0 0
  %115 = vmatpush2.bf16.msra.mxu0 0
  %116 = vmatprep.subr.bf16.mxu0 0
  %117 = vmatpush2.bf16.msra.mxu0 0
  %118 = vmatprep.subr.bf16.mxu0 0
  %119 = vmatpush2.bf16.msra.mxu0 0
  %120 = vmatprep.subr.bf16.mxu0 0
  %121 = vmatpush2.bf16.msra.mxu0 0
  %122 = vmatprep.subr.bf16.mxu0 0
  %123 = vmatpush2.bf16.msra.mxu0 0
  %124 = vmatprep.subr.bf16.mxu0 0
  %125 = vmatpush2.bf16.msra.mxu0 0
  %126 = vmatprep.mubr.bf16.mxu0 0
  %127 = vmatmul.mubr.bf16.gmra.mxu0 %v92
  %v128 = vpop.f32.mrf.mxu0
  %v129 = vadd.f32 %v83, %v128
  %v130 = vpop.f32.mrf.mxu0
  %v131 = vpop.f32.mrf.mxu0
  %v132 = vadd.f32 %v83, %v131
  %v133 = vpop.f32.mrf.mxu0
  %134 = vdwg.mxu0
  %v135 = vld [vmem:[%s5] sm:$0xf]
  %v136 = vld [vmem:[%s5 + $0x4] sm:$0xf]
  %v137 = vld [vmem:[%s6] sm:$0x1]
  %v139 = vlaneseq
  %v140 = vshrl.u32 %v139, 7
  %v141 = vsub.s32 0, %v140
  %v142 = vrot.slane %v137, %v141
  %v146 = vunpack.c.l.b16 %v135
  %v147 = vunpack.c.l.b16 %v136
  %v148 = vpack.c.b16 %v147, %v146
  %150 = vmatprep.subr.bf16.mxu0 0
  %151 = vmatpush1.bf16.msra.mxu0 0
  %152 = vmatprep.subr.bf16.mxu0 0
  %153 = vmatpush1.bf16.msra.mxu0 0
  %154 = vmatprep.subr.bf16.mxu0 0
  %155 = vmatpush1.bf16.msra.mxu0 0
  %156 = vmatprep.subr.bf16.mxu0 0
  %157 = vmatpush1.bf16.msra.mxu0 0
  %158 = vmatprep.subr.bf16.mxu0 0
  %159 = vmatpush1.bf16.msra.mxu0 0
  %160 = vmatprep.subr.bf16.mxu0 0
  %161 = vmatpush1.bf16.msra.mxu0 0
  %162 = vmatprep.subr.bf16.mxu0 0
  %163 = vmatpush1.bf16.msra.mxu0 0
  %164 = vmatprep.subr.bf16.mxu0 0
  %165 = vmatpush1.bf16.msra.mxu0 %v148
  %166 = vmatprep.subr.bf16.mxu0 0
  %167 = vmatpush2.bf16.msra.mxu0 0
  %168 = vmatprep.subr.bf16.mxu0 0
  %169 = vmatpush2.bf16.msra.mxu0 0
  %170 = vmatprep.subr.bf16.mxu0 0
  %171 = vmatpush2.bf16.msra.mxu0 0
  %172 = vmatprep.subr.bf16.mxu0 0
  %173 = vmatpush2.bf16.msra.mxu0 0
  %174 = vmatprep.subr.bf16.mxu0 0
  %175 = vmatpush2.bf16.msra.mxu0 0
  %176 = vmatprep.subr.bf16.mxu0 0
  %177 = vmatpush2.bf16.msra.mxu0 0
  %178 = vmatprep.subr.bf16.mxu0 0
  %179 = vmatpush2.bf16.msra.mxu0 0
  %180 = vmatprep.subr.bf16.mxu0 0
  %181 = vmatpush2.bf16.msra.mxu0 0
  %182 = vmatprep.mubr.bf16.mxu0 0
  %183 = vmatmul.mubr.bf16.gmra.mxu0 %v92
  %v184 = vpop.f32.mrf.mxu0
  %v185 = vadd.f32 %v142, %v184
  %v186 = vpop.f32.mrf.mxu0
  %v187 = vpop.f32.mrf.mxu0
  %v188 = vadd.f32 %v142, %v187
  %v189 = vpop.f32.mrf.mxu0
  %190 = vdwg.mxu0
  %v191 = vxor.u32 %v185, 2147483648
  %v192 = vxor.u32 %v188, 2147483648
  %v193 = vmul.f32 %v191, 1.442695
  %v194 = vpow.pop %v193
  %v195 = vmul.f32 %v192, 1.442695
  %v196 = vpow.pop %v195
  %v197 = vadd.f32 %v194, 1.0
  %v198 = vadd.f32 %v196, 1.0
  %v199 = vrcp.pop %v197
  %v200 = vmul.f32 1.0, %v199
  %v201 = vrcp.pop %v198
  %v202 = vmul.f32 1.0, %v201
  %v203 = vmul.f32 %v129, %v200
  %v204 = vmul.f32 %v132, %v202
  %205 = vst.msk [vmem:[%s7] sm:$0xff] %vm29, %v203
  %206 = vst.msk [vmem:[%s7 + $0x8] sm:$0xff] %vm29, %v204
  // Predicated region
  $region30: #{miipher_forward.51} parent=0 // pred_check
    _
  $region31: #{miipher_forward.51} parent=0 // pred_check_branch
    %208 = sbr.rel (0) target = $region33
  $region32: #{miipher_forward.51} parent=0 // pred_region
    _
  $region33: #{miipher_forward.51} parent=0 // pred_fallthru
    _
  // Predicated region
  $region34: #{miipher_forward.51} parent=0 // pred_check
    _
  $region35: #{miipher_forward.51} parent=0 // pred_check_branch
    %210 = sbr.rel (0) target = $region37
  $region36: #{miipher_forward.51} parent=0 // pred_region
    _
  $region37: #{miipher_forward.51} parent=0 // pred_fallthru
    _

// kernel: miipher_forward.49
$region0: #{miipher_forward.49}
  #allocation0 [shape = 'u32[]', space=smem, size = 0x4, offset = 0x4, fixed_abs, tag = 'smem constant byte address 0x4 - core index']
  #allocation1 [shape = 'u32[144,128]{1,0:T(1,128)}', space=vmem, size = 0x12000, scoped, tag = 'internal scratch']
  #allocation2 [shape = 'f32[4,8,1]{2,1,0:T(8,128)}', space=vmem, size = 0x4000, scoped, tag = 'scratch operand']
  #allocation3 [shape = 'f32[4,8,1]{2,1,0:T(8,128)}', space=vmem, size = 0x4000, scoped, tag = 'scratch operand']
  #allocation4 [shape = 'f32[4,8,4]{2,1,0:T(8,128)}', space=vmem, size = 0x4000, scoped, tag = 'scratch operand']
  %s0 = inlined_call_operand.vmem [shape: f32[2,8,16], index: 0, kind: input, shape index: {}]
  %s1 = inlined_call_operand.vmem [shape: f32[2,8,16], index: 1, kind: input, shape index: {}]
  %s2 = inlined_call_operand.vmem [shape: f32[2,8,16], index: 2, kind: input, shape index: {}]
  %s3 = inlined_call_operand.vmem [shape: f32[2,8,16], index: 3, kind: output, shape index: {}]
  %s4 = sld [smem:[#allocation0]]
  $region65: #{miipher_forward.49} parent=0
    _
  %s6 = ssub.s32 1, %s4
  %s7 = scalar_select 0, %s6, %s4
  loop: start=0, step=1, limit=4
  $region2: #{miipher_forward.49} parent=0 // loop_pre_header
    _
  $region3: #{miipher_forward.49} parent=0 // loop_header
    %s9 = sphi 0, %s13
    %p10 = scmp.ge.s32.totalorder %s9, 4
    %s16 = sphi 0, %s35
    %s17 = sphi 0, %s31
    %s18 = sphi 0, %s27
    %s19 = sphi 0, %s16
    %s20 = sphi 0, %s17
    %s21 = sphi 0, %s18
    %s22 = sphi 0, %s19
    %s23 = sphi 0, %s20
    %s24 = sphi 0, %s21
    %s40 = sphi 0, %s42
    %s43 = sphi 0, %s40
    %s44 = sphi 0, %s43
    %s60 = sphi 0, %s44
    %s68 = sphi 0, %s70
    %s71 = sphi 0, %s68
    %s72 = sphi 0, %s71
    %s88 = sphi 0, %s72
    %s96 = sphi 0, %s98
    %s99 = sphi 0, %s96
    %s100 = sphi 0, %s99
    %s116 = sphi 0, %s100
    %s124 = sphi 0, %s126
    %s127 = sphi 0, %s124
    %s128 = sphi 0, %s127
    %s144 = sphi 0, %s128
  $region4: #{miipher_forward.49} parent=0 // loop_header_branch
    %12 = sbr.rel (%p10) target = $region8
  $region5: #{miipher_forward.49} parent=0 // loop_body
    %s14 = ssub.s32 %s9, 1
    %s15 = ssub.s32 %s9, 2
    %s25 = sadd.s32 1, %s18
    %p26 = scmp.ge.s32.totalorder %s25, 1
    %s27 = scalar_select %p26, 0, %s25
    %s28 = sadd.s32 1, %s17
    %s29 = scalar_select %p26, %s28, %s17
    %p30 = scmp.ge.s32.totalorder %s29, 1
    %s31 = scalar_select %p30, 0, %s29
    %s32 = sadd.s32 1, %s16
    %s33 = scalar_select %p30, %s32, %s16
    %p34 = scmp.ge.s32.totalorder %s33, 2
    %s35 = scalar_select %p34, 0, %s33
    %s36 = ssub.s32 %s16, %s35
    %s37 = ssub.s32 %s17, %s31
    %s38 = sor.u32 %s36, %s37
    %p39 = scmp.eq.s32.totalorder %s38, 0
    %s41 = sadd.s32 %s40, 1
    %s42 = scalar_select %p39, %s40, %s41
    %p45 = pneg %p39
    %p46 = scmp.eq.s32.totalorder %s9, 1
    %p47 = por %p45, %p46
    %p48 = scmp.ne.s32.totalorder %s40, %s43
    %p49 = scmp.eq.s32.totalorder %s9, 0
    %p50 = por %p48, %p49
    %p51 = scmp.ne.s32.totalorder %s40, %s43
    %p52 = scmp.eq.s32.totalorder %s14, 1
    %p53 = por %p51, %p52
    %p54 = scmp.ne.s32.totalorder %s43, %s44
    %p55 = scmp.eq.s32.totalorder %s14, 0
    %p56 = por %p54, %p55
    %p57 = scmp.ne.s32.totalorder %s43, %s44
    %p58 = scmp.eq.s32.totalorder %s15, 1
    %p59 = por %p57, %p58
    %p61 = scmp.ne.s32.totalorder %s44, %s60
    %p62 = scmp.eq.s32.totalorder %s15, 0
    %p63 = por %p61, %p62
    %s64 = ssub.s32 %s16, %s35
    %s65 = ssub.s32 %s18, %s27
    %s66 = sor.u32 %s64, %s65
    %p67 = scmp.eq.s32.totalorder %s66, 0
    %s69 = sadd.s32 %s68, 1
    %s70 = scalar_select %p67, %s68, %s69
    %p73 = pneg %p67
    %p74 = scmp.eq.s32.totalorder %s9, 1
    %p75 = por %p73, %p74
    %p76 = scmp.ne.s32.totalorder %s68, %s71
    %p77 = scmp.eq.s32.totalorder %s9, 0
    %p78 = por %p76, %p77
    %p79 = scmp.ne.s32.totalorder %s68, %s71
    %p80 = scmp.eq.s32.totalorder %s14, 1
    %p81 = por %p79, %p80
    %p82 = scmp.ne.s32.totalorder %s71, %s72
    %p83 = scmp.eq.s32.totalorder %s14, 0
    %p84 = por %p82, %p83
    %p85 = scmp.ne.s32.totalorder %s71, %s72
    %p86 = scmp.eq.s32.totalorder %s15, 1
    %p87 = por %p85, %p86
    %p89 = scmp.ne.s32.totalorder %s72, %s88
    %p90 = scmp.eq.s32.totalorder %s15, 0
    %p91 = por %p89, %p90
    %s92 = ssub.s32 %s16, %s35
    %s93 = ssub.s32 %s18, %s27
    %s94 = sor.u32 %s92, %s93
    %p95 = scmp.eq.s32.totalorder %s94, 0
    %s97 = sadd.s32 %s96, 1
    %s98 = scalar_select %p95, %s96, %s97
    %p101 = pneg %p95
    %p102 = scmp.eq.s32.totalorder %s9, 1
    %p103 = por %p101, %p102
    %p104 = scmp.ne.s32.totalorder %s96, %s99
    %p105 = scmp.eq.s32.totalorder %s9, 0
    %p106 = por %p104, %p105
    %p107 = scmp.ne.s32.totalorder %s96, %s99
    %p108 = scmp.eq.s32.totalorder %s14, 1
    %p109 = por %p107, %p108
    %p110 = scmp.ne.s32.totalorder %s99, %s100
    %p111 = scmp.eq.s32.totalorder %s14, 0
    %p112 = por %p110, %p111
    %p113 = scmp.ne.s32.totalorder %s99, %s100
    %p114 = scmp.eq.s32.totalorder %s15, 1
    %p115 = por %p113, %p114
    %p117 = scmp.ne.s32.totalorder %s100, %s116
    %p118 = scmp.eq.s32.totalorder %s15, 0
    %p119 = por %p117, %p118
    %s120 = ssub.s32 %s16, %s35
    %s121 = ssub.s32 %s17, %s31
    %s122 = sor.u32 %s120, %s121
    %p123 = scmp.eq.s32.totalorder %s122, 0
    %s125 = sadd.s32 %s124, 1
    %s126 = scalar_select %p123, %s124, %s125
    %p129 = pneg %p123
    %p130 = scmp.eq.s32.totalorder %s9, 1
    %p131 = por %p129, %p130
    %p132 = scmp.ne.s32.totalorder %s124, %s127
    %p133 = scmp.eq.s32.totalorder %s9, 0
    %p134 = por %p132, %p133
    %p135 = scmp.ne.s32.totalorder %s124, %s127
    %p136 = scmp.eq.s32.totalorder %s14, 1
    %p137 = por %p135, %p136
    %p138 = scmp.ne.s32.totalorder %s127, %s128
    %p139 = scmp.eq.s32.totalorder %s14, 0
    %p140 = por %p138, %p139
    %p141 = scmp.ne.s32.totalorder %s127, %s128
    %p142 = scmp.eq.s32.totalorder %s15, 1
    %p143 = por %p141, %p142
    %p145 = scmp.ne.s32.totalorder %s128, %s144
    %p146 = scmp.eq.s32.totalorder %s15, 0
    %p147 = por %p145, %p146
    %p148 = scmp.le.s32.totalorder 1, %s9
    %p149 = scmp.lt.s32.totalorder %s9, 3
    %p150 = pnand %p148, %p149
    %p151 = pneg %p150
    // Predicated region
    $region9: #{miipher_forward.49} parent=5 // pred_check
      _
    $region10: #{miipher_forward.49} parent=5 // pred_check_branch
      %153 = sbr.rel (%p150) target = $region12
    $region11: #{miipher_forward.49} parent=5 // pred_region
      %s154 = ssub.s32 %s9, 1
    $region12: #{miipher_forward.49} parent=5 // pred_fallthru
      _
    %p155 = scmp.lt.s32.totalorder %s9, 2
    // Predicated region
    $region13: #{miipher_forward.49} parent=5 // pred_check
      %p156 = pneg %p155
    $region14: #{miipher_forward.49} parent=5 // pred_check_branch
      %158 = sbr.rel (%p156) target = $region16
    $region15: #{miipher_forward.49} parent=5 // pred_region
      // Predicated region
      $region17: #{miipher_forward.49} parent=15 // pred_check
        %p159 = pneg %p50
      $region18: #{miipher_forward.49} parent=15 // pred_check_branch
        %161 = sbr.rel (%p159) target = $region20
      $region19: #{miipher_forward.49} parent=15 // pred_region
        %p162 = scmp.lt.s32.totalorder %s16, 1
        %s163 = scalar_select %p162, %s16, 1
        %p164 = scmp.lt.s32.totalorder %s17, 0
        %s165 = scalar_select %p164, %s17, 0
        %s166 = sadd.s32 %s165, %s163
        %s167 = smul.addr %s166, 8
        %s168 = scalar_lea.vmem %s0, %s167
      $region20: #{miipher_forward.49} parent=15 // pred_fallthru
        _
      // Predicated region
      $region21: #{miipher_forward.49} parent=15 // pred_check
        %p169 = pneg %p78
      $region22: #{miipher_forward.49} parent=15 // pred_check_branch
        %171 = sbr.rel (%p169) target = $region24
      $region23: #{miipher_forward.49} parent=15 // pred_region
        %p172 = scmp.lt.s32.totalorder %s16, 1
        %s173 = scalar_select %p172, %s16, 1
        %p174 = scmp.lt.s32.totalorder %s18, 0
        %s175 = scalar_select %p174, %s18, 0
        %s176 = sadd.s32 %s175, %s173
        %s177 = smul.addr %s176, 8
        %s178 = scalar_lea.vmem %s1, %s177
      $region24: #{miipher_forward.49} parent=15 // pred_fallthru
        _
      // Predicated region
      $region25: #{miipher_forward.49} parent=15 // pred_check
        %p179 = pneg %p106
      $region26: #{miipher_forward.49} parent=15 // pred_check_branch
        %181 = sbr.rel (%p179) target = $region28
      $region27: #{miipher_forward.49} parent=15 // pred_region
        %p182 = scmp.lt.s32.totalorder %s16, 1
        %s183 = scalar_select %p182, %s16, 1
        %p184 = scmp.lt.s32.totalorder %s18, 0
        %s185 = scalar_select %p184, %s18, 0
        %s186 = sadd.s32 %s185, %s183
        %s187 = smul.addr %s186, 8
        %s188 = scalar_lea.vmem %s2, %s187
      $region28: #{miipher_forward.49} parent=15 // pred_fallthru
        _
    $region16: #{miipher_forward.49} parent=5 // pred_fallthru
      _
    %p189 = scmp.le.s32.totalorder 1, %s9
    %p190 = scmp.lt.s32.totalorder %s9, 3
    %p191 = pnand %p189, %p190
    %p192 = pneg %p191
    // Predicated region
    $region29: #{miipher_forward.49} parent=5 // pred_check
      _
    $region30: #{miipher_forward.49} parent=5 // pred_check_branch
      %194 = sbr.rel (%p191) target = $region32
    $region31: #{miipher_forward.49} parent=5 // pred_region
      %s195 = ssub.s32 %s9, 1
      %p196 = scmp.lt.s32.totalorder %s19, 1
      %s197 = scalar_select %p196, %s19, 1
      %p198 = scmp.lt.s32.totalorder %s20, 0
      %s199 = scalar_select %p198, %s20, 0
      %s200 = sadd.s32 %s199, %s197
      %s201 = smul.addr %s200, 8
      %s202 = scalar_lea.vmem %s0, %s201
      %p203 = pneg %p56
      %p204 = pneg %p53
      %p205 = scmp.lt.s32.totalorder %s19, 1
      %s206 = scalar_select %p205, %s19, 1
      %p207 = scmp.lt.s32.totalorder %s21, 0
      %s208 = scalar_select %p207, %s21, 0
      %s209 = sadd.s32 %s208, %s206
      %s210 = smul.addr %s209, 8
      %s211 = scalar_lea.vmem %s1, %s210
      %p212 = pneg %p84
      %p213 = pneg %p81
      %p214 = scmp.lt.s32.totalorder %s19, 1
      %s215 = scalar_select %p214, %s19, 1
      %p216 = scmp.lt.s32.totalorder %s21, 0
      %s217 = scalar_select %p216, %s21, 0
      %s218 = sadd.s32 %s217, %s215
      %s219 = smul.addr %s218, 8
      %s220 = scalar_lea.vmem %s2, %s219
      %p221 = pneg %p112
      %p222 = pneg %p109
      %p223 = pneg %p140
      %p224 = pneg %p137
      %p225 = scmp.lt.s32.totalorder %s19, 1
      %s226 = scalar_select %p225, %s19, 1
      %p227 = scmp.lt.s32.totalorder %s20, 0
      %s228 = scalar_select %p227, %s20, 0
      %s229 = sadd.s32 %s228, %s226
      %s230 = smul.addr %s229, 8
      %s231 = scalar_lea.vmem %s3, %s230
      %p232 = scmp.lt.s32.totalorder %s19, 1
      %s233 = scalar_select %p232, %s19, 1
      %p234 = scmp.lt.s32.totalorder %s20, 0
      %s235 = scalar_select %p234, %s20, 0
      %s236 = sadd.s32 %s235, %s233
      %s237 = smul.addr %s236, 8
      %s238 = scalar_lea.vmem %s0, %s237
      %p239 = scmp.lt.s32.totalorder %s19, 1
      %s240 = scalar_select %p239, %s19, 1
      %p241 = scmp.lt.s32.totalorder %s21, 0
      %s242 = scalar_select %p241, %s21, 0
      %s243 = sadd.s32 %s242, %s240
      %s244 = smul.addr %s243, 8
      %s245 = scalar_lea.vmem %s1, %s244
      %p246 = scmp.lt.s32.totalorder %s19, 1
      %s247 = scalar_select %p246, %s19, 1
      %p248 = scmp.lt.s32.totalorder %s21, 0
      %s249 = scalar_select %p248, %s21, 0
      %s250 = sadd.s32 %s249, %s247
      %s251 = smul.addr %s250, 8
      %s252 = scalar_lea.vmem %s2, %s251
      %p253 = scmp.lt.s32.totalorder %s19, 1
      %s254 = scalar_select %p253, %s19, 1
      %p255 = scmp.lt.s32.totalorder %s20, 0
      %s256 = scalar_select %p255, %s20, 0
      %s257 = sadd.s32 %s256, %s254
      %s258 = smul.addr %s257, 8
      %s259 = scalar_lea.vmem %s3, %s258
      %p261 = scmp.eq.s32.totalorder %s21, 0
      // Predicated region
      $region33: #{miipher_forward.49} parent=31 // pred_check
        %p262 = pneg %p261
      $region34: #{miipher_forward.49} parent=31 // pred_check_branch
        %264 = sbr.rel (%p262) target = $region36
      $region35: #{miipher_forward.49} parent=31 // pred_region
        %vm265 = vcmask 7168
        %266 = vst.msk [vmem:[#allocation2] sm:$0xff] %vm265, -inf
        %267 = vst.msk [vmem:[#allocation2 + $0x8] sm:$0xff] %vm265, -inf
        %268 = vst.msk [vmem:[#allocation2 + $0x10] sm:$0xff] %vm265, -inf
        %269 = vst.msk [vmem:[#allocation2 + $0x18] sm:$0xff] %vm265, -inf
        %270 = vst.msk [vmem:[#allocation3] sm:$0xff] %vm265, 0.0
        %271 = vst.msk [vmem:[#allocation3 + $0x8] sm:$0xff] %vm265, 0.0
        %272 = vst.msk [vmem:[#allocation3 + $0x10] sm:$0xff] %vm265, 0.0
        %273 = vst.msk [vmem:[#allocation3 + $0x18] sm:$0xff] %vm265, 0.0
        %vm274 = vcmask 31744
        %275 = vst.msk [vmem:[#allocation4] sm:$0xff] %vm274, 0.0
        %276 = vst.msk [vmem:[#allocation4 + $0x8] sm:$0xff] %vm274, 0.0
        %277 = vst.msk [vmem:[#allocation4 + $0x10] sm:$0xff] %vm274, 0.0
        %278 = vst.msk [vmem:[#allocation4 + $0x18] sm:$0xff] %vm274, 0.0
      $region36: #{miipher_forward.49} parent=31 // pred_fallthru
        _
      %v279 = vld [vmem:[%s238] sm:$0xff]
      %v280 = vpack.c.bf16 %v279, %v279
      %v281 = vld [vmem:[%s245] sm:$0xff]
      %v282 = vpack.c.bf16 %v281, %v281
      %v283 = vld [vmem:[%s252] sm:$0xff]
      %v284 = vpack.c.bf16 %v283, %v283
      %vm285 = vcmask 31744
      %v287 = vsel %vm285, %v280, 0
      %v290 = vsel %vm285, %v282, 0
      %292 = vmatprep.subr.bf16.mxu0 0
      %293 = vmatpush1.bf16.xpose.msra.mxu0 0
      %294 = vmatprep.subr.bf16.mxu0 0
      %295 = vmatpush1.bf16.xpose.msra.mxu0 0
      %296 = vmatprep.subr.bf16.mxu0 0
      %297 = vmatpush1.bf16.xpose.msra.mxu0 0
      %298 = vmatprep.subr.bf16.mxu0 0
      %299 = vmatpush1.bf16.xpose.msra.mxu0 0
      %300 = vmatprep.subr.bf16.mxu0 0
      %301 = vmatpush1.bf16.xpose.msra.mxu0 0
      %302 = vmatprep.subr.bf16.mxu0 0
      %303 = vmatpush1.bf16.xpose.msra.mxu0 0
      %304 = vmatprep.subr.bf16.mxu0 0
      %305 = vmatpush1.bf16.xpose.msra.mxu0 0
      %306 = vmatprep.subr.bf16.mxu0 0
      %307 = vmatpush1.bf16.xpose.msra.mxu0 %v290
      %308 = vmatprep.subr.bf16.mxu0 0
      %309 = vmatpush2.bf16.xpose.msra.mxu0 0
      %310 = vmatprep.subr.bf16.mxu0 0
      %311 = vmatpush2.bf16.xpose.msra.mxu0 0
      %312 = vmatprep.subr.bf16.mxu0 0
      %313 = vmatpush2.bf16.xpose.msra.mxu0 0
      %314 = vmatprep.subr.bf16.mxu0 0
      %315 = vmatpush2.bf16.xpose.msra.mxu0 0
      %316 = vmatprep.subr.bf16.mxu0 0
      %317 = vmatpush2.bf16.xpose.msra.mxu0 0
      %318 = vmatprep.subr.bf16.mxu0 0
      %319 = vmatpush2.bf16.xpose.msra.mxu0 0
      %320 = vmatprep.subr.bf16.mxu0 0
      %321 = vmatpush2.bf16.xpose.msra.mxu0 0
      %322 = vmatprep.subr.bf16.mxu0 0
      %323 = vmatpush2.bf16.xpose.msra.mxu0 0
      %324 = vmatprep.mubr.bf16.mxu0 0
      %325 = vmatmul.mubr.bf16.gmra.mxu0 %v287
      %v326 = vpop.f32.mrf.mxu0
      %v327 = vadd.f32 0.0, %v326
      %v328 = vpop.f32.mrf.mxu0
      %v329 = vpop.f32.mrf.mxu0
      %v330 = vpop.f32.mrf.mxu0
      %331 = vdwg.mxu0
      %v332 = vmul.f32 %v327, 0.5
      %v333 = vld [vmem:[#allocation2] sm:$0xff]
      %vm334 = vcmask 64512
      %v335 = vsel %vm334, %v332, -inf
      %336 = vmax.xlane.f32.xlu0 %v335
      %v337 = vpop.xlane.xlu0 %336
      %v338 = vmax.f32 %v333, %v337
      %v339 = vsub.f32 %v333, %v338
      %v340 = vmul.f32 %v339, 1.442695
      %v341 = vpow.pop %v340
      %343 = vset.pattern.permute.xlu0 0
      %344 = vperm.xlu0 %343, %v338
      %v345 = vpop.permute.xlu0 %344
      %v347 = vsub.f32 %v332, %v345
      %v348 = vmul.f32 %v347, 1.442695
      %v349 = vpow.pop %v348
      %v350 = vld [vmem:[#allocation3] sm:$0xff]
      %v351 = vmul.f32 %v341, %v350
      %v352 = vsel %vm334, %v349, 0.0
      %353 = vadd.xlane.f32.xlu0 %v352
      %v354 = vpop.xlane.xlu0 %353
      %v355 = vadd.f32 %v351, %v354
      %vm356 = vcmask 7168
      %357 = vst.msk [vmem:[#allocation3] sm:$0xff] %vm356, %v355
      %v358 = vld [vmem:[#allocation4] sm:$0xff]
      %360 = vset.pattern.permute.xlu0 0
      %361 = vperm.xlu0 %360, %v341
      %v362 = vpop.permute.xlu0 %361
      %v364 = vmul.f32 %v362, %v358
      %v365 = vpack.c.bf16 %v349, %v349
      %v367 = vsel %vm334, %v365, 0
      %vm369 = vcmask 1043456
      %v371 = vsel %vm369, %v284, 0
      %373 = vmatprep.subr.bf16.mxu0 0
      %374 = vmatpush1.bf16.msra.mxu0 0
      %375 = vmatprep.subr.bf16.mxu0 0
      %376 = vmatpush1.bf16.msra.mxu0 0
      %377 = vmatprep.subr.bf16.mxu0 0
      %378 = vmatpush1.bf16.msra.mxu0 0
      %379 = vmatprep.subr.bf16.mxu0 0
      %380 = vmatpush1.bf16.msra.mxu0 0
      %381 = vmatprep.subr.bf16.mxu0 0
      %382 = vmatpush1.bf16.msra.mxu0 0
      %383 = vmatprep.subr.bf16.mxu0 0
      %384 = vmatpush1.bf16.msra.mxu0 0
      %385 = vmatprep.subr.bf16.mxu0 0
      %386 = vmatpush1.bf16.msra.mxu0 0
      %387 = vmatprep.subr.bf16.mxu0 0
      %388 = vmatpush1.bf16.msra.mxu0 %v371
      %389 = vmatprep.subr.bf16.mxu0 0
      %390 = vmatpush2.bf16.msra.mxu0 0
      %391 = vmatprep.subr.bf16.mxu0 0
      %392 = vmatpush2.bf16.msra.mxu0 0
      %393 = vmatprep.subr.bf16.mxu0 0
      %394 = vmatpush2.bf16.msra.mxu0 0
      %395 = vmatprep.subr.bf16.mxu0 0
      %396 = vmatpush2.bf16.msra.mxu0 0
      %397 = vmatprep.subr.bf16.mxu0 0
      %398 = vmatpush2.bf16.msra.mxu0 0
      %399 = vmatprep.subr.bf16.mxu0 0
      %400 = vmatpush2.bf16.msra.mxu0 0
      %401 = vmatprep.subr.bf16.mxu0 0
      %402 = vmatpush2.bf16.msra.mxu0 0
      %403 = vmatprep.subr.bf16.mxu0 0
      %404 = vmatpush2.bf16.msra.mxu0 0
      %405 = vmatprep.mubr.bf16.mxu0 0
      %406 = vmatmul.mubr.bf16.gmra.mxu0 %v367
      %v407 = vpop.f32.mrf.mxu0
      %v408 = vadd.f32 0.0, %v407
      %v409 = vpop.f32.mrf.mxu0
      %v410 = vpop.f32.mrf.mxu0
      %v411 = vpop.f32.mrf.mxu0
      %412 = vdwg.mxu0
      %v413 = vadd.f32 %v364, %v408
      %414 = vst.msk [vmem:[#allocation4] sm:$0xff] %vm285, %v413
      %415 = vst.msk [vmem:[#allocation2] sm:$0xff] %vm356, %v338
      // Predicated region
      $region37: #{miipher_forward.49} parent=31 // pred_check
        %p416 = pneg %p261
      $region38: #{miipher_forward.49} parent=31 // pred_check_branch
        %418 = sbr.rel (%p416) target = $region40
      $region39: #{miipher_forward.49} parent=31 // pred_region
        %v419 = vld [vmem:[#allocation4] sm:$0xff]
        %v420 = vld [vmem:[#allocation3] sm:$0xff]
        %v421 = vrcp.pop %v420
        %423 = vset.pattern.permute.xlu0 0
        %424 = vperm.xlu0 %423, %v421
        %v425 = vpop.permute.xlu0 %424
        %v427 = vmul.f32 %v419, %v425
        %428 = vst.msk [vmem:[%s259] sm:$0xff] %vm285, %v427
      $region40: #{miipher_forward.49} parent=31 // pred_fallthru
        _
      %430 = vrot.lane.b32.xlu0 %v280, 124
      %v431 = vpop.permute.xlu0 %430
      %433 = vrot.lane.b32.xlu0 %v282, 124
      %v434 = vpop.permute.xlu0 %433
      %v436 = vsel %vm285, %v431, 0
      %v439 = vsel %vm285, %v434, 0
      %441 = vmatprep.subr.bf16.mxu0 0
      %442 = vmatpush1.bf16.xpose.msra.mxu0 0
      %443 = vmatprep.subr.bf16.mxu0 0
      %444 = vmatpush1.bf16.xpose.msra.mxu0 0
      %445 = vmatprep.subr.bf16.mxu0 0
      %446 = vmatpush1.bf16.xpose.msra.mxu0 0
      %447 = vmatprep.subr.bf16.mxu0 0
      %448 = vmatpush1.bf16.xpose.msra.mxu0 0
      %449 = vmatprep.subr.bf16.mxu0 0
      %450 = vmatpush1.bf16.xpose.msra.mxu0 0
      %451 = vmatprep.subr.bf16.mxu0 0
      %452 = vmatpush1.bf16.xpose.msra.mxu0 0
      %453 = vmatprep.subr.bf16.mxu0 0
      %454 = vmatpush1.bf16.xpose.msra.mxu0 0
      %455 = vmatprep.subr.bf16.mxu0 0
      %456 = vmatpush1.bf16.xpose.msra.mxu0 %v439
      %457 = vmatprep.subr.bf16.mxu0 0
      %458 = vmatpush2.bf16.xpose.msra.mxu0 0
      %459 = vmatprep.subr.bf16.mxu0 0
      %460 = vmatpush2.bf16.xpose.msra.mxu0 0
      %461 = vmatprep.subr.bf16.mxu0 0
      %462 = vmatpush2.bf16.xpose.msra.mxu0 0
      %463 = vmatprep.subr.bf16.mxu0 0
      %464 = vmatpush2.bf16.xpose.msra.mxu0 0
      %465 = vmatprep.subr.bf16.mxu0 0
      %466 = vmatpush2.bf16.xpose.msra.mxu0 0
      %467 = vmatprep.subr.bf16.mxu0 0
      %468 = vmatpush2.bf16.xpose.msra.mxu0 0
      %469 = vmatprep.subr.bf16.mxu0 0
      %470 = vmatpush2.bf16.xpose.msra.mxu0 0
      %471 = vmatprep.subr.bf16.mxu0 0
      %472 = vmatpush2.bf16.xpose.msra.mxu0 0
      %473 = vmatprep.mubr.bf16.mxu0 0
      %474 = vmatmul.mubr.bf16.gmra.mxu0 %v436
      %v475 = vpop.f32.mrf.mxu0
      %v476 = vadd.f32 0.0, %v475
      %v477 = vpop.f32.mrf.mxu0
      %v478 = vpop.f32.mrf.mxu0
      %v479 = vpop.f32.mrf.mxu0
      %480 = vdwg.mxu0
      %v481 = vmul.f32 %v476, 0.5
      %s482 = scalar_lea.vmem [#allocation2], 8
      %v483 = vld [vmem:[%s482] sm:$0xff]
      %v484 = vsel %vm334, %v481, -inf
      %485 = vmax.xlane.f32.xlu0 %v484
      %v486 = vpop.xlane.xlu0 %485
      %v487 = vmax.f32 %v483, %v486
      %v488 = vsub.f32 %v483, %v487
      %v489 = vmul.f32 %v488, 1.442695
      %v490 = vpow.pop %v489
      %492 = vset.pattern.permute.xlu0 0
      %493 = vperm.xlu0 %492, %v487
      %v494 = vpop.permute.xlu0 %493
      %v496 = vsub.f32 %v481, %v494
      %v497 = vmul.f32 %v496, 1.442695
      %v498 = vpow.pop %v497
      %s499 = scalar_lea.vmem [#allocation3], 8
      %v500 = vld [vmem:[%s499] sm:$0xff]
      %v501 = vmul.f32 %v490, %v500
      %v502 = vsel %vm334, %v498, 0.0
      %503 = vadd.xlane.f32.xlu0 %v502
      %v504 = vpop.xlane.xlu0 %503
      %v505 = vadd.f32 %v501, %v504
      %506 = vst.msk [vmem:[%s499] sm:$0xff] %vm356, %v505
      %s507 = scalar_lea.vmem [#allocation4], 8
      %v508 = vld [vmem:[%s507] sm:$0xff]
      %510 = vset.pattern.permute.xlu0 0
      %511 = vperm.xlu0 %510, %v490
      %v512 = vpop.permute.xlu0 %511
      %v514 = vmul.f32 %v512, %v508
      %v515 = vpack.c.bf16 %v498, %v498
      %517 = vrot.lane.b32.xlu0 %v284, 124
      %v518 = vpop.permute.xlu0 %517
      %v520 = vsel %vm334, %v515, 0
      %v523 = vsel %vm369, %v518, 0
      %525 = vmatprep.subr.bf16.mxu0 0
      %526 = vmatpush1.bf16.msra.mxu0 0
      %527 = vmatprep.subr.bf16.mxu0 0
      %528 = vmatpush1.bf16.msra.mxu0 0
      %529 = vmatprep.subr.bf16.mxu0 0
      %530 = vmatpush1.bf16.msra.mxu0 0
      %531 = vmatprep.subr.bf16.mxu0 0
      %532 = vmatpush1.bf16.msra.mxu0 0
      %533 = vmatprep.subr.bf16.mxu0 0
      %534 = vmatpush1.bf16.msra.mxu0 0
      %535 = vmatprep.subr.bf16.mxu0 0
      %536 = vmatpush1.bf16.msra.mxu0 0
      %537 = vmatprep.subr.bf16.mxu0 0
      %538 = vmatpush1.bf16.msra.mxu0 0
      %539 = vmatprep.subr.bf16.mxu0 0
      %540 = vmatpush1.bf16.msra.mxu0 %v523
      %541 = vmatprep.subr.bf16.mxu0 0
      %542 = vmatpush2.bf16.msra.mxu0 0
      %543 = vmatprep.subr.bf16.mxu0 0
      %544 = vmatpush2.bf16.msra.mxu0 0
      %545 = vmatprep.subr.bf16.mxu0 0
      %546 = vmatpush2.bf16.msra.mxu0 0
      %547 = vmatprep.subr.bf16.mxu0 0
      %548 = vmatpush2.bf16.msra.mxu0 0
      %549 = vmatprep.subr.bf16.mxu0 0
      %550 = vmatpush2.bf16.msra.mxu0 0
      %551 = vmatprep.subr.bf16.mxu0 0
      %552 = vmatpush2.bf16.msra.mxu0 0
      %553 = vmatprep.subr.bf16.mxu0 0
      %554 = vmatpush2.bf16.msra.mxu0 0
      %555 = vmatprep.subr.bf16.mxu0 0
      %556 = vmatpush2.bf16.msra.mxu0 0
      %557 = vmatprep.mubr.bf16.mxu0 0
      %558 = vmatmul.mubr.bf16.gmra.mxu0 %v520
      %v559 = vpop.f32.mrf.mxu0
      %v560 = vadd.f32 0.0, %v559
      %v561 = vpop.f32.mrf.mxu0
      %v562 = vpop.f32.mrf.mxu0
      %v563 = vpop.f32.mrf.mxu0
      %564 = vdwg.mxu0
      %v565 = vadd.f32 %v514, %v560
      %566 = vst.msk [vmem:[%s507] sm:$0xff] %vm285, %v565
      %567 = vst.msk [vmem:[%s482] sm:$0xff] %vm356, %v487
      // Predicated region
      $region41: #{miipher_forward.49} parent=31 // pred_check
        %p568 = pneg %p261
      $region42: #{miipher_forward.49} parent=31 // pred_check_branch
        %570 = sbr.rel (%p568) target = $region44
      $region43: #{miipher_forward.49} parent=31 // pred_region
        %v571 = vld [vmem:[%s507] sm:$0xff]
        %v572 = vld [vmem:[%s499] sm:$0xff]
        %v573 = vrcp.pop %v572
        %575 = vset.pattern.permute.xlu0 0
        %576 = vperm.xlu0 %575, %v573
        %v577 = vpop.permute.xlu0 %576
        %v579 = vmul.f32 %v571, %v577
        %581 = vrot.lane.b32.xlu0 %v579, 4
        %v582 = vpop.permute.xlu0 %581
        %vm584 = vcmask 64544
        %585 = vst.msk [vmem:[%s259] sm:$0xff] %vm584, %v582
      $region44: #{miipher_forward.49} parent=31 // pred_fallthru
        _
      %586 = vrot.lane.b32.xlu0 %v280, 120
      %v587 = vpop.permute.xlu0 %586
      %588 = vrot.lane.b32.xlu0 %v282, 120
      %v589 = vpop.permute.xlu0 %588
      %v591 = vsel %vm285, %v587, 0
      %v594 = vsel %vm285, %v589, 0
      %596 = vmatprep.subr.bf16.mxu0 0
      %597 = vmatpush1.bf16.xpose.msra.mxu0 0
      %598 = vmatprep.subr.bf16.mxu0 0
      %599 = vmatpush1.bf16.xpose.msra.mxu0 0
      %600 = vmatprep.subr.bf16.mxu0 0
      %601 = vmatpush1.bf16.xpose.msra.mxu0 0
      %602 = vmatprep.subr.bf16.mxu0 0
      %603 = vmatpush1.bf16.xpose.msra.mxu0 0
      %604 = vmatprep.subr.bf16.mxu0 0
      %605 = vmatpush1.bf16.xpose.msra.mxu0 0
      %606 = vmatprep.subr.bf16.mxu0 0
      %607 = vmatpush1.bf16.xpose.msra.mxu0 0
      %608 = vmatprep.subr.bf16.mxu0 0
      %609 = vmatpush1.bf16.xpose.msra.mxu0 0
      %610 = vmatprep.subr.bf16.mxu0 0
      %611 = vmatpush1.bf16.xpose.msra.mxu0 %v594
      %612 = vmatprep.subr.bf16.mxu0 0
      %613 = vmatpush2.bf16.xpose.msra.mxu0 0
      %614 = vmatprep.subr.bf16.mxu0 0
      %615 = vmatpush2.bf16.xpose.msra.mxu0 0
      %616 = vmatprep.subr.bf16.mxu0 0
      %617 = vmatpush2.bf16.xpose.msra.mxu0 0
      %618 = vmatprep.subr.bf16.mxu0 0
      %619 = vmatpush2.bf16.xpose.msra.mxu0 0
      %620 = vmatprep.subr.bf16.mxu0 0
      %621 = vmatpush2.bf16.xpose.msra.mxu0 0
      %622 = vmatprep.subr.bf16.mxu0 0
      %623 = vmatpush2.bf16.xpose.msra.mxu0 0
      %624 = vmatprep.subr.bf16.mxu0 0
      %625 = vmatpush2.bf16.xpose.msra.mxu0 0
      %626 = vmatprep.subr.bf16.mxu0 0
      %627 = vmatpush2.bf16.xpose.msra.mxu0 0
      %628 = vmatprep.mubr.bf16.mxu0 0
      %629 = vmatmul.mubr.bf16.gmra.mxu0 %v591
      %v630 = vpop.f32.mrf.mxu0
      %v631 = vadd.f32 0.0, %v630
      %v632 = vpop.f32.mrf.mxu0
      %v633 = vpop.f32.mrf.mxu0
      %v634 = vpop.f32.mrf.mxu0
      %635 = vdwg.mxu0
      %v636 = vmul.f32 %v631, 0.5
      %s637 = scalar_lea.vmem [#allocation2], 16
      %v638 = vld [vmem:[%s637] sm:$0xff]
      %v639 = vsel %vm334, %v636, -inf
      %640 = vmax.xlane.f32.xlu0 %v639
      %v641 = vpop.xlane.xlu0 %640
      %v642 = vmax.f32 %v638, %v641
      %v643 = vsub.f32 %v638, %v642
      %v644 = vmul.f32 %v643, 1.442695
      %v645 = vpow.pop %v644
      %647 = vset.pattern.permute.xlu0 0
      %648 = vperm.xlu0 %647, %v642
      %v649 = vpop.permute.xlu0 %648
      %v651 = vsub.f32 %v636, %v649
      %v652 = vmul.f32 %v651, 1.442695
      %v653 = vpow.pop %v652
      %s654 = scalar_lea.vmem [#allocation3], 16
      %v655 = vld [vmem:[%s654] sm:$0xff]
      %v656 = vmul.f32 %v645, %v655
      %v657 = vsel %vm334, %v653, 0.0
      %658 = vadd.xlane.f32.xlu0 %v657
      %v659 = vpop.xlane.xlu0 %658
      %v660 = vadd.f32 %v656, %v659
      %661 = vst.msk [vmem:[%s654] sm:$0xff] %vm356, %v660
      %s662 = scalar_lea.vmem [#allocation4], 16
      %v663 = vld [vmem:[%s662] sm:$0xff]
      %665 = vset.pattern.permute.xlu0 0
      %666 = vperm.xlu0 %665, %v645
      %v667 = vpop.permute.xlu0 %666
      %v669 = vmul.f32 %v667, %v663
      %v670 = vpack.c.bf16 %v653, %v653
      %671 = vrot.lane.b32.xlu0 %v284, 120
      %v672 = vpop.permute.xlu0 %671
      %v674 = vsel %vm334, %v670, 0
      %v677 = vsel %vm369, %v672, 0
      %679 = vmatprep.subr.bf16.mxu0 0
      %680 = vmatpush1.bf16.msra.mxu0 0
      %681 = vmatprep.subr.bf16.mxu0 0
      %682 = vmatpush1.bf16.msra.mxu0 0
      %683 = vmatprep.subr.bf16.mxu0 0
      %684 = vmatpush1.bf16.msra.mxu0 0
      %685 = vmatprep.subr.bf16.mxu0 0
      %686 = vmatpush1.bf16.msra.mxu0 0
      %687 = vmatprep.subr.bf16.mxu0 0
      %688 = vmatpush1.bf16.msra.mxu0 0
      %689 = vmatprep.subr.bf16.mxu0 0
      %690 = vmatpush1.bf16.msra.mxu0 0
      %691 = vmatprep.subr.bf16.mxu0 0
      %692 = vmatpush1.bf16.msra.mxu0 0
      %693 = vmatprep.subr.bf16.mxu0 0
      %694 = vmatpush1.bf16.msra.mxu0 %v677
      %695 = vmatprep.subr.bf16.mxu0 0
      %696 = vmatpush2.bf16.msra.mxu0 0
      %697 = vmatprep.subr.bf16.mxu0 0
      %698 = vmatpush2.bf16.msra.mxu0 0
      %699 = vmatprep.subr.bf16.mxu0 0
      %700 = vmatpush2.bf16.msra.mxu0 0
      %701 = vmatprep.subr.bf16.mxu0 0
      %702 = vmatpush2.bf16.msra.mxu0 0
      %703 = vmatprep.subr.bf16.mxu0 0
      %704 = vmatpush2.bf16.msra.mxu0 0
      %705 = vmatprep.subr.bf16.mxu0 0
      %706 = vmatpush2.bf16.msra.mxu0 0
      %707 = vmatprep.subr.bf16.mxu0 0
      %708 = vmatpush2.bf16.msra.mxu0 0
      %709 = vmatprep.subr.bf16.mxu0 0
      %710 = vmatpush2.bf16.msra.mxu0 0
      %711 = vmatprep.mubr.bf16.mxu0 0
      %712 = vmatmul.mubr.bf16.gmra.mxu0 %v674
      %v713 = vpop.f32.mrf.mxu0
      %v714 = vadd.f32 0.0, %v713
      %v715 = vpop.f32.mrf.mxu0
      %v716 = vpop.f32.mrf.mxu0
      %v717 = vpop.f32.mrf.mxu0
      %718 = vdwg.mxu0
      %v719 = vadd.f32 %v669, %v714
      %720 = vst.msk [vmem:[%s662] sm:$0xff] %vm285, %v719
      %721 = vst.msk [vmem:[%s637] sm:$0xff] %vm356, %v642
      // Predicated region
      $region45: #{miipher_forward.49} parent=31 // pred_check
        %p722 = pneg %p261
      $region46: #{miipher_forward.49} parent=31 // pred_check_branch
        %724 = sbr.rel (%p722) target = $region48
      $region47: #{miipher_forward.49} parent=31 // pred_region
        %v725 = vld [vmem:[%s662] sm:$0xff]
        %v726 = vld [vmem:[%s654] sm:$0xff]
        %v727 = vrcp.pop %v726
        %729 = vset.pattern.permute.xlu0 0
        %730 = vperm.xlu0 %729, %v727
        %v731 = vpop.permute.xlu0 %730
        %v733 = vmul.f32 %v725, %v731
        %735 = vrot.lane.b32.xlu0 %v733, 8
        %v736 = vpop.permute.xlu0 %735
        %vm738 = vcmask 97344
        %739 = vst.msk [vmem:[%s259] sm:$0xff] %vm738, %v736
      $region48: #{miipher_forward.49} parent=31 // pred_fallthru
        _
      %740 = vrot.lane.b32.xlu0 %v280, 116
      %v741 = vpop.permute.xlu0 %740
      %742 = vrot.lane.b32.xlu0 %v282, 116
      %v743 = vpop.permute.xlu0 %742
      %v745 = vsel %vm285, %v741, 0
      %v748 = vsel %vm285, %v743, 0
      %750 = vmatprep.subr.bf16.mxu0 0
      %751 = vmatpush1.bf16.xpose.msra.mxu0 0
      %752 = vmatprep.subr.bf16.mxu0 0
      %753 = vmatpush1.bf16.xpose.msra.mxu0 0
      %754 = vmatprep.subr.bf16.mxu0 0
      %755 = vmatpush1.bf16.xpose.msra.mxu0 0
      %756 = vmatprep.subr.bf16.mxu0 0
      %757 = vmatpush1.bf16.xpose.msra.mxu0 0
      %758 = vmatprep.subr.bf16.mxu0 0
      %759 = vmatpush1.bf16.xpose.msra.mxu0 0
      %760 = vmatprep.subr.bf16.mxu0 0
      %761 = vmatpush1.bf16.xpose.msra.mxu0 0
      %762 = vmatprep.subr.bf16.mxu0 0
      %763 = vmatpush1.bf16.xpose.msra.mxu0 0
      %764 = vmatprep.subr.bf16.mxu0 0
      %765 = vmatpush1.bf16.xpose.msra.mxu0 %v748
      %766 = vmatprep.subr.bf16.mxu0 0
      %767 = vmatpush2.bf16.xpose.msra.mxu0 0
      %768 = vmatprep.subr.bf16.mxu0 0
      %769 = vmatpush2.bf16.xpose.msra.mxu0 0
      %770 = vmatprep.subr.bf16.mxu0 0
      %771 = vmatpush2.bf16.xpose.msra.mxu0 0
      %772 = vmatprep.subr.bf16.mxu0 0
      %773 = vmatpush2.bf16.xpose.msra.mxu0 0
      %774 = vmatprep.subr.bf16.mxu0 0
      %775 = vmatpush2.bf16.xpose.msra.mxu0 0
      %776 = vmatprep.subr.bf16.mxu0 0
      %777 = vmatpush2.bf16.xpose.msra.mxu0 0
      %778 = vmatprep.subr.bf16.mxu0 0
      %779 = vmatpush2.bf16.xpose.msra.mxu0 0
      %780 = vmatprep.subr.bf16.mxu0 0
      %781 = vmatpush2.bf16.xpose.msra.mxu0 0
      %782 = vmatprep.mubr.bf16.mxu0 0
      %783 = vmatmul.mubr.bf16.gmra.mxu0 %v745
      %v784 = vpop.f32.mrf.mxu0
      %v785 = vadd.f32 0.0, %v784
      %v786 = vpop.f32.mrf.mxu0
      %v787 = vpop.f32.mrf.mxu0
      %v788 = vpop.f32.mrf.mxu0
      %789 = vdwg.mxu0
      %v790 = vmul.f32 %v785, 0.5
      %s791 = scalar_lea.vmem [#allocation2], 24
      %v792 = vld [vmem:[%s791] sm:$0xff]
      %v793 = vsel %vm334, %v790, -inf
      %794 = vmax.xlane.f32.xlu0 %v793
      %v795 = vpop.xlane.xlu0 %794
      %v796 = vmax.f32 %v792, %v795
      %v797 = vsub.f32 %v792, %v796
      %v798 = vmul.f32 %v797, 1.442695
      %v799 = vpow.pop %v798
      %801 = vset.pattern.permute.xlu0 0
      %802 = vperm.xlu0 %801, %v796
      %v803 = vpop.permute.xlu0 %802
      %v805 = vsub.f32 %v790, %v803
      %v806 = vmul.f32 %v805, 1.442695
      %v807 = vpow.pop %v806
      %s808 = scalar_lea.vmem [#allocation3], 24
      %v809 = vld [vmem:[%s808] sm:$0xff]
      %v810 = vmul.f32 %v799, %v809
      %v811 = vsel %vm334, %v807, 0.0
      %812 = vadd.xlane.f32.xlu0 %v811
      %v813 = vpop.xlane.xlu0 %812
      %v814 = vadd.f32 %v810, %v813
      %815 = vst.msk [vmem:[%s808] sm:$0xff] %vm356, %v814
      %s816 = scalar_lea.vmem [#allocation4], 24
      %v817 = vld [vmem:[%s816] sm:$0xff]
      %819 = vset.pattern.permute.xlu0 0
      %820 = vperm.xlu0 %819, %v799
      %v821 = vpop.permute.xlu0 %820
      %v823 = vmul.f32 %v821, %v817
      %v824 = vpack.c.bf16 %v807, %v807
      %825 = vrot.lane.b32.xlu0 %v284, 116
      %v826 = vpop.permute.xlu0 %825
      %v828 = vsel %vm334, %v824, 0
      %v831 = vsel %vm369, %v826, 0
      %833 = vmatprep.subr.bf16.mxu0 0
      %834 = vmatpush1.bf16.msra.mxu0 0
      %835 = vmatprep.subr.bf16.mxu0 0
      %836 = vmatpush1.bf16.msra.mxu0 0
      %837 = vmatprep.subr.bf16.mxu0 0
      %838 = vmatpush1.bf16.msra.mxu0 0
      %839 = vmatprep.subr.bf16.mxu0 0
      %840 = vmatpush1.bf16.msra.mxu0 0
      %841 = vmatprep.subr.bf16.mxu0 0
      %842 = vmatpush1.bf16.msra.mxu0 0
      %843 = vmatprep.subr.bf16.mxu0 0
      %844 = vmatpush1.bf16.msra.mxu0 0
      %845 = vmatprep.subr.bf16.mxu0 0
      %846 = vmatpush1.bf16.msra.mxu0 0
      %847 = vmatprep.subr.bf16.mxu0 0
      %848 = vmatpush1.bf16.msra.mxu0 %v831
      %849 = vmatprep.subr.bf16.mxu0 0
      %850 = vmatpush2.bf16.msra.mxu0 0
      %851 = vmatprep.subr.bf16.mxu0 0
      %852 = vmatpush2.bf16.msra.mxu0 0
      %853 = vmatprep.subr.bf16.mxu0 0
      %854 = vmatpush2.bf16.msra.mxu0 0
      %855 = vmatprep.subr.bf16.mxu0 0
      %856 = vmatpush2.bf16.msra.mxu0 0
      %857 = vmatprep.subr.bf16.mxu0 0
      %858 = vmatpush2.bf16.msra.mxu0 0
      %859 = vmatprep.subr.bf16.mxu0 0
      %860 = vmatpush2.bf16.msra.mxu0 0
      %861 = vmatprep.subr.bf16.mxu0 0
      %862 = vmatpush2.bf16.msra.mxu0 0
      %863 = vmatprep.subr.bf16.mxu0 0
      %864 = vmatpush2.bf16.msra.mxu0 0
      %865 = vmatprep.mubr.bf16.mxu0 0
      %866 = vmatmul.mubr.bf16.gmra.mxu0 %v828
      %v867 = vpop.f32.mrf.mxu0
      %v868 = vadd.f32 0.0, %v867
      %v869 = vpop.f32.mrf.mxu0
      %v870 = vpop.f32.mrf.mxu0
      %v871 = vpop.f32.mrf.mxu0
      %872 = vdwg.mxu0
      %v873 = vadd.f32 %v823, %v868
      %874 = vst.msk [vmem:[%s816] sm:$0xff] %vm285, %v873
      %875 = vst.msk [vmem:[%s791] sm:$0xff] %vm356, %v796
      // Predicated region
      $region49: #{miipher_forward.49} parent=31 // pred_check
        %p876 = pneg %p261
      $region50: #{miipher_forward.49} parent=31 // pred_check_branch
        %878 = sbr.rel (%p876) target = $region52
      $region51: #{miipher_forward.49} parent=31 // pred_region
        %v879 = vld [vmem:[%s816] sm:$0xff]
        %v880 = vld [vmem:[%s808] sm:$0xff]
        %v881 = vrcp.pop %v880
        %883 = vset.pattern.permute.xlu0 0
        %884 = vperm.xlu0 %883, %v881
        %v885 = vpop.permute.xlu0 %884
        %v887 = vmul.f32 %v879, %v885
        %889 = vrot.lane.b32.xlu0 %v887, 12
        %v890 = vpop.permute.xlu0 %889
        %vm892 = vcmask 130144
        %893 = vst.msk [vmem:[%s259] sm:$0xff] %vm892, %v890
      $region52: #{miipher_forward.49} parent=31 // pred_fallthru
        _
      %p894 = scmp.lt.s32.totalorder %s19, 1
      %s895 = scalar_select %p894, %s19, 1
      %p896 = scmp.lt.s32.totalorder %s20, 0
      %s897 = scalar_select %p896, %s20, 0
      %s898 = sadd.s32 %s897, %s895
      %s899 = smul.addr %s898, 8
      %s900 = scalar_lea.vmem %s3, %s899
      // Predicated region
      $region53: #{miipher_forward.49} parent=31 // pred_check
        %p901 = pneg %p137
      $region54: #{miipher_forward.49} parent=31 // pred_check_branch
        %903 = sbr.rel (%p901) target = $region56
      $region55: #{miipher_forward.49} parent=31 // pred_region
        _
      $region56: #{miipher_forward.49} parent=31 // pred_fallthru
        _
    $region32: #{miipher_forward.49} parent=5 // pred_fallthru
      _
    %p904 = scmp.le.s32.totalorder 2, %s9
    // Predicated region
    $region57: #{miipher_forward.49} parent=5 // pred_check
      %p905 = pneg %p904
    $region58: #{miipher_forward.49} parent=5 // pred_check_branch
      %907 = sbr.rel (%p905) target = $region60
    $region59: #{miipher_forward.49} parent=5 // pred_region
      %s908 = ssub.s32 %s9, 2
      // Predicated region
      $region61: #{miipher_forward.49} parent=59 // pred_check
        %p909 = pneg %p143
      $region62: #{miipher_forward.49} parent=59 // pred_check_branch
        %911 = sbr.rel (%p909) target = $region64
      $region63: #{miipher_forward.49} parent=59 // pred_region
        %p912 = scmp.lt.s32.totalorder %s22, 1
        %s913 = scalar_select %p912, %s22, 1
        %p914 = scmp.lt.s32.totalorder %s23, 0
        %s915 = scalar_select %p914, %s23, 0
        %s916 = sadd.s32 %s915, %s913
        %s917 = smul.addr %s916, 8
        %s918 = scalar_lea.vmem %s3, %s917
      $region64: #{miipher_forward.49} parent=59 // pred_fallthru
        _
    $region60: #{miipher_forward.49} parent=5 // pred_fallthru
      _
  $region6: #{miipher_forward.49} parent=0 // loop_footer
    %s13 = sadd.s32 1, %s9
  $region7: #{miipher_forward.49} parent=0 // loop_footer_branch
    %8 = sbr.rel target = $region3
  $region8: #{miipher_forward.49} parent=0 // loop_exit
    _

// kernel: miipher_forward.52
$region0: #{miipher_forward.52}
  #allocation0 [shape = 'u32[]', space=smem, size = 0x4, offset = 0x4, fixed_abs, tag = 'smem constant byte address 0x4 - core index']
  #allocation1 [shape = 'u32[144,128]{1,0:T(1,128)}', space=vmem, size = 0x12000, scoped, tag = 'internal scratch']
  %s0 = inlined_call_operand.vmem [shape: f32[2,8,16], index: 0, kind: input, shape index: {}]
  %s1 = inlined_call_operand.vmem [shape: f32[3,1,16], index: 1, kind: input, shape index: {}]
  %s2 = inlined_call_operand.vmem [shape: bf16[16,16], index: 2, kind: input, shape index: {}]
  %s3 = inlined_call_operand.vmem [shape: f32[1,16], index: 3, kind: input, shape index: {}]
  %s4 = inlined_call_operand.vmem [shape: f32[2,8,16], index: 4, kind: input, shape index: {}]
  %s5 = inlined_call_operand.vmem [shape: f32[2,8,16], index: 5, kind: output, shape index: {}]
  %s6 = sld [smem:[#allocation0]]
  $region53: #{miipher_forward.52} parent=0
    _
  %s8 = ssub.s32 1, %s6
  %s9 = scalar_select 0, %s8, %s6
  loop: start=0, step=1, limit=4
  $region2: #{miipher_forward.52} parent=0 // loop_pre_header
    _
  $region3: #{miipher_forward.52} parent=0 // loop_header
    %s11 = sphi 0, %s15
    %p12 = scmp.ge.s32.totalorder %s11, 4
    %s21 = sphi 0, %s23
    %s24 = sphi 0, %s21
    %s25 = sphi 0, %s24
    %s41 = sphi 0, %s25
    %s45 = sphi 0, %s45
    %s47 = sphi 0, %s45
    %s48 = sphi 0, %s47
    %s62 = sphi 0, %s48
    %s66 = sphi 0, %s66
    %s68 = sphi 0, %s66
    %s69 = sphi 0, %s68
    %s83 = sphi 0, %s69
    %s87 = sphi 0, %s87
    %s89 = sphi 0, %s87
    %s90 = sphi 0, %s89
    %s104 = sphi 0, %s90
    %s110 = sphi 0, %s112
    %s113 = sphi 0, %s110
    %s114 = sphi 0, %s113
    %s130 = sphi 0, %s114
    %s136 = sphi 0, %s138
    %s139 = sphi 0, %s136
    %s140 = sphi 0, %s139
    %s156 = sphi 0, %s140
  $region4: #{miipher_forward.52} parent=0 // loop_header_branch
    %14 = sbr.rel (%p12) target = $region8
  $region5: #{miipher_forward.52} parent=0 // loop_body
    %s16 = ssub.s32 %s11, 1
    %s17 = ssub.s32 %s11, 2
    %s18 = sadd.s32 %s11, 1
    %s19 = ssub.s32 %s11, %s18
    %p20 = scmp.eq.s32.totalorder %s19, 0
    %s22 = sadd.s32 %s21, 1
    %s23 = scalar_select %p20, %s21, %s22
    %p26 = pneg %p20
    %p27 = scmp.eq.s32.totalorder %s11, 1
    %p28 = por %p26, %p27
    %p29 = scmp.ne.s32.totalorder %s21, %s24
    %p30 = scmp.eq.s32.totalorder %s11, 0
    %p31 = por %p29, %p30
    %p32 = scmp.ne.s32.totalorder %s21, %s24
    %p33 = scmp.eq.s32.totalorder %s16, 1
    %p34 = por %p32, %p33
    %p35 = scmp.ne.s32.totalorder %s24, %s25
    %p36 = scmp.eq.s32.totalorder %s16, 0
    %p37 = por %p35, %p36
    %p38 = scmp.ne.s32.totalorder %s24, %s25
    %p39 = scmp.eq.s32.totalorder %s17, 1
    %p40 = por %p38, %p39
    %p42 = scmp.ne.s32.totalorder %s25, %s41
    %p43 = scmp.eq.s32.totalorder %s17, 0
    %p44 = por %p42, %p43
    %s46 = sadd.s32 %s45, 1
    %p49 = scmp.eq.s32.totalorder %s11, 1
    %p50 = scmp.ne.s32.totalorder %s45, %s47
    %p51 = scmp.eq.s32.totalorder %s11, 0
    %p52 = por %p50, %p51
    %p53 = scmp.ne.s32.totalorder %s45, %s47
    %p54 = scmp.eq.s32.totalorder %s16, 1
    %p55 = por %p53, %p54
    %p56 = scmp.ne.s32.totalorder %s47, %s48
    %p57 = scmp.eq.s32.totalorder %s16, 0
    %p58 = por %p56, %p57
    %p59 = scmp.ne.s32.totalorder %s47, %s48
    %p60 = scmp.eq.s32.totalorder %s17, 1
    %p61 = por %p59, %p60
    %p63 = scmp.ne.s32.totalorder %s48, %s62
    %p64 = scmp.eq.s32.totalorder %s17, 0
    %p65 = por %p63, %p64
    %s67 = sadd.s32 %s66, 1
    %p70 = scmp.eq.s32.totalorder %s11, 1
    %p71 = scmp.ne.s32.totalorder %s66, %s68
    %p72 = scmp.eq.s32.totalorder %s11, 0
    %p73 = por %p71, %p72
    %p74 = scmp.ne.s32.totalorder %s66, %s68
    %p75 = scmp.eq.s32.totalorder %s16, 1
    %p76 = por %p74, %p75
    %p77 = scmp.ne.s32.totalorder %s68, %s69
    %p78 = scmp.eq.s32.totalorder %s16, 0
    %p79 = por %p77, %p78
    %p80 = scmp.ne.s32.totalorder %s68, %s69
    %p81 = scmp.eq.s32.totalorder %s17, 1
    %p82 = por %p80, %p81
    %p84 = scmp.ne.s32.totalorder %s69, %s83
    %p85 = scmp.eq.s32.totalorder %s17, 0
    %p86 = por %p84, %p85
    %s88 = sadd.s32 %s87, 1
    %p91 = scmp.eq.s32.totalorder %s11, 1
    %p92 = scmp.ne.s32.totalorder %s87, %s89
    %p93 = scmp.eq.s32.totalorder %s11, 0
    %p94 = por %p92, %p93
    %p95 = scmp.ne.s32.totalorder %s87, %s89
    %p96 = scmp.eq.s32.totalorder %s16, 1
    %p97 = por %p95, %p96
    %p98 = scmp.ne.s32.totalorder %s89, %s90
    %p99 = scmp.eq.s32.totalorder %s16, 0
    %p100 = por %p98, %p99
    %p101 = scmp.ne.s32.totalorder %s89, %s90
    %p102 = scmp.eq.s32.totalorder %s17, 1
    %p103 = por %p101, %p102
    %p105 = scmp.ne.s32.totalorder %s90, %s104
    %p106 = scmp.eq.s32.totalorder %s17, 0
    %p107 = por %p105, %p106
    %s108 = ssub.s32 %s11, %s18
    %p109 = scmp.eq.s32.totalorder %s108, 0
    %s111 = sadd.s32 %s110, 1
    %s112 = scalar_select %p109, %s110, %s111
    %p115 = pneg %p109
    %p116 = scmp.eq.s32.totalorder %s11, 1
    %p117 = por %p115, %p116
    %p118 = scmp.ne.s32.totalorder %s110, %s113
    %p119 = scmp.eq.s32.totalorder %s11, 0
    %p120 = por %p118, %p119
    %p121 = scmp.ne.s32.totalorder %s110, %s113
    %p122 = scmp.eq.s32.totalorder %s16, 1
    %p123 = por %p121, %p122
    %p124 = scmp.ne.s32.totalorder %s113, %s114
    %p125 = scmp.eq.s32.totalorder %s16, 0
    %p126 = por %p124, %p125
    %p127 = scmp.ne.s32.totalorder %s113, %s114
    %p128 = scmp.eq.s32.totalorder %s17, 1
    %p129 = por %p127, %p128
    %p131 = scmp.ne.s32.totalorder %s114, %s130
    %p132 = scmp.eq.s32.totalorder %s17, 0
    %p133 = por %p131, %p132
    %s134 = ssub.s32 %s11, %s18
    %p135 = scmp.eq.s32.totalorder %s134, 0
    %s137 = sadd.s32 %s136, 1
    %s138 = scalar_select %p135, %s136, %s137
    %p141 = pneg %p135
    %p142 = scmp.eq.s32.totalorder %s11, 1
    %p143 = por %p141, %p142
    %p144 = scmp.ne.s32.totalorder %s136, %s139
    %p145 = scmp.eq.s32.totalorder %s11, 0
    %p146 = por %p144, %p145
    %p147 = scmp.ne.s32.totalorder %s136, %s139
    %p148 = scmp.eq.s32.totalorder %s16, 1
    %p149 = por %p147, %p148
    %p150 = scmp.ne.s32.totalorder %s139, %s140
    %p151 = scmp.eq.s32.totalorder %s16, 0
    %p152 = por %p150, %p151
    %p153 = scmp.ne.s32.totalorder %s139, %s140
    %p154 = scmp.eq.s32.totalorder %s17, 1
    %p155 = por %p153, %p154
    %p157 = scmp.ne.s32.totalorder %s140, %s156
    %p158 = scmp.eq.s32.totalorder %s17, 0
    %p159 = por %p157, %p158
    %p160 = scmp.le.s32.totalorder 1, %s11
    %p161 = scmp.lt.s32.totalorder %s11, 3
    %p162 = pnand %p160, %p161
    %p163 = pneg %p162
    // Predicated region
    $region9: #{miipher_forward.52} parent=5 // pred_check
      _
    $region10: #{miipher_forward.52} parent=5 // pred_check_branch
      %165 = sbr.rel (%p162) target = $region12
    $region11: #{miipher_forward.52} parent=5 // pred_region
      %s166 = ssub.s32 %s11, 1
      // Predicated region
      $region13: #{miipher_forward.52} parent=11 // pred_check
        %p167 = pneg %p58
      $region14: #{miipher_forward.52} parent=11 // pred_check_branch
        %169 = sbr.rel (%p167) target = $region16
      $region15: #{miipher_forward.52} parent=11 // pred_region
        _
      $region16: #{miipher_forward.52} parent=11 // pred_fallthru
        _
      // Predicated region
      $region17: #{miipher_forward.52} parent=11 // pred_check
        %p170 = pneg %p79
      $region18: #{miipher_forward.52} parent=11 // pred_check_branch
        %172 = sbr.rel (%p170) target = $region20
      $region19: #{miipher_forward.52} parent=11 // pred_region
        _
      $region20: #{miipher_forward.52} parent=11 // pred_fallthru
        _
      // Predicated region
      $region21: #{miipher_forward.52} parent=11 // pred_check
        %p173 = pneg %p100
      $region22: #{miipher_forward.52} parent=11 // pred_check_branch
        %175 = sbr.rel (%p173) target = $region24
      $region23: #{miipher_forward.52} parent=11 // pred_region
        _
      $region24: #{miipher_forward.52} parent=11 // pred_fallthru
        _
    $region12: #{miipher_forward.52} parent=5 // pred_fallthru
      _
    %p176 = scmp.lt.s32.totalorder %s11, 2
    // Predicated region
    $region25: #{miipher_forward.52} parent=5 // pred_check
      %p177 = pneg %p176
    $region26: #{miipher_forward.52} parent=5 // pred_check_branch
      %179 = sbr.rel (%p177) target = $region28
    $region27: #{miipher_forward.52} parent=5 // pred_region
      // Predicated region
      $region29: #{miipher_forward.52} parent=27 // pred_check
        %p180 = pneg %p31
      $region30: #{miipher_forward.52} parent=27 // pred_check_branch
        %182 = sbr.rel (%p180) target = $region32
      $region31: #{miipher_forward.52} parent=27 // pred_region
        %p183 = scmp.lt.s32.totalorder %s11, 1
        %s184 = scalar_select %p183, %s11, 1
        %s185 = smul.addr %s184, 8
        %s186 = scalar_lea.vmem %s0, %s185
      $region32: #{miipher_forward.52} parent=27 // pred_fallthru
        _
      // Predicated region
      $region33: #{miipher_forward.52} parent=27 // pred_check
        %p187 = pneg %p120
      $region34: #{miipher_forward.52} parent=27 // pred_check_branch
        %189 = sbr.rel (%p187) target = $region36
      $region35: #{miipher_forward.52} parent=27 // pred_region
        %p190 = scmp.lt.s32.totalorder %s11, 1
        %s191 = scalar_select %p190, %s11, 1
        %s192 = smul.addr %s191, 8
        %s193 = scalar_lea.vmem %s4, %s192
      $region36: #{miipher_forward.52} parent=27 // pred_fallthru
        _
    $region28: #{miipher_forward.52} parent=5 // pred_fallthru
      _
    %p194 = scmp.le.s32.totalorder 1, %s11
    %p195 = scmp.lt.s32.totalorder %s11, 3
    %p196 = pnand %p194, %p195
    %p197 = pneg %p196
    // Predicated region
    $region37: #{miipher_forward.52} parent=5 // pred_check
      _
    $region38: #{miipher_forward.52} parent=5 // pred_check_branch
      %199 = sbr.rel (%p196) target = $region40
    $region39: #{miipher_forward.52} parent=5 // pred_region
      %s200 = ssub.s32 %s11, 1
      %p201 = scmp.lt.s32.totalorder %s16, 1
      %s202 = scalar_select %p201, %s16, 1
      %s203 = smul.addr %s202, 8
      %s204 = scalar_lea.vmem %s0, %s203
      %p205 = pneg %p37
      %p206 = pneg %p34
      %p207 = pneg %p58
      %p208 = pneg %p55
      %p209 = pneg %p79
      %p210 = pneg %p76
      %p211 = pneg %p100
      %p212 = pneg %p97
      %p213 = scmp.lt.s32.totalorder %s16, 1
      %s214 = scalar_select %p213, %s16, 1
      %s215 = smul.addr %s214, 8
      %s216 = scalar_lea.vmem %s4, %s215
      %p217 = pneg %p126
      %p218 = pneg %p123
      %p219 = pneg %p152
      %p220 = pneg %p149
      %p221 = scmp.lt.s32.totalorder %s16, 1
      %s222 = scalar_select %p221, %s16, 1
      %s223 = smul.addr %s222, 8
      %s224 = scalar_lea.vmem %s5, %s223
      %p225 = scmp.lt.s32.totalorder %s16, 1
      %s226 = scalar_select %p225, %s16, 1
      %s227 = smul.addr %s226, 8
      %s228 = scalar_lea.vmem %s0, %s227
      %p229 = scmp.lt.s32.totalorder %s16, 1
      %s230 = scalar_select %p229, %s16, 1
      %s231 = smul.addr %s230, 8
      %s232 = scalar_lea.vmem %s4, %s231
      %p233 = scmp.lt.s32.totalorder %s16, 1
      %s234 = scalar_select %p233, %s16, 1
      %s235 = smul.addr %s234, 8
      %s236 = scalar_lea.vmem %s5, %s235
      %v238 = vld [vmem:[%s228] sm:$0xff]
      %v239 = vlaneseq
      %v240 = vshrl.u32 %v239, 7
      %v241 = vrot.slane %v238, 7
      %v242 = vadd.s32 %v240, 4294967295
      %vm243 = vcmp.ge.s32.totalorder %v242, 0
      %vm244 = vcmp.lt.s32.totalorder %v242, 8
      %vm245 = vmand %vm243, %vm244
      %v246 = vsel %vm245, 1, 0
      %vm247 = vcmp.eq.s32.totalorder %v246, 1
      %v248 = vsel %vm247, %v241, 0.0
      %v249 = vld [vmem:[%s1] sm:$0x1]
      %v251 = vlaneseq
      %v252 = vshrl.u32 %v251, 7
      %v253 = vsub.s32 0, %v252
      %v254 = vrot.slane %v249, %v253
      %v256 = vmul.f32 %v248, %v254
      %v257 = vadd.f32 %v256, 0.0
      %vm258 = vcmp.ge.s32.totalorder %v240, 0
      %vm259 = vcmp.lt.s32.totalorder %v240, 8
      %vm260 = vmand %vm258, %vm259
      %v261 = vsel %vm260, 1, 0
      %vm262 = vcmp.eq.s32.totalorder %v261, 1
      %v263 = vsel %vm262, %v238, 0.0
      %s264 = scalar_lea.vmem %s1, 1
      %v265 = vld [vmem:[%s264] sm:$0x1]
      %v267 = vlaneseq
      %v268 = vshrl.u32 %v267, 7
      %v269 = vsub.s32 0, %v268
      %v270 = vrot.slane %v265, %v269
      %v272 = vmul.f32 %v263, %v270
      %v273 = vadd.f32 %v257, %v272
      %v274 = vrot.slane %v238, 1
      %v275 = vadd.s32 %v240, 1
      %vm276 = vcmp.ge.s32.totalorder %v275, 0
      %vm277 = vcmp.lt.s32.totalorder %v275, 8
      %vm278 = vmand %vm276, %vm277
      %v279 = vsel %vm278, 1, 0
      %vm280 = vcmp.eq.s32.totalorder %v279, 1
      %v281 = vsel %vm280, %v274, 0.0
      %s282 = scalar_lea.vmem %s1, 2
      %v283 = vld [vmem:[%s282] sm:$0x1]
      %v285 = vlaneseq
      %v286 = vshrl.u32 %v285, 7
      %v287 = vsub.s32 0, %v286
      %v288 = vrot.slane %v283, %v287
      %v290 = vmul.f32 %v281, %v288
      %v291 = vadd.f32 %v273, %v290
      %v292 = vxor.u32 %v291, 2147483648
      %v293 = vmul.f32 %v292, 1.442695
      %v294 = vpow.pop %v293
      %v295 = vadd.f32 %v294, 1.0
      %v296 = vrcp.pop %v295
      %v297 = vmul.f32 1.0, %v296
      %v298 = vmul.f32 %v291, %v297
      %v299 = vpack.c.bf16 %v298, %v298
      %v300 = vld [vmem:[%s2] sm:$0xf]
      %v301 = vld [vmem:[%s2 + $0x4] sm:$0xf]
      %v302 = vld [vmem:[%s3] sm:$0x1]
      %v304 = vlaneseq
      %v305 = vshrl.u32 %v304, 7
      %v306 = vsub.s32 0, %v305
      %v307 = vrot.slane %v302, %v306
      %v311 = vunpack.c.l.b16 %v300
      %v312 = vunpack.c.l.b16 %v301
      %v313 = vpack.c.b16 %v312, %v311
      %vm315 = vcmask 130048
      %v317 = vsel %vm315, %v299, 0
      %319 = vmatprep.subr.bf16.mxu0 0
      %320 = vmatpush1.bf16.msra.mxu0 0
      %321 = vmatprep.subr.bf16.mxu0 0
      %322 = vmatpush1.bf16.msra.mxu0 0
      %323 = vmatprep.subr.bf16.mxu0 0
      %324 = vmatpush1.bf16.msra.mxu0 0
      %325 = vmatprep.subr.bf16.mxu0 0
      %326 = vmatpush1.bf16.msra.mxu0 0
      %327 = vmatprep.subr.bf16.mxu0 0
      %328 = vmatpush1.bf16.msra.mxu0 0
      %329 = vmatprep.subr.bf16.mxu0 0
      %330 = vmatpush1.bf16.msra.mxu0 0
      %331 = vmatprep.subr.bf16.mxu0 0
      %332 = vmatpush1.bf16.msra.mxu0 0
      %333 = vmatprep.subr.bf16.mxu0 0
      %334 = vmatpush1.bf16.msra.mxu0 %v313
      %335 = vmatprep.subr.bf16.mxu0 0
      %336 = vmatpush2.bf16.msra.mxu0 0
      %337 = vmatprep.subr.bf16.mxu0 0
      %338 = vmatpush2.bf16.msra.mxu0 0
      %339 = vmatprep.subr.bf16.mxu0 0
      %340 = vmatpush2.bf16.msra.mxu0 0
      %341 = vmatprep.subr.bf16.mxu0 0
      %342 = vmatpush2.bf16.msra.mxu0 0
      %343 = vmatprep.subr.bf16.mxu0 0
      %344 = vmatpush2.bf16.msra.mxu0 0
      %345 = vmatprep.subr.bf16.mxu0 0
      %346 = vmatpush2.bf16.msra.mxu0 0
      %347 = vmatprep.subr.bf16.mxu0 0
      %348 = vmatpush2.bf16.msra.mxu0 0
      %349 = vmatprep.subr.bf16.mxu0 0
      %350 = vmatpush2.bf16.msra.mxu0 0
      %351 = vmatprep.mubr.bf16.mxu0 0
      %352 = vmatmul.mubr.bf16.gmra.mxu0 %v317
      %v353 = vpop.f32.mrf.mxu0
      %v354 = vadd.f32 %v307, %v353
      %v355 = vpop.f32.mrf.mxu0
      %v356 = vpop.f32.mrf.mxu0
      %v357 = vpop.f32.mrf.mxu0
      %358 = vdwg.mxu0
      %v359 = vld [vmem:[%s232] sm:$0xff]
      %v360 = vadd.f32 %v359, %v354
      %361 = vst.msk [vmem:[%s236] sm:$0xff] %vm315, %v360
      %p362 = scmp.lt.s32.totalorder %s16, 1
      %s363 = scalar_select %p362, %s16, 1
      %s364 = smul.addr %s363, 8
      %s365 = scalar_lea.vmem %s5, %s364
      // Predicated region
      $region41: #{miipher_forward.52} parent=39 // pred_check
        %p366 = pneg %p149
      $region42: #{miipher_forward.52} parent=39 // pred_check_branch
        %368 = sbr.rel (%p366) target = $region44
      $region43: #{miipher_forward.52} parent=39 // pred_region
        _
      $region44: #{miipher_forward.52} parent=39 // pred_fallthru
        _
    $region40: #{miipher_forward.52} parent=5 // pred_fallthru
      _
    %p369 = scmp.le.s32.totalorder 2, %s11
    // Predicated region
    $region45: #{miipher_forward.52} parent=5 // pred_check
      %p370 = pneg %p369
    $region46: #{miipher_forward.52} parent=5 // pred_check_branch
      %372 = sbr.rel (%p370) target = $region48
    $region47: #{miipher_forward.52} parent=5 // pred_region
      %s373 = ssub.s32 %s11, 2
      // Predicated region
      $region49: #{miipher_forward.52} parent=47 // pred_check
        %p374 = pneg %p155
      $region50: #{miipher_forward.52} parent=47 // pred_check_branch
        %376 = sbr.rel (%p374) target = $region52
      $region51: #{miipher_forward.52} parent=47 // pred_region
        %p377 = scmp.lt.s32.totalorder %s17, 1
        %s378 = scalar_select %p377, %s17, 1
        %s379 = smul.addr %s378, 8
        %s380 = scalar_lea.vmem %s5, %s379
      $region52: #{miipher_forward.52} parent=47 // pred_fallthru
        _
    $region48: #{miipher_forward.52} parent=5 // pred_fallthru
      _
  $region6: #{miipher_forward.52} parent=0 // loop_footer
    %s15 = sadd.s32 1, %s11
  $region7: #{miipher_forward.52} parent=0 // loop_footer_branch
    %10 = sbr.rel target = $region3
  $region8: #{miipher_forward.52} parent=0 // loop_exit
    _

// kernel: miipher_forward.61
$region0: #{miipher_forward.61}
  #allocation0 [shape = 'u32[]', space=smem, size = 0x4, offset = 0x4, fixed_abs, tag = 'smem constant byte address 0x4 - core index']
  #allocation1 [shape = 'u32[144,128]{1,0:T(1,128)}', space=vmem, size = 0x12000, scoped, tag = 'internal scratch']
  %s0 = inlined_call_operand.vmem [shape: f32[16,16], index: 0, kind: input, shape index: {}]
  %s1 = inlined_call_operand.vmem [shape: bf16[16,32], index: 1, kind: input, shape index: {}]
  %s2 = inlined_call_operand.vmem [shape: f32[1,32], index: 2, kind: input, shape index: {}]
  %s3 = inlined_call_operand.vmem [shape: f32[16,32], index: 3, kind: output, shape index: {}]
  %s4 = sld [smem:[#allocation0]]
  $region22: #{miipher_forward.61} parent=0
    _
  %s6 = ssub.s32 1, %s4
  %s7 = scalar_select 0, %s6, %s4
  // Predicated region
  $region2: #{miipher_forward.61} parent=0 // pred_check
    _
  $region3: #{miipher_forward.61} parent=0 // pred_check_branch
    %9 = sbr.rel (0) target = $region5
  $region4: #{miipher_forward.61} parent=0 // pred_region
    _
  $region5: #{miipher_forward.61} parent=0 // pred_fallthru
    _
  // Predicated region
  $region6: #{miipher_forward.61} parent=0 // pred_check
    _
  $region7: #{miipher_forward.61} parent=0 // pred_check_branch
    %11 = sbr.rel (0) target = $region9
  $region8: #{miipher_forward.61} parent=0 // pred_region
    _
  $region9: #{miipher_forward.61} parent=0 // pred_fallthru
    _
  // Predicated region
  $region10: #{miipher_forward.61} parent=0 // pred_check
    _
  $region11: #{miipher_forward.61} parent=0 // pred_check_branch
    %13 = sbr.rel (0) target = $region13
  $region12: #{miipher_forward.61} parent=0 // pred_region
    _
  $region13: #{miipher_forward.61} parent=0 // pred_fallthru
    _
  %v15 = vld [vmem:[%s0] sm:$0xff]
  %v16 = vld [vmem:[%s0 + $0x8] sm:$0xff]
  %v17 = vpack.c.bf16 %v16, %v15
  %v18 = vld [vmem:[%s1] sm:$0xf]
  %v19 = vld [vmem:[%s1 + $0x4] sm:$0xf]
  %v20 = vld [vmem:[%s2] sm:$0x1]
  %v22 = vlaneseq
  %v23 = vshrl.u32 %v22, 7
  %v24 = vsub.s32 0, %v23
  %v25 = vrot.slane %v20, %v24
  %v29 = vunpack.c.l.b16 %v18
  %v30 = vunpack.c.l.b16 %v19
  %v31 = vpack.c.b16 %v30, %v29
  %vm33 = vcmask 130048
  %v35 = vsel %vm33, %v17, 0
  %37 = vmatprep.subr.bf16.mxu0 0
  %38 = vmatpush1.bf16.msra.mxu0 0
  %39 = vmatprep.subr.bf16.mxu0 0
  %40 = vmatpush1.bf16.msra.mxu0 0
  %41 = vmatprep.subr.bf16.mxu0 0
  %42 = vmatpush1.bf16.msra.mxu0 0
  %43 = vmatprep.subr.bf16.mxu0 0
  %44 = vmatpush1.bf16.msra.mxu0 0
  %45 = vmatprep.subr.bf16.mxu0 0
  %46 = vmatpush1.bf16.msra.mxu0 0
  %47 = vmatprep.subr.bf16.mxu0 0
  %48 = vmatpush1.bf16.msra.mxu0 0
  %49 = vmatprep.subr.bf16.mxu0 0
  %50 = vmatpush1.bf16.msra.mxu0 0
  %51 = vmatprep.subr.bf16.mxu0 0
  %52 = vmatpush1.bf16.msra.mxu0 %v31
  %53 = vmatprep.subr.bf16.mxu0 0
  %54 = vmatpush2.bf16.msra.mxu0 0
  %55 = vmatprep.subr.bf16.mxu0 0
  %56 = vmatpush2.bf16.msra.mxu0 0
  %57 = vmatprep.subr.bf16.mxu0 0
  %58 = vmatpush2.bf16.msra.mxu0 0
  %59 = vmatprep.subr.bf16.mxu0 0
  %60 = vmatpush2.bf16.msra.mxu0 0
  %61 = vmatprep.subr.bf16.mxu0 0
  %62 = vmatpush2.bf16.msra.mxu0 0
  %63 = vmatprep.subr.bf16.mxu0 0
  %64 = vmatpush2.bf16.msra.mxu0 0
  %65 = vmatprep.subr.bf16.mxu0 0
  %66 = vmatpush2.bf16.msra.mxu0 0
  %67 = vmatprep.subr.bf16.mxu0 0
  %68 = vmatpush2.bf16.msra.mxu0 0
  %69 = vmatprep.mubr.bf16.mxu0 0
  %70 = vmatmul.mubr.bf16.gmra.mxu0 %v35
  %v71 = vpop.f32.mrf.mxu0
  %v72 = vadd.f32 %v25, %v71
  %v73 = vpop.f32.mrf.mxu0
  %v74 = vpop.f32.mrf.mxu0
  %v75 = vadd.f32 %v25, %v74
  %v76 = vpop.f32.mrf.mxu0
  %77 = vdwg.mxu0
  %vm78 = vcmask 261120
  %79 = vst.msk [vmem:[%s3] sm:$0xff] %vm78, %v72
  %80 = vst.msk [vmem:[%s3 + $0x8] sm:$0xff] %vm78, %v75
  // Predicated region
  $region14: #{miipher_forward.61} parent=0 // pred_check
    _
  $region15: #{miipher_forward.61} parent=0 // pred_check_branch
    %82 = sbr.rel (0) target = $region17
  $region16: #{miipher_forward.61} parent=0 // pred_region
    _
  $region17: #{miipher_forward.61} parent=0 // pred_fallthru
    _
  // Predicated region
  $region18: #{miipher_forward.61} parent=0 // pred_check
    _
  $region19: #{miipher_forward.61} parent=0 // pred_check_branch
    %84 = sbr.rel (0) target = $region21
  $region20: #{miipher_forward.61} parent=0 // pred_region
    _
  $region21: #{miipher_forward.61} parent=0 // pred_fallthru
    _

// kernel: miipher_forward.53
$region0: #{miipher_forward.53}
  #allocation0 [shape = 'u32[]', space=smem, size = 0x4, offset = 0x4, fixed_abs, tag = 'smem constant byte address 0x4 - core index']
  #allocation1 [shape = 'u32[144,128]{1,0:T(1,128)}', space=vmem, size = 0x12000, scoped, tag = 'internal scratch']
  #allocation2 [shape = 'bf16[16,16]{1,0:T(8,128)(2,1)}', space=vmem, size = 0x1000, scoped, tag = 'scratch operand']
  #allocation3 [shape = 'f32[16,16]{1,0:T(8,128)}', space=vmem, size = 0x2000, scoped, tag = 'scratch operand']
  %s0 = inlined_call_operand.vmem [shape: f32[16,16], index: 0, kind: input, shape index: {}]
  %s1 = inlined_call_operand.vmem [shape: f32[1,16], index: 1, kind: input, shape index: {}]
  %s2 = inlined_call_operand.vmem [shape: f32[1,16], index: 2, kind: input, shape index: {}]
  %s3 = inlined_call_operand.vmem [shape: bf16[16,64], index: 3, kind: input, shape index: {}]
  %s4 = inlined_call_operand.vmem [shape: f32[1,64], index: 4, kind: input, shape index: {}]
  %s5 = inlined_call_operand.vmem [shape: bf16[64,16], index: 5, kind: input, shape index: {}]
  %s6 = inlined_call_operand.vmem [shape: f32[1,16], index: 6, kind: input, shape index: {}]
  %s7 = inlined_call_operand.vmem [shape: f32[1,16], index: 7, kind: input, shape index: {}]
  %s8 = inlined_call_operand.vmem [shape: f32[1,16], index: 8, kind: input, shape index: {}]
  %s9 = inlined_call_operand.vmem [shape: f32[16,16], index: 9, kind: output, shape index: {}]
  %s10 = sld [smem:[#allocation0]]
  $region54: #{miipher_forward.53} parent=0
    _
  %s12 = ssub.s32 1, %s10
  %s13 = scalar_select 0, %s12, %s10
  // Predicated region
  $region2: #{miipher_forward.53} parent=0 // pred_check
    _
  $region3: #{miipher_forward.53} parent=0 // pred_check_branch
    %15 = sbr.rel (0) target = $region5
  $region4: #{miipher_forward.53} parent=0 // pred_region
    _
  $region5: #{miipher_forward.53} parent=0 // pred_fallthru
    _
  // Predicated region
  $region6: #{miipher_forward.53} parent=0 // pred_check
    _
  $region7: #{miipher_forward.53} parent=0 // pred_check_branch
    %17 = sbr.rel (0) target = $region9
  $region8: #{miipher_forward.53} parent=0 // pred_region
    _
  $region9: #{miipher_forward.53} parent=0 // pred_fallthru
    _
  // Predicated region
  $region10: #{miipher_forward.53} parent=0 // pred_check
    _
  $region11: #{miipher_forward.53} parent=0 // pred_check_branch
    %19 = sbr.rel (0) target = $region13
  $region12: #{miipher_forward.53} parent=0 // pred_region
    _
  $region13: #{miipher_forward.53} parent=0 // pred_fallthru
    _
  // Predicated region
  $region14: #{miipher_forward.53} parent=0 // pred_check
    _
  $region15: #{miipher_forward.53} parent=0 // pred_check_branch
    %21 = sbr.rel (0) target = $region17
  $region16: #{miipher_forward.53} parent=0 // pred_region
    _
  $region17: #{miipher_forward.53} parent=0 // pred_fallthru
    _
  // Predicated region
  $region18: #{miipher_forward.53} parent=0 // pred_check
    _
  $region19: #{miipher_forward.53} parent=0 // pred_check_branch
    %23 = sbr.rel (0) target = $region21
  $region20: #{miipher_forward.53} parent=0 // pred_region
    _
  $region21: #{miipher_forward.53} parent=0 // pred_fallthru
    _
  // Predicated region
  $region22: #{miipher_forward.53} parent=0 // pred_check
    _
  $region23: #{miipher_forward.53} parent=0 // pred_check_branch
    %25 = sbr.rel (0) target = $region25
  $region24: #{miipher_forward.53} parent=0 // pred_region
    _
  $region25: #{miipher_forward.53} parent=0 // pred_fallthru
    _
  // Predicated region
  $region26: #{miipher_forward.53} parent=0 // pred_check
    _
  $region27: #{miipher_forward.53} parent=0 // pred_check_branch
    %27 = sbr.rel (0) target = $region29
  $region28: #{miipher_forward.53} parent=0 // pred_region
    _
  $region29: #{miipher_forward.53} parent=0 // pred_fallthru
    _
  // Predicated region
  $region30: #{miipher_forward.53} parent=0 // pred_check
    _
  $region31: #{miipher_forward.53} parent=0 // pred_check_branch
    %29 = sbr.rel (0) target = $region33
  $region32: #{miipher_forward.53} parent=0 // pred_region
    _
  $region33: #{miipher_forward.53} parent=0 // pred_fallthru
    _
  // Predicated region
  $region34: #{miipher_forward.53} parent=0 // pred_check
    _
  $region35: #{miipher_forward.53} parent=0 // pred_check_branch
    %31 = sbr.rel (0) target = $region37
  $region36: #{miipher_forward.53} parent=0 // pred_region
    _
  $region37: #{miipher_forward.53} parent=0 // pred_fallthru
    _
  %p33 = scmp.eq.s32.totalorder 0, 0
  // Predicated region
  $region38: #{miipher_forward.53} parent=0 // pred_check
    %p34 = pneg %p33
  $region39: #{miipher_forward.53} parent=0 // pred_check_branch
    %36 = sbr.rel (%p34) target = $region41
  $region40: #{miipher_forward.53} parent=0 // pred_region
    %v37 = vld [vmem:[%s0] sm:$0xff]
    %v38 = vld [vmem:[%s0 + $0x8] sm:$0xff]
    %vm39 = vcmask 130048
    %v40 = vsel %vm39, %v37, 0.0
    %41 = vadd.xlane.f32.xlu0 %v40
    %v42 = vpop.xlane.xlu0 %41
    %v43 = vsel %vm39, %v38, 0.0
    %44 = vadd.xlane.f32.xlu0 %v43
    %v45 = vpop.xlane.xlu0 %44
    %v46 = vrcp.pop 16.0
    %v47 = vmul.f32 %v42, %v46
    %v48 = vmul.f32 %v45, %v46
    %v49 = vsub.f32 %v37, %v47
    %v50 = vsub.f32 %v38, %v48
    %v51 = vmul.f32 %v49, %v49
    %v52 = vmul.f32 %v50, %v50
    %v53 = vsel %vm39, %v51, 0.0
    %54 = vadd.xlane.f32.xlu0 %v53
    %v55 = vpop.xlane.xlu0 %54
    %v56 = vsel %vm39, %v52, 0.0
    %57 = vadd.xlane.f32.xlu0 %v56
    %v58 = vpop.xlane.xlu0 %57
    %v59 = vmul.f32 %v55, %v46
    %v60 = vmul.f32 %v58, %v46
    %v61 = vadd.f32 %v59, 1e-05
    %v62 = vadd.f32 %v60, 1e-05
    %v63 = vrsqrt.pop %v61
    %v64 = vrsqrt.pop %v62
    %v65 = vmul.f32 %v49, %v63
    %v66 = vmul.f32 %v50, %v64
    %v67 = vld [vmem:[%s1] sm:$0x1]
    %v69 = vlaneseq
    %v70 = vshrl.u32 %v69, 7
    %v71 = vsub.s32 0, %v70
    %v72 = vrot.slane %v67, %v71
    %v74 = vmul.f32 %v65, %v72
    %v75 = vmul.f32 %v66, %v72
    %v76 = vld [vmem:[%s2] sm:$0x1]
    %v78 = vlaneseq
    %v79 = vshrl.u32 %v78, 7
    %v80 = vsub.s32 0, %v79
    %v81 = vrot.slane %v76, %v80
    %v83 = vadd.f32 %v74, %v81
    %v84 = vadd.f32 %v75, %v81
    %v85 = vpack.c.bf16 %v84, %v83
    %v87 = vunpack.c.l.b16 %v85
    %v88 = vunpack.c.h.b16 %v85
    %v89 = vpack.c.b16 %v87, %v87
    %v90 = vpack.c.b16 %v88, %v88
    %vm93 = vcmask 125952
    %94 = vst.msk [vmem:[#allocation2] sm:$0xf] %vm93, %v89
    %95 = vst.msk [vmem:[#allocation2 + $0x4] sm:$0xf] %vm93, %v90
    %96 = vst.msk [vmem:[#allocation3] sm:$0xff] %vm39, 0.0
    %97 = vst.msk [vmem:[#allocation3 + $0x8] sm:$0xff] %vm39, 0.0
  $region41: #{miipher_forward.53} parent=0 // pred_fallthru
    _
  %v98 = vld [vmem:[#allocation2] sm:$0xf]
  %v99 = vld [vmem:[#allocation2 + $0x4] sm:$0xf]
  %v100 = vld [vmem:[%s3] sm:$0xf]
  %v101 = vld [vmem:[%s3 + $0x4] sm:$0xf]
  %v102 = vld [vmem:[%s4] sm:$0x1]
  %v104 = vlaneseq
  %v105 = vshrl.u32 %v104, 7
  %v106 = vsub.s32 0, %v105
  %v107 = vrot.slane %v102, %v106
  %v111 = vunpack.c.l.b16 %v98
  %v112 = vunpack.c.l.b16 %v99
  %v113 = vpack.c.b16 %v112, %v111
  %v116 = vunpack.c.l.b16 %v100
  %v117 = vunpack.c.l.b16 %v101
  %v118 = vpack.c.b16 %v117, %v116
  %vm120 = vcmask 130048
  %v122 = vsel %vm120, %v113, 0
  %124 = vmatprep.subr.bf16.mxu0 0
  %125 = vmatpush1.bf16.msra.mxu0 0
  %126 = vmatprep.subr.bf16.mxu0 0
  %127 = vmatpush1.bf16.msra.mxu0 0
  %128 = vmatprep.subr.bf16.mxu0 0
  %129 = vmatpush1.bf16.msra.mxu0 0
  %130 = vmatprep.subr.bf16.mxu0 0
  %131 = vmatpush1.bf16.msra.mxu0 0
  %132 = vmatprep.subr.bf16.mxu0 0
  %133 = vmatpush1.bf16.msra.mxu0 0
  %134 = vmatprep.subr.bf16.mxu0 0
  %135 = vmatpush1.bf16.msra.mxu0 0
  %136 = vmatprep.subr.bf16.mxu0 0
  %137 = vmatpush1.bf16.msra.mxu0 0
  %138 = vmatprep.subr.bf16.mxu0 0
  %139 = vmatpush1.bf16.msra.mxu0 %v118
  %140 = vmatprep.subr.bf16.mxu0 0
  %141 = vmatpush2.bf16.msra.mxu0 0
  %142 = vmatprep.subr.bf16.mxu0 0
  %143 = vmatpush2.bf16.msra.mxu0 0
  %144 = vmatprep.subr.bf16.mxu0 0
  %145 = vmatpush2.bf16.msra.mxu0 0
  %146 = vmatprep.subr.bf16.mxu0 0
  %147 = vmatpush2.bf16.msra.mxu0 0
  %148 = vmatprep.subr.bf16.mxu0 0
  %149 = vmatpush2.bf16.msra.mxu0 0
  %150 = vmatprep.subr.bf16.mxu0 0
  %151 = vmatpush2.bf16.msra.mxu0 0
  %152 = vmatprep.subr.bf16.mxu0 0
  %153 = vmatpush2.bf16.msra.mxu0 0
  %154 = vmatprep.subr.bf16.mxu0 0
  %155 = vmatpush2.bf16.msra.mxu0 0
  %156 = vmatprep.mubr.bf16.mxu0 0
  %157 = vmatmul.mubr.bf16.gmra.mxu0 %v122
  %v158 = vpop.f32.mrf.mxu0
  %v159 = vadd.f32 %v107, %v158
  %v160 = vpop.f32.mrf.mxu0
  %v161 = vpop.f32.mrf.mxu0
  %v162 = vadd.f32 %v107, %v161
  %v163 = vpop.f32.mrf.mxu0
  %164 = vdwg.mxu0
  %v165 = vxor.u32 %v159, 2147483648
  %v166 = vxor.u32 %v162, 2147483648
  %v167 = vmul.f32 %v165, 1.442695
  %v168 = vpow.pop %v167
  %v169 = vmul.f32 %v166, 1.442695
  %v170 = vpow.pop %v169
  %v171 = vadd.f32 %v168, 1.0
  %v172 = vadd.f32 %v170, 1.0
  %v173 = vrcp.pop %v171
  %v174 = vmul.f32 1.0, %v173
  %v175 = vrcp.pop %v172
  %v176 = vmul.f32 1.0, %v175
  %v177 = vmul.f32 %v159, %v174
  %v178 = vmul.f32 %v162, %v176
  %v179 = vld [vmem:[#allocation3] sm:$0xff]
  %v180 = vld [vmem:[#allocation3 + $0x8] sm:$0xff]
  %v181 = vpack.c.bf16 %v178, %v177
  %v182 = vld [vmem:[%s5] sm:$0xf]
  %v183 = vld [vmem:[%s5 + $0x4] sm:$0xf]
  %v184 = vld [vmem:[%s5 + $0x8] sm:$0xf]
  %v185 = vld [vmem:[%s5 + $0xc] sm:$0xf]
  %v186 = vld [vmem:[%s5 + $0x10] sm:$0xf]
  %v187 = vld [vmem:[%s5 + $0x14] sm:$0xf]
  %v188 = vld [vmem:[%s5 + $0x18] sm:$0xf]
  %v189 = vld [vmem:[%s5 + $0x1c] sm:$0xf]
  %v198 = vunpack.c.l.b16 %v182
  %v199 = vunpack.c.l.b16 %v183
  %v200 = vunpack.c.l.b16 %v184
  %v201 = vunpack.c.l.b16 %v185
  %v202 = vunpack.c.l.b16 %v186
  %v203 = vunpack.c.l.b16 %v187
  %v204 = vunpack.c.l.b16 %v188
  %v205 = vunpack.c.l.b16 %v189
  %v206 = vpack.c.b16 %v199, %v198
  %v207 = vpack.c.b16 %v201, %v200
  %v208 = vpack.c.b16 %v203, %v202
  %v209 = vpack.c.b16 %v205, %v204
  %vm214 = vcmask 523264
  %v216 = vsel %vm214, %v181, 0
  %218 = vmatprep.subr.bf16.mxu0 0
  %219 = vmatpush1.bf16.msra.mxu0 0
  %220 = vmatprep.subr.bf16.mxu0 0
  %221 = vmatpush1.bf16.msra.mxu0 0
  %222 = vmatprep.subr.bf16.mxu0 0
  %223 = vmatpush1.bf16.msra.mxu0 0
  %224 = vmatprep.subr.bf16.mxu0 0
  %225 = vmatpush1.bf16.msra.mxu0 0
  %226 = vmatprep.subr.bf16.mxu0 0
  %227 = vmatpush1.bf16.msra.mxu0 %v209
  %228 = vmatprep.subr.bf16.mxu0 0
  %229 = vmatpush1.bf16.msra.mxu0 %v208
  %230 = vmatprep.subr.bf16.mxu0 0
  %231 = vmatpush1.bf16.msra.mxu0 %v207
  %232 = vmatprep.subr.bf16.mxu0 0
  %233 = vmatpush1.bf16.msra.mxu0 %v206
  %234 = vmatprep.subr.bf16.mxu0 0
  %235 = vmatpush2.bf16.msra.mxu0 0
  %236 = vmatprep.subr.bf16.mxu0 0
  %237 = vmatpush2.bf16.msra.mxu0 0
  %238 = vmatprep.subr.bf16.mxu0 0
  %239 = vmatpush2.bf16.msra.mxu0 0
  %240 = vmatprep.subr.bf16.mxu0 0
  %241 = vmatpush2.bf16.msra.mxu0 0
  %242 = vmatprep.subr.bf16.mxu0 0
  %243 = vmatpush2.bf16.msra.mxu0 0
  %244 = vmatprep.subr.bf16.mxu0 0
  %245 = vmatpush2.bf16.msra.mxu0 0
  %246 = vmatprep.subr.bf16.mxu0 0
  %247 = vmatpush2.bf16.msra.mxu0 0
  %248 = vmatprep.subr.bf16.mxu0 0
  %249 = vmatpush2.bf16.msra.mxu0 0
  %250 = vmatprep.mubr.bf16.mxu0 0
  %251 = vmatmul.mubr.bf16.gmra.mxu0 %v216
  %v252 = vpop.f32.mrf.mxu0
  %v253 = vadd.f32 0.0, %v252
  %v254 = vpop.f32.mrf.mxu0
  %v255 = vpop.f32.mrf.mxu0
  %v256 = vadd.f32 0.0, %v255
  %v257 = vpop.f32.mrf.mxu0
  %258 = vdwg.mxu0
  %v259 = vadd.f32 %v179, %v253
  %v260 = vadd.f32 %v180, %v256
  %261 = vst.msk [vmem:[#allocation3] sm:$0xff] %vm120, %v259
  %262 = vst.msk [vmem:[#allocation3 + $0x8] sm:$0xff] %vm120, %v260
  // Predicated region
  $region42: #{miipher_forward.53} parent=0 // pred_check
    %p263 = pneg %p33
  $region43: #{miipher_forward.53} parent=0 // pred_check_branch
    %265 = sbr.rel (%p263) target = $region45
  $region44: #{miipher_forward.53} parent=0 // pred_region
    %v266 = vld [vmem:[%s0] sm:$0xff]
    %v267 = vld [vmem:[%s0 + $0x8] sm:$0xff]
    %v268 = vld [vmem:[#allocation3] sm:$0xff]
    %v269 = vld [vmem:[#allocation3 + $0x8] sm:$0xff]
    %v270 = vld [vmem:[%s6] sm:$0x1]
    %v272 = vlaneseq
    %v273 = vshrl.u32 %v272, 7
    %v274 = vsub.s32 0, %v273
    %v275 = vrot.slane %v270, %v274
    %v277 = vadd.f32 %v268, %v275
    %v278 = vadd.f32 %v269, %v275
    %v279 = vmul.f32 %v277, 0.5
    %v280 = vmul.f32 %v278, 0.5
    %v281 = vadd.f32 %v266, %v279
    %v282 = vadd.f32 %v267, %v280
    %v283 = vsel %vm120, %v281, 0.0
    %284 = vadd.xlane.f32.xlu0 %v283
    %v285 = vpop.xlane.xlu0 %284
    %v286 = vsel %vm120, %v282, 0.0
    %287 = vadd.xlane.f32.xlu0 %v286
    %v288 = vpop.xlane.xlu0 %287
    %v289 = vrcp.pop 16.0
    %v290 = vmul.f32 %v285, %v289
    %v291 = vmul.f32 %v288, %v289
    %v292 = vsub.f32 %v281, %v290
    %v293 = vsub.f32 %v282, %v291
    %v294 = vmul.f32 %v292, %v292
    %v295 = vmul.f32 %v293, %v293
    %v296 = vsel %vm120, %v294, 0.0
    %297 = vadd.xlane.f32.xlu0 %v296
    %v298 = vpop.xlane.xlu0 %297
    %v299 = vsel %vm120, %v295, 0.0
    %300 = vadd.xlane.f32.xlu0 %v299
    %v301 = vpop.xlane.xlu0 %300
    %v302 = vmul.f32 %v298, %v289
    %v303 = vmul.f32 %v301, %v289
    %v304 = vadd.f32 %v302, 1e-05
    %v305 = vadd.f32 %v303, 1e-05
    %v306 = vrsqrt.pop %v304
    %v307 = vrsqrt.pop %v305
    %v308 = vmul.f32 %v292, %v306
    %v309 = vmul.f32 %v293, %v307
    %v310 = vld [vmem:[%s7] sm:$0x1]
    %v312 = vlaneseq
    %v313 = vshrl.u32 %v312, 7
    %v314 = vsub.s32 0, %v313
    %v315 = vrot.slane %v310, %v314
    %v317 = vmul.f32 %v308, %v315
    %v318 = vmul.f32 %v309, %v315
    %v319 = vld [vmem:[%s8] sm:$0x1]
    %v321 = vlaneseq
    %v322 = vshrl.u32 %v321, 7
    %v323 = vsub.s32 0, %v322
    %v324 = vrot.slane %v319, %v323
    %v326 = vadd.f32 %v317, %v324
    %v327 = vadd.f32 %v318, %v324
    %328 = vst.msk [vmem:[%s9] sm:$0xff] %vm120, %v326
    %329 = vst.msk [vmem:[%s9 + $0x8] sm:$0xff] %vm120, %v327
  $region45: #{miipher_forward.53} parent=0 // pred_fallthru
    _
  // Predicated region
  $region46: #{miipher_forward.53} parent=0 // pred_check
    _
  $region47: #{miipher_forward.53} parent=0 // pred_check_branch
    %331 = sbr.rel (0) target = $region49
  $region48: #{miipher_forward.53} parent=0 // pred_region
    _
  $region49: #{miipher_forward.53} parent=0 // pred_fallthru
    _
  // Predicated region
  $region50: #{miipher_forward.53} parent=0 // pred_check
    _
  $region51: #{miipher_forward.53} parent=0 // pred_check_branch
    %333 = sbr.rel (0) target = $region53
  $region52: #{miipher_forward.53} parent=0 // pred_region
    _
  $region53: #{miipher_forward.53} parent=0 // pred_fallthru
    _

// kernel: miipher_forward.62
$region0: #{miipher_forward.62}
  #allocation0 [shape = 'u32[]', space=smem, size = 0x4, offset = 0x4, fixed_abs, tag = 'smem constant byte address 0x4 - core index']
  #allocation1 [shape = 'u32[144,128]{1,0:T(1,128)}', space=vmem, size = 0x12000, scoped, tag = 'internal scratch']
  %s0 = inlined_call_operand.vmem [shape: f32[2,8,32], index: 0, kind: input, shape index: {}]
  %s1 = inlined_call_operand.vmem [shape: bf16[5,32,16], index: 1, kind: input, shape index: {}]
  %s2 = inlined_call_operand.vmem [shape: f32[1,16], index: 2, kind: input, shape index: {}]
  %s3 = inlined_call_operand.vmem [shape: f32[2,8,16], index: 3, kind: output, shape index: {0}]
  %s4 = inlined_call_operand.vmem [shape: f32[2,1,16], index: 4, kind: output, shape index: {1}]
  %s5 = inlined_call_operand.vmem [shape: f32[2,1,16], index: 5, kind: output, shape index: {2}]
  %6 = xla_tuple %s3, %s4, %s5
  %s7 = sld [smem:[#allocation0]]
  $region61: #{miipher_forward.62} parent=0
    _
  %s9 = ssub.s32 1, %s7
  %s10 = scalar_select 0, %s9, %s7
  loop: start=0, step=1, limit=4
  $region2: #{miipher_forward.62} parent=0 // loop_pre_header
    _
  $region3: #{miipher_forward.62} parent=0 // loop_header
    %s12 = sphi 0, %s16
    %p13 = scmp.ge.s32.totalorder %s12, 4
    %s22 = sphi 0, %s24
    %s25 = sphi 0, %s22
    %s26 = sphi 0, %s25
    %s42 = sphi 0, %s26
    %s46 = sphi 0, %s46
    %s48 = sphi 0, %s46
    %s49 = sphi 0, %s48
    %s63 = sphi 0, %s49
    %s67 = sphi 0, %s67
    %s69 = sphi 0, %s67
    %s70 = sphi 0, %s69
    %s84 = sphi 0, %s70
    %s90 = sphi 0, %s92
    %s93 = sphi 0, %s90
    %s94 = sphi 0, %s93
    %s110 = sphi 0, %s94
    %s116 = sphi 0, %s118
    %s119 = sphi 0, %s116
    %s120 = sphi 0, %s119
    %s136 = sphi 0, %s120
    %s142 = sphi 0, %s144
    %s145 = sphi 0, %s142
    %s146 = sphi 0, %s145
    %s162 = sphi 0, %s146
  $region4: #{miipher_forward.62} parent=0 // loop_header_branch
    %15 = sbr.rel (%p13) target = $region8
  $region5: #{miipher_forward.62} parent=0 // loop_body
    %s17 = ssub.s32 %s12, 1
    %s18 = ssub.s32 %s12, 2
    %s19 = sadd.s32 %s12, 1
    %s20 = ssub.s32 %s12, %s19
    %p21 = scmp.eq.s32.totalorder %s20, 0
    %s23 = sadd.s32 %s22, 1
    %s24 = scalar_select %p21, %s22, %s23
    %p27 = pneg %p21
    %p28 = scmp.eq.s32.totalorder %s12, 1
    %p29 = por %p27, %p28
    %p30 = scmp.ne.s32.totalorder %s22, %s25
    %p31 = scmp.eq.s32.totalorder %s12, 0
    %p32 = por %p30, %p31
    %p33 = scmp.ne.s32.totalorder %s22, %s25
    %p34 = scmp.eq.s32.totalorder %s17, 1
    %p35 = por %p33, %p34
    %p36 = scmp.ne.s32.totalorder %s25, %s26
    %p37 = scmp.eq.s32.totalorder %s17, 0
    %p38 = por %p36, %p37
    %p39 = scmp.ne.s32.totalorder %s25, %s26
    %p40 = scmp.eq.s32.totalorder %s18, 1
    %p41 = por %p39, %p40
    %p43 = scmp.ne.s32.totalorder %s26, %s42
    %p44 = scmp.eq.s32.totalorder %s18, 0
    %p45 = por %p43, %p44
    %s47 = sadd.s32 %s46, 1
    %p50 = scmp.eq.s32.totalorder %s12, 1
    %p51 = scmp.ne.s32.totalorder %s46, %s48
    %p52 = scmp.eq.s32.totalorder %s12, 0
    %p53 = por %p51, %p52
    %p54 = scmp.ne.s32.totalorder %s46, %s48
    %p55 = scmp.eq.s32.totalorder %s17, 1
    %p56 = por %p54, %p55
    %p57 = scmp.ne.s32.totalorder %s48, %s49
    %p58 = scmp.eq.s32.totalorder %s17, 0
    %p59 = por %p57, %p58
    %p60 = scmp.ne.s32.totalorder %s48, %s49
    %p61 = scmp.eq.s32.totalorder %s18, 1
    %p62 = por %p60, %p61
    %p64 = scmp.ne.s32.totalorder %s49, %s63
    %p65 = scmp.eq.s32.totalorder %s18, 0
    %p66 = por %p64, %p65
    %s68 = sadd.s32 %s67, 1
    %p71 = scmp.eq.s32.totalorder %s12, 1
    %p72 = scmp.ne.s32.totalorder %s67, %s69
    %p73 = scmp.eq.s32.totalorder %s12, 0
    %p74 = por %p72, %p73
    %p75 = scmp.ne.s32.totalorder %s67, %s69
    %p76 = scmp.eq.s32.totalorder %s17, 1
    %p77 = por %p75, %p76
    %p78 = scmp.ne.s32.totalorder %s69, %s70
    %p79 = scmp.eq.s32.totalorder %s17, 0
    %p80 = por %p78, %p79
    %p81 = scmp.ne.s32.totalorder %s69, %s70
    %p82 = scmp.eq.s32.totalorder %s18, 1
    %p83 = por %p81, %p82
    %p85 = scmp.ne.s32.totalorder %s70, %s84
    %p86 = scmp.eq.s32.totalorder %s18, 0
    %p87 = por %p85, %p86
    %s88 = ssub.s32 %s12, %s19
    %p89 = scmp.eq.s32.totalorder %s88, 0
    %s91 = sadd.s32 %s90, 1
    %s92 = scalar_select %p89, %s90, %s91
    %p95 = pneg %p89
    %p96 = scmp.eq.s32.totalorder %s12, 1
    %p97 = por %p95, %p96
    %p98 = scmp.ne.s32.totalorder %s90, %s93
    %p99 = scmp.eq.s32.totalorder %s12, 0
    %p100 = por %p98, %p99
    %p101 = scmp.ne.s32.totalorder %s90, %s93
    %p102 = scmp.eq.s32.totalorder %s17, 1
    %p103 = por %p101, %p102
    %p104 = scmp.ne.s32.totalorder %s93, %s94
    %p105 = scmp.eq.s32.totalorder %s17, 0
    %p106 = por %p104, %p105
    %p107 = scmp.ne.s32.totalorder %s93, %s94
    %p108 = scmp.eq.s32.totalorder %s18, 1
    %p109 = por %p107, %p108
    %p111 = scmp.ne.s32.totalorder %s94, %s110
    %p112 = scmp.eq.s32.totalorder %s18, 0
    %p113 = por %p111, %p112
    %s114 = ssub.s32 %s12, %s19
    %p115 = scmp.eq.s32.totalorder %s114, 0
    %s117 = sadd.s32 %s116, 1
    %s118 = scalar_select %p115, %s116, %s117
    %p121 = pneg %p115
    %p122 = scmp.eq.s32.totalorder %s12, 1
    %p123 = por %p121, %p122
    %p124 = scmp.ne.s32.totalorder %s116, %s119
    %p125 = scmp.eq.s32.totalorder %s12, 0
    %p126 = por %p124, %p125
    %p127 = scmp.ne.s32.totalorder %s116, %s119
    %p128 = scmp.eq.s32.totalorder %s17, 1
    %p129 = por %p127, %p128
    %p130 = scmp.ne.s32.totalorder %s119, %s120
    %p131 = scmp.eq.s32.totalorder %s17, 0
    %p132 = por %p130, %p131
    %p133 = scmp.ne.s32.totalorder %s119, %s120
    %p134 = scmp.eq.s32.totalorder %s18, 1
    %p135 = por %p133, %p134
    %p137 = scmp.ne.s32.totalorder %s120, %s136
    %p138 = scmp.eq.s32.totalorder %s18, 0
    %p139 = por %p137, %p138
    %s140 = ssub.s32 %s12, %s19
    %p141 = scmp.eq.s32.totalorder %s140, 0
    %s143 = sadd.s32 %s142, 1
    %s144 = scalar_select %p141, %s142, %s143
    %p147 = pneg %p141
    %p148 = scmp.eq.s32.totalorder %s12, 1
    %p149 = por %p147, %p148
    %p150 = scmp.ne.s32.totalorder %s142, %s145
    %p151 = scmp.eq.s32.totalorder %s12, 0
    %p152 = por %p150, %p151
    %p153 = scmp.ne.s32.totalorder %s142, %s145
    %p154 = scmp.eq.s32.totalorder %s17, 1
    %p155 = por %p153, %p154
    %p156 = scmp.ne.s32.totalorder %s145, %s146
    %p157 = scmp.eq.s32.totalorder %s17, 0
    %p158 = por %p156, %p157
    %p159 = scmp.ne.s32.totalorder %s145, %s146
    %p160 = scmp.eq.s32.totalorder %s18, 1
    %p161 = por %p159, %p160
    %p163 = scmp.ne.s32.totalorder %s146, %s162
    %p164 = scmp.eq.s32.totalorder %s18, 0
    %p165 = por %p163, %p164
    %p166 = scmp.le.s32.totalorder 1, %s12
    %p167 = scmp.lt.s32.totalorder %s12, 3
    %p168 = pnand %p166, %p167
    %p169 = pneg %p168
    // Predicated region
    $region9: #{miipher_forward.62} parent=5 // pred_check
      _
    $region10: #{miipher_forward.62} parent=5 // pred_check_branch
      %171 = sbr.rel (%p168) target = $region12
    $region11: #{miipher_forward.62} parent=5 // pred_region
      %s172 = ssub.s32 %s12, 1
      // Predicated region
      $region13: #{miipher_forward.62} parent=11 // pred_check
        %p173 = pneg %p59
      $region14: #{miipher_forward.62} parent=11 // pred_check_branch
        %175 = sbr.rel (%p173) target = $region16
      $region15: #{miipher_forward.62} parent=11 // pred_region
        _
      $region16: #{miipher_forward.62} parent=11 // pred_fallthru
        _
      // Predicated region
      $region17: #{miipher_forward.62} parent=11 // pred_check
        %p176 = pneg %p80
      $region18: #{miipher_forward.62} parent=11 // pred_check_branch
        %178 = sbr.rel (%p176) target = $region20
      $region19: #{miipher_forward.62} parent=11 // pred_region
        _
      $region20: #{miipher_forward.62} parent=11 // pred_fallthru
        _
    $region12: #{miipher_forward.62} parent=5 // pred_fallthru
      _
    %p179 = scmp.lt.s32.totalorder %s12, 2
    // Predicated region
    $region21: #{miipher_forward.62} parent=5 // pred_check
      %p180 = pneg %p179
    $region22: #{miipher_forward.62} parent=5 // pred_check_branch
      %182 = sbr.rel (%p180) target = $region24
    $region23: #{miipher_forward.62} parent=5 // pred_region
      // Predicated region
      $region25: #{miipher_forward.62} parent=23 // pred_check
        %p183 = pneg %p32
      $region26: #{miipher_forward.62} parent=23 // pred_check_branch
        %185 = sbr.rel (%p183) target = $region28
      $region27: #{miipher_forward.62} parent=23 // pred_region
        %p186 = scmp.lt.s32.totalorder %s12, 1
        %s187 = scalar_select %p186, %s12, 1
        %s188 = smul.addr %s187, 8
        %s189 = scalar_lea.vmem %s0, %s188
      $region28: #{miipher_forward.62} parent=23 // pred_fallthru
        _
    $region24: #{miipher_forward.62} parent=5 // pred_fallthru
      _
    %p190 = scmp.le.s32.totalorder 1, %s12
    %p191 = scmp.lt.s32.totalorder %s12, 3
    %p192 = pnand %p190, %p191
    %p193 = pneg %p192
    // Predicated region
    $region29: #{miipher_forward.62} parent=5 // pred_check
      _
    $region30: #{miipher_forward.62} parent=5 // pred_check_branch
      %195 = sbr.rel (%p192) target = $region32
    $region31: #{miipher_forward.62} parent=5 // pred_region
      %s196 = ssub.s32 %s12, 1
      %p197 = scmp.lt.s32.totalorder %s17, 1
      %s198 = scalar_select %p197, %s17, 1
      %s199 = smul.addr %s198, 8
      %s200 = scalar_lea.vmem %s0, %s199
      %p201 = pneg %p38
      %p202 = pneg %p35
      %p203 = pneg %p59
      %p204 = pneg %p56
      %p205 = pneg %p80
      %p206 = pneg %p77
      %p207 = pneg %p106
      %p208 = pneg %p103
      %p209 = scmp.lt.s32.totalorder %s17, 1
      %s210 = scalar_select %p209, %s17, 1
      %s211 = smul.addr %s210, 8
      %s212 = scalar_lea.vmem %s3, %s211
      %p213 = pneg %p132
      %p214 = pneg %p129
      %p215 = scmp.lt.s32.totalorder %s17, 1
      %s216 = scalar_select %p215, %s17, 1
      %s217 = scalar_lea.vmem %s4, %s216
      %p218 = pneg %p158
      %p219 = pneg %p155
      %p220 = scmp.lt.s32.totalorder %s17, 1
      %s221 = scalar_select %p220, %s17, 1
      %s222 = scalar_lea.vmem %s5, %s221
      %p223 = scmp.lt.s32.totalorder %s17, 1
      %s224 = scalar_select %p223, %s17, 1
      %s225 = smul.addr %s224, 8
      %s226 = scalar_lea.vmem %s0, %s225
      %p227 = scmp.lt.s32.totalorder %s17, 1
      %s228 = scalar_select %p227, %s17, 1
      %s229 = smul.addr %s228, 8
      %s230 = scalar_lea.vmem %s3, %s229
      %p231 = scmp.lt.s32.totalorder %s17, 1
      %s232 = scalar_select %p231, %s17, 1
      %s233 = scalar_lea.vmem %s4, %s232
      %p234 = scmp.lt.s32.totalorder %s17, 1
      %s235 = scalar_select %p234, %s17, 1
      %s236 = scalar_lea.vmem %s5, %s235
      %v238 = vld [vmem:[%s226] sm:$0xff]
      %v239 = vlaneseq
      %v240 = vshrl.u32 %v239, 7
      %v241 = vrot.slane %v238, 6
      %v242 = vadd.s32 %v240, 4294967294
      %vm243 = vcmp.ge.s32.totalorder %v242, 0
      %vm244 = vcmp.lt.s32.totalorder %v242, 8
      %vm245 = vmand %vm243, %vm244
      %v246 = vsel %vm245, 1, 0
      %vm247 = vcmp.eq.s32.totalorder %v246, 1
      %v248 = vsel %vm247, %v241, 0.0
      %v249 = vpack.c.bf16 %v248, %v248
      %v250 = vld [vmem:[%s1] sm:$0xf]
      %v251 = vld [vmem:[%s1 + $0x4] sm:$0xf]
      %v252 = vld [vmem:[%s1 + $0x8] sm:$0xf]
      %v253 = vld [vmem:[%s1 + $0xc] sm:$0xf]
      %v254 = vrot.slane %v238, 7
      %v255 = vadd.s32 %v240, 4294967295
      %vm256 = vcmp.ge.s32.totalorder %v255, 0
      %vm257 = vcmp.lt.s32.totalorder %v255, 8
      %vm258 = vmand %vm256, %vm257
      %v259 = vsel %vm258, 1, 0
      %vm260 = vcmp.eq.s32.totalorder %v259, 1
      %v261 = vsel %vm260, %v254, 0.0
      %v262 = vpack.c.bf16 %v261, %v261
      %s263 = scalar_lea.vmem %s1, 16
      %v264 = vld [vmem:[%s263] sm:$0xf]
      %v265 = vld [vmem:[%s263 + $0x4] sm:$0xf]
      %v266 = vld [vmem:[%s263 + $0x8] sm:$0xf]
      %v267 = vld [vmem:[%s263 + $0xc] sm:$0xf]
      %v272 = vunpack.c.l.b16 %v264
      %v273 = vunpack.c.l.b16 %v265
      %v274 = vunpack.c.l.b16 %v266
      %v275 = vunpack.c.l.b16 %v267
      %v276 = vpack.c.b16 %v273, %v272
      %v277 = vpack.c.b16 %v275, %v274
      %vm280 = vcmask 261120
      %v282 = vsel %vm280, %v262, 0
      %284 = vmatprep.subr.bf16.mxu0 0
      %285 = vmatpush1.bf16.msra.mxu0 0
      %286 = vmatprep.subr.bf16.mxu0 0
      %287 = vmatpush1.bf16.msra.mxu0 0
      %288 = vmatprep.subr.bf16.mxu0 0
      %289 = vmatpush1.bf16.msra.mxu0 0
      %290 = vmatprep.subr.bf16.mxu0 0
      %291 = vmatpush1.bf16.msra.mxu0 0
      %292 = vmatprep.subr.bf16.mxu0 0
      %293 = vmatpush1.bf16.msra.mxu0 0
      %294 = vmatprep.subr.bf16.mxu0 0
      %295 = vmatpush1.bf16.msra.mxu0 0
      %296 = vmatprep.subr.bf16.mxu0 0
      %297 = vmatpush1.bf16.msra.mxu0 %v277
      %298 = vmatprep.subr.bf16.mxu0 0
      %299 = vmatpush1.bf16.msra.mxu0 %v276
      %300 = vmatprep.subr.bf16.mxu0 0
      %301 = vmatpush2.bf16.msra.mxu0 0
      %302 = vmatprep.subr.bf16.mxu0 0
      %303 = vmatpush2.bf16.msra.mxu0 0
      %304 = vmatprep.subr.bf16.mxu0 0
      %305 = vmatpush2.bf16.msra.mxu0 0
      %306 = vmatprep.subr.bf16.mxu0 0
      %307 = vmatpush2.bf16.msra.mxu0 0
      %308 = vmatprep.subr.bf16.mxu0 0
      %309 = vmatpush2.bf16.msra.mxu0 0
      %310 = vmatprep.subr.bf16.mxu0 0
      %311 = vmatpush2.bf16.msra.mxu0 0
      %312 = vmatprep.subr.bf16.mxu0 0
      %313 = vmatpush2.bf16.msra.mxu0 0
      %314 = vmatprep.subr.bf16.mxu0 0
      %315 = vmatpush2.bf16.msra.mxu0 0
      %316 = vmatprep.mubr.bf16.mxu0 0
      %317 = vmatmul.mubr.bf16.gmra.mxu0 %v282
      %v318 = vpop.f32.mrf.mxu0
      %v319 = vadd.f32 0.0, %v318
      %v320 = vpop.f32.mrf.mxu0
      %v321 = vpop.f32.mrf.mxu0
      %v322 = vpop.f32.mrf.mxu0
      %323 = vdwg.mxu0
      %v328 = vunpack.c.l.b16 %v250
      %v329 = vunpack.c.l.b16 %v251
      %v330 = vunpack.c.l.b16 %v252
      %v331 = vunpack.c.l.b16 %v253
      %v332 = vpack.c.b16 %v329, %v328
      %v333 = vpack.c.b16 %v331, %v330
      %v337 = vsel %vm280, %v249, 0
      %339 = vmatprep.subr.bf16.mxu0 0
      %340 = vmatpush1.bf16.msra.mxu0 0
      %341 = vmatprep.subr.bf16.mxu0 0
      %342 = vmatpush1.bf16.msra.mxu0 0
      %343 = vmatprep.subr.bf16.mxu0 0
      %344 = vmatpush1.bf16.msra.mxu0 0
      %345 = vmatprep.subr.bf16.mxu0 0
      %346 = vmatpush1.bf16.msra.mxu0 0
      %347 = vmatprep.subr.bf16.mxu0 0
      %348 = vmatpush1.bf16.msra.mxu0 0
      %349 = vmatprep.subr.bf16.mxu0 0
      %350 = vmatpush1.bf16.msra.mxu0 0
      %351 = vmatprep.subr.bf16.mxu0 0
      %352 = vmatpush1.bf16.msra.mxu0 %v333
      %353 = vmatprep.subr.bf16.mxu0 0
      %354 = vmatpush1.bf16.msra.mxu0 %v332
      %355 = vmatprep.subr.bf16.mxu0 0
      %356 = vmatpush2.bf16.msra.mxu0 0
      %357 = vmatprep.subr.bf16.mxu0 0
      %358 = vmatpush2.bf16.msra.mxu0 0
      %359 = vmatprep.subr.bf16.mxu0 0
      %360 = vmatpush2.bf16.msra.mxu0 0
      %361 = vmatprep.subr.bf16.mxu0 0
      %362 = vmatpush2.bf16.msra.mxu0 0
      %363 = vmatprep.subr.bf16.mxu0 0
      %364 = vmatpush2.bf16.msra.mxu0 0
      %365 = vmatprep.subr.bf16.mxu0 0
      %366 = vmatpush2.bf16.msra.mxu0 0
      %367 = vmatprep.subr.bf16.mxu0 0
      %368 = vmatpush2.bf16.msra.mxu0 0
      %369 = vmatprep.subr.bf16.mxu0 0
      %370 = vmatpush2.bf16.msra.mxu0 0
      %371 = vmatprep.mubr.bf16.mxu0 0
      %372 = vmatmul.mubr.bf16.gmra.mxu0 %v337
      %v373 = vpop.f32.mrf.mxu0
      %v374 = vadd.f32 %v319, %v373
      %v375 = vpop.f32.mrf.mxu0
      %v376 = vpop.f32.mrf.mxu0
      %v377 = vpop.f32.mrf.mxu0
      %378 = vdwg.mxu0
      %vm379 = vcmp.ge.s32.totalorder %v240, 0
      %vm380 = vcmp.lt.s32.totalorder %v240, 8
      %vm381 = vmand %vm379, %vm380
      %v382 = vsel %vm381, 1, 0
      %vm383 = vcmp.eq.s32.totalorder %v382, 1
      %v384 = vsel %vm383, %v238, 0.0
      %v385 = vpack.c.bf16 %v384, %v384
      %s386 = scalar_lea.vmem %s1, 32
      %v387 = vld [vmem:[%s386] sm:$0xf]
      %v388 = vld [vmem:[%s386 + $0x4] sm:$0xf]
      %v389 = vld [vmem:[%s386 + $0x8] sm:$0xf]
      %v390 = vld [vmem:[%s386 + $0xc] sm:$0xf]
      %v395 = vunpack.c.l.b16 %v387
      %v396 = vunpack.c.l.b16 %v388
      %v397 = vunpack.c.l.b16 %v389
      %v398 = vunpack.c.l.b16 %v390
      %v399 = vpack.c.b16 %v396, %v395
      %v400 = vpack.c.b16 %v398, %v397
      %v404 = vsel %vm280, %v385, 0
      %406 = vmatprep.subr.bf16.mxu0 0
      %407 = vmatpush1.bf16.msra.mxu0 0
      %408 = vmatprep.subr.bf16.mxu0 0
      %409 = vmatpush1.bf16.msra.mxu0 0
      %410 = vmatprep.subr.bf16.mxu0 0
      %411 = vmatpush1.bf16.msra.mxu0 0
      %412 = vmatprep.subr.bf16.mxu0 0
      %413 = vmatpush1.bf16.msra.mxu0 0
      %414 = vmatprep.subr.bf16.mxu0 0
      %415 = vmatpush1.bf16.msra.mxu0 0
      %416 = vmatprep.subr.bf16.mxu0 0
      %417 = vmatpush1.bf16.msra.mxu0 0
      %418 = vmatprep.subr.bf16.mxu0 0
      %419 = vmatpush1.bf16.msra.mxu0 %v400
      %420 = vmatprep.subr.bf16.mxu0 0
      %421 = vmatpush1.bf16.msra.mxu0 %v399
      %422 = vmatprep.subr.bf16.mxu0 0
      %423 = vmatpush2.bf16.msra.mxu0 0
      %424 = vmatprep.subr.bf16.mxu0 0
      %425 = vmatpush2.bf16.msra.mxu0 0
      %426 = vmatprep.subr.bf16.mxu0 0
      %427 = vmatpush2.bf16.msra.mxu0 0
      %428 = vmatprep.subr.bf16.mxu0 0
      %429 = vmatpush2.bf16.msra.mxu0 0
      %430 = vmatprep.subr.bf16.mxu0 0
      %431 = vmatpush2.bf16.msra.mxu0 0
      %432 = vmatprep.subr.bf16.mxu0 0
      %433 = vmatpush2.bf16.msra.mxu0 0
      %434 = vmatprep.subr.bf16.mxu0 0
      %435 = vmatpush2.bf16.msra.mxu0 0
      %436 = vmatprep.subr.bf16.mxu0 0
      %437 = vmatpush2.bf16.msra.mxu0 0
      %438 = vmatprep.mubr.bf16.mxu0 0
      %439 = vmatmul.mubr.bf16.gmra.mxu0 %v404
      %v440 = vpop.f32.mrf.mxu0
      %v441 = vadd.f32 0.0, %v440
      %v442 = vpop.f32.mrf.mxu0
      %v443 = vpop.f32.mrf.mxu0
      %v444 = vpop.f32.mrf.mxu0
      %445 = vdwg.mxu0
      %v446 = vadd.f32 %v374, %v441
      %v447 = vrot.slane %v238, 1
      %v448 = vadd.s32 %v240, 1
      %vm449 = vcmp.ge.s32.totalorder %v448, 0
      %vm450 = vcmp.lt.s32.totalorder %v448, 8
      %vm451 = vmand %vm449, %vm450
      %v452 = vsel %vm451, 1, 0
      %vm453 = vcmp.eq.s32.totalorder %v452, 1
      %v454 = vsel %vm453, %v447, 0.0
      %v455 = vpack.c.bf16 %v454, %v454
      %s456 = scalar_lea.vmem %s1, 48
      %v457 = vld [vmem:[%s456] sm:$0xf]
      %v458 = vld [vmem:[%s456 + $0x4] sm:$0xf]
      %v459 = vld [vmem:[%s456 + $0x8] sm:$0xf]
      %v460 = vld [vmem:[%s456 + $0xc] sm:$0xf]
      %v465 = vunpack.c.l.b16 %v457
      %v466 = vunpack.c.l.b16 %v458
      %v467 = vunpack.c.l.b16 %v459
      %v468 = vunpack.c.l.b16 %v460
      %v469 = vpack.c.b16 %v466, %v465
      %v470 = vpack.c.b16 %v468, %v467
      %v474 = vsel %vm280, %v455, 0
      %476 = vmatprep.subr.bf16.mxu0 0
      %477 = vmatpush1.bf16.msra.mxu0 0
      %478 = vmatprep.subr.bf16.mxu0 0
      %479 = vmatpush1.bf16.msra.mxu0 0
      %480 = vmatprep.subr.bf16.mxu0 0
      %481 = vmatpush1.bf16.msra.mxu0 0
      %482 = vmatprep.subr.bf16.mxu0 0
      %483 = vmatpush1.bf16.msra.mxu0 0
      %484 = vmatprep.subr.bf16.mxu0 0
      %485 = vmatpush1.bf16.msra.mxu0 0
      %486 = vmatprep.subr.bf16.mxu0 0
      %487 = vmatpush1.bf16.msra.mxu0 0
      %488 = vmatprep.subr.bf16.mxu0 0
      %489 = vmatpush1.bf16.msra.mxu0 %v470
      %490 = vmatprep.subr.bf16.mxu0 0
      %491 = vmatpush1.bf16.msra.mxu0 %v469
      %492 = vmatprep.subr.bf16.mxu0 0
      %493 = vmatpush2.bf16.msra.mxu0 0
      %494 = vmatprep.subr.bf16.mxu0 0
      %495 = vmatpush2.bf16.msra.mxu0 0
      %496 = vmatprep.subr.bf16.mxu0 0
      %497 = vmatpush2.bf16.msra.mxu0 0
      %498 = vmatprep.subr.bf16.mxu0 0
      %499 = vmatpush2.bf16.msra.mxu0 0
      %500 = vmatprep.subr.bf16.mxu0 0
      %501 = vmatpush2.bf16.msra.mxu0 0
      %502 = vmatprep.subr.bf16.mxu0 0
      %503 = vmatpush2.bf16.msra.mxu0 0
      %504 = vmatprep.subr.bf16.mxu0 0
      %505 = vmatpush2.bf16.msra.mxu0 0
      %506 = vmatprep.subr.bf16.mxu0 0
      %507 = vmatpush2.bf16.msra.mxu0 0
      %508 = vmatprep.mubr.bf16.mxu0 0
      %509 = vmatmul.mubr.bf16.gmra.mxu0 %v474
      %v510 = vpop.f32.mrf.mxu0
      %v511 = vadd.f32 0.0, %v510
      %v512 = vpop.f32.mrf.mxu0
      %v513 = vpop.f32.mrf.mxu0
      %v514 = vpop.f32.mrf.mxu0
      %515 = vdwg.mxu0
      %v516 = vadd.f32 %v446, %v511
      %v517 = vrot.slane %v238, 2
      %v518 = vadd.s32 %v240, 2
      %vm519 = vcmp.ge.s32.totalorder %v518, 0
      %vm520 = vcmp.lt.s32.totalorder %v518, 8
      %vm521 = vmand %vm519, %vm520
      %v522 = vsel %vm521, 1, 0
      %vm523 = vcmp.eq.s32.totalorder %v522, 1
      %v524 = vsel %vm523, %v517, 0.0
      %v525 = vpack.c.bf16 %v524, %v524
      %s526 = scalar_lea.vmem %s1, 64
      %v527 = vld [vmem:[%s526] sm:$0xf]
      %v528 = vld [vmem:[%s526 + $0x4] sm:$0xf]
      %v529 = vld [vmem:[%s526 + $0x8] sm:$0xf]
      %v530 = vld [vmem:[%s526 + $0xc] sm:$0xf]
      %v535 = vunpack.c.l.b16 %v527
      %v536 = vunpack.c.l.b16 %v528
      %v537 = vunpack.c.l.b16 %v529
      %v538 = vunpack.c.l.b16 %v530
      %v539 = vpack.c.b16 %v536, %v535
      %v540 = vpack.c.b16 %v538, %v537
      %v544 = vsel %vm280, %v525, 0
      %546 = vmatprep.subr.bf16.mxu0 0
      %547 = vmatpush1.bf16.msra.mxu0 0
      %548 = vmatprep.subr.bf16.mxu0 0
      %549 = vmatpush1.bf16.msra.mxu0 0
      %550 = vmatprep.subr.bf16.mxu0 0
      %551 = vmatpush1.bf16.msra.mxu0 0
      %552 = vmatprep.subr.bf16.mxu0 0
      %553 = vmatpush1.bf16.msra.mxu0 0
      %554 = vmatprep.subr.bf16.mxu0 0
      %555 = vmatpush1.bf16.msra.mxu0 0
      %556 = vmatprep.subr.bf16.mxu0 0
      %557 = vmatpush1.bf16.msra.mxu0 0
      %558 = vmatprep.subr.bf16.mxu0 0
      %559 = vmatpush1.bf16.msra.mxu0 %v540
      %560 = vmatprep.subr.bf16.mxu0 0
      %561 = vmatpush1.bf16.msra.mxu0 %v539
      %562 = vmatprep.subr.bf16.mxu0 0
      %563 = vmatpush2.bf16.msra.mxu0 0
      %564 = vmatprep.subr.bf16.mxu0 0
      %565 = vmatpush2.bf16.msra.mxu0 0
      %566 = vmatprep.subr.bf16.mxu0 0
      %567 = vmatpush2.bf16.msra.mxu0 0
      %568 = vmatprep.subr.bf16.mxu0 0
      %569 = vmatpush2.bf16.msra.mxu0 0
      %570 = vmatprep.subr.bf16.mxu0 0
      %571 = vmatpush2.bf16.msra.mxu0 0
      %572 = vmatprep.subr.bf16.mxu0 0
      %573 = vmatpush2.bf16.msra.mxu0 0
      %574 = vmatprep.subr.bf16.mxu0 0
      %575 = vmatpush2.bf16.msra.mxu0 0
      %576 = vmatprep.subr.bf16.mxu0 0
      %577 = vmatpush2.bf16.msra.mxu0 0
      %578 = vmatprep.mubr.bf16.mxu0 0
      %579 = vmatmul.mubr.bf16.gmra.mxu0 %v544
      %v580 = vpop.f32.mrf.mxu0
      %v581 = vadd.f32 0.0, %v580
      %v582 = vpop.f32.mrf.mxu0
      %v583 = vpop.f32.mrf.mxu0
      %v584 = vpop.f32.mrf.mxu0
      %585 = vdwg.mxu0
      %v586 = vadd.f32 %v516, %v581
      %v587 = vld [vmem:[%s2] sm:$0x1]
      %v589 = vlaneseq
      %v590 = vshrl.u32 %v589, 7
      %v591 = vsub.s32 0, %v590
      %v592 = vrot.slane %v587, %v591
      %v594 = vadd.f32 %v586, %v592
      %vm595 = vcmask 130048
      %596 = vst.msk [vmem:[%s230] sm:$0xff] %vm595, %v594
      %v597 = vsel %vm595, %v594, 0.0
      %v598 = vrot.slane %v597, 4
      %v599 = vadd.f32 %v597, %v598
      %v600 = vrot.slane %v599, 2
      %v601 = vadd.f32 %v599, %v600
      %v602 = vrot.slane %v601, 1
      %v603 = vadd.f32 %v601, %v602
      %vm604 = vcmask 122880
      %605 = vst.msk [vmem:[%s233] sm:$0x1] %vm604, %v603
      %v606 = vmul.f32 %v594, %v594
      %v607 = vsel %vm595, %v606, 0.0
      %v608 = vrot.slane %v607, 4
      %v609 = vadd.f32 %v607, %v608
      %v610 = vrot.slane %v609, 2
      %v611 = vadd.f32 %v609, %v610
      %v612 = vrot.slane %v611, 1
      %v613 = vadd.f32 %v611, %v612
      %614 = vst.msk [vmem:[%s236] sm:$0x1] %vm604, %v613
      %p615 = scmp.lt.s32.totalorder %s17, 1
      %s616 = scalar_select %p615, %s17, 1
      %s617 = smul.addr %s616, 8
      %s618 = scalar_lea.vmem %s3, %s617
      %p619 = scmp.lt.s32.totalorder %s17, 1
      %s620 = scalar_select %p619, %s17, 1
      %s621 = scalar_lea.vmem %s4, %s620
      %p622 = scmp.lt.s32.totalorder %s17, 1
      %s623 = scalar_select %p622, %s17, 1
      %s624 = scalar_lea.vmem %s5, %s623
      // Predicated region
      $region33: #{miipher_forward.62} parent=31 // pred_check
        %p625 = pneg %p103
      $region34: #{miipher_forward.62} parent=31 // pred_check_branch
        %627 = sbr.rel (%p625) target = $region36
      $region35: #{miipher_forward.62} parent=31 // pred_region
        _
      $region36: #{miipher_forward.62} parent=31 // pred_fallthru
        _
      // Predicated region
      $region37: #{miipher_forward.62} parent=31 // pred_check
        %p628 = pneg %p129
      $region38: #{miipher_forward.62} parent=31 // pred_check_branch
        %630 = sbr.rel (%p628) target = $region40
      $region39: #{miipher_forward.62} parent=31 // pred_region
        _
      $region40: #{miipher_forward.62} parent=31 // pred_fallthru
        _
      // Predicated region
      $region41: #{miipher_forward.62} parent=31 // pred_check
        %p631 = pneg %p155
      $region42: #{miipher_forward.62} parent=31 // pred_check_branch
        %633 = sbr.rel (%p631) target = $region44
      $region43: #{miipher_forward.62} parent=31 // pred_region
        _
      $region44: #{miipher_forward.62} parent=31 // pred_fallthru
        _
    $region32: #{miipher_forward.62} parent=5 // pred_fallthru
      _
    %p634 = scmp.le.s32.totalorder 2, %s12
    // Predicated region
    $region45: #{miipher_forward.62} parent=5 // pred_check
      %p635 = pneg %p634
    $region46: #{miipher_forward.62} parent=5 // pred_check_branch
      %637 = sbr.rel (%p635) target = $region48
    $region47: #{miipher_forward.62} parent=5 // pred_region
      %s638 = ssub.s32 %s12, 2
      // Predicated region
      $region49: #{miipher_forward.62} parent=47 // pred_check
        %p639 = pneg %p109
      $region50: #{miipher_forward.62} parent=47 // pred_check_branch
        %641 = sbr.rel (%p639) target = $region52
      $region51: #{miipher_forward.62} parent=47 // pred_region
        %p642 = scmp.lt.s32.totalorder %s18, 1
        %s643 = scalar_select %p642, %s18, 1
        %s644 = smul.addr %s643, 8
        %s645 = scalar_lea.vmem %s3, %s644
      $region52: #{miipher_forward.62} parent=47 // pred_fallthru
        _
      // Predicated region
      $region53: #{miipher_forward.62} parent=47 // pred_check
        %p646 = pneg %p135
      $region54: #{miipher_forward.62} parent=47 // pred_check_branch
        %648 = sbr.rel (%p646) target = $region56
      $region55: #{miipher_forward.62} parent=47 // pred_region
        %p649 = scmp.lt.s32.totalorder %s18, 1
        %s650 = scalar_select %p649, %s18, 1
        %s651 = scalar_lea.vmem %s4, %s650
      $region56: #{miipher_forward.62} parent=47 // pred_fallthru
        _
      // Predicated region
      $region57: #{miipher_forward.62} parent=47 // pred_check
        %p652 = pneg %p161
      $region58: #{miipher_forward.62} parent=47 // pred_check_branch
        %654 = sbr.rel (%p652) target = $region60
      $region59: #{miipher_forward.62} parent=47 // pred_region
        %p655 = scmp.lt.s32.totalorder %s18, 1
        %s656 = scalar_select %p655, %s18, 1
        %s657 = scalar_lea.vmem %s5, %s656
      $region60: #{miipher_forward.62} parent=47 // pred_fallthru
        _
    $region48: #{miipher_forward.62} parent=5 // pred_fallthru
      _
  $region6: #{miipher_forward.62} parent=0 // loop_footer
    %s16 = sadd.s32 1, %s12
  $region7: #{miipher_forward.62} parent=0 // loop_footer_branch
    %11 = sbr.rel target = $region3
  $region8: #{miipher_forward.62} parent=0 // loop_exit
    _

// kernel: miipher_forward.67
$region0: #{miipher_forward.67}
  #allocation0 [shape = 'u32[]', space=smem, size = 0x4, offset = 0x4, fixed_abs, tag = 'smem constant byte address 0x4 - core index']
  #allocation1 [shape = 'u32[144,128]{1,0:T(1,128)}', space=vmem, size = 0x12000, scoped, tag = 'internal scratch']
  %s0 = inlined_call_operand.vmem [shape: f32[16,32], index: 0, kind: input, shape index: {}]
  %s1 = inlined_call_operand.vmem [shape: f32[16,32], index: 1, kind: input, shape index: {}]
  %s2 = inlined_call_operand.vmem [shape: f32[1,32], index: 2, kind: input, shape index: {}]
  %s3 = inlined_call_operand.vmem [shape: f32[1,32], index: 3, kind: input, shape index: {}]
  %s4 = inlined_call_operand.vmem [shape: f32[16,32], index: 4, kind: output, shape index: {}]
  %s5 = sld [smem:[#allocation0]]
  $region26: #{miipher_forward.67} parent=0
    _
  %s7 = ssub.s32 1, %s5
  %s8 = scalar_select 0, %s7, %s5
  // Predicated region
  $region2: #{miipher_forward.67} parent=0 // pred_check
    _
  $region3: #{miipher_forward.67} parent=0 // pred_check_branch
    %10 = sbr.rel (0) target = $region5
  $region4: #{miipher_forward.67} parent=0 // pred_region
    _
  $region5: #{miipher_forward.67} parent=0 // pred_fallthru
    _
  // Predicated region
  $region6: #{miipher_forward.67} parent=0 // pred_check
    _
  $region7: #{miipher_forward.67} parent=0 // pred_check_branch
    %12 = sbr.rel (0) target = $region9
  $region8: #{miipher_forward.67} parent=0 // pred_region
    _
  $region9: #{miipher_forward.67} parent=0 // pred_fallthru
    _
  // Predicated region
  $region10: #{miipher_forward.67} parent=0 // pred_check
    _
  $region11: #{miipher_forward.67} parent=0 // pred_check_branch
    %14 = sbr.rel (0) target = $region13
  $region12: #{miipher_forward.67} parent=0 // pred_region
    _
  $region13: #{miipher_forward.67} parent=0 // pred_fallthru
    _
  // Predicated region
  $region14: #{miipher_forward.67} parent=0 // pred_check
    _
  $region15: #{miipher_forward.67} parent=0 // pred_check_branch
    %16 = sbr.rel (0) target = $region17
  $region16: #{miipher_forward.67} parent=0 // pred_region
    _
  $region17: #{miipher_forward.67} parent=0 // pred_fallthru
    _
  %v17 = vld [vmem:[%s1] sm:$0xff]
  %v18 = vld [vmem:[%s1 + $0x8] sm:$0xff]
  %v19 = vld [vmem:[%s0] sm:$0xff]
  %v20 = vld [vmem:[%s0 + $0x8] sm:$0xff]
  %v21 = vld [vmem:[%s2] sm:$0x1]
  %v23 = vlaneseq
  %v24 = vshrl.u32 %v23, 7
  %v25 = vsub.s32 0, %v24
  %v26 = vrot.slane %v21, %v25
  %v28 = vmul.f32 %v19, %v26
  %v29 = vmul.f32 %v20, %v26
  %v30 = vadd.f32 %v17, %v28
  %v31 = vadd.f32 %v18, %v29
  %v32 = vld [vmem:[%s3] sm:$0x1]
  %v34 = vlaneseq
  %v35 = vshrl.u32 %v34, 7
  %v36 = vsub.s32 0, %v35
  %v37 = vrot.slane %v32, %v36
  %v39 = vadd.f32 %v30, %v37
  %v40 = vadd.f32 %v31, %v37
  %vm41 = vcmask 261120
  %42 = vst.msk [vmem:[%s4] sm:$0xff] %vm41, %v39
  %43 = vst.msk [vmem:[%s4 + $0x8] sm:$0xff] %vm41, %v40
  // Predicated region
  $region18: #{miipher_forward.67} parent=0 // pred_check
    _
  $region19: #{miipher_forward.67} parent=0 // pred_check_branch
    %45 = sbr.rel (0) target = $region21
  $region20: #{miipher_forward.67} parent=0 // pred_region
    _
  $region21: #{miipher_forward.67} parent=0 // pred_fallthru
    _
  // Predicated region
  $region22: #{miipher_forward.67} parent=0 // pred_check
    _
  $region23: #{miipher_forward.67} parent=0 // pred_check_branch
    %47 = sbr.rel (0) target = $region25
  $region24: #{miipher_forward.67} parent=0 // pred_region
    _
  $region25: #{miipher_forward.67} parent=0 // pred_fallthru
    _

// kernel: miipher_forward.63
$region0: #{miipher_forward.63}
  #allocation0 [shape = 'u32[]', space=smem, size = 0x4, offset = 0x4, fixed_abs, tag = 'smem constant byte address 0x4 - core index']
  #allocation1 [shape = 'u32[144,128]{1,0:T(1,128)}', space=vmem, size = 0x12000, scoped, tag = 'internal scratch']
  %s0 = inlined_call_operand.vmem [shape: f32[2,8,16], index: 0, kind: input, shape index: {}]
  %s1 = inlined_call_operand.vmem [shape: f32[1,16], index: 1, kind: input, shape index: {}]
  %s2 = inlined_call_operand.vmem [shape: f32[1,16], index: 2, kind: input, shape index: {}]
  %s3 = inlined_call_operand.vmem [shape: bf16[5,16,16], index: 3, kind: input, shape index: {}]
  %s4 = inlined_call_operand.vmem [shape: f32[1,16], index: 4, kind: input, shape index: {}]
  %s5 = inlined_call_operand.vmem [shape: f32[2,8,16], index: 5, kind: output, shape index: {0}]
  %s6 = inlined_call_operand.vmem [shape: f32[2,1,16], index: 6, kind: output, shape index: {1}]
  %s7 = inlined_call_operand.vmem [shape: f32[2,1,16], index: 7, kind: output, shape index: {2}]
  %8 = xla_tuple %s5, %s6, %s7
  %s9 = sld [smem:[#allocation0]]
  $region69: #{miipher_forward.63} parent=0
    _
  %s11 = ssub.s32 1, %s9
  %s12 = scalar_select 0, %s11, %s9
  loop: start=0, step=1, limit=4
  $region2: #{miipher_forward.63} parent=0 // loop_pre_header
    _
  $region3: #{miipher_forward.63} parent=0 // loop_header
    %s14 = sphi 0, %s18
    %p15 = scmp.ge.s32.totalorder %s14, 4
    %s24 = sphi 0, %s26
    %s27 = sphi 0, %s24
    %s28 = sphi 0, %s27
    %s44 = sphi 0, %s28
    %s48 = sphi 0, %s48
    %s50 = sphi 0, %s48
    %s51 = sphi 0, %s50
    %s65 = sphi 0, %s51
    %s69 = sphi 0, %s69
    %s71 = sphi 0, %s69
    %s72 = sphi 0, %s71
    %s86 = sphi 0, %s72
    %s90 = sphi 0, %s90
    %s92 = sphi 0, %s90
    %s93 = sphi 0, %s92
    %s107 = sphi 0, %s93
    %s111 = sphi 0, %s111
    %s113 = sphi 0, %s111
    %s114 = sphi 0, %s113
    %s128 = sphi 0, %s114
    %s134 = sphi 0, %s136
    %s137 = sphi 0, %s134
    %s138 = sphi 0, %s137
    %s154 = sphi 0, %s138
    %s160 = sphi 0, %s162
    %s163 = sphi 0, %s160
    %s164 = sphi 0, %s163
    %s180 = sphi 0, %s164
    %s186 = sphi 0, %s188
    %s189 = sphi 0, %s186
    %s190 = sphi 0, %s189
    %s206 = sphi 0, %s190
  $region4: #{miipher_forward.63} parent=0 // loop_header_branch
    %17 = sbr.rel (%p15) target = $region8
  $region5: #{miipher_forward.63} parent=0 // loop_body
    %s19 = ssub.s32 %s14, 1
    %s20 = ssub.s32 %s14, 2
    %s21 = sadd.s32 %s14, 1
    %s22 = ssub.s32 %s14, %s21
    %p23 = scmp.eq.s32.totalorder %s22, 0
    %s25 = sadd.s32 %s24, 1
    %s26 = scalar_select %p23, %s24, %s25
    %p29 = pneg %p23
    %p30 = scmp.eq.s32.totalorder %s14, 1
    %p31 = por %p29, %p30
    %p32 = scmp.ne.s32.totalorder %s24, %s27
    %p33 = scmp.eq.s32.totalorder %s14, 0
    %p34 = por %p32, %p33
    %p35 = scmp.ne.s32.totalorder %s24, %s27
    %p36 = scmp.eq.s32.totalorder %s19, 1
    %p37 = por %p35, %p36
    %p38 = scmp.ne.s32.totalorder %s27, %s28
    %p39 = scmp.eq.s32.totalorder %s19, 0
    %p40 = por %p38, %p39
    %p41 = scmp.ne.s32.totalorder %s27, %s28
    %p42 = scmp.eq.s32.totalorder %s20, 1
    %p43 = por %p41, %p42
    %p45 = scmp.ne.s32.totalorder %s28, %s44
    %p46 = scmp.eq.s32.totalorder %s20, 0
    %p47 = por %p45, %p46
    %s49 = sadd.s32 %s48, 1
    %p52 = scmp.eq.s32.totalorder %s14, 1
    %p53 = scmp.ne.s32.totalorder %s48, %s50
    %p54 = scmp.eq.s32.totalorder %s14, 0
    %p55 = por %p53, %p54
    %p56 = scmp.ne.s32.totalorder %s48, %s50
    %p57 = scmp.eq.s32.totalorder %s19, 1
    %p58 = por %p56, %p57
    %p59 = scmp.ne.s32.totalorder %s50, %s51
    %p60 = scmp.eq.s32.totalorder %s19, 0
    %p61 = por %p59, %p60
    %p62 = scmp.ne.s32.totalorder %s50, %s51
    %p63 = scmp.eq.s32.totalorder %s20, 1
    %p64 = por %p62, %p63
    %p66 = scmp.ne.s32.totalorder %s51, %s65
    %p67 = scmp.eq.s32.totalorder %s20, 0
    %p68 = por %p66, %p67
    %s70 = sadd.s32 %s69, 1
    %p73 = scmp.eq.s32.totalorder %s14, 1
    %p74 = scmp.ne.s32.totalorder %s69, %s71
    %p75 = scmp.eq.s32.totalorder %s14, 0
    %p76 = por %p74, %p75
    %p77 = scmp.ne.s32.totalorder %s69, %s71
    %p78 = scmp.eq.s32.totalorder %s19, 1
    %p79 = por %p77, %p78
    %p80 = scmp.ne.s32.totalorder %s71, %s72
    %p81 = scmp.eq.s32.totalorder %s19, 0
    %p82 = por %p80, %p81
    %p83 = scmp.ne.s32.totalorder %s71, %s72
    %p84 = scmp.eq.s32.totalorder %s20, 1
    %p85 = por %p83, %p84
    %p87 = scmp.ne.s32.totalorder %s72, %s86
    %p88 = scmp.eq.s32.totalorder %s20, 0
    %p89 = por %p87, %p88
    %s91 = sadd.s32 %s90, 1
    %p94 = scmp.eq.s32.totalorder %s14, 1
    %p95 = scmp.ne.s32.totalorder %s90, %s92
    %p96 = scmp.eq.s32.totalorder %s14, 0
    %p97 = por %p95, %p96
    %p98 = scmp.ne.s32.totalorder %s90, %s92
    %p99 = scmp.eq.s32.totalorder %s19, 1
    %p100 = por %p98, %p99
    %p101 = scmp.ne.s32.totalorder %s92, %s93
    %p102 = scmp.eq.s32.totalorder %s19, 0
    %p103 = por %p101, %p102
    %p104 = scmp.ne.s32.totalorder %s92, %s93
    %p105 = scmp.eq.s32.totalorder %s20, 1
    %p106 = por %p104, %p105
    %p108 = scmp.ne.s32.totalorder %s93, %s107
    %p109 = scmp.eq.s32.totalorder %s20, 0
    %p110 = por %p108, %p109
    %s112 = sadd.s32 %s111, 1
    %p115 = scmp.eq.s32.totalorder %s14, 1
    %p116 = scmp.ne.s32.totalorder %s111, %s113
    %p117 = scmp.eq.s32.totalorder %s14, 0
    %p118 = por %p116, %p117
    %p119 = scmp.ne.s32.totalorder %s111, %s113
    %p120 = scmp.eq.s32.totalorder %s19, 1
    %p121 = por %p119, %p120
    %p122 = scmp.ne.s32.totalorder %s113, %s114
    %p123 = scmp.eq.s32.totalorder %s19, 0
    %p124 = por %p122, %p123
    %p125 = scmp.ne.s32.totalorder %s113, %s114
    %p126 = scmp.eq.s32.totalorder %s20, 1
    %p127 = por %p125, %p126
    %p129 = scmp.ne.s32.totalorder %s114, %s128
    %p130 = scmp.eq.s32.totalorder %s20, 0
    %p131 = por %p129, %p130
    %s132 = ssub.s32 %s14, %s21
    %p133 = scmp.eq.s32.totalorder %s132, 0
    %s135 = sadd.s32 %s134, 1
    %s136 = scalar_select %p133, %s134, %s135
    %p139 = pneg %p133
    %p140 = scmp.eq.s32.totalorder %s14, 1
    %p141 = por %p139, %p140
    %p142 = scmp.ne.s32.totalorder %s134, %s137
    %p143 = scmp.eq.s32.totalorder %s14, 0
    %p144 = por %p142, %p143
    %p145 = scmp.ne.s32.totalorder %s134, %s137
    %p146 = scmp.eq.s32.totalorder %s19, 1
    %p147 = por %p145, %p146
    %p148 = scmp.ne.s32.totalorder %s137, %s138
    %p149 = scmp.eq.s32.totalorder %s19, 0
    %p150 = por %p148, %p149
    %p151 = scmp.ne.s32.totalorder %s137, %s138
    %p152 = scmp.eq.s32.totalorder %s20, 1
    %p153 = por %p151, %p152
    %p155 = scmp.ne.s32.totalorder %s138, %s154
    %p156 = scmp.eq.s32.totalorder %s20, 0
    %p157 = por %p155, %p156
    %s158 = ssub.s32 %s14, %s21
    %p159 = scmp.eq.s32.totalorder %s158, 0
    %s161 = sadd.s32 %s160, 1
    %s162 = scalar_select %p159, %s160, %s161
    %p165 = pneg %p159
    %p166 = scmp.eq.s32.totalorder %s14, 1
    %p167 = por %p165, %p166
    %p168 = scmp.ne.s32.totalorder %s160, %s163
    %p169 = scmp.eq.s32.totalorder %s14, 0
    %p170 = por %p168, %p169
    %p171 = scmp.ne.s32.totalorder %s160, %s163
    %p172 = scmp.eq.s32.totalorder %s19, 1
    %p173 = por %p171, %p172
    %p174 = scmp.ne.s32.totalorder %s163, %s164
    %p175 = scmp.eq.s32.totalorder %s19, 0
    %p176 = por %p174, %p175
    %p177 = scmp.ne.s32.totalorder %s163, %s164
    %p178 = scmp.eq.s32.totalorder %s20, 1
    %p179 = por %p177, %p178
    %p181 = scmp.ne.s32.totalorder %s164, %s180
    %p182 = scmp.eq.s32.totalorder %s20, 0
    %p183 = por %p181, %p182
    %s184 = ssub.s32 %s14, %s21
    %p185 = scmp.eq.s32.totalorder %s184, 0
    %s187 = sadd.s32 %s186, 1
    %s188 = scalar_select %p185, %s186, %s187
    %p191 = pneg %p185
    %p192 = scmp.eq.s32.totalorder %s14, 1
    %p193 = por %p191, %p192
    %p194 = scmp.ne.s32.totalorder %s186, %s189
    %p195 = scmp.eq.s32.totalorder %s14, 0
    %p196 = por %p194, %p195
    %p197 = scmp.ne.s32.totalorder %s186, %s189
    %p198 = scmp.eq.s32.totalorder %s19, 1
    %p199 = por %p197, %p198
    %p200 = scmp.ne.s32.totalorder %s189, %s190
    %p201 = scmp.eq.s32.totalorder %s19, 0
    %p202 = por %p200, %p201
    %p203 = scmp.ne.s32.totalorder %s189, %s190
    %p204 = scmp.eq.s32.totalorder %s20, 1
    %p205 = por %p203, %p204
    %p207 = scmp.ne.s32.totalorder %s190, %s206
    %p208 = scmp.eq.s32.totalorder %s20, 0
    %p209 = por %p207, %p208
    %p210 = scmp.le.s32.totalorder 1, %s14
    %p211 = scmp.lt.s32.totalorder %s14, 3
    %p212 = pnand %p210, %p211
    %p213 = pneg %p212
    // Predicated region
    $region9: #{miipher_forward.63} parent=5 // pred_check
      _
    $region10: #{miipher_forward.63} parent=5 // pred_check_branch
      %215 = sbr.rel (%p212) target = $region12
    $region11: #{miipher_forward.63} parent=5 // pred_region
      %s216 = ssub.s32 %s14, 1
      // Predicated region
      $region13: #{miipher_forward.63} parent=11 // pred_check
        %p217 = pneg %p61
      $region14: #{miipher_forward.63} parent=11 // pred_check_branch
        %219 = sbr.rel (%p217) target = $region16
      $region15: #{miipher_forward.63} parent=11 // pred_region
        _
      $region16: #{miipher_forward.63} parent=11 // pred_fallthru
        _
      // Predicated region
      $region17: #{miipher_forward.63} parent=11 // pred_check
        %p220 = pneg %p82
      $region18: #{miipher_forward.63} parent=11 // pred_check_branch
        %222 = sbr.rel (%p220) target = $region20
      $region19: #{miipher_forward.63} parent=11 // pred_region
        _
      $region20: #{miipher_forward.63} parent=11 // pred_fallthru
        _
      // Predicated region
      $region21: #{miipher_forward.63} parent=11 // pred_check
        %p223 = pneg %p103
      $region22: #{miipher_forward.63} parent=11 // pred_check_branch
        %225 = sbr.rel (%p223) target = $region24
      $region23: #{miipher_forward.63} parent=11 // pred_region
        _
      $region24: #{miipher_forward.63} parent=11 // pred_fallthru
        _
      // Predicated region
      $region25: #{miipher_forward.63} parent=11 // pred_check
        %p226 = pneg %p124
      $region26: #{miipher_forward.63} parent=11 // pred_check_branch
        %228 = sbr.rel (%p226) target = $region28
      $region27: #{miipher_forward.63} parent=11 // pred_region
        _
      $region28: #{miipher_forward.63} parent=11 // pred_fallthru
        _
    $region12: #{miipher_forward.63} parent=5 // pred_fallthru
      _
    %p229 = scmp.lt.s32.totalorder %s14, 2
    // Predicated region
    $region29: #{miipher_forward.63} parent=5 // pred_check
      %p230 = pneg %p229
    $region30: #{miipher_forward.63} parent=5 // pred_check_branch
      %232 = sbr.rel (%p230) target = $region32
    $region31: #{miipher_forward.63} parent=5 // pred_region
      // Predicated region
      $region33: #{miipher_forward.63} parent=31 // pred_check
        %p233 = pneg %p34
      $region34: #{miipher_forward.63} parent=31 // pred_check_branch
        %235 = sbr.rel (%p233) target = $region36
      $region35: #{miipher_forward.63} parent=31 // pred_region
        %p236 = scmp.lt.s32.totalorder %s14, 1
        %s237 = scalar_select %p236, %s14, 1
        %s238 = smul.addr %s237, 8
        %s239 = scalar_lea.vmem %s0, %s238
      $region36: #{miipher_forward.63} parent=31 // pred_fallthru
        _
    $region32: #{miipher_forward.63} parent=5 // pred_fallthru
      _
    %p240 = scmp.le.s32.totalorder 1, %s14
    %p241 = scmp.lt.s32.totalorder %s14, 3
    %p242 = pnand %p240, %p241
    %p243 = pneg %p242
    // Predicated region
    $region37: #{miipher_forward.63} parent=5 // pred_check
      _
    $region38: #{miipher_forward.63} parent=5 // pred_check_branch
      %245 = sbr.rel (%p242) target = $region40
    $region39: #{miipher_forward.63} parent=5 // pred_region
      %s246 = ssub.s32 %s14, 1
      %p247 = scmp.lt.s32.totalorder %s19, 1
      %s248 = scalar_select %p247, %s19, 1
      %s249 = smul.addr %s248, 8
      %s250 = scalar_lea.vmem %s0, %s249
      %p251 = pneg %p40
      %p252 = pneg %p37
      %p253 = pneg %p61
      %p254 = pneg %p58
      %p255 = pneg %p82
      %p256 = pneg %p79
      %p257 = pneg %p103
      %p258 = pneg %p100
      %p259 = pneg %p124
      %p260 = pneg %p121
      %p261 = pneg %p150
      %p262 = pneg %p147
      %p263 = scmp.lt.s32.totalorder %s19, 1
      %s264 = scalar_select %p263, %s19, 1
      %s265 = smul.addr %s264, 8
      %s266 = scalar_lea.vmem %s5, %s265
      %p267 = pneg %p176
      %p268 = pneg %p173
      %p269 = scmp.lt.s32.totalorder %s19, 1
      %s270 = scalar_select %p269, %s19, 1
      %s271 = scalar_lea.vmem %s6, %s270
      %p272 = pneg %p202
      %p273 = pneg %p199
      %p274 = scmp.lt.s32.totalorder %s19, 1
      %s275 = scalar_select %p274, %s19, 1
      %s276 = scalar_lea.vmem %s7, %s275
      %p277 = scmp.lt.s32.totalorder %s19, 1
      %s278 = scalar_select %p277, %s19, 1
      %s279 = smul.addr %s278, 8
      %s280 = scalar_lea.vmem %s0, %s279
      %p281 = scmp.lt.s32.totalorder %s19, 1
      %s282 = scalar_select %p281, %s19, 1
      %s283 = smul.addr %s282, 8
      %s284 = scalar_lea.vmem %s5, %s283
      %p285 = scmp.lt.s32.totalorder %s19, 1
      %s286 = scalar_select %p285, %s19, 1
      %s287 = scalar_lea.vmem %s6, %s286
      %p288 = scmp.lt.s32.totalorder %s19, 1
      %s289 = scalar_select %p288, %s19, 1
      %s290 = scalar_lea.vmem %s7, %s289
      %v292 = vld [vmem:[%s280] sm:$0xff]
      %v293 = vld [vmem:[%s1] sm:$0x1]
      %v295 = vlaneseq
      %v296 = vshrl.u32 %v295, 7
      %v297 = vsub.s32 0, %v296
      %v298 = vrot.slane %v293, %v297
      %v300 = vmul.f32 %v292, %v298
      %v301 = vld [vmem:[%s2] sm:$0x1]
      %v303 = vlaneseq
      %v304 = vshrl.u32 %v303, 7
      %v305 = vsub.s32 0, %v304
      %v306 = vrot.slane %v301, %v305
      %v308 = vadd.f32 %v300, %v306
      %v309 = vtanh.pop %v308
      %v310 = vlaneseq
      %v311 = vshrl.u32 %v310, 7
      %v312 = vrot.slane %v309, 6
      %v313 = vadd.s32 %v311, 4294967294
      %vm314 = vcmp.ge.s32.totalorder %v313, 0
      %vm315 = vcmp.lt.s32.totalorder %v313, 8
      %vm316 = vmand %vm314, %vm315
      %v317 = vsel %vm316, 1, 0
      %vm318 = vcmp.eq.s32.totalorder %v317, 1
      %v319 = vsel %vm318, %v312, 0.0
      %v320 = vpack.c.bf16 %v319, %v319
      %v321 = vld [vmem:[%s3] sm:$0xf]
      %v322 = vld [vmem:[%s3 + $0x4] sm:$0xf]
      %v323 = vrot.slane %v309, 7
      %v324 = vadd.s32 %v311, 4294967295
      %vm325 = vcmp.ge.s32.totalorder %v324, 0
      %vm326 = vcmp.lt.s32.totalorder %v324, 8
      %vm327 = vmand %vm325, %vm326
      %v328 = vsel %vm327, 1, 0
      %vm329 = vcmp.eq.s32.totalorder %v328, 1
      %v330 = vsel %vm329, %v323, 0.0
      %v331 = vpack.c.bf16 %v330, %v330
      %s332 = scalar_lea.vmem %s3, 8
      %v333 = vld [vmem:[%s332] sm:$0xf]
      %v334 = vld [vmem:[%s332 + $0x4] sm:$0xf]
      %v337 = vunpack.c.l.b16 %v333
      %v338 = vunpack.c.l.b16 %v334
      %v339 = vpack.c.b16 %v338, %v337
      %vm341 = vcmask 130048
      %v343 = vsel %vm341, %v331, 0
      %345 = vmatprep.subr.bf16.mxu0 0
      %346 = vmatpush1.bf16.msra.mxu0 0
      %347 = vmatprep.subr.bf16.mxu0 0
      %348 = vmatpush1.bf16.msra.mxu0 0
      %349 = vmatprep.subr.bf16.mxu0 0
      %350 = vmatpush1.bf16.msra.mxu0 0
      %351 = vmatprep.subr.bf16.mxu0 0
      %352 = vmatpush1.bf16.msra.mxu0 0
      %353 = vmatprep.subr.bf16.mxu0 0
      %354 = vmatpush1.bf16.msra.mxu0 0
      %355 = vmatprep.subr.bf16.mxu0 0
      %356 = vmatpush1.bf16.msra.mxu0 0
      %357 = vmatprep.subr.bf16.mxu0 0
      %358 = vmatpush1.bf16.msra.mxu0 0
      %359 = vmatprep.subr.bf16.mxu0 0
      %360 = vmatpush1.bf16.msra.mxu0 %v339
      %361 = vmatprep.subr.bf16.mxu0 0
      %362 = vmatpush2.bf16.msra.mxu0 0
      %363 = vmatprep.subr.bf16.mxu0 0
      %364 = vmatpush2.bf16.msra.mxu0 0
      %365 = vmatprep.subr.bf16.mxu0 0
      %366 = vmatpush2.bf16.msra.mxu0 0
      %367 = vmatprep.subr.bf16.mxu0 0
      %368 = vmatpush2.bf16.msra.mxu0 0
      %369 = vmatprep.subr.bf16.mxu0 0
      %370 = vmatpush2.bf16.msra.mxu0 0
      %371 = vmatprep.subr.bf16.mxu0 0
      %372 = vmatpush2.bf16.msra.mxu0 0
      %373 = vmatprep.subr.bf16.mxu0 0
      %374 = vmatpush2.bf16.msra.mxu0 0
      %375 = vmatprep.subr.bf16.mxu0 0
      %376 = vmatpush2.bf16.msra.mxu0 0
      %377 = vmatprep.mubr.bf16.mxu0 0
      %378 = vmatmul.mubr.bf16.gmra.mxu0 %v343
      %v379 = vpop.f32.mrf.mxu0
      %v380 = vadd.f32 0.0, %v379
      %v381 = vpop.f32.mrf.mxu0
      %v382 = vpop.f32.mrf.mxu0
      %v383 = vpop.f32.mrf.mxu0
      %384 = vdwg.mxu0
      %v387 = vunpack.c.l.b16 %v321
      %v388 = vunpack.c.l.b16 %v322
      %v389 = vpack.c.b16 %v388, %v387
      %v392 = vsel %vm341, %v320, 0
      %394 = vmatprep.subr.bf16.mxu0 0
      %395 = vmatpush1.bf16.msra.mxu0 0
      %396 = vmatprep.subr.bf16.mxu0 0
      %397 = vmatpush1.bf16.msra.mxu0 0
      %398 = vmatprep.subr.bf16.mxu0 0
      %399 = vmatpush1.bf16.msra.mxu0 0
      %400 = vmatprep.subr.bf16.mxu0 0
      %401 = vmatpush1.bf16.msra.mxu0 0
      %402 = vmatprep.subr.bf16.mxu0 0
      %403 = vmatpush1.bf16.msra.mxu0 0
      %404 = vmatprep.subr.bf16.mxu0 0
      %405 = vmatpush1.bf16.msra.mxu0 0
      %406 = vmatprep.subr.bf16.mxu0 0
      %407 = vmatpush1.bf16.msra.mxu0 0
      %408 = vmatprep.subr.bf16.mxu0 0
      %409 = vmatpush1.bf16.msra.mxu0 %v389
      %410 = vmatprep.subr.bf16.mxu0 0
      %411 = vmatpush2.bf16.msra.mxu0 0
      %412 = vmatprep.subr.bf16.mxu0 0
      %413 = vmatpush2.bf16.msra.mxu0 0
      %414 = vmatprep.subr.bf16.mxu0 0
      %415 = vmatpush2.bf16.msra.mxu0 0
      %416 = vmatprep.subr.bf16.mxu0 0
      %417 = vmatpush2.bf16.msra.mxu0 0
      %418 = vmatprep.subr.bf16.mxu0 0
      %419 = vmatpush2.bf16.msra.mxu0 0
      %420 = vmatprep.subr.bf16.mxu0 0
      %421 = vmatpush2.bf16.msra.mxu0 0
      %422 = vmatprep.subr.bf16.mxu0 0
      %423 = vmatpush2.bf16.msra.mxu0 0
      %424 = vmatprep.subr.bf16.mxu0 0
      %425 = vmatpush2.bf16.msra.mxu0 0
      %426 = vmatprep.mubr.bf16.mxu0 0
      %427 = vmatmul.mubr.bf16.gmra.mxu0 %v392
      %v428 = vpop.f32.mrf.mxu0
      %v429 = vadd.f32 %v380, %v428
      %v430 = vpop.f32.mrf.mxu0
      %v431 = vpop.f32.mrf.mxu0
      %v432 = vpop.f32.mrf.mxu0
      %433 = vdwg.mxu0
      %vm434 = vcmp.ge.s32.totalorder %v311, 0
      %vm435 = vcmp.lt.s32.totalorder %v311, 8
      %vm436 = vmand %vm434, %vm435
      %v437 = vsel %vm436, 1, 0
      %vm438 = vcmp.eq.s32.totalorder %v437, 1
      %v439 = vsel %vm438, %v309, 0.0
      %v440 = vpack.c.bf16 %v439, %v439
      %s441 = scalar_lea.vmem %s3, 16
      %v442 = vld [vmem:[%s441] sm:$0xf]
      %v443 = vld [vmem:[%s441 + $0x4] sm:$0xf]
      %v446 = vunpack.c.l.b16 %v442
      %v447 = vunpack.c.l.b16 %v443
      %v448 = vpack.c.b16 %v447, %v446
      %v451 = vsel %vm341, %v440, 0
      %453 = vmatprep.subr.bf16.mxu0 0
      %454 = vmatpush1.bf16.msra.mxu0 0
      %455 = vmatprep.subr.bf16.mxu0 0
      %456 = vmatpush1.bf16.msra.mxu0 0
      %457 = vmatprep.subr.bf16.mxu0 0
      %458 = vmatpush1.bf16.msra.mxu0 0
      %459 = vmatprep.subr.bf16.mxu0 0
      %460 = vmatpush1.bf16.msra.mxu0 0
      %461 = vmatprep.subr.bf16.mxu0 0
      %462 = vmatpush1.bf16.msra.mxu0 0
      %463 = vmatprep.subr.bf16.mxu0 0
      %464 = vmatpush1.bf16.msra.mxu0 0
      %465 = vmatprep.subr.bf16.mxu0 0
      %466 = vmatpush1.bf16.msra.mxu0 0
      %467 = vmatprep.subr.bf16.mxu0 0
      %468 = vmatpush1.bf16.msra.mxu0 %v448
      %469 = vmatprep.subr.bf16.mxu0 0
      %470 = vmatpush2.bf16.msra.mxu0 0
      %471 = vmatprep.subr.bf16.mxu0 0
      %472 = vmatpush2.bf16.msra.mxu0 0
      %473 = vmatprep.subr.bf16.mxu0 0
      %474 = vmatpush2.bf16.msra.mxu0 0
      %475 = vmatprep.subr.bf16.mxu0 0
      %476 = vmatpush2.bf16.msra.mxu0 0
      %477 = vmatprep.subr.bf16.mxu0 0
      %478 = vmatpush2.bf16.msra.mxu0 0
      %479 = vmatprep.subr.bf16.mxu0 0
      %480 = vmatpush2.bf16.msra.mxu0 0
      %481 = vmatprep.subr.bf16.mxu0 0
      %482 = vmatpush2.bf16.msra.mxu0 0
      %483 = vmatprep.subr.bf16.mxu0 0
      %484 = vmatpush2.bf16.msra.mxu0 0
      %485 = vmatprep.mubr.bf16.mxu0 0
      %486 = vmatmul.mubr.bf16.gmra.mxu0 %v451
      %v487 = vpop.f32.mrf.mxu0
      %v488 = vadd.f32 0.0, %v487
      %v489 = vpop.f32.mrf.mxu0
      %v490 = vpop.f32.mrf.mxu0
      %v491 = vpop.f32.mrf.mxu0
      %492 = vdwg.mxu0
      %v493 = vadd.f32 %v429, %v488
      %v494 = vrot.slane %v309, 1
      %v495 = vadd.s32 %v311, 1
      %vm496 = vcmp.ge.s32.totalorder %v495, 0
      %vm497 = vcmp.lt.s32.totalorder %v495, 8
      %vm498 = vmand %vm496, %vm497
      %v499 = vsel %vm498, 1, 0
      %vm500 = vcmp.eq.s32.totalorder %v499, 1
      %v501 = vsel %vm500, %v494, 0.0
      %v502 = vpack.c.bf16 %v501, %v501
      %s503 = scalar_lea.vmem %s3, 24
      %v504 = vld [vmem:[%s503] sm:$0xf]
      %v505 = vld [vmem:[%s503 + $0x4] sm:$0xf]
      %v508 = vunpack.c.l.b16 %v504
      %v509 = vunpack.c.l.b16 %v505
      %v510 = vpack.c.b16 %v509, %v508
      %v513 = vsel %vm341, %v502, 0
      %515 = vmatprep.subr.bf16.mxu0 0
      %516 = vmatpush1.bf16.msra.mxu0 0
      %517 = vmatprep.subr.bf16.mxu0 0
      %518 = vmatpush1.bf16.msra.mxu0 0
      %519 = vmatprep.subr.bf16.mxu0 0
      %520 = vmatpush1.bf16.msra.mxu0 0
      %521 = vmatprep.subr.bf16.mxu0 0
      %522 = vmatpush1.bf16.msra.mxu0 0
      %523 = vmatprep.subr.bf16.mxu0 0
      %524 = vmatpush1.bf16.msra.mxu0 0
      %525 = vmatprep.subr.bf16.mxu0 0
      %526 = vmatpush1.bf16.msra.mxu0 0
      %527 = vmatprep.subr.bf16.mxu0 0
      %528 = vmatpush1.bf16.msra.mxu0 0
      %529 = vmatprep.subr.bf16.mxu0 0
      %530 = vmatpush1.bf16.msra.mxu0 %v510
      %531 = vmatprep.subr.bf16.mxu0 0
      %532 = vmatpush2.bf16.msra.mxu0 0
      %533 = vmatprep.subr.bf16.mxu0 0
      %534 = vmatpush2.bf16.msra.mxu0 0
      %535 = vmatprep.subr.bf16.mxu0 0
      %536 = vmatpush2.bf16.msra.mxu0 0
      %537 = vmatprep.subr.bf16.mxu0 0
      %538 = vmatpush2.bf16.msra.mxu0 0
      %539 = vmatprep.subr.bf16.mxu0 0
      %540 = vmatpush2.bf16.msra.mxu0 0
      %541 = vmatprep.subr.bf16.mxu0 0
      %542 = vmatpush2.bf16.msra.mxu0 0
      %543 = vmatprep.subr.bf16.mxu0 0
      %544 = vmatpush2.bf16.msra.mxu0 0
      %545 = vmatprep.subr.bf16.mxu0 0
      %546 = vmatpush2.bf16.msra.mxu0 0
      %547 = vmatprep.mubr.bf16.mxu0 0
      %548 = vmatmul.mubr.bf16.gmra.mxu0 %v513
      %v549 = vpop.f32.mrf.mxu0
      %v550 = vadd.f32 0.0, %v549
      %v551 = vpop.f32.mrf.mxu0
      %v552 = vpop.f32.mrf.mxu0
      %v553 = vpop.f32.mrf.mxu0
      %554 = vdwg.mxu0
      %v555 = vadd.f32 %v493, %v550
      %v556 = vrot.slane %v309, 2
      %v557 = vadd.s32 %v311, 2
      %vm558 = vcmp.ge.s32.totalorder %v557, 0
      %vm559 = vcmp.lt.s32.totalorder %v557, 8
      %vm560 = vmand %vm558, %vm559
      %v561 = vsel %vm560, 1, 0
      %vm562 = vcmp.eq.s32.totalorder %v561, 1
      %v563 = vsel %vm562, %v556, 0.0
      %v564 = vpack.c.bf16 %v563, %v563
      %s565 = scalar_lea.vmem %s3, 32
      %v566 = vld [vmem:[%s565] sm:$0xf]
      %v567 = vld [vmem:[%s565 + $0x4] sm:$0xf]
      %v570 = vunpack.c.l.b16 %v566
      %v571 = vunpack.c.l.b16 %v567
      %v572 = vpack.c.b16 %v571, %v570
      %v575 = vsel %vm341, %v564, 0
      %577 = vmatprep.subr.bf16.mxu0 0
      %578 = vmatpush1.bf16.msra.mxu0 0
      %579 = vmatprep.subr.bf16.mxu0 0
      %580 = vmatpush1.bf16.msra.mxu0 0
      %581 = vmatprep.subr.bf16.mxu0 0
      %582 = vmatpush1.bf16.msra.mxu0 0
      %583 = vmatprep.subr.bf16.mxu0 0
      %584 = vmatpush1.bf16.msra.mxu0 0
      %585 = vmatprep.subr.bf16.mxu0 0
      %586 = vmatpush1.bf16.msra.mxu0 0
      %587 = vmatprep.subr.bf16.mxu0 0
      %588 = vmatpush1.bf16.msra.mxu0 0
      %589 = vmatprep.subr.bf16.mxu0 0
      %590 = vmatpush1.bf16.msra.mxu0 0
      %591 = vmatprep.subr.bf16.mxu0 0
      %592 = vmatpush1.bf16.msra.mxu0 %v572
      %593 = vmatprep.subr.bf16.mxu0 0
      %594 = vmatpush2.bf16.msra.mxu0 0
      %595 = vmatprep.subr.bf16.mxu0 0
      %596 = vmatpush2.bf16.msra.mxu0 0
      %597 = vmatprep.subr.bf16.mxu0 0
      %598 = vmatpush2.bf16.msra.mxu0 0
      %599 = vmatprep.subr.bf16.mxu0 0
      %600 = vmatpush2.bf16.msra.mxu0 0
      %601 = vmatprep.subr.bf16.mxu0 0
      %602 = vmatpush2.bf16.msra.mxu0 0
      %603 = vmatprep.subr.bf16.mxu0 0
      %604 = vmatpush2.bf16.msra.mxu0 0
      %605 = vmatprep.subr.bf16.mxu0 0
      %606 = vmatpush2.bf16.msra.mxu0 0
      %607 = vmatprep.subr.bf16.mxu0 0
      %608 = vmatpush2.bf16.msra.mxu0 0
      %609 = vmatprep.mubr.bf16.mxu0 0
      %610 = vmatmul.mubr.bf16.gmra.mxu0 %v575
      %v611 = vpop.f32.mrf.mxu0
      %v612 = vadd.f32 0.0, %v611
      %v613 = vpop.f32.mrf.mxu0
      %v614 = vpop.f32.mrf.mxu0
      %v615 = vpop.f32.mrf.mxu0
      %616 = vdwg.mxu0
      %v617 = vadd.f32 %v555, %v612
      %v618 = vld [vmem:[%s4] sm:$0x1]
      %v620 = vlaneseq
      %v621 = vshrl.u32 %v620, 7
      %v622 = vsub.s32 0, %v621
      %v623 = vrot.slane %v618, %v622
      %v625 = vadd.f32 %v617, %v623
      %626 = vst.msk [vmem:[%s284] sm:$0xff] %vm341, %v625
      %v627 = vsel %vm341, %v625, 0.0
      %v628 = vrot.slane %v627, 4
      %v629 = vadd.f32 %v627, %v628
      %v630 = vrot.slane %v629, 2
      %v631 = vadd.f32 %v629, %v630
      %v632 = vrot.slane %v631, 1
      %v633 = vadd.f32 %v631, %v632
      %vm634 = vcmask 122880
      %635 = vst.msk [vmem:[%s287] sm:$0x1] %vm634, %v633
      %v636 = vmul.f32 %v625, %v625
      %v637 = vsel %vm341, %v636, 0.0
      %v638 = vrot.slane %v637, 4
      %v639 = vadd.f32 %v637, %v638
      %v640 = vrot.slane %v639, 2
      %v641 = vadd.f32 %v639, %v640
      %v642 = vrot.slane %v641, 1
      %v643 = vadd.f32 %v641, %v642
      %644 = vst.msk [vmem:[%s290] sm:$0x1] %vm634, %v643
      %p645 = scmp.lt.s32.totalorder %s19, 1
      %s646 = scalar_select %p645, %s19, 1
      %s647 = smul.addr %s646, 8
      %s648 = scalar_lea.vmem %s5, %s647
      %p649 = scmp.lt.s32.totalorder %s19, 1
      %s650 = scalar_select %p649, %s19, 1
      %s651 = scalar_lea.vmem %s6, %s650
      %p652 = scmp.lt.s32.totalorder %s19, 1
      %s653 = scalar_select %p652, %s19, 1
      %s654 = scalar_lea.vmem %s7, %s653
      // Predicated region
      $region41: #{miipher_forward.63} parent=39 // pred_check
        %p655 = pneg %p147
      $region42: #{miipher_forward.63} parent=39 // pred_check_branch
        %657 = sbr.rel (%p655) target = $region44
      $region43: #{miipher_forward.63} parent=39 // pred_region
        _
      $region44: #{miipher_forward.63} parent=39 // pred_fallthru
        _
      // Predicated region
      $region45: #{miipher_forward.63} parent=39 // pred_check
        %p658 = pneg %p173
      $region46: #{miipher_forward.63} parent=39 // pred_check_branch
        %660 = sbr.rel (%p658) target = $region48
      $region47: #{miipher_forward.63} parent=39 // pred_region
        _
      $region48: #{miipher_forward.63} parent=39 // pred_fallthru
        _
      // Predicated region
      $region49: #{miipher_forward.63} parent=39 // pred_check
        %p661 = pneg %p199
      $region50: #{miipher_forward.63} parent=39 // pred_check_branch
        %663 = sbr.rel (%p661) target = $region52
      $region51: #{miipher_forward.63} parent=39 // pred_region
        _
      $region52: #{miipher_forward.63} parent=39 // pred_fallthru
        _
    $region40: #{miipher_forward.63} parent=5 // pred_fallthru
      _
    %p664 = scmp.le.s32.totalorder 2, %s14
    // Predicated region
    $region53: #{miipher_forward.63} parent=5 // pred_check
      %p665 = pneg %p664
    $region54: #{miipher_forward.63} parent=5 // pred_check_branch
      %667 = sbr.rel (%p665) target = $region56
    $region55: #{miipher_forward.63} parent=5 // pred_region
      %s668 = ssub.s32 %s14, 2
      // Predicated region
      $region57: #{miipher_forward.63} parent=55 // pred_check
        %p669 = pneg %p153
      $region58: #{miipher_forward.63} parent=55 // pred_check_branch
        %671 = sbr.rel (%p669) target = $region60
      $region59: #{miipher_forward.63} parent=55 // pred_region
        %p672 = scmp.lt.s32.totalorder %s20, 1
        %s673 = scalar_select %p672, %s20, 1
        %s674 = smul.addr %s673, 8
        %s675 = scalar_lea.vmem %s5, %s674
      $region60: #{miipher_forward.63} parent=55 // pred_fallthru
        _
      // Predicated region
      $region61: #{miipher_forward.63} parent=55 // pred_check
        %p676 = pneg %p179
      $region62: #{miipher_forward.63} parent=55 // pred_check_branch
        %678 = sbr.rel (%p676) target = $region64
      $region63: #{miipher_forward.63} parent=55 // pred_region
        %p679 = scmp.lt.s32.totalorder %s20, 1
        %s680 = scalar_select %p679, %s20, 1
        %s681 = scalar_lea.vmem %s6, %s680
      $region64: #{miipher_forward.63} parent=55 // pred_fallthru
        _
      // Predicated region
      $region65: #{miipher_forward.63} parent=55 // pred_check
        %p682 = pneg %p205
      $region66: #{miipher_forward.63} parent=55 // pred_check_branch
        %684 = sbr.rel (%p682) target = $region68
      $region67: #{miipher_forward.63} parent=55 // pred_region
        %p685 = scmp.lt.s32.totalorder %s20, 1
        %s686 = scalar_select %p685, %s20, 1
        %s687 = scalar_lea.vmem %s7, %s686
      $region68: #{miipher_forward.63} parent=55 // pred_fallthru
        _
    $region56: #{miipher_forward.63} parent=5 // pred_fallthru
      _
  $region6: #{miipher_forward.63} parent=0 // loop_footer
    %s18 = sadd.s32 1, %s14
  $region7: #{miipher_forward.63} parent=0 // loop_footer_branch
    %13 = sbr.rel target = $region3
  $region8: #{miipher_forward.63} parent=0 // loop_exit
    _

// kernel: miipher_forward.66
$region0: #{miipher_forward.66}
  #allocation0 [shape = 'u32[]', space=smem, size = 0x4, offset = 0x4, fixed_abs, tag = 'smem constant byte address 0x4 - core index']
  #allocation1 [shape = 'u32[144,128]{1,0:T(1,128)}', space=vmem, size = 0x12000, scoped, tag = 'internal scratch']
  %s0 = inlined_call_operand.vmem [shape: f32[2,8,16], index: 0, kind: input, shape index: {}]
  %s1 = inlined_call_operand.vmem [shape: f32[1,16], index: 1, kind: input, shape index: {}]
  %s2 = inlined_call_operand.vmem [shape: f32[1,16], index: 2, kind: input, shape index: {}]
  %s3 = inlined_call_operand.vmem [shape: bf16[5,16,32], index: 3, kind: input, shape index: {}]
  %s4 = inlined_call_operand.vmem [shape: f32[1,32], index: 4, kind: input, shape index: {}]
  %s5 = inlined_call_operand.vmem [shape: f32[2,8,32], index: 5, kind: output, shape index: {0}]
  %s6 = inlined_call_operand.vmem [shape: f32[2,1,32], index: 6, kind: output, shape index: {1}]
  %s7 = inlined_call_operand.vmem [shape: f32[2,1,32], index: 7, kind: output, shape index: {2}]
  %8 = xla_tuple %s5, %s6, %s7
  %s9 = sld [smem:[#allocation0]]
  $region69: #{miipher_forward.66} parent=0
    _
  %s11 = ssub.s32 1, %s9
  %s12 = scalar_select 0, %s11, %s9
  loop: start=0, step=1, limit=4
  $region2: #{miipher_forward.66} parent=0 // loop_pre_header
    _
  $region3: #{miipher_forward.66} parent=0 // loop_header
    %s14 = sphi 0, %s18
    %p15 = scmp.ge.s32.totalorder %s14, 4
    %s24 = sphi 0, %s26
    %s27 = sphi 0, %s24
    %s28 = sphi 0, %s27
    %s44 = sphi 0, %s28
    %s48 = sphi 0, %s48
    %s50 = sphi 0, %s48
    %s51 = sphi 0, %s50
    %s65 = sphi 0, %s51
    %s69 = sphi 0, %s69
    %s71 = sphi 0, %s69
    %s72 = sphi 0, %s71
    %s86 = sphi 0, %s72
    %s90 = sphi 0, %s90
    %s92 = sphi 0, %s90
    %s93 = sphi 0, %s92
    %s107 = sphi 0, %s93
    %s111 = sphi 0, %s111
    %s113 = sphi 0, %s111
    %s114 = sphi 0, %s113
    %s128 = sphi 0, %s114
    %s134 = sphi 0, %s136
    %s137 = sphi 0, %s134
    %s138 = sphi 0, %s137
    %s154 = sphi 0, %s138
    %s160 = sphi 0, %s162
    %s163 = sphi 0, %s160
    %s164 = sphi 0, %s163
    %s180 = sphi 0, %s164
    %s186 = sphi 0, %s188
    %s189 = sphi 0, %s186
    %s190 = sphi 0, %s189
    %s206 = sphi 0, %s190
  $region4: #{miipher_forward.66} parent=0 // loop_header_branch
    %17 = sbr.rel (%p15) target = $region8
  $region5: #{miipher_forward.66} parent=0 // loop_body
    %s19 = ssub.s32 %s14, 1
    %s20 = ssub.s32 %s14, 2
    %s21 = sadd.s32 %s14, 1
    %s22 = ssub.s32 %s14, %s21
    %p23 = scmp.eq.s32.totalorder %s22, 0
    %s25 = sadd.s32 %s24, 1
    %s26 = scalar_select %p23, %s24, %s25
    %p29 = pneg %p23
    %p30 = scmp.eq.s32.totalorder %s14, 1
    %p31 = por %p29, %p30
    %p32 = scmp.ne.s32.totalorder %s24, %s27
    %p33 = scmp.eq.s32.totalorder %s14, 0
    %p34 = por %p32, %p33
    %p35 = scmp.ne.s32.totalorder %s24, %s27
    %p36 = scmp.eq.s32.totalorder %s19, 1
    %p37 = por %p35, %p36
    %p38 = scmp.ne.s32.totalorder %s27, %s28
    %p39 = scmp.eq.s32.totalorder %s19, 0
    %p40 = por %p38, %p39
    %p41 = scmp.ne.s32.totalorder %s27, %s28
    %p42 = scmp.eq.s32.totalorder %s20, 1
    %p43 = por %p41, %p42
    %p45 = scmp.ne.s32.totalorder %s28, %s44
    %p46 = scmp.eq.s32.totalorder %s20, 0
    %p47 = por %p45, %p46
    %s49 = sadd.s32 %s48, 1
    %p52 = scmp.eq.s32.totalorder %s14, 1
    %p53 = scmp.ne.s32.totalorder %s48, %s50
    %p54 = scmp.eq.s32.totalorder %s14, 0
    %p55 = por %p53, %p54
    %p56 = scmp.ne.s32.totalorder %s48, %s50
    %p57 = scmp.eq.s32.totalorder %s19, 1
    %p58 = por %p56, %p57
    %p59 = scmp.ne.s32.totalorder %s50, %s51
    %p60 = scmp.eq.s32.totalorder %s19, 0
    %p61 = por %p59, %p60
    %p62 = scmp.ne.s32.totalorder %s50, %s51
    %p63 = scmp.eq.s32.totalorder %s20, 1
    %p64 = por %p62, %p63
    %p66 = scmp.ne.s32.totalorder %s51, %s65
    %p67 = scmp.eq.s32.totalorder %s20, 0
    %p68 = por %p66, %p67
    %s70 = sadd.s32 %s69, 1
    %p73 = scmp.eq.s32.totalorder %s14, 1
    %p74 = scmp.ne.s32.totalorder %s69, %s71
    %p75 = scmp.eq.s32.totalorder %s14, 0
    %p76 = por %p74, %p75
    %p77 = scmp.ne.s32.totalorder %s69, %s71
    %p78 = scmp.eq.s32.totalorder %s19, 1
    %p79 = por %p77, %p78
    %p80 = scmp.ne.s32.totalorder %s71, %s72
    %p81 = scmp.eq.s32.totalorder %s19, 0
    %p82 = por %p80, %p81
    %p83 = scmp.ne.s32.totalorder %s71, %s72
    %p84 = scmp.eq.s32.totalorder %s20, 1
    %p85 = por %p83, %p84
    %p87 = scmp.ne.s32.totalorder %s72, %s86
    %p88 = scmp.eq.s32.totalorder %s20, 0
    %p89 = por %p87, %p88
    %s91 = sadd.s32 %s90, 1
    %p94 = scmp.eq.s32.totalorder %s14, 1
    %p95 = scmp.ne.s32.totalorder %s90, %s92
    %p96 = scmp.eq.s32.totalorder %s14, 0
    %p97 = por %p95, %p96
    %p98 = scmp.ne.s32.totalorder %s90, %s92
    %p99 = scmp.eq.s32.totalorder %s19, 1
    %p100 = por %p98, %p99
    %p101 = scmp.ne.s32.totalorder %s92, %s93
    %p102 = scmp.eq.s32.totalorder %s19, 0
    %p103 = por %p101, %p102
    %p104 = scmp.ne.s32.totalorder %s92, %s93
    %p105 = scmp.eq.s32.totalorder %s20, 1
    %p106 = por %p104, %p105
    %p108 = scmp.ne.s32.totalorder %s93, %s107
    %p109 = scmp.eq.s32.totalorder %s20, 0
    %p110 = por %p108, %p109
    %s112 = sadd.s32 %s111, 1
    %p115 = scmp.eq.s32.totalorder %s14, 1
    %p116 = scmp.ne.s32.totalorder %s111, %s113
    %p117 = scmp.eq.s32.totalorder %s14, 0
    %p118 = por %p116, %p117
    %p119 = scmp.ne.s32.totalorder %s111, %s113
    %p120 = scmp.eq.s32.totalorder %s19, 1
    %p121 = por %p119, %p120
    %p122 = scmp.ne.s32.totalorder %s113, %s114
    %p123 = scmp.eq.s32.totalorder %s19, 0
    %p124 = por %p122, %p123
    %p125 = scmp.ne.s32.totalorder %s113, %s114
    %p126 = scmp.eq.s32.totalorder %s20, 1
    %p127 = por %p125, %p126
    %p129 = scmp.ne.s32.totalorder %s114, %s128
    %p130 = scmp.eq.s32.totalorder %s20, 0
    %p131 = por %p129, %p130
    %s132 = ssub.s32 %s14, %s21
    %p133 = scmp.eq.s32.totalorder %s132, 0
    %s135 = sadd.s32 %s134, 1
    %s136 = scalar_select %p133, %s134, %s135
    %p139 = pneg %p133
    %p140 = scmp.eq.s32.totalorder %s14, 1
    %p141 = por %p139, %p140
    %p142 = scmp.ne.s32.totalorder %s134, %s137
    %p143 = scmp.eq.s32.totalorder %s14, 0
    %p144 = por %p142, %p143
    %p145 = scmp.ne.s32.totalorder %s134, %s137
    %p146 = scmp.eq.s32.totalorder %s19, 1
    %p147 = por %p145, %p146
    %p148 = scmp.ne.s32.totalorder %s137, %s138
    %p149 = scmp.eq.s32.totalorder %s19, 0
    %p150 = por %p148, %p149
    %p151 = scmp.ne.s32.totalorder %s137, %s138
    %p152 = scmp.eq.s32.totalorder %s20, 1
    %p153 = por %p151, %p152
    %p155 = scmp.ne.s32.totalorder %s138, %s154
    %p156 = scmp.eq.s32.totalorder %s20, 0
    %p157 = por %p155, %p156
    %s158 = ssub.s32 %s14, %s21
    %p159 = scmp.eq.s32.totalorder %s158, 0
    %s161 = sadd.s32 %s160, 1
    %s162 = scalar_select %p159, %s160, %s161
    %p165 = pneg %p159
    %p166 = scmp.eq.s32.totalorder %s14, 1
    %p167 = por %p165, %p166
    %p168 = scmp.ne.s32.totalorder %s160, %s163
    %p169 = scmp.eq.s32.totalorder %s14, 0
    %p170 = por %p168, %p169
    %p171 = scmp.ne.s32.totalorder %s160, %s163
    %p172 = scmp.eq.s32.totalorder %s19, 1
    %p173 = por %p171, %p172
    %p174 = scmp.ne.s32.totalorder %s163, %s164
    %p175 = scmp.eq.s32.totalorder %s19, 0
    %p176 = por %p174, %p175
    %p177 = scmp.ne.s32.totalorder %s163, %s164
    %p178 = scmp.eq.s32.totalorder %s20, 1
    %p179 = por %p177, %p178
    %p181 = scmp.ne.s32.totalorder %s164, %s180
    %p182 = scmp.eq.s32.totalorder %s20, 0
    %p183 = por %p181, %p182
    %s184 = ssub.s32 %s14, %s21
    %p185 = scmp.eq.s32.totalorder %s184, 0
    %s187 = sadd.s32 %s186, 1
    %s188 = scalar_select %p185, %s186, %s187
    %p191 = pneg %p185
    %p192 = scmp.eq.s32.totalorder %s14, 1
    %p193 = por %p191, %p192
    %p194 = scmp.ne.s32.totalorder %s186, %s189
    %p195 = scmp.eq.s32.totalorder %s14, 0
    %p196 = por %p194, %p195
    %p197 = scmp.ne.s32.totalorder %s186, %s189
    %p198 = scmp.eq.s32.totalorder %s19, 1
    %p199 = por %p197, %p198
    %p200 = scmp.ne.s32.totalorder %s189, %s190
    %p201 = scmp.eq.s32.totalorder %s19, 0
    %p202 = por %p200, %p201
    %p203 = scmp.ne.s32.totalorder %s189, %s190
    %p204 = scmp.eq.s32.totalorder %s20, 1
    %p205 = por %p203, %p204
    %p207 = scmp.ne.s32.totalorder %s190, %s206
    %p208 = scmp.eq.s32.totalorder %s20, 0
    %p209 = por %p207, %p208
    %p210 = scmp.le.s32.totalorder 1, %s14
    %p211 = scmp.lt.s32.totalorder %s14, 3
    %p212 = pnand %p210, %p211
    %p213 = pneg %p212
    // Predicated region
    $region9: #{miipher_forward.66} parent=5 // pred_check
      _
    $region10: #{miipher_forward.66} parent=5 // pred_check_branch
      %215 = sbr.rel (%p212) target = $region12
    $region11: #{miipher_forward.66} parent=5 // pred_region
      %s216 = ssub.s32 %s14, 1
      // Predicated region
      $region13: #{miipher_forward.66} parent=11 // pred_check
        %p217 = pneg %p61
      $region14: #{miipher_forward.66} parent=11 // pred_check_branch
        %219 = sbr.rel (%p217) target = $region16
      $region15: #{miipher_forward.66} parent=11 // pred_region
        _
      $region16: #{miipher_forward.66} parent=11 // pred_fallthru
        _
      // Predicated region
      $region17: #{miipher_forward.66} parent=11 // pred_check
        %p220 = pneg %p82
      $region18: #{miipher_forward.66} parent=11 // pred_check_branch
        %222 = sbr.rel (%p220) target = $region20
      $region19: #{miipher_forward.66} parent=11 // pred_region
        _
      $region20: #{miipher_forward.66} parent=11 // pred_fallthru
        _
      // Predicated region
      $region21: #{miipher_forward.66} parent=11 // pred_check
        %p223 = pneg %p103
      $region22: #{miipher_forward.66} parent=11 // pred_check_branch
        %225 = sbr.rel (%p223) target = $region24
      $region23: #{miipher_forward.66} parent=11 // pred_region
        _
      $region24: #{miipher_forward.66} parent=11 // pred_fallthru
        _
      // Predicated region
      $region25: #{miipher_forward.66} parent=11 // pred_check
        %p226 = pneg %p124
      $region26: #{miipher_forward.66} parent=11 // pred_check_branch
        %228 = sbr.rel (%p226) target = $region28
      $region27: #{miipher_forward.66} parent=11 // pred_region
        _
      $region28: #{miipher_forward.66} parent=11 // pred_fallthru
        _
    $region12: #{miipher_forward.66} parent=5 // pred_fallthru
      _
    %p229 = scmp.lt.s32.totalorder %s14, 2
    // Predicated region
    $region29: #{miipher_forward.66} parent=5 // pred_check
      %p230 = pneg %p229
    $region30: #{miipher_forward.66} parent=5 // pred_check_branch
      %232 = sbr.rel (%p230) target = $region32
    $region31: #{miipher_forward.66} parent=5 // pred_region
      // Predicated region
      $region33: #{miipher_forward.66} parent=31 // pred_check
        %p233 = pneg %p34
      $region34: #{miipher_forward.66} parent=31 // pred_check_branch
        %235 = sbr.rel (%p233) target = $region36
      $region35: #{miipher_forward.66} parent=31 // pred_region
        %p236 = scmp.lt.s32.totalorder %s14, 1
        %s237 = scalar_select %p236, %s14, 1
        %s238 = smul.addr %s237, 8
        %s239 = scalar_lea.vmem %s0, %s238
      $region36: #{miipher_forward.66} parent=31 // pred_fallthru
        _
    $region32: #{miipher_forward.66} parent=5 // pred_fallthru
      _
    %p240 = scmp.le.s32.totalorder 1, %s14
    %p241 = scmp.lt.s32.totalorder %s14, 3
    %p242 = pnand %p240, %p241
    %p243 = pneg %p242
    // Predicated region
    $region37: #{miipher_forward.66} parent=5 // pred_check
      _
    $region38: #{miipher_forward.66} parent=5 // pred_check_branch
      %245 = sbr.rel (%p242) target = $region40
    $region39: #{miipher_forward.66} parent=5 // pred_region
      %s246 = ssub.s32 %s14, 1
      %p247 = scmp.lt.s32.totalorder %s19, 1
      %s248 = scalar_select %p247, %s19, 1
      %s249 = smul.addr %s248, 8
      %s250 = scalar_lea.vmem %s0, %s249
      %p251 = pneg %p40
      %p252 = pneg %p37
      %p253 = pneg %p61
      %p254 = pneg %p58
      %p255 = pneg %p82
      %p256 = pneg %p79
      %p257 = pneg %p103
      %p258 = pneg %p100
      %p259 = pneg %p124
      %p260 = pneg %p121
      %p261 = pneg %p150
      %p262 = pneg %p147
      %p263 = scmp.lt.s32.totalorder %s19, 1
      %s264 = scalar_select %p263, %s19, 1
      %s265 = smul.addr %s264, 8
      %s266 = scalar_lea.vmem %s5, %s265
      %p267 = pneg %p176
      %p268 = pneg %p173
      %p269 = scmp.lt.s32.totalorder %s19, 1
      %s270 = scalar_select %p269, %s19, 1
      %s271 = scalar_lea.vmem %s6, %s270
      %p272 = pneg %p202
      %p273 = pneg %p199
      %p274 = scmp.lt.s32.totalorder %s19, 1
      %s275 = scalar_select %p274, %s19, 1
      %s276 = scalar_lea.vmem %s7, %s275
      %p277 = scmp.lt.s32.totalorder %s19, 1
      %s278 = scalar_select %p277, %s19, 1
      %s279 = smul.addr %s278, 8
      %s280 = scalar_lea.vmem %s0, %s279
      %p281 = scmp.lt.s32.totalorder %s19, 1
      %s282 = scalar_select %p281, %s19, 1
      %s283 = smul.addr %s282, 8
      %s284 = scalar_lea.vmem %s5, %s283
      %p285 = scmp.lt.s32.totalorder %s19, 1
      %s286 = scalar_select %p285, %s19, 1
      %s287 = scalar_lea.vmem %s6, %s286
      %p288 = scmp.lt.s32.totalorder %s19, 1
      %s289 = scalar_select %p288, %s19, 1
      %s290 = scalar_lea.vmem %s7, %s289
      %v292 = vld [vmem:[%s280] sm:$0xff]
      %v293 = vld [vmem:[%s1] sm:$0x1]
      %v295 = vlaneseq
      %v296 = vshrl.u32 %v295, 7
      %v297 = vsub.s32 0, %v296
      %v298 = vrot.slane %v293, %v297
      %v300 = vmul.f32 %v292, %v298
      %v301 = vld [vmem:[%s2] sm:$0x1]
      %v303 = vlaneseq
      %v304 = vshrl.u32 %v303, 7
      %v305 = vsub.s32 0, %v304
      %v306 = vrot.slane %v301, %v305
      %v308 = vadd.f32 %v300, %v306
      %v309 = vtanh.pop %v308
      %v310 = vlaneseq
      %v311 = vshrl.u32 %v310, 7
      %v312 = vrot.slane %v309, 6
      %v313 = vadd.s32 %v311, 4294967294
      %vm314 = vcmp.ge.s32.totalorder %v313, 0
      %vm315 = vcmp.lt.s32.totalorder %v313, 8
      %vm316 = vmand %vm314, %vm315
      %v317 = vsel %vm316, 1, 0
      %vm318 = vcmp.eq.s32.totalorder %v317, 1
      %v319 = vsel %vm318, %v312, 0.0
      %v320 = vpack.c.bf16 %v319, %v319
      %v321 = vld [vmem:[%s3] sm:$0xf]
      %v322 = vld [vmem:[%s3 + $0x4] sm:$0xf]
      %v323 = vrot.slane %v309, 7
      %v324 = vadd.s32 %v311, 4294967295
      %vm325 = vcmp.ge.s32.totalorder %v324, 0
      %vm326 = vcmp.lt.s32.totalorder %v324, 8
      %vm327 = vmand %vm325, %vm326
      %v328 = vsel %vm327, 1, 0
      %vm329 = vcmp.eq.s32.totalorder %v328, 1
      %v330 = vsel %vm329, %v323, 0.0
      %v331 = vpack.c.bf16 %v330, %v330
      %s332 = scalar_lea.vmem %s3, 8
      %v333 = vld [vmem:[%s332] sm:$0xf]
      %v334 = vld [vmem:[%s332 + $0x4] sm:$0xf]
      %v337 = vunpack.c.l.b16 %v333
      %v338 = vunpack.c.l.b16 %v334
      %v339 = vpack.c.b16 %v338, %v337
      %vm341 = vcmask 130048
      %v343 = vsel %vm341, %v331, 0
      %345 = vmatprep.subr.bf16.mxu0 0
      %346 = vmatpush1.bf16.msra.mxu0 0
      %347 = vmatprep.subr.bf16.mxu0 0
      %348 = vmatpush1.bf16.msra.mxu0 0
      %349 = vmatprep.subr.bf16.mxu0 0
      %350 = vmatpush1.bf16.msra.mxu0 0
      %351 = vmatprep.subr.bf16.mxu0 0
      %352 = vmatpush1.bf16.msra.mxu0 0
      %353 = vmatprep.subr.bf16.mxu0 0
      %354 = vmatpush1.bf16.msra.mxu0 0
      %355 = vmatprep.subr.bf16.mxu0 0
      %356 = vmatpush1.bf16.msra.mxu0 0
      %357 = vmatprep.subr.bf16.mxu0 0
      %358 = vmatpush1.bf16.msra.mxu0 0
      %359 = vmatprep.subr.bf16.mxu0 0
      %360 = vmatpush1.bf16.msra.mxu0 %v339
      %361 = vmatprep.subr.bf16.mxu0 0
      %362 = vmatpush2.bf16.msra.mxu0 0
      %363 = vmatprep.subr.bf16.mxu0 0
      %364 = vmatpush2.bf16.msra.mxu0 0
      %365 = vmatprep.subr.bf16.mxu0 0
      %366 = vmatpush2.bf16.msra.mxu0 0
      %367 = vmatprep.subr.bf16.mxu0 0
      %368 = vmatpush2.bf16.msra.mxu0 0
      %369 = vmatprep.subr.bf16.mxu0 0
      %370 = vmatpush2.bf16.msra.mxu0 0
      %371 = vmatprep.subr.bf16.mxu0 0
      %372 = vmatpush2.bf16.msra.mxu0 0
      %373 = vmatprep.subr.bf16.mxu0 0
      %374 = vmatpush2.bf16.msra.mxu0 0
      %375 = vmatprep.subr.bf16.mxu0 0
      %376 = vmatpush2.bf16.msra.mxu0 0
      %377 = vmatprep.mubr.bf16.mxu0 0
      %378 = vmatmul.mubr.bf16.gmra.mxu0 %v343
      %v379 = vpop.f32.mrf.mxu0
      %v380 = vadd.f32 0.0, %v379
      %v381 = vpop.f32.mrf.mxu0
      %v382 = vpop.f32.mrf.mxu0
      %v383 = vpop.f32.mrf.mxu0
      %384 = vdwg.mxu0
      %v387 = vunpack.c.l.b16 %v321
      %v388 = vunpack.c.l.b16 %v322
      %v389 = vpack.c.b16 %v388, %v387
      %v392 = vsel %vm341, %v320, 0
      %394 = vmatprep.subr.bf16.mxu0 0
      %395 = vmatpush1.bf16.msra.mxu0 0
      %396 = vmatprep.subr.bf16.mxu0 0
      %397 = vmatpush1.bf16.msra.mxu0 0
      %398 = vmatprep.subr.bf16.mxu0 0
      %399 = vmatpush1.bf16.msra.mxu0 0
      %400 = vmatprep.subr.bf16.mxu0 0
      %401 = vmatpush1.bf16.msra.mxu0 0
      %402 = vmatprep.subr.bf16.mxu0 0
      %403 = vmatpush1.bf16.msra.mxu0 0
      %404 = vmatprep.subr.bf16.mxu0 0
      %405 = vmatpush1.bf16.msra.mxu0 0
      %406 = vmatprep.subr.bf16.mxu0 0
      %407 = vmatpush1.bf16.msra.mxu0 0
      %408 = vmatprep.subr.bf16.mxu0 0
      %409 = vmatpush1.bf16.msra.mxu0 %v389
      %410 = vmatprep.subr.bf16.mxu0 0
      %411 = vmatpush2.bf16.msra.mxu0 0
      %412 = vmatprep.subr.bf16.mxu0 0
      %413 = vmatpush2.bf16.msra.mxu0 0
      %414 = vmatprep.subr.bf16.mxu0 0
      %415 = vmatpush2.bf16.msra.mxu0 0
      %416 = vmatprep.subr.bf16.mxu0 0
      %417 = vmatpush2.bf16.msra.mxu0 0
      %418 = vmatprep.subr.bf16.mxu0 0
      %419 = vmatpush2.bf16.msra.mxu0 0
      %420 = vmatprep.subr.bf16.mxu0 0
      %421 = vmatpush2.bf16.msra.mxu0 0
      %422 = vmatprep.subr.bf16.mxu0 0
      %423 = vmatpush2.bf16.msra.mxu0 0
      %424 = vmatprep.subr.bf16.mxu0 0
      %425 = vmatpush2.bf16.msra.mxu0 0
      %426 = vmatprep.mubr.bf16.mxu0 0
      %427 = vmatmul.mubr.bf16.gmra.mxu0 %v392
      %v428 = vpop.f32.mrf.mxu0
      %v429 = vadd.f32 %v380, %v428
      %v430 = vpop.f32.mrf.mxu0
      %v431 = vpop.f32.mrf.mxu0
      %v432 = vpop.f32.mrf.mxu0
      %433 = vdwg.mxu0
      %vm434 = vcmp.ge.s32.totalorder %v311, 0
      %vm435 = vcmp.lt.s32.totalorder %v311, 8
      %vm436 = vmand %vm434, %vm435
      %v437 = vsel %vm436, 1, 0
      %vm438 = vcmp.eq.s32.totalorder %v437, 1
      %v439 = vsel %vm438, %v309, 0.0
      %v440 = vpack.c.bf16 %v439, %v439
      %s441 = scalar_lea.vmem %s3, 16
      %v442 = vld [vmem:[%s441] sm:$0xf]
      %v443 = vld [vmem:[%s441 + $0x4] sm:$0xf]
      %v446 = vunpack.c.l.b16 %v442
      %v447 = vunpack.c.l.b16 %v443
      %v448 = vpack.c.b16 %v447, %v446
      %v451 = vsel %vm341, %v440, 0
      %453 = vmatprep.subr.bf16.mxu0 0
      %454 = vmatpush1.bf16.msra.mxu0 0
      %455 = vmatprep.subr.bf16.mxu0 0
      %456 = vmatpush1.bf16.msra.mxu0 0
      %457 = vmatprep.subr.bf16.mxu0 0
      %458 = vmatpush1.bf16.msra.mxu0 0
      %459 = vmatprep.subr.bf16.mxu0 0
      %460 = vmatpush1.bf16.msra.mxu0 0
      %461 = vmatprep.subr.bf16.mxu0 0
      %462 = vmatpush1.bf16.msra.mxu0 0
      %463 = vmatprep.subr.bf16.mxu0 0
      %464 = vmatpush1.bf16.msra.mxu0 0
      %465 = vmatprep.subr.bf16.mxu0 0
      %466 = vmatpush1.bf16.msra.mxu0 0
      %467 = vmatprep.subr.bf16.mxu0 0
      %468 = vmatpush1.bf16.msra.mxu0 %v448
      %469 = vmatprep.subr.bf16.mxu0 0
      %470 = vmatpush2.bf16.msra.mxu0 0
      %471 = vmatprep.subr.bf16.mxu0 0
      %472 = vmatpush2.bf16.msra.mxu0 0
      %473 = vmatprep.subr.bf16.mxu0 0
      %474 = vmatpush2.bf16.msra.mxu0 0
      %475 = vmatprep.subr.bf16.mxu0 0
      %476 = vmatpush2.bf16.msra.mxu0 0
      %477 = vmatprep.subr.bf16.mxu0 0
      %478 = vmatpush2.bf16.msra.mxu0 0
      %479 = vmatprep.subr.bf16.mxu0 0
      %480 = vmatpush2.bf16.msra.mxu0 0
      %481 = vmatprep.subr.bf16.mxu0 0
      %482 = vmatpush2.bf16.msra.mxu0 0
      %483 = vmatprep.subr.bf16.mxu0 0
      %484 = vmatpush2.bf16.msra.mxu0 0
      %485 = vmatprep.mubr.bf16.mxu0 0
      %486 = vmatmul.mubr.bf16.gmra.mxu0 %v451
      %v487 = vpop.f32.mrf.mxu0
      %v488 = vadd.f32 0.0, %v487
      %v489 = vpop.f32.mrf.mxu0
      %v490 = vpop.f32.mrf.mxu0
      %v491 = vpop.f32.mrf.mxu0
      %492 = vdwg.mxu0
      %v493 = vadd.f32 %v429, %v488
      %v494 = vrot.slane %v309, 1
      %v495 = vadd.s32 %v311, 1
      %vm496 = vcmp.ge.s32.totalorder %v495, 0
      %vm497 = vcmp.lt.s32.totalorder %v495, 8
      %vm498 = vmand %vm496, %vm497
      %v499 = vsel %vm498, 1, 0
      %vm500 = vcmp.eq.s32.totalorder %v499, 1
      %v501 = vsel %vm500, %v494, 0.0
      %v502 = vpack.c.bf16 %v501, %v501
      %s503 = scalar_lea.vmem %s3, 24
      %v504 = vld [vmem:[%s503] sm:$0xf]
      %v505 = vld [vmem:[%s503 + $0x4] sm:$0xf]
      %v508 = vunpack.c.l.b16 %v504
      %v509 = vunpack.c.l.b16 %v505
      %v510 = vpack.c.b16 %v509, %v508
      %v513 = vsel %vm341, %v502, 0
      %515 = vmatprep.subr.bf16.mxu0 0
      %516 = vmatpush1.bf16.msra.mxu0 0
      %517 = vmatprep.subr.bf16.mxu0 0
      %518 = vmatpush1.bf16.msra.mxu0 0
      %519 = vmatprep.subr.bf16.mxu0 0
      %520 = vmatpush1.bf16.msra.mxu0 0
      %521 = vmatprep.subr.bf16.mxu0 0
      %522 = vmatpush1.bf16.msra.mxu0 0
      %523 = vmatprep.subr.bf16.mxu0 0
      %524 = vmatpush1.bf16.msra.mxu0 0
      %525 = vmatprep.subr.bf16.mxu0 0
      %526 = vmatpush1.bf16.msra.mxu0 0
      %527 = vmatprep.subr.bf16.mxu0 0
      %528 = vmatpush1.bf16.msra.mxu0 0
      %529 = vmatprep.subr.bf16.mxu0 0
      %530 = vmatpush1.bf16.msra.mxu0 %v510
      %531 = vmatprep.subr.bf16.mxu0 0
      %532 = vmatpush2.bf16.msra.mxu0 0
      %533 = vmatprep.subr.bf16.mxu0 0
      %534 = vmatpush2.bf16.msra.mxu0 0
      %535 = vmatprep.subr.bf16.mxu0 0
      %536 = vmatpush2.bf16.msra.mxu0 0
      %537 = vmatprep.subr.bf16.mxu0 0
      %538 = vmatpush2.bf16.msra.mxu0 0
      %539 = vmatprep.subr.bf16.mxu0 0
      %540 = vmatpush2.bf16.msra.mxu0 0
      %541 = vmatprep.subr.bf16.mxu0 0
      %542 = vmatpush2.bf16.msra.mxu0 0
      %543 = vmatprep.subr.bf16.mxu0 0
      %544 = vmatpush2.bf16.msra.mxu0 0
      %545 = vmatprep.subr.bf16.mxu0 0
      %546 = vmatpush2.bf16.msra.mxu0 0
      %547 = vmatprep.mubr.bf16.mxu0 0
      %548 = vmatmul.mubr.bf16.gmra.mxu0 %v513
      %v549 = vpop.f32.mrf.mxu0
      %v550 = vadd.f32 0.0, %v549
      %v551 = vpop.f32.mrf.mxu0
      %v552 = vpop.f32.mrf.mxu0
      %v553 = vpop.f32.mrf.mxu0
      %554 = vdwg.mxu0
      %v555 = vadd.f32 %v493, %v550
      %v556 = vrot.slane %v309, 2
      %v557 = vadd.s32 %v311, 2
      %vm558 = vcmp.ge.s32.totalorder %v557, 0
      %vm559 = vcmp.lt.s32.totalorder %v557, 8
      %vm560 = vmand %vm558, %vm559
      %v561 = vsel %vm560, 1, 0
      %vm562 = vcmp.eq.s32.totalorder %v561, 1
      %v563 = vsel %vm562, %v556, 0.0
      %v564 = vpack.c.bf16 %v563, %v563
      %s565 = scalar_lea.vmem %s3, 32
      %v566 = vld [vmem:[%s565] sm:$0xf]
      %v567 = vld [vmem:[%s565 + $0x4] sm:$0xf]
      %v570 = vunpack.c.l.b16 %v566
      %v571 = vunpack.c.l.b16 %v567
      %v572 = vpack.c.b16 %v571, %v570
      %v575 = vsel %vm341, %v564, 0
      %577 = vmatprep.subr.bf16.mxu0 0
      %578 = vmatpush1.bf16.msra.mxu0 0
      %579 = vmatprep.subr.bf16.mxu0 0
      %580 = vmatpush1.bf16.msra.mxu0 0
      %581 = vmatprep.subr.bf16.mxu0 0
      %582 = vmatpush1.bf16.msra.mxu0 0
      %583 = vmatprep.subr.bf16.mxu0 0
      %584 = vmatpush1.bf16.msra.mxu0 0
      %585 = vmatprep.subr.bf16.mxu0 0
      %586 = vmatpush1.bf16.msra.mxu0 0
      %587 = vmatprep.subr.bf16.mxu0 0
      %588 = vmatpush1.bf16.msra.mxu0 0
      %589 = vmatprep.subr.bf16.mxu0 0
      %590 = vmatpush1.bf16.msra.mxu0 0
      %591 = vmatprep.subr.bf16.mxu0 0
      %592 = vmatpush1.bf16.msra.mxu0 %v572
      %593 = vmatprep.subr.bf16.mxu0 0
      %594 = vmatpush2.bf16.msra.mxu0 0
      %595 = vmatprep.subr.bf16.mxu0 0
      %596 = vmatpush2.bf16.msra.mxu0 0
      %597 = vmatprep.subr.bf16.mxu0 0
      %598 = vmatpush2.bf16.msra.mxu0 0
      %599 = vmatprep.subr.bf16.mxu0 0
      %600 = vmatpush2.bf16.msra.mxu0 0
      %601 = vmatprep.subr.bf16.mxu0 0
      %602 = vmatpush2.bf16.msra.mxu0 0
      %603 = vmatprep.subr.bf16.mxu0 0
      %604 = vmatpush2.bf16.msra.mxu0 0
      %605 = vmatprep.subr.bf16.mxu0 0
      %606 = vmatpush2.bf16.msra.mxu0 0
      %607 = vmatprep.subr.bf16.mxu0 0
      %608 = vmatpush2.bf16.msra.mxu0 0
      %609 = vmatprep.mubr.bf16.mxu0 0
      %610 = vmatmul.mubr.bf16.gmra.mxu0 %v575
      %v611 = vpop.f32.mrf.mxu0
      %v612 = vadd.f32 0.0, %v611
      %v613 = vpop.f32.mrf.mxu0
      %v614 = vpop.f32.mrf.mxu0
      %v615 = vpop.f32.mrf.mxu0
      %616 = vdwg.mxu0
      %v617 = vadd.f32 %v555, %v612
      %v618 = vld [vmem:[%s4] sm:$0x1]
      %v620 = vlaneseq
      %v621 = vshrl.u32 %v620, 7
      %v622 = vsub.s32 0, %v621
      %v623 = vrot.slane %v618, %v622
      %v625 = vadd.f32 %v617, %v623
      %vm626 = vcmask 261120
      %627 = vst.msk [vmem:[%s284] sm:$0xff] %vm626, %v625
      %v628 = vsel %vm626, %v625, 0.0
      %v629 = vrot.slane %v628, 4
      %v630 = vadd.f32 %v628, %v629
      %v631 = vrot.slane %v630, 2
      %v632 = vadd.f32 %v630, %v631
      %v633 = vrot.slane %v632, 1
      %v634 = vadd.f32 %v632, %v633
      %vm635 = vcmask 253952
      %636 = vst.msk [vmem:[%s287] sm:$0x1] %vm635, %v634
      %v637 = vmul.f32 %v625, %v625
      %v638 = vsel %vm626, %v637, 0.0
      %v639 = vrot.slane %v638, 4
      %v640 = vadd.f32 %v638, %v639
      %v641 = vrot.slane %v640, 2
      %v642 = vadd.f32 %v640, %v641
      %v643 = vrot.slane %v642, 1
      %v644 = vadd.f32 %v642, %v643
      %645 = vst.msk [vmem:[%s290] sm:$0x1] %vm635, %v644
      %p646 = scmp.lt.s32.totalorder %s19, 1
      %s647 = scalar_select %p646, %s19, 1
      %s648 = smul.addr %s647, 8
      %s649 = scalar_lea.vmem %s5, %s648
      %p650 = scmp.lt.s32.totalorder %s19, 1
      %s651 = scalar_select %p650, %s19, 1
      %s652 = scalar_lea.vmem %s6, %s651
      %p653 = scmp.lt.s32.totalorder %s19, 1
      %s654 = scalar_select %p653, %s19, 1
      %s655 = scalar_lea.vmem %s7, %s654
      // Predicated region
      $region41: #{miipher_forward.66} parent=39 // pred_check
        %p656 = pneg %p147
      $region42: #{miipher_forward.66} parent=39 // pred_check_branch
        %658 = sbr.rel (%p656) target = $region44
      $region43: #{miipher_forward.66} parent=39 // pred_region
        _
      $region44: #{miipher_forward.66} parent=39 // pred_fallthru
        _
      // Predicated region
      $region45: #{miipher_forward.66} parent=39 // pred_check
        %p659 = pneg %p173
      $region46: #{miipher_forward.66} parent=39 // pred_check_branch
        %661 = sbr.rel (%p659) target = $region48
      $region47: #{miipher_forward.66} parent=39 // pred_region
        _
      $region48: #{miipher_forward.66} parent=39 // pred_fallthru
        _
      // Predicated region
      $region49: #{miipher_forward.66} parent=39 // pred_check
        %p662 = pneg %p199
      $region50: #{miipher_forward.66} parent=39 // pred_check_branch
        %664 = sbr.rel (%p662) target = $region52
      $region51: #{miipher_forward.66} parent=39 // pred_region
        _
      $region52: #{miipher_forward.66} parent=39 // pred_fallthru
        _
    $region40: #{miipher_forward.66} parent=5 // pred_fallthru
      _
    %p665 = scmp.le.s32.totalorder 2, %s14
    // Predicated region
    $region53: #{miipher_forward.66} parent=5 // pred_check
      %p666 = pneg %p665
    $region54: #{miipher_forward.66} parent=5 // pred_check_branch
      %668 = sbr.rel (%p666) target = $region56
    $region55: #{miipher_forward.66} parent=5 // pred_region
      %s669 = ssub.s32 %s14, 2
      // Predicated region
      $region57: #{miipher_forward.66} parent=55 // pred_check
        %p670 = pneg %p153
      $region58: #{miipher_forward.66} parent=55 // pred_check_branch
        %672 = sbr.rel (%p670) target = $region60
      $region59: #{miipher_forward.66} parent=55 // pred_region
        %p673 = scmp.lt.s32.totalorder %s20, 1
        %s674 = scalar_select %p673, %s20, 1
        %s675 = smul.addr %s674, 8
        %s676 = scalar_lea.vmem %s5, %s675
      $region60: #{miipher_forward.66} parent=55 // pred_fallthru
        _
      // Predicated region
      $region61: #{miipher_forward.66} parent=55 // pred_check
        %p677 = pneg %p179
      $region62: #{miipher_forward.66} parent=55 // pred_check_branch
        %679 = sbr.rel (%p677) target = $region64
      $region63: #{miipher_forward.66} parent=55 // pred_region
        %p680 = scmp.lt.s32.totalorder %s20, 1
        %s681 = scalar_select %p680, %s20, 1
        %s682 = scalar_lea.vmem %s6, %s681
      $region64: #{miipher_forward.66} parent=55 // pred_fallthru
        _
      // Predicated region
      $region65: #{miipher_forward.66} parent=55 // pred_check
        %p683 = pneg %p205
      $region66: #{miipher_forward.66} parent=55 // pred_check_branch
        %685 = sbr.rel (%p683) target = $region68
      $region67: #{miipher_forward.66} parent=55 // pred_region
        %p686 = scmp.lt.s32.totalorder %s20, 1
        %s687 = scalar_select %p686, %s20, 1
        %s688 = scalar_lea.vmem %s7, %s687
      $region68: #{miipher_forward.66} parent=55 // pred_fallthru
        _
    $region56: #{miipher_forward.66} parent=5 // pred_fallthru
      _
  $region6: #{miipher_forward.66} parent=0 // loop_footer
    %s18 = sadd.s32 1, %s14
  $region7: #{miipher_forward.66} parent=0 // loop_footer_branch
    %13 = sbr.rel target = $region3
  $region8: #{miipher_forward.66} parent=0 // loop_exit
    _

</llo_original>
